<compile_context>
chip_gen: v6e
topology: v6e:2x2x1
jax: 0.10.0
libtpu: 0.0.40
codegen_flags: <defaults>
</compile_context>

<pallas_src>
import jax
import jax.numpy as jnp
from jax.experimental import pallas as pl
from jax.experimental.pallas import tpu as pltpu


def _bilstm_kernel(nw_ref, gxf_ref, gxb_ref, whhf_ref, whhb_ref,
                   of_ref, ob_ref, hf_ref, cf_ref, hb_ref, cb_ref):
    # nw_ref  : (B, 1)      int32  valid lengths
    # gxf_ref : (TC, B, 4H) f32    precomputed x@W_ih^T + bias, forward dir
    # gxb_ref : (TC, B, 4H) f32    same, backward dir (time-reversed chunk)
    # whhf/b  : (H, 4H)     f32    recurrent weights (pre-transposed)
    # of/ob   : (TC, B, H)  f32    per-direction hidden-state outputs
    # hf/cf/hb/cb : (B, H)  f32    VMEM scratch carried across time chunks
    c = pl.program_id(0)
    n_chunks = pl.num_programs(0)
    TC = gxf_ref.shape[0]
    B, H = hf_ref.shape

    @pl.when(c == 0)
    def _():
        z = jnp.zeros((B, H), jnp.float32)
        hf_ref[...] = z
        cf_ref[...] = z
        hb_ref[...] = z
        cb_ref[...] = z

    nw = nw_ref[...]                      # (B, 1) int32
    base_f = c * TC                       # global time offset, forward chunk
    base_b = (n_chunks - 1 - c) * TC      # global time offset, backward chunk

    def cell(gates, c_state):
        # PyTorch gate order: i, f, g, o. H is a multiple of 128 so the gate
        # slices are lane-aligned (no relayout).
        i_g = jax.nn.sigmoid(gates[:, 0 * H:1 * H])
        f_g = jax.nn.sigmoid(gates[:, 1 * H:2 * H])
        g_g = jnp.tanh(gates[:, 2 * H:3 * H])
        o_g = jax.nn.sigmoid(gates[:, 3 * H:4 * H])
        c_new = f_g * c_state + i_g * g_g
        h_new = o_g * jnp.tanh(c_new)
        return h_new, c_new

    def step(i, carry):
        # ---------- forward direction: local time index i ----------
        h_f = hf_ref[...]
        c_f = cf_ref[...]
        gates_f = gxf_ref[i] + jnp.dot(h_f, whhf_ref[...],
                                       preferred_element_type=jnp.float32)
        hf_new, cf_new = cell(gates_f, c_f)
        valid_f = jnp.broadcast_to(base_f + i < nw, (B, H))   # one broadcast
        cf_ref[...] = jnp.where(valid_f, cf_new, c_f)
        hf_ref[...] = jnp.where(valid_f, hf_new, h_f)
        of_ref[i] = jnp.where(valid_f, hf_new, 0.0)

        # ---------- backward direction: local time index TC-1-i ----------
        j = TC - 1 - i
        h_b = hb_ref[...]
        c_b = cb_ref[...]
        gates_b = gxb_ref[j] + jnp.dot(h_b, whhb_ref[...],
                                       preferred_element_type=jnp.float32)
        hb_new, cb_new = cell(gates_b, c_b)
        valid_b = jnp.broadcast_to(base_b + j < nw, (B, H))
        cb_ref[...] = jnp.where(valid_b, cb_new, c_b)
        hb_ref[...] = jnp.where(valid_b, hb_new, h_b)
        ob_ref[j] = jnp.where(valid_b, hb_new, 0.0)
        return carry

    jax.lax.fori_loop(0, TC, step, 0, unroll=min(TC, 8))


def lstm_forward(x, n_wins, w_ih, w_hh, b_ih, b_hh, time_chunk=64):
    """Bidirectional LSTM forward with packed-sequence masking.

    Args:
      x:      (B, T, D) float32, batch-first input (T == n_wins.max()).
      n_wins: (B,) int, valid sequence lengths.
      w_ih:   (2, 4H, D)  stacked [forward, reverse] PyTorch weight_ih.
      w_hh:   (2, 4H, H)  stacked [forward, reverse] PyTorch weight_hh.
      b_ih:   (2, 4H), b_hh: (2, 4H).
    Returns:
      (out, n_wins) with out: (B, T, 2H) float32, zero past n_wins[b],
      feature dim ordered [forward, backward] as in PyTorch.
    """
    B, T, D = x.shape
    H = w_hh.shape[-1]
    assert w_ih.shape == (2, 4 * H, D) and w_hh.shape == (2, 4 * H, H)
    assert H % 128 == 0, "lane-aligned gate slicing requires H % 128 == 0"

    tc = min(time_chunk, T)
    n_chunks = pl.cdiv(T, tc)
    T_pad = n_chunks * tc

    # Pre-transpose weights so dots contract the feature axis directly.
    wih_t = jnp.transpose(w_ih, (0, 2, 1)).astype(jnp.float32)   # (2, D, 4H)
    whh_t = jnp.transpose(w_hh, (0, 2, 1)).astype(jnp.float32)   # (2, H, 4H)
    bias = (b_ih + b_hh).astype(jnp.float32)                     # (2, 4H)

    x_tm = jnp.transpose(x, (1, 0, 2)).astype(jnp.float32)       # (T, B, D)
    if T_pad > T:
        # Padded timesteps have tid >= n_wins, so the in-kernel mask keeps the
        # state untouched and their outputs zero; they are dropped below.
        x_tm = jnp.pad(x_tm, ((0, T_pad - T), (0, 0), (0, 0)))

    # Hoisted input projection + bias for BOTH directions as one roofline
    # matmul outside the sequential recurrence.
    gx = jnp.einsum("tbd,gdh->gtbh", x_tm, wih_t,
                    precision=jax.lax.Precision.HIGHEST)
    gx = gx + bias[:, None, None, :]                             # (2,T_pad,B,4H)
    gx_f, gx_b = gx[0], gx[1]

    nw_col = n_wins.astype(jnp.int32).reshape(B, 1)

    grid_spec = pltpu.PrefetchScalarGridSpec(
        num_scalar_prefetch=0,
        grid=(n_chunks,),   # time chunks: the sequential recurrence axis
        in_specs=[
            # lengths: tiny, resident
            pl.BlockSpec((B, 1), lambda c: (0, 0)),
            # forward gates_x chunk (walks left -> right)
            pl.BlockSpec((tc, B, 4 * H), lambda c: (c, 0, 0)),
            # backward gates_x chunk (walks right -> left)
            pl.BlockSpec((tc, B, 4 * H), lambda c: (n_chunks - 1 - c, 0, 0)),
            # recurrent weights: constant index_map -> resident across time
            pl.BlockSpec((H, 4 * H), lambda c: (0, 0)),
            pl.BlockSpec((H, 4 * H), lambda c: (0, 0)),
        ],
        out_specs=[
            pl.BlockSpec((tc, B, H), lambda c: (c, 0, 0)),
            pl.BlockSpec((tc, B, H), lambda c: (n_chunks - 1 - c, 0, 0)),
        ],
        scratch_shapes=[
            pltpu.VMEM((B, H), jnp.float32),   # h forward
            pltpu.VMEM((B, H), jnp.float32),   # c forward
            pltpu.VMEM((B, H), jnp.float32),   # h backward
            pltpu.VMEM((B, H), jnp.float32),   # c backward
        ],
    )

    out_f, out_b = pl.pallas_call(
        _bilstm_kernel,
        out_shape=(jax.ShapeDtypeStruct((T_pad, B, H), jnp.float32),
                   jax.ShapeDtypeStruct((T_pad, B, H), jnp.float32)),
        grid_spec=grid_spec,
        compiler_params=pltpu.CompilerParams(
            dimension_semantics=("arbitrary",),   # time carries the recurrence
        ),
    )(nw_col, gx_f, gx_b, whh_t[0], whh_t[1])

    # (T, B, H) x 2 -> (B, T, 2H) with [forward, backward] feature order.
    out = jnp.concatenate([out_f[:T], out_b[:T]], axis=-1)   # (T, B, 2H)
    out = jnp.transpose(out, (1, 0, 2))                      # (B, T, 2H)
    return out, n_wins


def lstm_ref(x, n_wins, w_ih, w_hh, b_ih, b_hh):
    """Pure-JAX reference mirroring packed bidirectional nn.LSTM forward."""
    B, T, D = x.shape
    H = w_hh.shape[-1]
    wih_t = jnp.transpose(w_ih, (0, 2, 1)).astype(jnp.float32)
    whh_t = jnp.transpose(w_hh, (0, 2, 1)).astype(jnp.float32)
    bias = (b_ih + b_hh).astype(jnp.float32)[:, None, :]
    hp = jax.lax.Precision.HIGHEST
    outs = []
    for d in range(2):
        h = jnp.zeros((B, H), jnp.float32)
        c = jnp.zeros((B, H), jnp.float32)
        ys = [None] * T
        order = range(T) if d == 0 else range(T - 1, -1, -1)
        for t in order:
            gates = (jnp.dot(x[:, t, :], wih_t[d], precision=hp)
                     + jnp.dot(h, whh_t[d], precision=hp) + bias[d])
            i = jax.nn.sigmoid(gates[:, :H])
            f = jax.nn.sigmoid(gates[:, H:2 * H])
            g = jnp.tanh(gates[:, 2 * H:3 * H])
            o = jax.nn.sigmoid(gates[:, 3 * H:])
            c_new = f * c + i * g
            h_new = o * jnp.tanh(c_new)
            valid = (t < n_wins)[:, None]
            c = jnp.where(valid, c_new, c)
            h = jnp.where(valid, h_new, h)
            ys[t] = jnp.where(valid, h_new, 0.0)
        outs.append(jnp.stack(ys, axis=1))
    return jnp.concatenate(outs, axis=-1), n_wins


if __name__ == "__main__":
    # Small shapes consistent with the module: batch=2, seq=8, input_size=32,
    # lstm_h=128 (module default), bidirectional.
    B, T, D, H = 2, 8, 32, 128
    key = jax.random.PRNGKey(0)
    kx, kw1, kw2, kb1, kb2 = jax.random.split(key, 5)
    k = 1.0 / jnp.sqrt(jnp.float32(H))  # PyTorch nn.LSTM init scale
    x = jax.random.normal(kx, (B, T, D), dtype=jnp.float32)
    w_ih = jax.random.uniform(kw1, (2, 4 * H, D), minval=-k, maxval=k,
                              dtype=jnp.float32)
    w_hh = jax.random.uniform(kw2, (2, 4 * H, H), minval=-k, maxval=k,
                              dtype=jnp.float32)
    b_ih = jax.random.uniform(kb1, (2, 4 * H), minval=-k, maxval=k,
                              dtype=jnp.float32)
    b_hh = jax.random.uniform(kb2, (2, 4 * H), minval=-k, maxval=k,
                              dtype=jnp.float32)
    # Variable lengths; T == n_wins.max() as pad_packed_sequence would produce.
    n_wins = jnp.array([8, 5], dtype=jnp.int32)

    out, nw_out = lstm_forward(x, n_wins, w_ih, w_hh, b_ih, b_hh)
    jax.block_until_ready(out)

    out_ref, _ = lstm_ref(x, n_wins, w_ih, w_hh, b_ih, b_hh)
    assert out.shape == (B, T, 2 * H)
    assert jnp.allclose(out, out_ref, atol=2e-4, rtol=2e-4), \
        float(jnp.max(jnp.abs(out - out_ref)))
    # Padded timesteps (t >= n_wins[b]) must be exactly zero.
    assert bool(jnp.all(out[1, 5:, :] == 0.0))
    assert bool(jnp.all(nw_out == n_wins))

    print("KERNEL_OK")
</pallas_src>

<mosaic_0001>
module attributes {stable_mosaic.version = 11 : i64} {
  func.func @_bilstm_kernel(%arg0: i32, %arg1: memref<2x1xi32, #tpu.memory_space<vmem>>, %arg2: memref<8x2x512xf32, #tpu.memory_space<vmem>>, %arg3: memref<8x2x512xf32, #tpu.memory_space<vmem>>, %arg4: memref<128x512xf32, #tpu.memory_space<vmem>>, %arg5: memref<128x512xf32, #tpu.memory_space<vmem>>, %arg6: memref<8x2x128xf32, #tpu.memory_space<vmem>>, %arg7: memref<8x2x128xf32, #tpu.memory_space<vmem>>, %arg8: memref<2x128xf32, #tpu.memory_space<vmem>>, %arg9: memref<2x128xf32, #tpu.memory_space<vmem>>, %arg10: memref<2x128xf32, #tpu.memory_space<vmem>>, %arg11: memref<2x128xf32, #tpu.memory_space<vmem>>) attributes {dimension_semantics = [#tpu.dimension_semantics<arbitrary>], iteration_bounds = array<i64: 1>, scalar_prefetch = 0 : i64, scratch_operands = 4 : i64, tpu.core_type = #tpu.core_type<tc>, window_params = [{pipeline_mode = #tpu.pipeline_mode<synchronous>, transform_indices = @transform_0, window_bounds = array<i64: 2, 1>}, {transform_indices = @transform_1, window_bounds = array<i64: 8, 2, 512>}, {transform_indices = @transform_2, window_bounds = array<i64: 8, 2, 512>}, {pipeline_mode = #tpu.pipeline_mode<synchronous>, transform_indices = @transform_3, window_bounds = array<i64: 128, 512>}, {pipeline_mode = #tpu.pipeline_mode<synchronous>, transform_indices = @transform_4, window_bounds = array<i64: 128, 512>}, {transform_indices = @transform_5, window_bounds = array<i64: 8, 2, 128>}, {transform_indices = @transform_6, window_bounds = array<i64: 8, 2, 128>}]} {
    %c0_i32 = arith.constant 0 : i32
    %0 = arith.cmpi eq, %arg0, %c0_i32 : i32
    %1 = arith.extui %0 : i1 to i32
    %c0_i32_0 = arith.constant 0 : i32
    %2 = arith.cmpi ne, %1, %c0_i32_0 : i32
    scf.if %2 {
      %cst_317 = arith.constant 0.000000e+00 : f32
      %783 = vector.broadcast %cst_317 : f32 to vector<2x128xf32>
      %c0_318 = arith.constant 0 : index
      %c0_319 = arith.constant 0 : index
      %784 = vector.load %arg8[%c0_318, %c0_319] : memref<2x128xf32, #tpu.memory_space<vmem>>, vector<2x128xf32>
      tpu.vector_store %arg8[%c0_318, %c0_319], %783 {strides = array<i32>} : memref<2x128xf32, #tpu.memory_space<vmem>>, vector<2x128xf32>,
      %c0_320 = arith.constant 0 : index
      %c0_321 = arith.constant 0 : index
      %785 = vector.load %arg9[%c0_320, %c0_321] : memref<2x128xf32, #tpu.memory_space<vmem>>, vector<2x128xf32>
      tpu.vector_store %arg9[%c0_320, %c0_321], %783 {strides = array<i32>} : memref<2x128xf32, #tpu.memory_space<vmem>>, vector<2x128xf32>,
      %c0_322 = arith.constant 0 : index
      %c0_323 = arith.constant 0 : index
      %786 = vector.load %arg10[%c0_322, %c0_323] : memref<2x128xf32, #tpu.memory_space<vmem>>, vector<2x128xf32>
      tpu.vector_store %arg10[%c0_322, %c0_323], %783 {strides = array<i32>} : memref<2x128xf32, #tpu.memory_space<vmem>>, vector<2x128xf32>,
      %c0_324 = arith.constant 0 : index
      %c0_325 = arith.constant 0 : index
      %787 = vector.load %arg11[%c0_324, %c0_325] : memref<2x128xf32, #tpu.memory_space<vmem>>, vector<2x128xf32>
      tpu.vector_store %arg11[%c0_324, %c0_325], %783 {strides = array<i32>} : memref<2x128xf32, #tpu.memory_space<vmem>>, vector<2x128xf32>,
    } else {
    }
    %c0 = arith.constant 0 : index
    %c0_1 = arith.constant 0 : index
    %3 = vector.load %arg1[%c0, %c0_1] : memref<2x1xi32, #tpu.memory_space<vmem>>, vector<2x1xi32>
    %c8_i32 = arith.constant 8 : i32
    %4 = arith.muli %arg0, %c8_i32 : i32
    %c0_i32_2 = arith.constant 0 : i32
    %5 = arith.subi %c0_i32_2, %arg0 : i32
    %c8_i32_3 = arith.constant 8 : i32
    %6 = arith.muli %5, %c8_i32_3 : i32
    %c0_i32_4 = arith.constant 0 : i32
    %c0_5 = arith.constant 0 : index
    %c0_6 = arith.constant 0 : index
    %7 = vector.load %arg8[%c0_5, %c0_6] : memref<2x128xf32, #tpu.memory_space<vmem>>, vector<2x128xf32>
    %c0_7 = arith.constant 0 : index
    %c0_8 = arith.constant 0 : index
    %8 = vector.load %arg9[%c0_7, %c0_8] : memref<2x128xf32, #tpu.memory_space<vmem>>, vector<2x128xf32>
    %9 = arith.index_cast %c0_i32_4 : i32 to index
    %c0_9 = arith.constant 0 : index
    %c0_10 = arith.constant 0 : index
    %10 = vector.load %arg2[%9, %c0_9, %c0_10] : memref<8x2x512xf32, #tpu.memory_space<vmem>>, vector<1x2x512xf32>
    %11 = vector.shape_cast %10 : vector<1x2x512xf32> to vector<2x512xf32>
    %c0_11 = arith.constant 0 : index
    %c0_12 = arith.constant 0 : index
    %12 = vector.load %arg4[%c0_11, %c0_12] : memref<128x512xf32, #tpu.memory_space<vmem>>, vector<128x512xf32>
    %cst = arith.constant dense<0.000000e+00> : vector<2x512xf32>
    %13 = tpu.matmul %7, %12, %cst {dimension_numbers = #tpu.dot_dimension_numbers<[1], [0], [0], [1], [0, 0, 1, 1], [], []>} : vector<2x128xf32>, vector<128x512xf32>, vector<2x512xf32> -> vector<2x512xf32>
    %14 = arith.addf %11, %13 : vector<2x512xf32>
    %15 = vector.extract_strided_slice %14 {offsets = [0, 0], sizes = [2, 128], strides = [1, 1]} : vector<2x512xf32> to vector<2x128xf32>
    %16 = arith.negf %15 : vector<2x128xf32>
    %17 = math.exp %16 : vector<2x128xf32>
    %cst_13 = arith.constant 1.000000e+00 : f32
    %18 = vector.broadcast %cst_13 : f32 to vector<2x128xf32>
    %19 = arith.addf %18, %17 : vector<2x128xf32>
    %20 = arith.divf %18, %19 : vector<2x128xf32>
    %21 = vector.extract_strided_slice %14 {offsets = [0, 128], sizes = [2, 128], strides = [1, 1]} : vector<2x512xf32> to vector<2x128xf32>
    %22 = arith.negf %21 : vector<2x128xf32>
    %23 = math.exp %22 : vector<2x128xf32>
    %cst_14 = arith.constant 1.000000e+00 : f32
    %24 = vector.broadcast %cst_14 : f32 to vector<2x128xf32>
    %25 = arith.addf %24, %23 : vector<2x128xf32>
    %26 = arith.divf %24, %25 : vector<2x128xf32>
    %27 = vector.extract_strided_slice %14 {offsets = [0, 256], sizes = [2, 128], strides = [1, 1]} : vector<2x512xf32> to vector<2x128xf32>
    %28 = math.tanh %27 : vector<2x128xf32>
    %29 = vector.extract_strided_slice %14 {offsets = [0, 384], sizes = [2, 128], strides = [1, 1]} : vector<2x512xf32> to vector<2x128xf32>
    %30 = arith.negf %29 : vector<2x128xf32>
    %31 = math.exp %30 : vector<2x128xf32>
    %cst_15 = arith.constant 1.000000e+00 : f32
    %32 = vector.broadcast %cst_15 : f32 to vector<2x128xf32>
    %33 = arith.addf %32, %31 : vector<2x128xf32>
    %34 = arith.divf %32, %33 : vector<2x128xf32>
    %35 = arith.mulf %26, %8 : vector<2x128xf32>
    %36 = arith.mulf %20, %28 : vector<2x128xf32>
    %37 = arith.addf %35, %36 : vector<2x128xf32>
    %38 = math.tanh %37 : vector<2x128xf32>
    %39 = arith.mulf %34, %38 : vector<2x128xf32>
    %40 = arith.addi %4, %c0_i32_4 : i32
    %41 = vector.broadcast %40 : i32 to vector<2x1xi32>
    %42 = arith.cmpi slt, %41, %3 : vector<2x1xi32>
    %43 = vector.shape_cast %42 : vector<2x1xi1> to vector<2x1xi1>
    %44 = vector.broadcast %43 : vector<2x1xi1> to vector<2x128xi1>
    %45 = arith.select %44, %37, %8 : vector<2x128xi1>, vector<2x128xf32>
    %c0_16 = arith.constant 0 : index
    %c0_17 = arith.constant 0 : index
    %46 = vector.load %arg9[%c0_16, %c0_17] : memref<2x128xf32, #tpu.memory_space<vmem>>, vector<2x128xf32>
    tpu.vector_store %arg9[%c0_16, %c0_17], %45 {strides = array<i32>} : memref<2x128xf32, #tpu.memory_space<vmem>>, vector<2x128xf32>,
    %47 = arith.select %44, %39, %7 : vector<2x128xi1>, vector<2x128xf32>
    %c0_18 = arith.constant 0 : index
    %c0_19 = arith.constant 0 : index
    %48 = vector.load %arg8[%c0_18, %c0_19] : memref<2x128xf32, #tpu.memory_space<vmem>>, vector<2x128xf32>
    tpu.vector_store %arg8[%c0_18, %c0_19], %47 {strides = array<i32>} : memref<2x128xf32, #tpu.memory_space<vmem>>, vector<2x128xf32>,
    %cst_20 = arith.constant 0.000000e+00 : f32
    %49 = vector.broadcast %cst_20 : f32 to vector<2x128xf32>
    %50 = arith.select %44, %39, %49 : vector<2x128xi1>, vector<2x128xf32>
    %51 = arith.index_cast %c0_i32_4 : i32 to index
    %c0_21 = arith.constant 0 : index
    %c0_22 = arith.constant 0 : index
    %52 = vector.load %arg6[%51, %c0_21, %c0_22] : memref<8x2x128xf32, #tpu.memory_space<vmem>>, vector<1x2x128xf32>
    %53 = vector.shape_cast %52 : vector<1x2x128xf32> to vector<2x128xf32>
    %54 = vector.shape_cast %50 : vector<2x128xf32> to vector<1x2x128xf32>
    tpu.vector_store %arg6[%51, %c0_21, %c0_22], %54 {strides = array<i32>} : memref<8x2x128xf32, #tpu.memory_space<vmem>>, vector<1x2x128xf32>,
    %c7_i32 = arith.constant 7 : i32
    %55 = arith.subi %c7_i32, %c0_i32_4 : i32
    %c0_23 = arith.constant 0 : index
    %c0_24 = arith.constant 0 : index
    %56 = vector.load %arg10[%c0_23, %c0_24] : memref<2x128xf32, #tpu.memory_space<vmem>>, vector<2x128xf32>
    %c0_25 = arith.constant 0 : index
    %c0_26 = arith.constant 0 : index
    %57 = vector.load %arg11[%c0_25, %c0_26] : memref<2x128xf32, #tpu.memory_space<vmem>>, vector<2x128xf32>
    %58 = arith.index_cast %55 : i32 to index
    %c0_27 = arith.constant 0 : index
    %c0_28 = arith.constant 0 : index
    %59 = vector.load %arg3[%58, %c0_27, %c0_28] : memref<8x2x512xf32, #tpu.memory_space<vmem>>, vector<1x2x512xf32>
    %60 = vector.shape_cast %59 : vector<1x2x512xf32> to vector<2x512xf32>
    %c0_29 = arith.constant 0 : index
    %c0_30 = arith.constant 0 : index
    %61 = vector.load %arg5[%c0_29, %c0_30] : memref<128x512xf32, #tpu.memory_space<vmem>>, vector<128x512xf32>
    %cst_31 = arith.constant dense<0.000000e+00> : vector<2x512xf32>
    %62 = tpu.matmul %56, %61, %cst_31 {dimension_numbers = #tpu.dot_dimension_numbers<[1], [0], [0], [1], [0, 0, 1, 1], [], []>} : vector<2x128xf32>, vector<128x512xf32>, vector<2x512xf32> -> vector<2x512xf32>
    %63 = arith.addf %60, %62 : vector<2x512xf32>
    %64 = vector.extract_strided_slice %63 {offsets = [0, 0], sizes = [2, 128], strides = [1, 1]} : vector<2x512xf32> to vector<2x128xf32>
    %65 = arith.negf %64 : vector<2x128xf32>
    %66 = math.exp %65 : vector<2x128xf32>
    %cst_32 = arith.constant 1.000000e+00 : f32
    %67 = vector.broadcast %cst_32 : f32 to vector<2x128xf32>
    %68 = arith.addf %67, %66 : vector<2x128xf32>
    %69 = arith.divf %67, %68 : vector<2x128xf32>
    %70 = vector.extract_strided_slice %63 {offsets = [0, 128], sizes = [2, 128], strides = [1, 1]} : vector<2x512xf32> to vector<2x128xf32>
    %71 = arith.negf %70 : vector<2x128xf32>
    %72 = math.exp %71 : vector<2x128xf32>
    %cst_33 = arith.constant 1.000000e+00 : f32
    %73 = vector.broadcast %cst_33 : f32 to vector<2x128xf32>
    %74 = arith.addf %73, %72 : vector<2x128xf32>
    %75 = arith.divf %73, %74 : vector<2x128xf32>
    %76 = vector.extract_strided_slice %63 {offsets = [0, 256], sizes = [2, 128], strides = [1, 1]} : vector<2x512xf32> to vector<2x128xf32>
    %77 = math.tanh %76 : vector<2x128xf32>
    %78 = vector.extract_strided_slice %63 {offsets = [0, 384], sizes = [2, 128], strides = [1, 1]} : vector<2x512xf32> to vector<2x128xf32>
    %79 = arith.negf %78 : vector<2x128xf32>
    %80 = math.exp %79 : vector<2x128xf32>
    %cst_34 = arith.constant 1.000000e+00 : f32
    %81 = vector.broadcast %cst_34 : f32 to vector<2x128xf32>
    %82 = arith.addf %81, %80 : vector<2x128xf32>
    %83 = arith.divf %81, %82 : vector<2x128xf32>
    %84 = arith.mulf %75, %57 : vector<2x128xf32>
    %85 = arith.mulf %69, %77 : vector<2x128xf32>
    %86 = arith.addf %84, %85 : vector<2x128xf32>
    %87 = math.tanh %86 : vector<2x128xf32>
    %88 = arith.mulf %83, %87 : vector<2x128xf32>
    %89 = arith.addi %6, %55 : i32
    %90 = vector.broadcast %89 : i32 to vector<2x1xi32>
    %91 = arith.cmpi slt, %90, %3 : vector<2x1xi32>
    %92 = vector.shape_cast %91 : vector<2x1xi1> to vector<2x1xi1>
    %93 = vector.broadcast %92 : vector<2x1xi1> to vector<2x128xi1>
    %94 = arith.select %93, %86, %57 : vector<2x128xi1>, vector<2x128xf32>
    %c0_35 = arith.constant 0 : index
    %c0_36 = arith.constant 0 : index
    %95 = vector.load %arg11[%c0_35, %c0_36] : memref<2x128xf32, #tpu.memory_space<vmem>>, vector<2x128xf32>
    tpu.vector_store %arg11[%c0_35, %c0_36], %94 {strides = array<i32>} : memref<2x128xf32, #tpu.memory_space<vmem>>, vector<2x128xf32>,
    %96 = arith.select %93, %88, %56 : vector<2x128xi1>, vector<2x128xf32>
    %c0_37 = arith.constant 0 : index
    %c0_38 = arith.constant 0 : index
    %97 = vector.load %arg10[%c0_37, %c0_38] : memref<2x128xf32, #tpu.memory_space<vmem>>, vector<2x128xf32>
    tpu.vector_store %arg10[%c0_37, %c0_38], %96 {strides = array<i32>} : memref<2x128xf32, #tpu.memory_space<vmem>>, vector<2x128xf32>,
    %cst_39 = arith.constant 0.000000e+00 : f32
    %98 = vector.broadcast %cst_39 : f32 to vector<2x128xf32>
    %99 = arith.select %93, %88, %98 : vector<2x128xi1>, vector<2x128xf32>
    %100 = arith.index_cast %55 : i32 to index
    %c0_40 = arith.constant 0 : index
    %c0_41 = arith.constant 0 : index
    %101 = vector.load %arg7[%100, %c0_40, %c0_41] : memref<8x2x128xf32, #tpu.memory_space<vmem>>, vector<1x2x128xf32>
    %102 = vector.shape_cast %101 : vector<1x2x128xf32> to vector<2x128xf32>
    %103 = vector.shape_cast %99 : vector<2x128xf32> to vector<1x2x128xf32>
    tpu.vector_store %arg7[%100, %c0_40, %c0_41], %103 {strides = array<i32>} : memref<8x2x128xf32, #tpu.memory_space<vmem>>, vector<1x2x128xf32>,
    %c1_i32 = arith.constant 1 : i32
    %c0_42 = arith.constant 0 : index
    %c0_43 = arith.constant 0 : index
    %104 = vector.load %arg8[%c0_42, %c0_43] : memref<2x128xf32, #tpu.memory_space<vmem>>, vector<2x128xf32>
    %c0_44 = arith.constant 0 : index
    %c0_45 = arith.constant 0 : index
    %105 = vector.load %arg9[%c0_44, %c0_45] : memref<2x128xf32, #tpu.memory_space<vmem>>, vector<2x128xf32>
    %106 = arith.index_cast %c1_i32 : i32 to index
    %c0_46 = arith.constant 0 : index
    %c0_47 = arith.constant 0 : index
    %107 = vector.load %arg2[%106, %c0_46, %c0_47] : memref<8x2x512xf32, #tpu.memory_space<vmem>>, vector<1x2x512xf32>
    %108 = vector.shape_cast %107 : vector<1x2x512xf32> to vector<2x512xf32>
    %c0_48 = arith.constant 0 : index
    %c0_49 = arith.constant 0 : index
    %109 = vector.load %arg4[%c0_48, %c0_49] : memref<128x512xf32, #tpu.memory_space<vmem>>, vector<128x512xf32>
    %cst_50 = arith.constant dense<0.000000e+00> : vector<2x512xf32>
    %110 = tpu.matmul %104, %109, %cst_50 {dimension_numbers = #tpu.dot_dimension_numbers<[1], [0], [0], [1], [0, 0, 1, 1], [], []>} : vector<2x128xf32>, vector<128x512xf32>, vector<2x512xf32> -> vector<2x512xf32>
    %111 = arith.addf %108, %110 : vector<2x512xf32>
    %112 = vector.extract_strided_slice %111 {offsets = [0, 0], sizes = [2, 128], strides = [1, 1]} : vector<2x512xf32> to vector<2x128xf32>
    %113 = arith.negf %112 : vector<2x128xf32>
    %114 = math.exp %113 : vector<2x128xf32>
    %cst_51 = arith.constant 1.000000e+00 : f32
    %115 = vector.broadcast %cst_51 : f32 to vector<2x128xf32>
    %116 = arith.addf %115, %114 : vector<2x128xf32>
    %117 = arith.divf %115, %116 : vector<2x128xf32>
    %118 = vector.extract_strided_slice %111 {offsets = [0, 128], sizes = [2, 128], strides = [1, 1]} : vector<2x512xf32> to vector<2x128xf32>
    %119 = arith.negf %118 : vector<2x128xf32>
    %120 = math.exp %119 : vector<2x128xf32>
    %cst_52 = arith.constant 1.000000e+00 : f32
    %121 = vector.broadcast %cst_52 : f32 to vector<2x128xf32>
    %122 = arith.addf %121, %120 : vector<2x128xf32>
    %123 = arith.divf %121, %122 : vector<2x128xf32>
    %124 = vector.extract_strided_slice %111 {offsets = [0, 256], sizes = [2, 128], strides = [1, 1]} : vector<2x512xf32> to vector<2x128xf32>
    %125 = math.tanh %124 : vector<2x128xf32>
    %126 = vector.extract_strided_slice %111 {offsets = [0, 384], sizes = [2, 128], strides = [1, 1]} : vector<2x512xf32> to vector<2x128xf32>
    %127 = arith.negf %126 : vector<2x128xf32>
    %128 = math.exp %127 : vector<2x128xf32>
    %cst_53 = arith.constant 1.000000e+00 : f32
    %129 = vector.broadcast %cst_53 : f32 to vector<2x128xf32>
    %130 = arith.addf %129, %128 : vector<2x128xf32>
    %131 = arith.divf %129, %130 : vector<2x128xf32>
    %132 = arith.mulf %123, %105 : vector<2x128xf32>
    %133 = arith.mulf %117, %125 : vector<2x128xf32>
    %134 = arith.addf %132, %133 : vector<2x128xf32>
    %135 = math.tanh %134 : vector<2x128xf32>
    %136 = arith.mulf %131, %135 : vector<2x128xf32>
    %137 = arith.addi %4, %c1_i32 : i32
    %138 = vector.broadcast %137 : i32 to vector<2x1xi32>
    %139 = arith.cmpi slt, %138, %3 : vector<2x1xi32>
    %140 = vector.shape_cast %139 : vector<2x1xi1> to vector<2x1xi1>
    %141 = vector.broadcast %140 : vector<2x1xi1> to vector<2x128xi1>
    %142 = arith.select %141, %134, %105 : vector<2x128xi1>, vector<2x128xf32>
    %c0_54 = arith.constant 0 : index
    %c0_55 = arith.constant 0 : index
    %143 = vector.load %arg9[%c0_54, %c0_55] : memref<2x128xf32, #tpu.memory_space<vmem>>, vector<2x128xf32>
    tpu.vector_store %arg9[%c0_54, %c0_55], %142 {strides = array<i32>} : memref<2x128xf32, #tpu.memory_space<vmem>>, vector<2x128xf32>,
    %144 = arith.select %141, %136, %104 : vector<2x128xi1>, vector<2x128xf32>
    %c0_56 = arith.constant 0 : index
    %c0_57 = arith.constant 0 : index
    %145 = vector.load %arg8[%c0_56, %c0_57] : memref<2x128xf32, #tpu.memory_space<vmem>>, vector<2x128xf32>
    tpu.vector_store %arg8[%c0_56, %c0_57], %144 {strides = array<i32>} : memref<2x128xf32, #tpu.memory_space<vmem>>, vector<2x128xf32>,
    %cst_58 = arith.constant 0.000000e+00 : f32
    %146 = vector.broadcast %cst_58 : f32 to vector<2x128xf32>
    %147 = arith.select %141, %136, %146 : vector<2x128xi1>, vector<2x128xf32>
    %148 = arith.index_cast %c1_i32 : i32 to index
    %c0_59 = arith.constant 0 : index
    %c0_60 = arith.constant 0 : index
    %149 = vector.load %arg6[%148, %c0_59, %c0_60] : memref<8x2x128xf32, #tpu.memory_space<vmem>>, vector<1x2x128xf32>
    %150 = vector.shape_cast %149 : vector<1x2x128xf32> to vector<2x128xf32>
    %151 = vector.shape_cast %147 : vector<2x128xf32> to vector<1x2x128xf32>
    tpu.vector_store %arg6[%148, %c0_59, %c0_60], %151 {strides = array<i32>} : memref<8x2x128xf32, #tpu.memory_space<vmem>>, vector<1x2x128xf32>,
    %c7_i32_61 = arith.constant 7 : i32
    %152 = arith.subi %c7_i32_61, %c1_i32 : i32
    %c0_62 = arith.constant 0 : index
    %c0_63 = arith.constant 0 : index
    %153 = vector.load %arg10[%c0_62, %c0_63] : memref<2x128xf32, #tpu.memory_space<vmem>>, vector<2x128xf32>
    %c0_64 = arith.constant 0 : index
    %c0_65 = arith.constant 0 : index
    %154 = vector.load %arg11[%c0_64, %c0_65] : memref<2x128xf32, #tpu.memory_space<vmem>>, vector<2x128xf32>
    %155 = arith.index_cast %152 : i32 to index
    %c0_66 = arith.constant 0 : index
    %c0_67 = arith.constant 0 : index
    %156 = vector.load %arg3[%155, %c0_66, %c0_67] : memref<8x2x512xf32, #tpu.memory_space<vmem>>, vector<1x2x512xf32>
    %157 = vector.shape_cast %156 : vector<1x2x512xf32> to vector<2x512xf32>
    %c0_68 = arith.constant 0 : index
    %c0_69 = arith.constant 0 : index
    %158 = vector.load %arg5[%c0_68, %c0_69] : memref<128x512xf32, #tpu.memory_space<vmem>>, vector<128x512xf32>
    %cst_70 = arith.constant dense<0.000000e+00> : vector<2x512xf32>
    %159 = tpu.matmul %153, %158, %cst_70 {dimension_numbers = #tpu.dot_dimension_numbers<[1], [0], [0], [1], [0, 0, 1, 1], [], []>} : vector<2x128xf32>, vector<128x512xf32>, vector<2x512xf32> -> vector<2x512xf32>
    %160 = arith.addf %157, %159 : vector<2x512xf32>
    %161 = vector.extract_strided_slice %160 {offsets = [0, 0], sizes = [2, 128], strides = [1, 1]} : vector<2x512xf32> to vector<2x128xf32>
    %162 = arith.negf %161 : vector<2x128xf32>
    %163 = math.exp %162 : vector<2x128xf32>
    %cst_71 = arith.constant 1.000000e+00 : f32
    %164 = vector.broadcast %cst_71 : f32 to vector<2x128xf32>
    %165 = arith.addf %164, %163 : vector<2x128xf32>
    %166 = arith.divf %164, %165 : vector<2x128xf32>
    %167 = vector.extract_strided_slice %160 {offsets = [0, 128], sizes = [2, 128], strides = [1, 1]} : vector<2x512xf32> to vector<2x128xf32>
    %168 = arith.negf %167 : vector<2x128xf32>
    %169 = math.exp %168 : vector<2x128xf32>
    %cst_72 = arith.constant 1.000000e+00 : f32
    %170 = vector.broadcast %cst_72 : f32 to vector<2x128xf32>
    %171 = arith.addf %170, %169 : vector<2x128xf32>
    %172 = arith.divf %170, %171 : vector<2x128xf32>
    %173 = vector.extract_strided_slice %160 {offsets = [0, 256], sizes = [2, 128], strides = [1, 1]} : vector<2x512xf32> to vector<2x128xf32>
    %174 = math.tanh %173 : vector<2x128xf32>
    %175 = vector.extract_strided_slice %160 {offsets = [0, 384], sizes = [2, 128], strides = [1, 1]} : vector<2x512xf32> to vector<2x128xf32>
    %176 = arith.negf %175 : vector<2x128xf32>
    %177 = math.exp %176 : vector<2x128xf32>
    %cst_73 = arith.constant 1.000000e+00 : f32
    %178 = vector.broadcast %cst_73 : f32 to vector<2x128xf32>
    %179 = arith.addf %178, %177 : vector<2x128xf32>
    %180 = arith.divf %178, %179 : vector<2x128xf32>
    %181 = arith.mulf %172, %154 : vector<2x128xf32>
    %182 = arith.mulf %166, %174 : vector<2x128xf32>
    %183 = arith.addf %181, %182 : vector<2x128xf32>
    %184 = math.tanh %183 : vector<2x128xf32>
    %185 = arith.mulf %180, %184 : vector<2x128xf32>
    %186 = arith.addi %6, %152 : i32
    %187 = vector.broadcast %186 : i32 to vector<2x1xi32>
    %188 = arith.cmpi slt, %187, %3 : vector<2x1xi32>
    %189 = vector.shape_cast %188 : vector<2x1xi1> to vector<2x1xi1>
    %190 = vector.broadcast %189 : vector<2x1xi1> to vector<2x128xi1>
    %191 = arith.select %190, %183, %154 : vector<2x128xi1>, vector<2x128xf32>
    %c0_74 = arith.constant 0 : index
    %c0_75 = arith.constant 0 : index
    %192 = vector.load %arg11[%c0_74, %c0_75] : memref<2x128xf32, #tpu.memory_space<vmem>>, vector<2x128xf32>
    tpu.vector_store %arg11[%c0_74, %c0_75], %191 {strides = array<i32>} : memref<2x128xf32, #tpu.memory_space<vmem>>, vector<2x128xf32>,
    %193 = arith.select %190, %185, %153 : vector<2x128xi1>, vector<2x128xf32>
    %c0_76 = arith.constant 0 : index
    %c0_77 = arith.constant 0 : index
    %194 = vector.load %arg10[%c0_76, %c0_77] : memref<2x128xf32, #tpu.memory_space<vmem>>, vector<2x128xf32>
    tpu.vector_store %arg10[%c0_76, %c0_77], %193 {strides = array<i32>} : memref<2x128xf32, #tpu.memory_space<vmem>>, vector<2x128xf32>,
    %cst_78 = arith.constant 0.000000e+00 : f32
    %195 = vector.broadcast %cst_78 : f32 to vector<2x128xf32>
    %196 = arith.select %190, %185, %195 : vector<2x128xi1>, vector<2x128xf32>
    %197 = arith.index_cast %152 : i32 to index
    %c0_79 = arith.constant 0 : index
    %c0_80 = arith.constant 0 : index
    %198 = vector.load %arg7[%197, %c0_79, %c0_80] : memref<8x2x128xf32, #tpu.memory_space<vmem>>, vector<1x2x128xf32>
    %199 = vector.shape_cast %198 : vector<1x2x128xf32> to vector<2x128xf32>
    %200 = vector.shape_cast %196 : vector<2x128xf32> to vector<1x2x128xf32>
    tpu.vector_store %arg7[%197, %c0_79, %c0_80], %200 {strides = array<i32>} : memref<8x2x128xf32, #tpu.memory_space<vmem>>, vector<1x2x128xf32>,
    %c2_i32 = arith.constant 2 : i32
    %c0_81 = arith.constant 0 : index
    %c0_82 = arith.constant 0 : index
    %201 = vector.load %arg8[%c0_81, %c0_82] : memref<2x128xf32, #tpu.memory_space<vmem>>, vector<2x128xf32>
    %c0_83 = arith.constant 0 : index
    %c0_84 = arith.constant 0 : index
    %202 = vector.load %arg9[%c0_83, %c0_84] : memref<2x128xf32, #tpu.memory_space<vmem>>, vector<2x128xf32>
    %203 = arith.index_cast %c2_i32 : i32 to index
    %c0_85 = arith.constant 0 : index
    %c0_86 = arith.constant 0 : index
    %204 = vector.load %arg2[%203, %c0_85, %c0_86] : memref<8x2x512xf32, #tpu.memory_space<vmem>>, vector<1x2x512xf32>
    %205 = vector.shape_cast %204 : vector<1x2x512xf32> to vector<2x512xf32>
    %c0_87 = arith.constant 0 : index
    %c0_88 = arith.constant 0 : index
    %206 = vector.load %arg4[%c0_87, %c0_88] : memref<128x512xf32, #tpu.memory_space<vmem>>, vector<128x512xf32>
    %cst_89 = arith.constant dense<0.000000e+00> : vector<2x512xf32>
    %207 = tpu.matmul %201, %206, %cst_89 {dimension_numbers = #tpu.dot_dimension_numbers<[1], [0], [0], [1], [0, 0, 1, 1], [], []>} : vector<2x128xf32>, vector<128x512xf32>, vector<2x512xf32> -> vector<2x512xf32>
    %208 = arith.addf %205, %207 : vector<2x512xf32>
    %209 = vector.extract_strided_slice %208 {offsets = [0, 0], sizes = [2, 128], strides = [1, 1]} : vector<2x512xf32> to vector<2x128xf32>
    %210 = arith.negf %209 : vector<2x128xf32>
    %211 = math.exp %210 : vector<2x128xf32>
    %cst_90 = arith.constant 1.000000e+00 : f32
    %212 = vector.broadcast %cst_90 : f32 to vector<2x128xf32>
    %213 = arith.addf %212, %211 : vector<2x128xf32>
    %214 = arith.divf %212, %213 : vector<2x128xf32>
    %215 = vector.extract_strided_slice %208 {offsets = [0, 128], sizes = [2, 128], strides = [1, 1]} : vector<2x512xf32> to vector<2x128xf32>
    %216 = arith.negf %215 : vector<2x128xf32>
    %217 = math.exp %216 : vector<2x128xf32>
    %cst_91 = arith.constant 1.000000e+00 : f32
    %218 = vector.broadcast %cst_91 : f32 to vector<2x128xf32>
    %219 = arith.addf %218, %217 : vector<2x128xf32>
    %220 = arith.divf %218, %219 : vector<2x128xf32>
    %221 = vector.extract_strided_slice %208 {offsets = [0, 256], sizes = [2, 128], strides = [1, 1]} : vector<2x512xf32> to vector<2x128xf32>
    %222 = math.tanh %221 : vector<2x128xf32>
    %223 = vector.extract_strided_slice %208 {offsets = [0, 384], sizes = [2, 128], strides = [1, 1]} : vector<2x512xf32> to vector<2x128xf32>
    %224 = arith.negf %223 : vector<2x128xf32>
    %225 = math.exp %224 : vector<2x128xf32>
    %cst_92 = arith.constant 1.000000e+00 : f32
    %226 = vector.broadcast %cst_92 : f32 to vector<2x128xf32>
    %227 = arith.addf %226, %225 : vector<2x128xf32>
    %228 = arith.divf %226, %227 : vector<2x128xf32>
    %229 = arith.mulf %220, %202 : vector<2x128xf32>
    %230 = arith.mulf %214, %222 : vector<2x128xf32>
    %231 = arith.addf %229, %230 : vector<2x128xf32>
    %232 = math.tanh %231 : vector<2x128xf32>
    %233 = arith.mulf %228, %232 : vector<2x128xf32>
    %234 = arith.addi %4, %c2_i32 : i32
    %235 = vector.broadcast %234 : i32 to vector<2x1xi32>
    %236 = arith.cmpi slt, %235, %3 : vector<2x1xi32>
    %237 = vector.shape_cast %236 : vector<2x1xi1> to vector<2x1xi1>
    %238 = vector.broadcast %237 : vector<2x1xi1> to vector<2x128xi1>
    %239 = arith.select %238, %231, %202 : vector<2x128xi1>, vector<2x128xf32>
    %c0_93 = arith.constant 0 : index
    %c0_94 = arith.constant 0 : index
    %240 = vector.load %arg9[%c0_93, %c0_94] : memref<2x128xf32, #tpu.memory_space<vmem>>, vector<2x128xf32>
    tpu.vector_store %arg9[%c0_93, %c0_94], %239 {strides = array<i32>} : memref<2x128xf32, #tpu.memory_space<vmem>>, vector<2x128xf32>,
    %241 = arith.select %238, %233, %201 : vector<2x128xi1>, vector<2x128xf32>
    %c0_95 = arith.constant 0 : index
    %c0_96 = arith.constant 0 : index
    %242 = vector.load %arg8[%c0_95, %c0_96] : memref<2x128xf32, #tpu.memory_space<vmem>>, vector<2x128xf32>
    tpu.vector_store %arg8[%c0_95, %c0_96], %241 {strides = array<i32>} : memref<2x128xf32, #tpu.memory_space<vmem>>, vector<2x128xf32>,
    %cst_97 = arith.constant 0.000000e+00 : f32
    %243 = vector.broadcast %cst_97 : f32 to vector<2x128xf32>
    %244 = arith.select %238, %233, %243 : vector<2x128xi1>, vector<2x128xf32>
    %245 = arith.index_cast %c2_i32 : i32 to index
    %c0_98 = arith.constant 0 : index
    %c0_99 = arith.constant 0 : index
    %246 = vector.load %arg6[%245, %c0_98, %c0_99] : memref<8x2x128xf32, #tpu.memory_space<vmem>>, vector<1x2x128xf32>
    %247 = vector.shape_cast %246 : vector<1x2x128xf32> to vector<2x128xf32>
    %248 = vector.shape_cast %244 : vector<2x128xf32> to vector<1x2x128xf32>
    tpu.vector_store %arg6[%245, %c0_98, %c0_99], %248 {strides = array<i32>} : memref<8x2x128xf32, #tpu.memory_space<vmem>>, vector<1x2x128xf32>,
    %c7_i32_100 = arith.constant 7 : i32
    %249 = arith.subi %c7_i32_100, %c2_i32 : i32
    %c0_101 = arith.constant 0 : index
    %c0_102 = arith.constant 0 : index
    %250 = vector.load %arg10[%c0_101, %c0_102] : memref<2x128xf32, #tpu.memory_space<vmem>>, vector<2x128xf32>
    %c0_103 = arith.constant 0 : index
    %c0_104 = arith.constant 0 : index
    %251 = vector.load %arg11[%c0_103, %c0_104] : memref<2x128xf32, #tpu.memory_space<vmem>>, vector<2x128xf32>
    %252 = arith.index_cast %249 : i32 to index
    %c0_105 = arith.constant 0 : index
    %c0_106 = arith.constant 0 : index
    %253 = vector.load %arg3[%252, %c0_105, %c0_106] : memref<8x2x512xf32, #tpu.memory_space<vmem>>, vector<1x2x512xf32>
    %254 = vector.shape_cast %253 : vector<1x2x512xf32> to vector<2x512xf32>
    %c0_107 = arith.constant 0 : index
    %c0_108 = arith.constant 0 : index
    %255 = vector.load %arg5[%c0_107, %c0_108] : memref<128x512xf32, #tpu.memory_space<vmem>>, vector<128x512xf32>
    %cst_109 = arith.constant dense<0.000000e+00> : vector<2x512xf32>
    %256 = tpu.matmul %250, %255, %cst_109 {dimension_numbers = #tpu.dot_dimension_numbers<[1], [0], [0], [1], [0, 0, 1, 1], [], []>} : vector<2x128xf32>, vector<128x512xf32>, vector<2x512xf32> -> vector<2x512xf32>
    %257 = arith.addf %254, %256 : vector<2x512xf32>
    %258 = vector.extract_strided_slice %257 {offsets = [0, 0], sizes = [2, 128], strides = [1, 1]} : vector<2x512xf32> to vector<2x128xf32>
    %259 = arith.negf %258 : vector<2x128xf32>
    %260 = math.exp %259 : vector<2x128xf32>
    %cst_110 = arith.constant 1.000000e+00 : f32
    %261 = vector.broadcast %cst_110 : f32 to vector<2x128xf32>
    %262 = arith.addf %261, %260 : vector<2x128xf32>
    %263 = arith.divf %261, %262 : vector<2x128xf32>
    %264 = vector.extract_strided_slice %257 {offsets = [0, 128], sizes = [2, 128], strides = [1, 1]} : vector<2x512xf32> to vector<2x128xf32>
    %265 = arith.negf %264 : vector<2x128xf32>
    %266 = math.exp %265 : vector<2x128xf32>
    %cst_111 = arith.constant 1.000000e+00 : f32
    %267 = vector.broadcast %cst_111 : f32 to vector<2x128xf32>
    %268 = arith.addf %267, %266 : vector<2x128xf32>
    %269 = arith.divf %267, %268 : vector<2x128xf32>
    %270 = vector.extract_strided_slice %257 {offsets = [0, 256], sizes = [2, 128], strides = [1, 1]} : vector<2x512xf32> to vector<2x128xf32>
    %271 = math.tanh %270 : vector<2x128xf32>
    %272 = vector.extract_strided_slice %257 {offsets = [0, 384], sizes = [2, 128], strides = [1, 1]} : vector<2x512xf32> to vector<2x128xf32>
    %273 = arith.negf %272 : vector<2x128xf32>
    %274 = math.exp %273 : vector<2x128xf32>
    %cst_112 = arith.constant 1.000000e+00 : f32
    %275 = vector.broadcast %cst_112 : f32 to vector<2x128xf32>
    %276 = arith.addf %275, %274 : vector<2x128xf32>
    %277 = arith.divf %275, %276 : vector<2x128xf32>
    %278 = arith.mulf %269, %251 : vector<2x128xf32>
    %279 = arith.mulf %263, %271 : vector<2x128xf32>
    %280 = arith.addf %278, %279 : vector<2x128xf32>
    %281 = math.tanh %280 : vector<2x128xf32>
    %282 = arith.mulf %277, %281 : vector<2x128xf32>
    %283 = arith.addi %6, %249 : i32
    %284 = vector.broadcast %283 : i32 to vector<2x1xi32>
    %285 = arith.cmpi slt, %284, %3 : vector<2x1xi32>
    %286 = vector.shape_cast %285 : vector<2x1xi1> to vector<2x1xi1>
    %287 = vector.broadcast %286 : vector<2x1xi1> to vector<2x128xi1>
    %288 = arith.select %287, %280, %251 : vector<2x128xi1>, vector<2x128xf32>
    %c0_113 = arith.constant 0 : index
    %c0_114 = arith.constant 0 : index
    %289 = vector.load %arg11[%c0_113, %c0_114] : memref<2x128xf32, #tpu.memory_space<vmem>>, vector<2x128xf32>
    tpu.vector_store %arg11[%c0_113, %c0_114], %288 {strides = array<i32>} : memref<2x128xf32, #tpu.memory_space<vmem>>, vector<2x128xf32>,
    %290 = arith.select %287, %282, %250 : vector<2x128xi1>, vector<2x128xf32>
    %c0_115 = arith.constant 0 : index
    %c0_116 = arith.constant 0 : index
    %291 = vector.load %arg10[%c0_115, %c0_116] : memref<2x128xf32, #tpu.memory_space<vmem>>, vector<2x128xf32>
    tpu.vector_store %arg10[%c0_115, %c0_116], %290 {strides = array<i32>} : memref<2x128xf32, #tpu.memory_space<vmem>>, vector<2x128xf32>,
    %cst_117 = arith.constant 0.000000e+00 : f32
    %292 = vector.broadcast %cst_117 : f32 to vector<2x128xf32>
    %293 = arith.select %287, %282, %292 : vector<2x128xi1>, vector<2x128xf32>
    %294 = arith.index_cast %249 : i32 to index
    %c0_118 = arith.constant 0 : index
    %c0_119 = arith.constant 0 : index
    %295 = vector.load %arg7[%294, %c0_118, %c0_119] : memref<8x2x128xf32, #tpu.memory_space<vmem>>, vector<1x2x128xf32>
    %296 = vector.shape_cast %295 : vector<1x2x128xf32> to vector<2x128xf32>
    %297 = vector.shape_cast %293 : vector<2x128xf32> to vector<1x2x128xf32>
    tpu.vector_store %arg7[%294, %c0_118, %c0_119], %297 {strides = array<i32>} : memref<8x2x128xf32, #tpu.memory_space<vmem>>, vector<1x2x128xf32>,
    %c3_i32 = arith.constant 3 : i32
    %c0_120 = arith.constant 0 : index
    %c0_121 = arith.constant 0 : index
    %298 = vector.load %arg8[%c0_120, %c0_121] : memref<2x128xf32, #tpu.memory_space<vmem>>, vector<2x128xf32>
    %c0_122 = arith.constant 0 : index
    %c0_123 = arith.constant 0 : index
    %299 = vector.load %arg9[%c0_122, %c0_123] : memref<2x128xf32, #tpu.memory_space<vmem>>, vector<2x128xf32>
    %300 = arith.index_cast %c3_i32 : i32 to index
    %c0_124 = arith.constant 0 : index
    %c0_125 = arith.constant 0 : index
    %301 = vector.load %arg2[%300, %c0_124, %c0_125] : memref<8x2x512xf32, #tpu.memory_space<vmem>>, vector<1x2x512xf32>
    %302 = vector.shape_cast %301 : vector<1x2x512xf32> to vector<2x512xf32>
    %c0_126 = arith.constant 0 : index
    %c0_127 = arith.constant 0 : index
    %303 = vector.load %arg4[%c0_126, %c0_127] : memref<128x512xf32, #tpu.memory_space<vmem>>, vector<128x512xf32>
    %cst_128 = arith.constant dense<0.000000e+00> : vector<2x512xf32>
    %304 = tpu.matmul %298, %303, %cst_128 {dimension_numbers = #tpu.dot_dimension_numbers<[1], [0], [0], [1], [0, 0, 1, 1], [], []>} : vector<2x128xf32>, vector<128x512xf32>, vector<2x512xf32> -> vector<2x512xf32>
    %305 = arith.addf %302, %304 : vector<2x512xf32>
    %306 = vector.extract_strided_slice %305 {offsets = [0, 0], sizes = [2, 128], strides = [1, 1]} : vector<2x512xf32> to vector<2x128xf32>
    %307 = arith.negf %306 : vector<2x128xf32>
    %308 = math.exp %307 : vector<2x128xf32>
    %cst_129 = arith.constant 1.000000e+00 : f32
    %309 = vector.broadcast %cst_129 : f32 to vector<2x128xf32>
    %310 = arith.addf %309, %308 : vector<2x128xf32>
    %311 = arith.divf %309, %310 : vector<2x128xf32>
    %312 = vector.extract_strided_slice %305 {offsets = [0, 128], sizes = [2, 128], strides = [1, 1]} : vector<2x512xf32> to vector<2x128xf32>
    %313 = arith.negf %312 : vector<2x128xf32>
    %314 = math.exp %313 : vector<2x128xf32>
    %cst_130 = arith.constant 1.000000e+00 : f32
    %315 = vector.broadcast %cst_130 : f32 to vector<2x128xf32>
    %316 = arith.addf %315, %314 : vector<2x128xf32>
    %317 = arith.divf %315, %316 : vector<2x128xf32>
    %318 = vector.extract_strided_slice %305 {offsets = [0, 256], sizes = [2, 128], strides = [1, 1]} : vector<2x512xf32> to vector<2x128xf32>
    %319 = math.tanh %318 : vector<2x128xf32>
    %320 = vector.extract_strided_slice %305 {offsets = [0, 384], sizes = [2, 128], strides = [1, 1]} : vector<2x512xf32> to vector<2x128xf32>
    %321 = arith.negf %320 : vector<2x128xf32>
    %322 = math.exp %321 : vector<2x128xf32>
    %cst_131 = arith.constant 1.000000e+00 : f32
    %323 = vector.broadcast %cst_131 : f32 to vector<2x128xf32>
    %324 = arith.addf %323, %322 : vector<2x128xf32>
    %325 = arith.divf %323, %324 : vector<2x128xf32>
    %326 = arith.mulf %317, %299 : vector<2x128xf32>
    %327 = arith.mulf %311, %319 : vector<2x128xf32>
    %328 = arith.addf %326, %327 : vector<2x128xf32>
    %329 = math.tanh %328 : vector<2x128xf32>
    %330 = arith.mulf %325, %329 : vector<2x128xf32>
    %331 = arith.addi %4, %c3_i32 : i32
    %332 = vector.broadcast %331 : i32 to vector<2x1xi32>
    %333 = arith.cmpi slt, %332, %3 : vector<2x1xi32>
    %334 = vector.shape_cast %333 : vector<2x1xi1> to vector<2x1xi1>
    %335 = vector.broadcast %334 : vector<2x1xi1> to vector<2x128xi1>
    %336 = arith.select %335, %328, %299 : vector<2x128xi1>, vector<2x128xf32>
    %c0_132 = arith.constant 0 : index
    %c0_133 = arith.constant 0 : index
    %337 = vector.load %arg9[%c0_132, %c0_133] : memref<2x128xf32, #tpu.memory_space<vmem>>, vector<2x128xf32>
    tpu.vector_store %arg9[%c0_132, %c0_133], %336 {strides = array<i32>} : memref<2x128xf32, #tpu.memory_space<vmem>>, vector<2x128xf32>,
    %338 = arith.select %335, %330, %298 : vector<2x128xi1>, vector<2x128xf32>
    %c0_134 = arith.constant 0 : index
    %c0_135 = arith.constant 0 : index
    %339 = vector.load %arg8[%c0_134, %c0_135] : memref<2x128xf32, #tpu.memory_space<vmem>>, vector<2x128xf32>
    tpu.vector_store %arg8[%c0_134, %c0_135], %338 {strides = array<i32>} : memref<2x128xf32, #tpu.memory_space<vmem>>, vector<2x128xf32>,
    %cst_136 = arith.constant 0.000000e+00 : f32
    %340 = vector.broadcast %cst_136 : f32 to vector<2x128xf32>
    %341 = arith.select %335, %330, %340 : vector<2x128xi1>, vector<2x128xf32>
    %342 = arith.index_cast %c3_i32 : i32 to index
    %c0_137 = arith.constant 0 : index
    %c0_138 = arith.constant 0 : index
    %343 = vector.load %arg6[%342, %c0_137, %c0_138] : memref<8x2x128xf32, #tpu.memory_space<vmem>>, vector<1x2x128xf32>
    %344 = vector.shape_cast %343 : vector<1x2x128xf32> to vector<2x128xf32>
    %345 = vector.shape_cast %341 : vector<2x128xf32> to vector<1x2x128xf32>
    tpu.vector_store %arg6[%342, %c0_137, %c0_138], %345 {strides = array<i32>} : memref<8x2x128xf32, #tpu.memory_space<vmem>>, vector<1x2x128xf32>,
    %c7_i32_139 = arith.constant 7 : i32
    %346 = arith.subi %c7_i32_139, %c3_i32 : i32
    %c0_140 = arith.constant 0 : index
    %c0_141 = arith.constant 0 : index
    %347 = vector.load %arg10[%c0_140, %c0_141] : memref<2x128xf32, #tpu.memory_space<vmem>>, vector<2x128xf32>
    %c0_142 = arith.constant 0 : index
    %c0_143 = arith.constant 0 : index
    %348 = vector.load %arg11[%c0_142, %c0_143] : memref<2x128xf32, #tpu.memory_space<vmem>>, vector<2x128xf32>
    %349 = arith.index_cast %346 : i32 to index
    %c0_144 = arith.constant 0 : index
    %c0_145 = arith.constant 0 : index
    %350 = vector.load %arg3[%349, %c0_144, %c0_145] : memref<8x2x512xf32, #tpu.memory_space<vmem>>, vector<1x2x512xf32>
    %351 = vector.shape_cast %350 : vector<1x2x512xf32> to vector<2x512xf32>
    %c0_146 = arith.constant 0 : index
    %c0_147 = arith.constant 0 : index
    %352 = vector.load %arg5[%c0_146, %c0_147] : memref<128x512xf32, #tpu.memory_space<vmem>>, vector<128x512xf32>
    %cst_148 = arith.constant dense<0.000000e+00> : vector<2x512xf32>
    %353 = tpu.matmul %347, %352, %cst_148 {dimension_numbers = #tpu.dot_dimension_numbers<[1], [0], [0], [1], [0, 0, 1, 1], [], []>} : vector<2x128xf32>, vector<128x512xf32>, vector<2x512xf32> -> vector<2x512xf32>
    %354 = arith.addf %351, %353 : vector<2x512xf32>
    %355 = vector.extract_strided_slice %354 {offsets = [0, 0], sizes = [2, 128], strides = [1, 1]} : vector<2x512xf32> to vector<2x128xf32>
    %356 = arith.negf %355 : vector<2x128xf32>
    %357 = math.exp %356 : vector<2x128xf32>
    %cst_149 = arith.constant 1.000000e+00 : f32
    %358 = vector.broadcast %cst_149 : f32 to vector<2x128xf32>
    %359 = arith.addf %358, %357 : vector<2x128xf32>
    %360 = arith.divf %358, %359 : vector<2x128xf32>
    %361 = vector.extract_strided_slice %354 {offsets = [0, 128], sizes = [2, 128], strides = [1, 1]} : vector<2x512xf32> to vector<2x128xf32>
    %362 = arith.negf %361 : vector<2x128xf32>
    %363 = math.exp %362 : vector<2x128xf32>
    %cst_150 = arith.constant 1.000000e+00 : f32
    %364 = vector.broadcast %cst_150 : f32 to vector<2x128xf32>
    %365 = arith.addf %364, %363 : vector<2x128xf32>
    %366 = arith.divf %364, %365 : vector<2x128xf32>
    %367 = vector.extract_strided_slice %354 {offsets = [0, 256], sizes = [2, 128], strides = [1, 1]} : vector<2x512xf32> to vector<2x128xf32>
    %368 = math.tanh %367 : vector<2x128xf32>
    %369 = vector.extract_strided_slice %354 {offsets = [0, 384], sizes = [2, 128], strides = [1, 1]} : vector<2x512xf32> to vector<2x128xf32>
    %370 = arith.negf %369 : vector<2x128xf32>
    %371 = math.exp %370 : vector<2x128xf32>
    %cst_151 = arith.constant 1.000000e+00 : f32
    %372 = vector.broadcast %cst_151 : f32 to vector<2x128xf32>
    %373 = arith.addf %372, %371 : vector<2x128xf32>
    %374 = arith.divf %372, %373 : vector<2x128xf32>
    %375 = arith.mulf %366, %348 : vector<2x128xf32>
    %376 = arith.mulf %360, %368 : vector<2x128xf32>
    %377 = arith.addf %375, %376 : vector<2x128xf32>
    %378 = math.tanh %377 : vector<2x128xf32>
    %379 = arith.mulf %374, %378 : vector<2x128xf32>
    %380 = arith.addi %6, %346 : i32
    %381 = vector.broadcast %380 : i32 to vector<2x1xi32>
    %382 = arith.cmpi slt, %381, %3 : vector<2x1xi32>
    %383 = vector.shape_cast %382 : vector<2x1xi1> to vector<2x1xi1>
    %384 = vector.broadcast %383 : vector<2x1xi1> to vector<2x128xi1>
    %385 = arith.select %384, %377, %348 : vector<2x128xi1>, vector<2x128xf32>
    %c0_152 = arith.constant 0 : index
    %c0_153 = arith.constant 0 : index
    %386 = vector.load %arg11[%c0_152, %c0_153] : memref<2x128xf32, #tpu.memory_space<vmem>>, vector<2x128xf32>
    tpu.vector_store %arg11[%c0_152, %c0_153], %385 {strides = array<i32>} : memref<2x128xf32, #tpu.memory_space<vmem>>, vector<2x128xf32>,
    %387 = arith.select %384, %379, %347 : vector<2x128xi1>, vector<2x128xf32>
    %c0_154 = arith.constant 0 : index
    %c0_155 = arith.constant 0 : index
    %388 = vector.load %arg10[%c0_154, %c0_155] : memref<2x128xf32, #tpu.memory_space<vmem>>, vector<2x128xf32>
    tpu.vector_store %arg10[%c0_154, %c0_155], %387 {strides = array<i32>} : memref<2x128xf32, #tpu.memory_space<vmem>>, vector<2x128xf32>,
    %cst_156 = arith.constant 0.000000e+00 : f32
    %389 = vector.broadcast %cst_156 : f32 to vector<2x128xf32>
    %390 = arith.select %384, %379, %389 : vector<2x128xi1>, vector<2x128xf32>
    %391 = arith.index_cast %346 : i32 to index
    %c0_157 = arith.constant 0 : index
    %c0_158 = arith.constant 0 : index
    %392 = vector.load %arg7[%391, %c0_157, %c0_158] : memref<8x2x128xf32, #tpu.memory_space<vmem>>, vector<1x2x128xf32>
    %393 = vector.shape_cast %392 : vector<1x2x128xf32> to vector<2x128xf32>
    %394 = vector.shape_cast %390 : vector<2x128xf32> to vector<1x2x128xf32>
    tpu.vector_store %arg7[%391, %c0_157, %c0_158], %394 {strides = array<i32>} : memref<8x2x128xf32, #tpu.memory_space<vmem>>, vector<1x2x128xf32>,
    %c4_i32 = arith.constant 4 : i32
    %c0_159 = arith.constant 0 : index
    %c0_160 = arith.constant 0 : index
    %395 = vector.load %arg8[%c0_159, %c0_160] : memref<2x128xf32, #tpu.memory_space<vmem>>, vector<2x128xf32>
    %c0_161 = arith.constant 0 : index
    %c0_162 = arith.constant 0 : index
    %396 = vector.load %arg9[%c0_161, %c0_162] : memref<2x128xf32, #tpu.memory_space<vmem>>, vector<2x128xf32>
    %397 = arith.index_cast %c4_i32 : i32 to index
    %c0_163 = arith.constant 0 : index
    %c0_164 = arith.constant 0 : index
    %398 = vector.load %arg2[%397, %c0_163, %c0_164] : memref<8x2x512xf32, #tpu.memory_space<vmem>>, vector<1x2x512xf32>
    %399 = vector.shape_cast %398 : vector<1x2x512xf32> to vector<2x512xf32>
    %c0_165 = arith.constant 0 : index
    %c0_166 = arith.constant 0 : index
    %400 = vector.load %arg4[%c0_165, %c0_166] : memref<128x512xf32, #tpu.memory_space<vmem>>, vector<128x512xf32>
    %cst_167 = arith.constant dense<0.000000e+00> : vector<2x512xf32>
    %401 = tpu.matmul %395, %400, %cst_167 {dimension_numbers = #tpu.dot_dimension_numbers<[1], [0], [0], [1], [0, 0, 1, 1], [], []>} : vector<2x128xf32>, vector<128x512xf32>, vector<2x512xf32> -> vector<2x512xf32>
    %402 = arith.addf %399, %401 : vector<2x512xf32>
    %403 = vector.extract_strided_slice %402 {offsets = [0, 0], sizes = [2, 128], strides = [1, 1]} : vector<2x512xf32> to vector<2x128xf32>
    %404 = arith.negf %403 : vector<2x128xf32>
    %405 = math.exp %404 : vector<2x128xf32>
    %cst_168 = arith.constant 1.000000e+00 : f32
    %406 = vector.broadcast %cst_168 : f32 to vector<2x128xf32>
    %407 = arith.addf %406, %405 : vector<2x128xf32>
    %408 = arith.divf %406, %407 : vector<2x128xf32>
    %409 = vector.extract_strided_slice %402 {offsets = [0, 128], sizes = [2, 128], strides = [1, 1]} : vector<2x512xf32> to vector<2x128xf32>
    %410 = arith.negf %409 : vector<2x128xf32>
    %411 = math.exp %410 : vector<2x128xf32>
    %cst_169 = arith.constant 1.000000e+00 : f32
    %412 = vector.broadcast %cst_169 : f32 to vector<2x128xf32>
    %413 = arith.addf %412, %411 : vector<2x128xf32>
    %414 = arith.divf %412, %413 : vector<2x128xf32>
    %415 = vector.extract_strided_slice %402 {offsets = [0, 256], sizes = [2, 128], strides = [1, 1]} : vector<2x512xf32> to vector<2x128xf32>
    %416 = math.tanh %415 : vector<2x128xf32>
    %417 = vector.extract_strided_slice %402 {offsets = [0, 384], sizes = [2, 128], strides = [1, 1]} : vector<2x512xf32> to vector<2x128xf32>
    %418 = arith.negf %417 : vector<2x128xf32>
    %419 = math.exp %418 : vector<2x128xf32>
    %cst_170 = arith.constant 1.000000e+00 : f32
    %420 = vector.broadcast %cst_170 : f32 to vector<2x128xf32>
    %421 = arith.addf %420, %419 : vector<2x128xf32>
    %422 = arith.divf %420, %421 : vector<2x128xf32>
    %423 = arith.mulf %414, %396 : vector<2x128xf32>
    %424 = arith.mulf %408, %416 : vector<2x128xf32>
    %425 = arith.addf %423, %424 : vector<2x128xf32>
    %426 = math.tanh %425 : vector<2x128xf32>
    %427 = arith.mulf %422, %426 : vector<2x128xf32>
    %428 = arith.addi %4, %c4_i32 : i32
    %429 = vector.broadcast %428 : i32 to vector<2x1xi32>
    %430 = arith.cmpi slt, %429, %3 : vector<2x1xi32>
    %431 = vector.shape_cast %430 : vector<2x1xi1> to vector<2x1xi1>
    %432 = vector.broadcast %431 : vector<2x1xi1> to vector<2x128xi1>
    %433 = arith.select %432, %425, %396 : vector<2x128xi1>, vector<2x128xf32>
    %c0_171 = arith.constant 0 : index
    %c0_172 = arith.constant 0 : index
    %434 = vector.load %arg9[%c0_171, %c0_172] : memref<2x128xf32, #tpu.memory_space<vmem>>, vector<2x128xf32>
    tpu.vector_store %arg9[%c0_171, %c0_172], %433 {strides = array<i32>} : memref<2x128xf32, #tpu.memory_space<vmem>>, vector<2x128xf32>,
    %435 = arith.select %432, %427, %395 : vector<2x128xi1>, vector<2x128xf32>
    %c0_173 = arith.constant 0 : index
    %c0_174 = arith.constant 0 : index
    %436 = vector.load %arg8[%c0_173, %c0_174] : memref<2x128xf32, #tpu.memory_space<vmem>>, vector<2x128xf32>
    tpu.vector_store %arg8[%c0_173, %c0_174], %435 {strides = array<i32>} : memref<2x128xf32, #tpu.memory_space<vmem>>, vector<2x128xf32>,
    %cst_175 = arith.constant 0.000000e+00 : f32
    %437 = vector.broadcast %cst_175 : f32 to vector<2x128xf32>
    %438 = arith.select %432, %427, %437 : vector<2x128xi1>, vector<2x128xf32>
    %439 = arith.index_cast %c4_i32 : i32 to index
    %c0_176 = arith.constant 0 : index
    %c0_177 = arith.constant 0 : index
    %440 = vector.load %arg6[%439, %c0_176, %c0_177] : memref<8x2x128xf32, #tpu.memory_space<vmem>>, vector<1x2x128xf32>
    %441 = vector.shape_cast %440 : vector<1x2x128xf32> to vector<2x128xf32>
    %442 = vector.shape_cast %438 : vector<2x128xf32> to vector<1x2x128xf32>
    tpu.vector_store %arg6[%439, %c0_176, %c0_177], %442 {strides = array<i32>} : memref<8x2x128xf32, #tpu.memory_space<vmem>>, vector<1x2x128xf32>,
    %c7_i32_178 = arith.constant 7 : i32
    %443 = arith.subi %c7_i32_178, %c4_i32 : i32
    %c0_179 = arith.constant 0 : index
    %c0_180 = arith.constant 0 : index
    %444 = vector.load %arg10[%c0_179, %c0_180] : memref<2x128xf32, #tpu.memory_space<vmem>>, vector<2x128xf32>
    %c0_181 = arith.constant 0 : index
    %c0_182 = arith.constant 0 : index
    %445 = vector.load %arg11[%c0_181, %c0_182] : memref<2x128xf32, #tpu.memory_space<vmem>>, vector<2x128xf32>
    %446 = arith.index_cast %443 : i32 to index
    %c0_183 = arith.constant 0 : index
    %c0_184 = arith.constant 0 : index
    %447 = vector.load %arg3[%446, %c0_183, %c0_184] : memref<8x2x512xf32, #tpu.memory_space<vmem>>, vector<1x2x512xf32>
    %448 = vector.shape_cast %447 : vector<1x2x512xf32> to vector<2x512xf32>
    %c0_185 = arith.constant 0 : index
    %c0_186 = arith.constant 0 : index
    %449 = vector.load %arg5[%c0_185, %c0_186] : memref<128x512xf32, #tpu.memory_space<vmem>>, vector<128x512xf32>
    %cst_187 = arith.constant dense<0.000000e+00> : vector<2x512xf32>
    %450 = tpu.matmul %444, %449, %cst_187 {dimension_numbers = #tpu.dot_dimension_numbers<[1], [0], [0], [1], [0, 0, 1, 1], [], []>} : vector<2x128xf32>, vector<128x512xf32>, vector<2x512xf32> -> vector<2x512xf32>
    %451 = arith.addf %448, %450 : vector<2x512xf32>
    %452 = vector.extract_strided_slice %451 {offsets = [0, 0], sizes = [2, 128], strides = [1, 1]} : vector<2x512xf32> to vector<2x128xf32>
    %453 = arith.negf %452 : vector<2x128xf32>
    %454 = math.exp %453 : vector<2x128xf32>
    %cst_188 = arith.constant 1.000000e+00 : f32
    %455 = vector.broadcast %cst_188 : f32 to vector<2x128xf32>
    %456 = arith.addf %455, %454 : vector<2x128xf32>
    %457 = arith.divf %455, %456 : vector<2x128xf32>
    %458 = vector.extract_strided_slice %451 {offsets = [0, 128], sizes = [2, 128], strides = [1, 1]} : vector<2x512xf32> to vector<2x128xf32>
    %459 = arith.negf %458 : vector<2x128xf32>
    %460 = math.exp %459 : vector<2x128xf32>
    %cst_189 = arith.constant 1.000000e+00 : f32
    %461 = vector.broadcast %cst_189 : f32 to vector<2x128xf32>
    %462 = arith.addf %461, %460 : vector<2x128xf32>
    %463 = arith.divf %461, %462 : vector<2x128xf32>
    %464 = vector.extract_strided_slice %451 {offsets = [0, 256], sizes = [2, 128], strides = [1, 1]} : vector<2x512xf32> to vector<2x128xf32>
    %465 = math.tanh %464 : vector<2x128xf32>
    %466 = vector.extract_strided_slice %451 {offsets = [0, 384], sizes = [2, 128], strides = [1, 1]} : vector<2x512xf32> to vector<2x128xf32>
    %467 = arith.negf %466 : vector<2x128xf32>
    %468 = math.exp %467 : vector<2x128xf32>
    %cst_190 = arith.constant 1.000000e+00 : f32
    %469 = vector.broadcast %cst_190 : f32 to vector<2x128xf32>
    %470 = arith.addf %469, %468 : vector<2x128xf32>
    %471 = arith.divf %469, %470 : vector<2x128xf32>
    %472 = arith.mulf %463, %445 : vector<2x128xf32>
    %473 = arith.mulf %457, %465 : vector<2x128xf32>
    %474 = arith.addf %472, %473 : vector<2x128xf32>
    %475 = math.tanh %474 : vector<2x128xf32>
    %476 = arith.mulf %471, %475 : vector<2x128xf32>
    %477 = arith.addi %6, %443 : i32
    %478 = vector.broadcast %477 : i32 to vector<2x1xi32>
    %479 = arith.cmpi slt, %478, %3 : vector<2x1xi32>
    %480 = vector.shape_cast %479 : vector<2x1xi1> to vector<2x1xi1>
    %481 = vector.broadcast %480 : vector<2x1xi1> to vector<2x128xi1>
    %482 = arith.select %481, %474, %445 : vector<2x128xi1>, vector<2x128xf32>
    %c0_191 = arith.constant 0 : index
    %c0_192 = arith.constant 0 : index
    %483 = vector.load %arg11[%c0_191, %c0_192] : memref<2x128xf32, #tpu.memory_space<vmem>>, vector<2x128xf32>
    tpu.vector_store %arg11[%c0_191, %c0_192], %482 {strides = array<i32>} : memref<2x128xf32, #tpu.memory_space<vmem>>, vector<2x128xf32>,
    %484 = arith.select %481, %476, %444 : vector<2x128xi1>, vector<2x128xf32>
    %c0_193 = arith.constant 0 : index
    %c0_194 = arith.constant 0 : index
    %485 = vector.load %arg10[%c0_193, %c0_194] : memref<2x128xf32, #tpu.memory_space<vmem>>, vector<2x128xf32>
    tpu.vector_store %arg10[%c0_193, %c0_194], %484 {strides = array<i32>} : memref<2x128xf32, #tpu.memory_space<vmem>>, vector<2x128xf32>,
    %cst_195 = arith.constant 0.000000e+00 : f32
    %486 = vector.broadcast %cst_195 : f32 to vector<2x128xf32>
    %487 = arith.select %481, %476, %486 : vector<2x128xi1>, vector<2x128xf32>
    %488 = arith.index_cast %443 : i32 to index
    %c0_196 = arith.constant 0 : index
    %c0_197 = arith.constant 0 : index
    %489 = vector.load %arg7[%488, %c0_196, %c0_197] : memref<8x2x128xf32, #tpu.memory_space<vmem>>, vector<1x2x128xf32>
    %490 = vector.shape_cast %489 : vector<1x2x128xf32> to vector<2x128xf32>
    %491 = vector.shape_cast %487 : vector<2x128xf32> to vector<1x2x128xf32>
    tpu.vector_store %arg7[%488, %c0_196, %c0_197], %491 {strides = array<i32>} : memref<8x2x128xf32, #tpu.memory_space<vmem>>, vector<1x2x128xf32>,
    %c5_i32 = arith.constant 5 : i32
    %c0_198 = arith.constant 0 : index
    %c0_199 = arith.constant 0 : index
    %492 = vector.load %arg8[%c0_198, %c0_199] : memref<2x128xf32, #tpu.memory_space<vmem>>, vector<2x128xf32>
    %c0_200 = arith.constant 0 : index
    %c0_201 = arith.constant 0 : index
    %493 = vector.load %arg9[%c0_200, %c0_201] : memref<2x128xf32, #tpu.memory_space<vmem>>, vector<2x128xf32>
    %494 = arith.index_cast %c5_i32 : i32 to index
    %c0_202 = arith.constant 0 : index
    %c0_203 = arith.constant 0 : index
    %495 = vector.load %arg2[%494, %c0_202, %c0_203] : memref<8x2x512xf32, #tpu.memory_space<vmem>>, vector<1x2x512xf32>
    %496 = vector.shape_cast %495 : vector<1x2x512xf32> to vector<2x512xf32>
    %c0_204 = arith.constant 0 : index
    %c0_205 = arith.constant 0 : index
    %497 = vector.load %arg4[%c0_204, %c0_205] : memref<128x512xf32, #tpu.memory_space<vmem>>, vector<128x512xf32>
    %cst_206 = arith.constant dense<0.000000e+00> : vector<2x512xf32>
    %498 = tpu.matmul %492, %497, %cst_206 {dimension_numbers = #tpu.dot_dimension_numbers<[1], [0], [0], [1], [0, 0, 1, 1], [], []>} : vector<2x128xf32>, vector<128x512xf32>, vector<2x512xf32> -> vector<2x512xf32>
    %499 = arith.addf %496, %498 : vector<2x512xf32>
    %500 = vector.extract_strided_slice %499 {offsets = [0, 0], sizes = [2, 128], strides = [1, 1]} : vector<2x512xf32> to vector<2x128xf32>
    %501 = arith.negf %500 : vector<2x128xf32>
    %502 = math.exp %501 : vector<2x128xf32>
    %cst_207 = arith.constant 1.000000e+00 : f32
    %503 = vector.broadcast %cst_207 : f32 to vector<2x128xf32>
    %504 = arith.addf %503, %502 : vector<2x128xf32>
    %505 = arith.divf %503, %504 : vector<2x128xf32>
    %506 = vector.extract_strided_slice %499 {offsets = [0, 128], sizes = [2, 128], strides = [1, 1]} : vector<2x512xf32> to vector<2x128xf32>
    %507 = arith.negf %506 : vector<2x128xf32>
    %508 = math.exp %507 : vector<2x128xf32>
    %cst_208 = arith.constant 1.000000e+00 : f32
    %509 = vector.broadcast %cst_208 : f32 to vector<2x128xf32>
    %510 = arith.addf %509, %508 : vector<2x128xf32>
    %511 = arith.divf %509, %510 : vector<2x128xf32>
    %512 = vector.extract_strided_slice %499 {offsets = [0, 256], sizes = [2, 128], strides = [1, 1]} : vector<2x512xf32> to vector<2x128xf32>
    %513 = math.tanh %512 : vector<2x128xf32>
    %514 = vector.extract_strided_slice %499 {offsets = [0, 384], sizes = [2, 128], strides = [1, 1]} : vector<2x512xf32> to vector<2x128xf32>
    %515 = arith.negf %514 : vector<2x128xf32>
    %516 = math.exp %515 : vector<2x128xf32>
    %cst_209 = arith.constant 1.000000e+00 : f32
    %517 = vector.broadcast %cst_209 : f32 to vector<2x128xf32>
    %518 = arith.addf %517, %516 : vector<2x128xf32>
    %519 = arith.divf %517, %518 : vector<2x128xf32>
    %520 = arith.mulf %511, %493 : vector<2x128xf32>
    %521 = arith.mulf %505, %513 : vector<2x128xf32>
    %522 = arith.addf %520, %521 : vector<2x128xf32>
    %523 = math.tanh %522 : vector<2x128xf32>
    %524 = arith.mulf %519, %523 : vector<2x128xf32>
    %525 = arith.addi %4, %c5_i32 : i32
    %526 = vector.broadcast %525 : i32 to vector<2x1xi32>
    %527 = arith.cmpi slt, %526, %3 : vector<2x1xi32>
    %528 = vector.shape_cast %527 : vector<2x1xi1> to vector<2x1xi1>
    %529 = vector.broadcast %528 : vector<2x1xi1> to vector<2x128xi1>
    %530 = arith.select %529, %522, %493 : vector<2x128xi1>, vector<2x128xf32>
    %c0_210 = arith.constant 0 : index
    %c0_211 = arith.constant 0 : index
    %531 = vector.load %arg9[%c0_210, %c0_211] : memref<2x128xf32, #tpu.memory_space<vmem>>, vector<2x128xf32>
    tpu.vector_store %arg9[%c0_210, %c0_211], %530 {strides = array<i32>} : memref<2x128xf32, #tpu.memory_space<vmem>>, vector<2x128xf32>,
    %532 = arith.select %529, %524, %492 : vector<2x128xi1>, vector<2x128xf32>
    %c0_212 = arith.constant 0 : index
    %c0_213 = arith.constant 0 : index
    %533 = vector.load %arg8[%c0_212, %c0_213] : memref<2x128xf32, #tpu.memory_space<vmem>>, vector<2x128xf32>
    tpu.vector_store %arg8[%c0_212, %c0_213], %532 {strides = array<i32>} : memref<2x128xf32, #tpu.memory_space<vmem>>, vector<2x128xf32>,
    %cst_214 = arith.constant 0.000000e+00 : f32
    %534 = vector.broadcast %cst_214 : f32 to vector<2x128xf32>
    %535 = arith.select %529, %524, %534 : vector<2x128xi1>, vector<2x128xf32>
    %536 = arith.index_cast %c5_i32 : i32 to index
    %c0_215 = arith.constant 0 : index
    %c0_216 = arith.constant 0 : index
    %537 = vector.load %arg6[%536, %c0_215, %c0_216] : memref<8x2x128xf32, #tpu.memory_space<vmem>>, vector<1x2x128xf32>
    %538 = vector.shape_cast %537 : vector<1x2x128xf32> to vector<2x128xf32>
    %539 = vector.shape_cast %535 : vector<2x128xf32> to vector<1x2x128xf32>
    tpu.vector_store %arg6[%536, %c0_215, %c0_216], %539 {strides = array<i32>} : memref<8x2x128xf32, #tpu.memory_space<vmem>>, vector<1x2x128xf32>,
    %c7_i32_217 = arith.constant 7 : i32
    %540 = arith.subi %c7_i32_217, %c5_i32 : i32
    %c0_218 = arith.constant 0 : index
    %c0_219 = arith.constant 0 : index
    %541 = vector.load %arg10[%c0_218, %c0_219] : memref<2x128xf32, #tpu.memory_space<vmem>>, vector<2x128xf32>
    %c0_220 = arith.constant 0 : index
    %c0_221 = arith.constant 0 : index
    %542 = vector.load %arg11[%c0_220, %c0_221] : memref<2x128xf32, #tpu.memory_space<vmem>>, vector<2x128xf32>
    %543 = arith.index_cast %540 : i32 to index
    %c0_222 = arith.constant 0 : index
    %c0_223 = arith.constant 0 : index
    %544 = vector.load %arg3[%543, %c0_222, %c0_223] : memref<8x2x512xf32, #tpu.memory_space<vmem>>, vector<1x2x512xf32>
    %545 = vector.shape_cast %544 : vector<1x2x512xf32> to vector<2x512xf32>
    %c0_224 = arith.constant 0 : index
    %c0_225 = arith.constant 0 : index
    %546 = vector.load %arg5[%c0_224, %c0_225] : memref<128x512xf32, #tpu.memory_space<vmem>>, vector<128x512xf32>
    %cst_226 = arith.constant dense<0.000000e+00> : vector<2x512xf32>
    %547 = tpu.matmul %541, %546, %cst_226 {dimension_numbers = #tpu.dot_dimension_numbers<[1], [0], [0], [1], [0, 0, 1, 1], [], []>} : vector<2x128xf32>, vector<128x512xf32>, vector<2x512xf32> -> vector<2x512xf32>
    %548 = arith.addf %545, %547 : vector<2x512xf32>
    %549 = vector.extract_strided_slice %548 {offsets = [0, 0], sizes = [2, 128], strides = [1, 1]} : vector<2x512xf32> to vector<2x128xf32>
    %550 = arith.negf %549 : vector<2x128xf32>
    %551 = math.exp %550 : vector<2x128xf32>
    %cst_227 = arith.constant 1.000000e+00 : f32
    %552 = vector.broadcast %cst_227 : f32 to vector<2x128xf32>
    %553 = arith.addf %552, %551 : vector<2x128xf32>
    %554 = arith.divf %552, %553 : vector<2x128xf32>
    %555 = vector.extract_strided_slice %548 {offsets = [0, 128], sizes = [2, 128], strides = [1, 1]} : vector<2x512xf32> to vector<2x128xf32>
    %556 = arith.negf %555 : vector<2x128xf32>
    %557 = math.exp %556 : vector<2x128xf32>
    %cst_228 = arith.constant 1.000000e+00 : f32
    %558 = vector.broadcast %cst_228 : f32 to vector<2x128xf32>
    %559 = arith.addf %558, %557 : vector<2x128xf32>
    %560 = arith.divf %558, %559 : vector<2x128xf32>
    %561 = vector.extract_strided_slice %548 {offsets = [0, 256], sizes = [2, 128], strides = [1, 1]} : vector<2x512xf32> to vector<2x128xf32>
    %562 = math.tanh %561 : vector<2x128xf32>
    %563 = vector.extract_strided_slice %548 {offsets = [0, 384], sizes = [2, 128], strides = [1, 1]} : vector<2x512xf32> to vector<2x128xf32>
    %564 = arith.negf %563 : vector<2x128xf32>
    %565 = math.exp %564 : vector<2x128xf32>
    %cst_229 = arith.constant 1.000000e+00 : f32
    %566 = vector.broadcast %cst_229 : f32 to vector<2x128xf32>
    %567 = arith.addf %566, %565 : vector<2x128xf32>
    %568 = arith.divf %566, %567 : vector<2x128xf32>
    %569 = arith.mulf %560, %542 : vector<2x128xf32>
    %570 = arith.mulf %554, %562 : vector<2x128xf32>
    %571 = arith.addf %569, %570 : vector<2x128xf32>
    %572 = math.tanh %571 : vector<2x128xf32>
    %573 = arith.mulf %568, %572 : vector<2x128xf32>
    %574 = arith.addi %6, %540 : i32
    %575 = vector.broadcast %574 : i32 to vector<2x1xi32>
    %576 = arith.cmpi slt, %575, %3 : vector<2x1xi32>
    %577 = vector.shape_cast %576 : vector<2x1xi1> to vector<2x1xi1>
    %578 = vector.broadcast %577 : vector<2x1xi1> to vector<2x128xi1>
    %579 = arith.select %578, %571, %542 : vector<2x128xi1>, vector<2x128xf32>
    %c0_230 = arith.constant 0 : index
    %c0_231 = arith.constant 0 : index
    %580 = vector.load %arg11[%c0_230, %c0_231] : memref<2x128xf32, #tpu.memory_space<vmem>>, vector<2x128xf32>
    tpu.vector_store %arg11[%c0_230, %c0_231], %579 {strides = array<i32>} : memref<2x128xf32, #tpu.memory_space<vmem>>, vector<2x128xf32>,
    %581 = arith.select %578, %573, %541 : vector<2x128xi1>, vector<2x128xf32>
    %c0_232 = arith.constant 0 : index
    %c0_233 = arith.constant 0 : index
    %582 = vector.load %arg10[%c0_232, %c0_233] : memref<2x128xf32, #tpu.memory_space<vmem>>, vector<2x128xf32>
    tpu.vector_store %arg10[%c0_232, %c0_233], %581 {strides = array<i32>} : memref<2x128xf32, #tpu.memory_space<vmem>>, vector<2x128xf32>,
    %cst_234 = arith.constant 0.000000e+00 : f32
    %583 = vector.broadcast %cst_234 : f32 to vector<2x128xf32>
    %584 = arith.select %578, %573, %583 : vector<2x128xi1>, vector<2x128xf32>
    %585 = arith.index_cast %540 : i32 to index
    %c0_235 = arith.constant 0 : index
    %c0_236 = arith.constant 0 : index
    %586 = vector.load %arg7[%585, %c0_235, %c0_236] : memref<8x2x128xf32, #tpu.memory_space<vmem>>, vector<1x2x128xf32>
    %587 = vector.shape_cast %586 : vector<1x2x128xf32> to vector<2x128xf32>
    %588 = vector.shape_cast %584 : vector<2x128xf32> to vector<1x2x128xf32>
    tpu.vector_store %arg7[%585, %c0_235, %c0_236], %588 {strides = array<i32>} : memref<8x2x128xf32, #tpu.memory_space<vmem>>, vector<1x2x128xf32>,
    %c6_i32 = arith.constant 6 : i32
    %c0_237 = arith.constant 0 : index
    %c0_238 = arith.constant 0 : index
    %589 = vector.load %arg8[%c0_237, %c0_238] : memref<2x128xf32, #tpu.memory_space<vmem>>, vector<2x128xf32>
    %c0_239 = arith.constant 0 : index
    %c0_240 = arith.constant 0 : index
    %590 = vector.load %arg9[%c0_239, %c0_240] : memref<2x128xf32, #tpu.memory_space<vmem>>, vector<2x128xf32>
    %591 = arith.index_cast %c6_i32 : i32 to index
    %c0_241 = arith.constant 0 : index
    %c0_242 = arith.constant 0 : index
    %592 = vector.load %arg2[%591, %c0_241, %c0_242] : memref<8x2x512xf32, #tpu.memory_space<vmem>>, vector<1x2x512xf32>
    %593 = vector.shape_cast %592 : vector<1x2x512xf32> to vector<2x512xf32>
    %c0_243 = arith.constant 0 : index
    %c0_244 = arith.constant 0 : index
    %594 = vector.load %arg4[%c0_243, %c0_244] : memref<128x512xf32, #tpu.memory_space<vmem>>, vector<128x512xf32>
    %cst_245 = arith.constant dense<0.000000e+00> : vector<2x512xf32>
    %595 = tpu.matmul %589, %594, %cst_245 {dimension_numbers = #tpu.dot_dimension_numbers<[1], [0], [0], [1], [0, 0, 1, 1], [], []>} : vector<2x128xf32>, vector<128x512xf32>, vector<2x512xf32> -> vector<2x512xf32>
    %596 = arith.addf %593, %595 : vector<2x512xf32>
    %597 = vector.extract_strided_slice %596 {offsets = [0, 0], sizes = [2, 128], strides = [1, 1]} : vector<2x512xf32> to vector<2x128xf32>
    %598 = arith.negf %597 : vector<2x128xf32>
    %599 = math.exp %598 : vector<2x128xf32>
    %cst_246 = arith.constant 1.000000e+00 : f32
    %600 = vector.broadcast %cst_246 : f32 to vector<2x128xf32>
    %601 = arith.addf %600, %599 : vector<2x128xf32>
    %602 = arith.divf %600, %601 : vector<2x128xf32>
    %603 = vector.extract_strided_slice %596 {offsets = [0, 128], sizes = [2, 128], strides = [1, 1]} : vector<2x512xf32> to vector<2x128xf32>
    %604 = arith.negf %603 : vector<2x128xf32>
    %605 = math.exp %604 : vector<2x128xf32>
    %cst_247 = arith.constant 1.000000e+00 : f32
    %606 = vector.broadcast %cst_247 : f32 to vector<2x128xf32>
    %607 = arith.addf %606, %605 : vector<2x128xf32>
    %608 = arith.divf %606, %607 : vector<2x128xf32>
    %609 = vector.extract_strided_slice %596 {offsets = [0, 256], sizes = [2, 128], strides = [1, 1]} : vector<2x512xf32> to vector<2x128xf32>
    %610 = math.tanh %609 : vector<2x128xf32>
    %611 = vector.extract_strided_slice %596 {offsets = [0, 384], sizes = [2, 128], strides = [1, 1]} : vector<2x512xf32> to vector<2x128xf32>
    %612 = arith.negf %611 : vector<2x128xf32>
    %613 = math.exp %612 : vector<2x128xf32>
    %cst_248 = arith.constant 1.000000e+00 : f32
    %614 = vector.broadcast %cst_248 : f32 to vector<2x128xf32>
    %615 = arith.addf %614, %613 : vector<2x128xf32>
    %616 = arith.divf %614, %615 : vector<2x128xf32>
    %617 = arith.mulf %608, %590 : vector<2x128xf32>
    %618 = arith.mulf %602, %610 : vector<2x128xf32>
    %619 = arith.addf %617, %618 : vector<2x128xf32>
    %620 = math.tanh %619 : vector<2x128xf32>
    %621 = arith.mulf %616, %620 : vector<2x128xf32>
    %622 = arith.addi %4, %c6_i32 : i32
    %623 = vector.broadcast %622 : i32 to vector<2x1xi32>
    %624 = arith.cmpi slt, %623, %3 : vector<2x1xi32>
    %625 = vector.shape_cast %624 : vector<2x1xi1> to vector<2x1xi1>
    %626 = vector.broadcast %625 : vector<2x1xi1> to vector<2x128xi1>
    %627 = arith.select %626, %619, %590 : vector<2x128xi1>, vector<2x128xf32>
    %c0_249 = arith.constant 0 : index
    %c0_250 = arith.constant 0 : index
    %628 = vector.load %arg9[%c0_249, %c0_250] : memref<2x128xf32, #tpu.memory_space<vmem>>, vector<2x128xf32>
    tpu.vector_store %arg9[%c0_249, %c0_250], %627 {strides = array<i32>} : memref<2x128xf32, #tpu.memory_space<vmem>>, vector<2x128xf32>,
    %629 = arith.select %626, %621, %589 : vector<2x128xi1>, vector<2x128xf32>
    %c0_251 = arith.constant 0 : index
    %c0_252 = arith.constant 0 : index
    %630 = vector.load %arg8[%c0_251, %c0_252] : memref<2x128xf32, #tpu.memory_space<vmem>>, vector<2x128xf32>
    tpu.vector_store %arg8[%c0_251, %c0_252], %629 {strides = array<i32>} : memref<2x128xf32, #tpu.memory_space<vmem>>, vector<2x128xf32>,
    %cst_253 = arith.constant 0.000000e+00 : f32
    %631 = vector.broadcast %cst_253 : f32 to vector<2x128xf32>
    %632 = arith.select %626, %621, %631 : vector<2x128xi1>, vector<2x128xf32>
    %633 = arith.index_cast %c6_i32 : i32 to index
    %c0_254 = arith.constant 0 : index
    %c0_255 = arith.constant 0 : index
    %634 = vector.load %arg6[%633, %c0_254, %c0_255] : memref<8x2x128xf32, #tpu.memory_space<vmem>>, vector<1x2x128xf32>
    %635 = vector.shape_cast %634 : vector<1x2x128xf32> to vector<2x128xf32>
    %636 = vector.shape_cast %632 : vector<2x128xf32> to vector<1x2x128xf32>
    tpu.vector_store %arg6[%633, %c0_254, %c0_255], %636 {strides = array<i32>} : memref<8x2x128xf32, #tpu.memory_space<vmem>>, vector<1x2x128xf32>,
    %c7_i32_256 = arith.constant 7 : i32
    %637 = arith.subi %c7_i32_256, %c6_i32 : i32
    %c0_257 = arith.constant 0 : index
    %c0_258 = arith.constant 0 : index
    %638 = vector.load %arg10[%c0_257, %c0_258] : memref<2x128xf32, #tpu.memory_space<vmem>>, vector<2x128xf32>
    %c0_259 = arith.constant 0 : index
    %c0_260 = arith.constant 0 : index
    %639 = vector.load %arg11[%c0_259, %c0_260] : memref<2x128xf32, #tpu.memory_space<vmem>>, vector<2x128xf32>
    %640 = arith.index_cast %637 : i32 to index
    %c0_261 = arith.constant 0 : index
    %c0_262 = arith.constant 0 : index
    %641 = vector.load %arg3[%640, %c0_261, %c0_262] : memref<8x2x512xf32, #tpu.memory_space<vmem>>, vector<1x2x512xf32>
    %642 = vector.shape_cast %641 : vector<1x2x512xf32> to vector<2x512xf32>
    %c0_263 = arith.constant 0 : index
    %c0_264 = arith.constant 0 : index
    %643 = vector.load %arg5[%c0_263, %c0_264] : memref<128x512xf32, #tpu.memory_space<vmem>>, vector<128x512xf32>
    %cst_265 = arith.constant dense<0.000000e+00> : vector<2x512xf32>
    %644 = tpu.matmul %638, %643, %cst_265 {dimension_numbers = #tpu.dot_dimension_numbers<[1], [0], [0], [1], [0, 0, 1, 1], [], []>} : vector<2x128xf32>, vector<128x512xf32>, vector<2x512xf32> -> vector<2x512xf32>
    %645 = arith.addf %642, %644 : vector<2x512xf32>
    %646 = vector.extract_strided_slice %645 {offsets = [0, 0], sizes = [2, 128], strides = [1, 1]} : vector<2x512xf32> to vector<2x128xf32>
    %647 = arith.negf %646 : vector<2x128xf32>
    %648 = math.exp %647 : vector<2x128xf32>
    %cst_266 = arith.constant 1.000000e+00 : f32
    %649 = vector.broadcast %cst_266 : f32 to vector<2x128xf32>
    %650 = arith.addf %649, %648 : vector<2x128xf32>
    %651 = arith.divf %649, %650 : vector<2x128xf32>
    %652 = vector.extract_strided_slice %645 {offsets = [0, 128], sizes = [2, 128], strides = [1, 1]} : vector<2x512xf32> to vector<2x128xf32>
    %653 = arith.negf %652 : vector<2x128xf32>
    %654 = math.exp %653 : vector<2x128xf32>
    %cst_267 = arith.constant 1.000000e+00 : f32
    %655 = vector.broadcast %cst_267 : f32 to vector<2x128xf32>
    %656 = arith.addf %655, %654 : vector<2x128xf32>
    %657 = arith.divf %655, %656 : vector<2x128xf32>
    %658 = vector.extract_strided_slice %645 {offsets = [0, 256], sizes = [2, 128], strides = [1, 1]} : vector<2x512xf32> to vector<2x128xf32>
    %659 = math.tanh %658 : vector<2x128xf32>
    %660 = vector.extract_strided_slice %645 {offsets = [0, 384], sizes = [2, 128], strides = [1, 1]} : vector<2x512xf32> to vector<2x128xf32>
    %661 = arith.negf %660 : vector<2x128xf32>
    %662 = math.exp %661 : vector<2x128xf32>
    %cst_268 = arith.constant 1.000000e+00 : f32
    %663 = vector.broadcast %cst_268 : f32 to vector<2x128xf32>
    %664 = arith.addf %663, %662 : vector<2x128xf32>
    %665 = arith.divf %663, %664 : vector<2x128xf32>
    %666 = arith.mulf %657, %639 : vector<2x128xf32>
    %667 = arith.mulf %651, %659 : vector<2x128xf32>
    %668 = arith.addf %666, %667 : vector<2x128xf32>
    %669 = math.tanh %668 : vector<2x128xf32>
    %670 = arith.mulf %665, %669 : vector<2x128xf32>
    %671 = arith.addi %6, %637 : i32
    %672 = vector.broadcast %671 : i32 to vector<2x1xi32>
    %673 = arith.cmpi slt, %672, %3 : vector<2x1xi32>
    %674 = vector.shape_cast %673 : vector<2x1xi1> to vector<2x1xi1>
    %675 = vector.broadcast %674 : vector<2x1xi1> to vector<2x128xi1>
    %676 = arith.select %675, %668, %639 : vector<2x128xi1>, vector<2x128xf32>
    %c0_269 = arith.constant 0 : index
    %c0_270 = arith.constant 0 : index
    %677 = vector.load %arg11[%c0_269, %c0_270] : memref<2x128xf32, #tpu.memory_space<vmem>>, vector<2x128xf32>
    tpu.vector_store %arg11[%c0_269, %c0_270], %676 {strides = array<i32>} : memref<2x128xf32, #tpu.memory_space<vmem>>, vector<2x128xf32>,
    %678 = arith.select %675, %670, %638 : vector<2x128xi1>, vector<2x128xf32>
    %c0_271 = arith.constant 0 : index
    %c0_272 = arith.constant 0 : index
    %679 = vector.load %arg10[%c0_271, %c0_272] : memref<2x128xf32, #tpu.memory_space<vmem>>, vector<2x128xf32>
    tpu.vector_store %arg10[%c0_271, %c0_272], %678 {strides = array<i32>} : memref<2x128xf32, #tpu.memory_space<vmem>>, vector<2x128xf32>,
    %cst_273 = arith.constant 0.000000e+00 : f32
    %680 = vector.broadcast %cst_273 : f32 to vector<2x128xf32>
    %681 = arith.select %675, %670, %680 : vector<2x128xi1>, vector<2x128xf32>
    %682 = arith.index_cast %637 : i32 to index
    %c0_274 = arith.constant 0 : index
    %c0_275 = arith.constant 0 : index
    %683 = vector.load %arg7[%682, %c0_274, %c0_275] : memref<8x2x128xf32, #tpu.memory_space<vmem>>, vector<1x2x128xf32>
    %684 = vector.shape_cast %683 : vector<1x2x128xf32> to vector<2x128xf32>
    %685 = vector.shape_cast %681 : vector<2x128xf32> to vector<1x2x128xf32>
    tpu.vector_store %arg7[%682, %c0_274, %c0_275], %685 {strides = array<i32>} : memref<8x2x128xf32, #tpu.memory_space<vmem>>, vector<1x2x128xf32>,
    %c7_i32_276 = arith.constant 7 : i32
    %c0_277 = arith.constant 0 : index
    %c0_278 = arith.constant 0 : index
    %686 = vector.load %arg8[%c0_277, %c0_278] : memref<2x128xf32, #tpu.memory_space<vmem>>, vector<2x128xf32>
    %c0_279 = arith.constant 0 : index
    %c0_280 = arith.constant 0 : index
    %687 = vector.load %arg9[%c0_279, %c0_280] : memref<2x128xf32, #tpu.memory_space<vmem>>, vector<2x128xf32>
    %688 = arith.index_cast %c7_i32_276 : i32 to index
    %c0_281 = arith.constant 0 : index
    %c0_282 = arith.constant 0 : index
    %689 = vector.load %arg2[%688, %c0_281, %c0_282] : memref<8x2x512xf32, #tpu.memory_space<vmem>>, vector<1x2x512xf32>
    %690 = vector.shape_cast %689 : vector<1x2x512xf32> to vector<2x512xf32>
    %c0_283 = arith.constant 0 : index
    %c0_284 = arith.constant 0 : index
    %691 = vector.load %arg4[%c0_283, %c0_284] : memref<128x512xf32, #tpu.memory_space<vmem>>, vector<128x512xf32>
    %cst_285 = arith.constant dense<0.000000e+00> : vector<2x512xf32>
    %692 = tpu.matmul %686, %691, %cst_285 {dimension_numbers = #tpu.dot_dimension_numbers<[1], [0], [0], [1], [0, 0, 1, 1], [], []>} : vector<2x128xf32>, vector<128x512xf32>, vector<2x512xf32> -> vector<2x512xf32>
    %693 = arith.addf %690, %692 : vector<2x512xf32>
    %694 = vector.extract_strided_slice %693 {offsets = [0, 0], sizes = [2, 128], strides = [1, 1]} : vector<2x512xf32> to vector<2x128xf32>
    %695 = arith.negf %694 : vector<2x128xf32>
    %696 = math.exp %695 : vector<2x128xf32>
    %cst_286 = arith.constant 1.000000e+00 : f32
    %697 = vector.broadcast %cst_286 : f32 to vector<2x128xf32>
    %698 = arith.addf %697, %696 : vector<2x128xf32>
    %699 = arith.divf %697, %698 : vector<2x128xf32>
    %700 = vector.extract_strided_slice %693 {offsets = [0, 128], sizes = [2, 128], strides = [1, 1]} : vector<2x512xf32> to vector<2x128xf32>
    %701 = arith.negf %700 : vector<2x128xf32>
    %702 = math.exp %701 : vector<2x128xf32>
    %cst_287 = arith.constant 1.000000e+00 : f32
    %703 = vector.broadcast %cst_287 : f32 to vector<2x128xf32>
    %704 = arith.addf %703, %702 : vector<2x128xf32>
    %705 = arith.divf %703, %704 : vector<2x128xf32>
    %706 = vector.extract_strided_slice %693 {offsets = [0, 256], sizes = [2, 128], strides = [1, 1]} : vector<2x512xf32> to vector<2x128xf32>
    %707 = math.tanh %706 : vector<2x128xf32>
    %708 = vector.extract_strided_slice %693 {offsets = [0, 384], sizes = [2, 128], strides = [1, 1]} : vector<2x512xf32> to vector<2x128xf32>
    %709 = arith.negf %708 : vector<2x128xf32>
    %710 = math.exp %709 : vector<2x128xf32>
    %cst_288 = arith.constant 1.000000e+00 : f32
    %711 = vector.broadcast %cst_288 : f32 to vector<2x128xf32>
    %712 = arith.addf %711, %710 : vector<2x128xf32>
    %713 = arith.divf %711, %712 : vector<2x128xf32>
    %714 = arith.mulf %705, %687 : vector<2x128xf32>
    %715 = arith.mulf %699, %707 : vector<2x128xf32>
    %716 = arith.addf %714, %715 : vector<2x128xf32>
    %717 = math.tanh %716 : vector<2x128xf32>
    %718 = arith.mulf %713, %717 : vector<2x128xf32>
    %719 = arith.addi %4, %c7_i32_276 : i32
    %720 = vector.broadcast %719 : i32 to vector<2x1xi32>
    %721 = arith.cmpi slt, %720, %3 : vector<2x1xi32>
    %722 = vector.shape_cast %721 : vector<2x1xi1> to vector<2x1xi1>
    %723 = vector.broadcast %722 : vector<2x1xi1> to vector<2x128xi1>
    %724 = arith.select %723, %716, %687 : vector<2x128xi1>, vector<2x128xf32>
    %c0_289 = arith.constant 0 : index
    %c0_290 = arith.constant 0 : index
    %725 = vector.load %arg9[%c0_289, %c0_290] : memref<2x128xf32, #tpu.memory_space<vmem>>, vector<2x128xf32>
    tpu.vector_store %arg9[%c0_289, %c0_290], %724 {strides = array<i32>} : memref<2x128xf32, #tpu.memory_space<vmem>>, vector<2x128xf32>,
    %726 = arith.select %723, %718, %686 : vector<2x128xi1>, vector<2x128xf32>
    %c0_291 = arith.constant 0 : index
    %c0_292 = arith.constant 0 : index
    %727 = vector.load %arg8[%c0_291, %c0_292] : memref<2x128xf32, #tpu.memory_space<vmem>>, vector<2x128xf32>
    tpu.vector_store %arg8[%c0_291, %c0_292], %726 {strides = array<i32>} : memref<2x128xf32, #tpu.memory_space<vmem>>, vector<2x128xf32>,
    %cst_293 = arith.constant 0.000000e+00 : f32
    %728 = vector.broadcast %cst_293 : f32 to vector<2x128xf32>
    %729 = arith.select %723, %718, %728 : vector<2x128xi1>, vector<2x128xf32>
    %730 = arith.index_cast %c7_i32_276 : i32 to index
    %c0_294 = arith.constant 0 : index
    %c0_295 = arith.constant 0 : index
    %731 = vector.load %arg6[%730, %c0_294, %c0_295] : memref<8x2x128xf32, #tpu.memory_space<vmem>>, vector<1x2x128xf32>
    %732 = vector.shape_cast %731 : vector<1x2x128xf32> to vector<2x128xf32>
    %733 = vector.shape_cast %729 : vector<2x128xf32> to vector<1x2x128xf32>
    tpu.vector_store %arg6[%730, %c0_294, %c0_295], %733 {strides = array<i32>} : memref<8x2x128xf32, #tpu.memory_space<vmem>>, vector<1x2x128xf32>,
    %c7_i32_296 = arith.constant 7 : i32
    %734 = arith.subi %c7_i32_296, %c7_i32_276 : i32
    %c0_297 = arith.constant 0 : index
    %c0_298 = arith.constant 0 : index
    %735 = vector.load %arg10[%c0_297, %c0_298] : memref<2x128xf32, #tpu.memory_space<vmem>>, vector<2x128xf32>
    %c0_299 = arith.constant 0 : index
    %c0_300 = arith.constant 0 : index
    %736 = vector.load %arg11[%c0_299, %c0_300] : memref<2x128xf32, #tpu.memory_space<vmem>>, vector<2x128xf32>
    %737 = arith.index_cast %734 : i32 to index
    %c0_301 = arith.constant 0 : index
    %c0_302 = arith.constant 0 : index
    %738 = vector.load %arg3[%737, %c0_301, %c0_302] : memref<8x2x512xf32, #tpu.memory_space<vmem>>, vector<1x2x512xf32>
    %739 = vector.shape_cast %738 : vector<1x2x512xf32> to vector<2x512xf32>
    %c0_303 = arith.constant 0 : index
    %c0_304 = arith.constant 0 : index
    %740 = vector.load %arg5[%c0_303, %c0_304] : memref<128x512xf32, #tpu.memory_space<vmem>>, vector<128x512xf32>
    %cst_305 = arith.constant dense<0.000000e+00> : vector<2x512xf32>
    %741 = tpu.matmul %735, %740, %cst_305 {dimension_numbers = #tpu.dot_dimension_numbers<[1], [0], [0], [1], [0, 0, 1, 1], [], []>} : vector<2x128xf32>, vector<128x512xf32>, vector<2x512xf32> -> vector<2x512xf32>
    %742 = arith.addf %739, %741 : vector<2x512xf32>
    %743 = vector.extract_strided_slice %742 {offsets = [0, 0], sizes = [2, 128], strides = [1, 1]} : vector<2x512xf32> to vector<2x128xf32>
    %744 = arith.negf %743 : vector<2x128xf32>
    %745 = math.exp %744 : vector<2x128xf32>
    %cst_306 = arith.constant 1.000000e+00 : f32
    %746 = vector.broadcast %cst_306 : f32 to vector<2x128xf32>
    %747 = arith.addf %746, %745 : vector<2x128xf32>
    %748 = arith.divf %746, %747 : vector<2x128xf32>
    %749 = vector.extract_strided_slice %742 {offsets = [0, 128], sizes = [2, 128], strides = [1, 1]} : vector<2x512xf32> to vector<2x128xf32>
    %750 = arith.negf %749 : vector<2x128xf32>
    %751 = math.exp %750 : vector<2x128xf32>
    %cst_307 = arith.constant 1.000000e+00 : f32
    %752 = vector.broadcast %cst_307 : f32 to vector<2x128xf32>
    %753 = arith.addf %752, %751 : vector<2x128xf32>
    %754 = arith.divf %752, %753 : vector<2x128xf32>
    %755 = vector.extract_strided_slice %742 {offsets = [0, 256], sizes = [2, 128], strides = [1, 1]} : vector<2x512xf32> to vector<2x128xf32>
    %756 = math.tanh %755 : vector<2x128xf32>
    %757 = vector.extract_strided_slice %742 {offsets = [0, 384], sizes = [2, 128], strides = [1, 1]} : vector<2x512xf32> to vector<2x128xf32>
    %758 = arith.negf %757 : vector<2x128xf32>
    %759 = math.exp %758 : vector<2x128xf32>
    %cst_308 = arith.constant 1.000000e+00 : f32
    %760 = vector.broadcast %cst_308 : f32 to vector<2x128xf32>
    %761 = arith.addf %760, %759 : vector<2x128xf32>
    %762 = arith.divf %760, %761 : vector<2x128xf32>
    %763 = arith.mulf %754, %736 : vector<2x128xf32>
    %764 = arith.mulf %748, %756 : vector<2x128xf32>
    %765 = arith.addf %763, %764 : vector<2x128xf32>
    %766 = math.tanh %765 : vector<2x128xf32>
    %767 = arith.mulf %762, %766 : vector<2x128xf32>
    %768 = arith.addi %6, %734 : i32
    %769 = vector.broadcast %768 : i32 to vector<2x1xi32>
    %770 = arith.cmpi slt, %769, %3 : vector<2x1xi32>
    %771 = vector.shape_cast %770 : vector<2x1xi1> to vector<2x1xi1>
    %772 = vector.broadcast %771 : vector<2x1xi1> to vector<2x128xi1>
    %773 = arith.select %772, %765, %736 : vector<2x128xi1>, vector<2x128xf32>
    %c0_309 = arith.constant 0 : index
    %c0_310 = arith.constant 0 : index
    %774 = vector.load %arg11[%c0_309, %c0_310] : memref<2x128xf32, #tpu.memory_space<vmem>>, vector<2x128xf32>
    tpu.vector_store %arg11[%c0_309, %c0_310], %773 {strides = array<i32>} : memref<2x128xf32, #tpu.memory_space<vmem>>, vector<2x128xf32>,
    %775 = arith.select %772, %767, %735 : vector<2x128xi1>, vector<2x128xf32>
    %c0_311 = arith.constant 0 : index
    %c0_312 = arith.constant 0 : index
    %776 = vector.load %arg10[%c0_311, %c0_312] : memref<2x128xf32, #tpu.memory_space<vmem>>, vector<2x128xf32>
    tpu.vector_store %arg10[%c0_311, %c0_312], %775 {strides = array<i32>} : memref<2x128xf32, #tpu.memory_space<vmem>>, vector<2x128xf32>,
    %cst_313 = arith.constant 0.000000e+00 : f32
    %777 = vector.broadcast %cst_313 : f32 to vector<2x128xf32>
    %778 = arith.select %772, %767, %777 : vector<2x128xi1>, vector<2x128xf32>
    %779 = arith.index_cast %734 : i32 to index
    %c0_314 = arith.constant 0 : index
    %c0_315 = arith.constant 0 : index
    %780 = vector.load %arg7[%779, %c0_314, %c0_315] : memref<8x2x128xf32, #tpu.memory_space<vmem>>, vector<1x2x128xf32>
    %781 = vector.shape_cast %780 : vector<1x2x128xf32> to vector<2x128xf32>
    %782 = vector.shape_cast %778 : vector<2x128xf32> to vector<1x2x128xf32>
    tpu.vector_store %arg7[%779, %c0_314, %c0_315], %782 {strides = array<i32>} : memref<8x2x128xf32, #tpu.memory_space<vmem>>, vector<1x2x128xf32>,
    %c8_i32_316 = arith.constant 8 : i32
    return
  }
  func.func @transform_0(%arg0: i32) -> (i32, i32) {
    %c0_i32 = arith.constant 0 : i32
    %c0_i32_0 = arith.constant 0 : i32
    %c0_i32_1 = arith.constant 0 : i32
    return %c0_i32, %c0_i32_0 : i32, i32
  }
  func.func @transform_1(%arg0: i32) -> (i32, i32, i32) {
    %c0_i32 = arith.constant 0 : i32
    %c0_i32_0 = arith.constant 0 : i32
    %c0_i32_1 = arith.constant 0 : i32
    return %arg0, %c0_i32, %c0_i32_0 : i32, i32, i32
  }
  func.func @transform_2(%arg0: i32) -> (i32, i32, i32) {
    %c0_i32 = arith.constant 0 : i32
    %0 = arith.subi %c0_i32, %arg0 : i32
    %c0_i32_0 = arith.constant 0 : i32
    %c0_i32_1 = arith.constant 0 : i32
    %c0_i32_2 = arith.constant 0 : i32
    return %0, %c0_i32_0, %c0_i32_1 : i32, i32, i32
  }
  func.func @transform_3(%arg0: i32) -> (i32, i32) {
    %c0_i32 = arith.constant 0 : i32
    %c0_i32_0 = arith.constant 0 : i32
    %c0_i32_1 = arith.constant 0 : i32
    return %c0_i32, %c0_i32_0 : i32, i32
  }
  func.func @transform_4(%arg0: i32) -> (i32, i32) {
    %c0_i32 = arith.constant 0 : i32
    %c0_i32_0 = arith.constant 0 : i32
    %c0_i32_1 = arith.constant 0 : i32
    return %c0_i32, %c0_i32_0 : i32, i32
  }
  func.func @transform_5(%arg0: i32) -> (i32, i32, i32) {
    %c0_i32 = arith.constant 0 : i32
    %c0_i32_0 = arith.constant 0 : i32
    %c0_i32_1 = arith.constant 0 : i32
    return %arg0, %c0_i32, %c0_i32_0 : i32, i32, i32
  }
  func.func @transform_6(%arg0: i32) -> (i32, i32, i32) {
    %c0_i32 = arith.constant 0 : i32
    %0 = arith.subi %c0_i32, %arg0 : i32
    %c0_i32_0 = arith.constant 0 : i32
    %c0_i32_1 = arith.constant 0 : i32
    %c0_i32_2 = arith.constant 0 : i32
    return %0, %c0_i32_0, %c0_i32_1 : i32, i32, i32
  }
}

</mosaic_0001>

<llo_original>
// kernel: tpu_custom_call.1
$region0: #{tpu_custom_call.1}
  #allocation0 [shape = 'u32[]', space=smem, size = 0x4, offset = 0x4, fixed_abs, tag = 'smem constant byte address 0x4 - core index']
  #allocation1 [shape = 'u32[144,128]{1,0:T(1,128)}', space=vmem, size = 0x12000, scoped, tag = 'internal scratch']
  #allocation2 [shape = 'f32[2,128]{1,0:T(2,128)}', space=vmem, size = 0x400, scoped, tag = 'scratch operand']
  #allocation3 [shape = 'f32[2,128]{1,0:T(2,128)}', space=vmem, size = 0x400, scoped, tag = 'scratch operand']
  #allocation4 [shape = 'f32[2,128]{1,0:T(2,128)}', space=vmem, size = 0x400, scoped, tag = 'scratch operand']
  #allocation5 [shape = 'f32[2,128]{1,0:T(2,128)}', space=vmem, size = 0x400, scoped, tag = 'scratch operand']
  %s0 = inlined_call_operand.vmem [shape: s32[2,1], index: 0, kind: input, shape index: {}]
  %s1 = inlined_call_operand.hbm [shape: f32[8,2,512], index: 1, kind: input, shape index: {}]
  %s2 = inlined_call_operand.hbm [shape: f32[8,2,512], index: 2, kind: input, shape index: {}]
  %s3 = inlined_call_operand.hbm [shape: f32[128,512], index: 3, kind: input, shape index: {}]
  %s4 = inlined_call_operand.hbm [shape: f32[128,512], index: 4, kind: input, shape index: {}]
  %s5 = inlined_call_operand.hbm [shape: f32[8,2,128], index: 5, kind: output, shape index: {0}]
  %s6 = inlined_call_operand.hbm [shape: f32[8,2,128], index: 6, kind: output, shape index: {1}]
  %7 = xla_tuple %s5, %s6
  %s8 = sld [smem:[#allocation0]]
  $region58: #{tpu_custom_call.1} parent=0
    _
  %s10 = ssub.s32 1, %s8
  %s11 = scalar_select 0, %s10, %s8
  $region1: #{tpu_custom_call.1} parent=0
    #allocation6 [shape = 'u8[32768]{0}', space=vmem, size = 0x8000, scoped, tag = 'input window, operand 1, single buffered']
    #allocation7 [shape = 's32[1]{0}', space=sflag, size = 0x4, scoped, tag = 'scoped memory for tpu_custom_call.1']
    #allocation8 [shape = 's32[1]{0}', space=sflag, size = 0x4, scoped, tag = 'scoped memory for tpu_custom_call.1']
    #allocation9 [shape = 'u8[32768]{0}', space=vmem, size = 0x8000, scoped, tag = 'input window, operand 2, single buffered']
    #allocation10 [shape = 's32[1]{0}', space=sflag, size = 0x4, scoped, tag = 'scoped memory for tpu_custom_call.1']
    #allocation11 [shape = 'u8[262144]{0}', space=vmem, size = 0x40000, scoped, tag = 'input window, operand 3, single buffered']
    #allocation12 [shape = 'u8[262144]{0}', space=vmem, size = 0x40000, scoped, tag = 'input window, operand 4, single buffered']
    #allocation13 [shape = 's32[1]{0}', space=sflag, size = 0x4, scoped, tag = 'scoped memory for tpu_custom_call.1']
    #allocation14 [shape = 'u8[8192]{0}', space=vmem, size = 0x2000, scoped, tag = 'output window, operand 0, single buffered']
    #allocation15 [shape = 'u8[8192]{0}', space=vmem, size = 0x2000, scoped, tag = 'output window, operand 1, single buffered']
    #allocation16 [shape = 's32[1]{0}', space=sflag, size = 0x4, scoped, tag = 'scoped memory for tpu_custom_call.1']
    %12 = vsyncpa [#allocation7], 0
    %13 = vsyncpa [#allocation10], 0
    %14 = vsyncpa [#allocation13], 0
    %15 = vsyncpa [#allocation8], 0
    %16 = vsyncpa [#allocation16], 0
    // Predicated region
    $region2: #{tpu_custom_call.1} parent=1 // pred_check
      _
    $region3: #{tpu_custom_call.1} parent=1 // pred_check_branch
      %18 = sbr.rel (0) target = $region5
    $region4: #{tpu_custom_call.1} parent=1 // pred_region
      _
    $region5: #{tpu_custom_call.1} parent=1 // pred_fallthru
      _
    // Predicated region
    $region6: #{tpu_custom_call.1} parent=1 // pred_check
      _
    $region7: #{tpu_custom_call.1} parent=1 // pred_check_branch
      %20 = sbr.rel (0) target = $region9
    $region8: #{tpu_custom_call.1} parent=1 // pred_region
      %s22 = ssub.s32 1024, 1024
      %23 = vsyncadd [#allocation7], %s22
      %s24 = sshll.u32 [#allocation6], 4
      %s25 = int_to_ptr.vmem [resolvable:$true] %s24
      %30 = dma.hbm_to_vmem [thread:$0]  %s1, 1024, %s25, [#allocation7], 128, 128, 8
    $region9: #{tpu_custom_call.1} parent=1 // pred_fallthru
      _
    // Predicated region
    $region10: #{tpu_custom_call.1} parent=1 // pred_check
      _
    $region11: #{tpu_custom_call.1} parent=1 // pred_check_branch
      %32 = sbr.rel (0) target = $region13
    $region12: #{tpu_custom_call.1} parent=1 // pred_region
      %s33 = ssub.s32 0, 0
      %s34 = smul.u32 8, %s33
      %s36 = ssub.s32 1024, 1024
      %37 = vsyncadd [#allocation10], %s36
      %s38 = smul.addr %s34, 4
      %s39 = smul.addr %s38, 32
      %s40 = scalar_lea.hbm %s2, %s39
      %s41 = sshll.u32 [#allocation9], 4
      %s42 = int_to_ptr.vmem [resolvable:$true] %s41
      %47 = dma.hbm_to_vmem [thread:$0]  %s40, 1024, %s42, [#allocation10], 128, 128, 8
    $region13: #{tpu_custom_call.1} parent=1 // pred_fallthru
      _
    // Predicated region
    $region14: #{tpu_custom_call.1} parent=1 // pred_check
      _
    $region15: #{tpu_custom_call.1} parent=1 // pred_check_branch
      %49 = sbr.rel (0) target = $region17
    $region16: #{tpu_custom_call.1} parent=1 // pred_region
      %s51 = ssub.s32 8192, 8192
      %52 = vsyncadd [#allocation10], %s51
      %s53 = sshll.u32 [#allocation11], 4
      %s54 = int_to_ptr.vmem [resolvable:$true] %s53
      %59 = dma.hbm_to_vmem [thread:$0]  %s3, 8192, %s54, [#allocation10], 512, 512, 32
    $region17: #{tpu_custom_call.1} parent=1 // pred_fallthru
      _
    // Predicated region
    $region18: #{tpu_custom_call.1} parent=1 // pred_check
      _
    $region19: #{tpu_custom_call.1} parent=1 // pred_check_branch
      %61 = sbr.rel (0) target = $region21
    $region20: #{tpu_custom_call.1} parent=1 // pred_region
      %s63 = ssub.s32 8192, 8192
      %64 = vsyncadd [#allocation13], %s63
      %s65 = sshll.u32 [#allocation12], 4
      %s66 = int_to_ptr.vmem [resolvable:$true] %s65
      %71 = dma.hbm_to_vmem [thread:$0]  %s4, 8192, %s66, [#allocation13], 512, 512, 32
    $region21: #{tpu_custom_call.1} parent=1 // pred_fallthru
      _
    // Predicated region
    $region22: #{tpu_custom_call.1} parent=1 // pred_check
      _
    $region23: #{tpu_custom_call.1} parent=1 // pred_check_branch
      %73 = sbr.rel (0) target = $region25
    $region24: #{tpu_custom_call.1} parent=1 // pred_region
      %74 = dma.done [#allocation7], 1024
    $region25: #{tpu_custom_call.1} parent=1 // pred_fallthru
      _
    // Predicated region
    $region26: #{tpu_custom_call.1} parent=1 // pred_check
      _
    $region27: #{tpu_custom_call.1} parent=1 // pred_check_branch
      %76 = sbr.rel (0) target = $region29
    $region28: #{tpu_custom_call.1} parent=1 // pred_region
      %77 = dma.done [#allocation10], 1024
    $region29: #{tpu_custom_call.1} parent=1 // pred_fallthru
      _
    // Predicated region
    $region30: #{tpu_custom_call.1} parent=1 // pred_check
      _
    $region31: #{tpu_custom_call.1} parent=1 // pred_check_branch
      %79 = sbr.rel (0) target = $region33
    $region32: #{tpu_custom_call.1} parent=1 // pred_region
      %80 = dma.done [#allocation10], 8192
    $region33: #{tpu_custom_call.1} parent=1 // pred_fallthru
      _
    // Predicated region
    $region34: #{tpu_custom_call.1} parent=1 // pred_check
      _
    $region35: #{tpu_custom_call.1} parent=1 // pred_check_branch
      %82 = sbr.rel (0) target = $region37
    $region36: #{tpu_custom_call.1} parent=1 // pred_region
      %83 = dma.done [#allocation13], 8192
    $region37: #{tpu_custom_call.1} parent=1 // pred_fallthru
      _
    %s84 = ssub.s32 0, 0
    %s85 = smul.u32 8, %s84
    %s86 = ssub.s32 0, 0
    %s87 = smul.u32 8, %s86
    %p88 = scmp.eq.s32.totalorder 0, 0
    // Predicated region
    $region38: #{tpu_custom_call.1} parent=1 // pred_check
      %p89 = pneg %p88
    $region39: #{tpu_custom_call.1} parent=1 // pred_check_branch
      %91 = sbr.rel (%p89) target = $region41
    $region40: #{tpu_custom_call.1} parent=1 // pred_region
      %92 = vst [vmem:[#allocation2] sm:$0x3] 0.0
      %93 = vst [vmem:[#allocation3] sm:$0x3] 0.0
      %94 = vst [vmem:[#allocation4] sm:$0x3] 0.0
      %95 = vst [vmem:[#allocation5] sm:$0x3] 0.0
    $region41: #{tpu_custom_call.1} parent=1 // pred_fallthru
      _
    %v96 = vld [vmem:[%s0] sm:$0x3]
    %s97 = smul.u32 0, 8
    %s98 = ssub.s32 0, 0
    %s99 = smul.u32 %s98, 8
    %v100 = vld [vmem:[#allocation2] sm:$0x3]
    %v101 = vld [vmem:[#allocation3] sm:$0x3]
    %v102 = vld [vmem:[#allocation6] sm:$0xff]
    %v103 = vld [vmem:[#allocation11] sm:$0xff]
    %v104 = vld [vmem:[#allocation11 + $0x8] sm:$0xff]
    %v105 = vld [vmem:[#allocation11 + $0x10] sm:$0xff]
    %v106 = vld [vmem:[#allocation11 + $0x18] sm:$0xff]
    %v107 = vld [vmem:[#allocation11 + $0x20] sm:$0xff]
    %v108 = vld [vmem:[#allocation11 + $0x28] sm:$0xff]
    %v109 = vld [vmem:[#allocation11 + $0x30] sm:$0xff]
    %v110 = vld [vmem:[#allocation11 + $0x38] sm:$0xff]
    %v111 = vld [vmem:[#allocation11 + $0x40] sm:$0xff]
    %v112 = vld [vmem:[#allocation11 + $0x48] sm:$0xff]
    %v113 = vld [vmem:[#allocation11 + $0x50] sm:$0xff]
    %v114 = vld [vmem:[#allocation11 + $0x58] sm:$0xff]
    %v115 = vld [vmem:[#allocation11 + $0x60] sm:$0xff]
    %v116 = vld [vmem:[#allocation11 + $0x68] sm:$0xff]
    %v117 = vld [vmem:[#allocation11 + $0x70] sm:$0xff]
    %v118 = vld [vmem:[#allocation11 + $0x78] sm:$0xff]
    %v119 = vld [vmem:[#allocation11 + $0x80] sm:$0xff]
    %v120 = vld [vmem:[#allocation11 + $0x88] sm:$0xff]
    %v121 = vld [vmem:[#allocation11 + $0x90] sm:$0xff]
    %v122 = vld [vmem:[#allocation11 + $0x98] sm:$0xff]
    %v123 = vld [vmem:[#allocation11 + $0xa0] sm:$0xff]
    %v124 = vld [vmem:[#allocation11 + $0xa8] sm:$0xff]
    %v125 = vld [vmem:[#allocation11 + $0xb0] sm:$0xff]
    %v126 = vld [vmem:[#allocation11 + $0xb8] sm:$0xff]
    %v127 = vld [vmem:[#allocation11 + $0xc0] sm:$0xff]
    %v128 = vld [vmem:[#allocation11 + $0xc8] sm:$0xff]
    %v129 = vld [vmem:[#allocation11 + $0xd0] sm:$0xff]
    %v130 = vld [vmem:[#allocation11 + $0xd8] sm:$0xff]
    %v131 = vld [vmem:[#allocation11 + $0xe0] sm:$0xff]
    %v132 = vld [vmem:[#allocation11 + $0xe8] sm:$0xff]
    %v133 = vld [vmem:[#allocation11 + $0xf0] sm:$0xff]
    %v134 = vld [vmem:[#allocation11 + $0xf8] sm:$0xff]
    %v135 = vld [vmem:[#allocation11 + $0x100] sm:$0xff]
    %v136 = vld [vmem:[#allocation11 + $0x108] sm:$0xff]
    %v137 = vld [vmem:[#allocation11 + $0x110] sm:$0xff]
    %v138 = vld [vmem:[#allocation11 + $0x118] sm:$0xff]
    %v139 = vld [vmem:[#allocation11 + $0x120] sm:$0xff]
    %v140 = vld [vmem:[#allocation11 + $0x128] sm:$0xff]
    %v141 = vld [vmem:[#allocation11 + $0x130] sm:$0xff]
    %v142 = vld [vmem:[#allocation11 + $0x138] sm:$0xff]
    %v143 = vld [vmem:[#allocation11 + $0x140] sm:$0xff]
    %v144 = vld [vmem:[#allocation11 + $0x148] sm:$0xff]
    %v145 = vld [vmem:[#allocation11 + $0x150] sm:$0xff]
    %v146 = vld [vmem:[#allocation11 + $0x158] sm:$0xff]
    %v147 = vld [vmem:[#allocation11 + $0x160] sm:$0xff]
    %v148 = vld [vmem:[#allocation11 + $0x168] sm:$0xff]
    %v149 = vld [vmem:[#allocation11 + $0x170] sm:$0xff]
    %v150 = vld [vmem:[#allocation11 + $0x178] sm:$0xff]
    %v151 = vld [vmem:[#allocation11 + $0x180] sm:$0xff]
    %v152 = vld [vmem:[#allocation11 + $0x188] sm:$0xff]
    %v153 = vld [vmem:[#allocation11 + $0x190] sm:$0xff]
    %v154 = vld [vmem:[#allocation11 + $0x198] sm:$0xff]
    %v155 = vld [vmem:[#allocation11 + $0x1a0] sm:$0xff]
    %v156 = vld [vmem:[#allocation11 + $0x1a8] sm:$0xff]
    %v157 = vld [vmem:[#allocation11 + $0x1b0] sm:$0xff]
    %v158 = vld [vmem:[#allocation11 + $0x1b8] sm:$0xff]
    %v159 = vld [vmem:[#allocation11 + $0x1c0] sm:$0xff]
    %v160 = vld [vmem:[#allocation11 + $0x1c8] sm:$0xff]
    %v161 = vld [vmem:[#allocation11 + $0x1d0] sm:$0xff]
    %v162 = vld [vmem:[#allocation11 + $0x1d8] sm:$0xff]
    %v163 = vld [vmem:[#allocation11 + $0x1e0] sm:$0xff]
    %v164 = vld [vmem:[#allocation11 + $0x1e8] sm:$0xff]
    %v165 = vld [vmem:[#allocation11 + $0x1f0] sm:$0xff]
    %v166 = vld [vmem:[#allocation11 + $0x1f8] sm:$0xff]
    %167 = vmatprep.subr.mxu0 %v164
    %168 = vmatpush1.msra.mxu0 %v163
    %169 = vmatprep.subr.mxu0 %v160
    %170 = vmatpush1.msra.mxu0 %v159
    %171 = vmatprep.subr.mxu0 %v156
    %172 = vmatpush1.msra.mxu0 %v155
    %173 = vmatprep.subr.mxu0 %v152
    %174 = vmatpush1.msra.mxu0 %v151
    %175 = vmatprep.subr.mxu0 %v148
    %176 = vmatpush1.msra.mxu0 %v147
    %177 = vmatprep.subr.mxu0 %v144
    %178 = vmatpush1.msra.mxu0 %v143
    %179 = vmatprep.subr.mxu0 %v140
    %180 = vmatpush1.msra.mxu0 %v139
    %181 = vmatprep.subr.mxu0 %v136
    %182 = vmatpush1.msra.mxu0 %v135
    %183 = vmatprep.subr.mxu0 %v132
    %184 = vmatpush1.msra.mxu0 %v131
    %185 = vmatprep.subr.mxu0 %v128
    %186 = vmatpush1.msra.mxu0 %v127
    %187 = vmatprep.subr.mxu0 %v124
    %188 = vmatpush1.msra.mxu0 %v123
    %189 = vmatprep.subr.mxu0 %v120
    %190 = vmatpush1.msra.mxu0 %v119
    %191 = vmatprep.subr.mxu0 %v116
    %192 = vmatpush1.msra.mxu0 %v115
    %193 = vmatprep.subr.mxu0 %v112
    %194 = vmatpush1.msra.mxu0 %v111
    %195 = vmatprep.subr.mxu0 %v108
    %196 = vmatpush1.msra.mxu0 %v107
    %197 = vmatprep.subr.mxu0 %v104
    %198 = vmatpush1.msra.mxu0 %v103
    %199 = vmatprep.subr.mxu0 0.0
    %200 = vmatpush2.msra.mxu0 0.0
    %201 = vmatprep.subr.mxu0 0.0
    %202 = vmatpush2.msra.mxu0 0.0
    %203 = vmatprep.subr.mxu0 0.0
    %204 = vmatpush2.msra.mxu0 0.0
    %205 = vmatprep.subr.mxu0 0.0
    %206 = vmatpush2.msra.mxu0 0.0
    %207 = vmatprep.subr.mxu0 0.0
    %208 = vmatpush2.msra.mxu0 0.0
    %209 = vmatprep.subr.mxu0 0.0
    %210 = vmatpush2.msra.mxu0 0.0
    %211 = vmatprep.subr.mxu0 0.0
    %212 = vmatpush2.msra.mxu0 0.0
    %213 = vmatprep.subr.mxu0 0.0
    %214 = vmatpush2.msra.mxu0 0.0
    %215 = vmatprep.subr.mxu0 0.0
    %216 = vmatpush2.msra.mxu0 0.0
    %217 = vmatprep.subr.mxu0 0.0
    %218 = vmatpush2.msra.mxu0 0.0
    %219 = vmatprep.subr.mxu0 0.0
    %220 = vmatpush2.msra.mxu0 0.0
    %221 = vmatprep.subr.mxu0 0.0
    %222 = vmatpush2.msra.mxu0 0.0
    %223 = vmatprep.subr.mxu0 0.0
    %224 = vmatpush2.msra.mxu0 0.0
    %225 = vmatprep.subr.mxu0 0.0
    %226 = vmatpush2.msra.mxu0 0.0
    %227 = vmatprep.subr.mxu0 0.0
    %228 = vmatpush2.msra.mxu0 0.0
    %229 = vmatprep.subr.mxu0 0.0
    %230 = vmatpush2.msra.mxu0 0.0
    %231 = vmatprep.mubr.f32.mxu0 0.0
    %232 = vmatmul.mubr.f32.gmra.mxu0 %v100
    %v233 = vpop.f32.mrf.mxu0
    %v234 = vadd.f32 0.0, %v233
    %v235 = vpop.f32.mrf.mxu0
    %v236 = vadd.f32 0.0, %v235
    %237 = vdwg.mxu0
    %238 = vmatprep.subr.mxu0 %v166
    %239 = vmatpush1.msra.mxu0 %v165
    %240 = vmatprep.subr.mxu0 %v162
    %241 = vmatpush1.msra.mxu0 %v161
    %242 = vmatprep.subr.mxu0 %v158
    %243 = vmatpush1.msra.mxu0 %v157
    %244 = vmatprep.subr.mxu0 %v154
    %245 = vmatpush1.msra.mxu0 %v153
    %246 = vmatprep.subr.mxu0 %v150
    %247 = vmatpush1.msra.mxu0 %v149
    %248 = vmatprep.subr.mxu0 %v146
    %249 = vmatpush1.msra.mxu0 %v145
    %250 = vmatprep.subr.mxu0 %v142
    %251 = vmatpush1.msra.mxu0 %v141
    %252 = vmatprep.subr.mxu0 %v138
    %253 = vmatpush1.msra.mxu0 %v137
    %254 = vmatprep.subr.mxu0 %v134
    %255 = vmatpush1.msra.mxu0 %v133
    %256 = vmatprep.subr.mxu0 %v130
    %257 = vmatpush1.msra.mxu0 %v129
    %258 = vmatprep.subr.mxu0 %v126
    %259 = vmatpush1.msra.mxu0 %v125
    %260 = vmatprep.subr.mxu0 %v122
    %261 = vmatpush1.msra.mxu0 %v121
    %262 = vmatprep.subr.mxu0 %v118
    %263 = vmatpush1.msra.mxu0 %v117
    %264 = vmatprep.subr.mxu0 %v114
    %265 = vmatpush1.msra.mxu0 %v113
    %266 = vmatprep.subr.mxu0 %v110
    %267 = vmatpush1.msra.mxu0 %v109
    %268 = vmatprep.subr.mxu0 %v106
    %269 = vmatpush1.msra.mxu0 %v105
    %270 = vmatprep.subr.mxu0 0.0
    %271 = vmatpush2.msra.mxu0 0.0
    %272 = vmatprep.subr.mxu0 0.0
    %273 = vmatpush2.msra.mxu0 0.0
    %274 = vmatprep.subr.mxu0 0.0
    %275 = vmatpush2.msra.mxu0 0.0
    %276 = vmatprep.subr.mxu0 0.0
    %277 = vmatpush2.msra.mxu0 0.0
    %278 = vmatprep.subr.mxu0 0.0
    %279 = vmatpush2.msra.mxu0 0.0
    %280 = vmatprep.subr.mxu0 0.0
    %281 = vmatpush2.msra.mxu0 0.0
    %282 = vmatprep.subr.mxu0 0.0
    %283 = vmatpush2.msra.mxu0 0.0
    %284 = vmatprep.subr.mxu0 0.0
    %285 = vmatpush2.msra.mxu0 0.0
    %286 = vmatprep.subr.mxu0 0.0
    %287 = vmatpush2.msra.mxu0 0.0
    %288 = vmatprep.subr.mxu0 0.0
    %289 = vmatpush2.msra.mxu0 0.0
    %290 = vmatprep.subr.mxu0 0.0
    %291 = vmatpush2.msra.mxu0 0.0
    %292 = vmatprep.subr.mxu0 0.0
    %293 = vmatpush2.msra.mxu0 0.0
    %294 = vmatprep.subr.mxu0 0.0
    %295 = vmatpush2.msra.mxu0 0.0
    %296 = vmatprep.subr.mxu0 0.0
    %297 = vmatpush2.msra.mxu0 0.0
    %298 = vmatprep.subr.mxu0 0.0
    %299 = vmatpush2.msra.mxu0 0.0
    %300 = vmatprep.subr.mxu0 0.0
    %301 = vmatpush2.msra.mxu0 0.0
    %302 = vmatprep.mubr.f32.mxu0 0.0
    %303 = vmatmul.mubr.f32.gmra.mxu0 %v100
    %v304 = vpop.f32.mrf.mxu0
    %v305 = vadd.f32 0.0, %v304
    %v306 = vpop.f32.mrf.mxu0
    %v307 = vadd.f32 0.0, %v306
    %308 = vdwg.mxu0
    %v313 = vcombine.low %v234, %v236
    %v314 = vcombine.low %v305, %v307
    %v316 = vunpack.c.l.s4 1983009808
    %v317 = vunpack.c.0.s8 %v316
    %v318 = vlaneseq
    %v319 = vshrl.u32 %v318, 7
    %v320 = vsub.s32 %v317, %v319
    %v321 = vrot.slane %v313, %v320
    %v323 = vunpack.c.l.s4 1983009808
    %v324 = vunpack.c.0.s8 %v323
    %v325 = vlaneseq
    %v326 = vshrl.u32 %v325, 7
    %v327 = vsub.s32 %v324, %v326
    %v328 = vrot.slane %v314, %v327
    %v329 = vcombine.low %v321, %v328
    %v331 = vadd.f32 %v102, %v329
    %v332 = vxor.u32 %v331, 2147483648
    %v333 = vmul.f32 %v332, 1.442695
    %v334 = vpow.pop %v333
    %v335 = vadd.f32 %v334, 1.0
    %v336 = vrcp.pop %v335
    %v337 = vmul.f32 1.0, %v336
    %v339 = vrot.slane %v331, 2
    %v341 = vxor.u32 %v339, 2147483648
    %v342 = vmul.f32 %v341, 1.442695
    %v343 = vpow.pop %v342
    %v344 = vadd.f32 %v343, 1.0
    %v345 = vrcp.pop %v344
    %v346 = vmul.f32 1.0, %v345
    %v347 = vrot.slane %v331, 4
    %v349 = vtanh.pop %v347
    %v350 = vrot.slane %v331, 6
    %v352 = vxor.u32 %v350, 2147483648
    %v353 = vmul.f32 %v352, 1.442695
    %v354 = vpow.pop %v353
    %v355 = vadd.f32 %v354, 1.0
    %v356 = vrcp.pop %v355
    %v357 = vmul.f32 1.0, %v356
    %v358 = vmul.f32 %v346, %v101
    %v359 = vmul.f32 %v337, %v349
    %v360 = vadd.f32 %v358, %v359
    %v361 = vtanh.pop %v360
    %v362 = vmul.f32 %v357, %v361
    %v363 = vstv %s97
    %vm364 = vcmp.lt.s32.totalorder %v363, %v96
    %v365 = vsel %vm364, 1, 0
    %366 = vset.pattern.permute.xlu0 0
    %367 = vperm.xlu0 %366, %v365
    %v368 = vpop.permute.xlu0 %367
    %vm369 = vcmp.eq.s32.totalorder %v368, 1
    %v370 = vsel %vm369, %v360, %v101
    %371 = vst [vmem:[#allocation3] sm:$0x3] %v370
    %v372 = vsel %vm369, %v362, %v100
    %373 = vst [vmem:[#allocation2] sm:$0x3] %v372
    %v374 = vsel %vm369, %v362, 0.0
    %375 = vst [vmem:[#allocation14] sm:$0x3] %v374
    %v376 = vld [vmem:[#allocation4] sm:$0x3]
    %v377 = vld [vmem:[#allocation5] sm:$0x3]
    %s378 = scalar_lea.vmem [#allocation9], 56
    %v379 = vld [vmem:[%s378] sm:$0xff]
    %v380 = vld [vmem:[#allocation12] sm:$0xff]
    %v381 = vld [vmem:[#allocation12 + $0x8] sm:$0xff]
    %v382 = vld [vmem:[#allocation12 + $0x10] sm:$0xff]
    %v383 = vld [vmem:[#allocation12 + $0x18] sm:$0xff]
    %v384 = vld [vmem:[#allocation12 + $0x20] sm:$0xff]
    %v385 = vld [vmem:[#allocation12 + $0x28] sm:$0xff]
    %v386 = vld [vmem:[#allocation12 + $0x30] sm:$0xff]
    %v387 = vld [vmem:[#allocation12 + $0x38] sm:$0xff]
    %v388 = vld [vmem:[#allocation12 + $0x40] sm:$0xff]
    %v389 = vld [vmem:[#allocation12 + $0x48] sm:$0xff]
    %v390 = vld [vmem:[#allocation12 + $0x50] sm:$0xff]
    %v391 = vld [vmem:[#allocation12 + $0x58] sm:$0xff]
    %v392 = vld [vmem:[#allocation12 + $0x60] sm:$0xff]
    %v393 = vld [vmem:[#allocation12 + $0x68] sm:$0xff]
    %v394 = vld [vmem:[#allocation12 + $0x70] sm:$0xff]
    %v395 = vld [vmem:[#allocation12 + $0x78] sm:$0xff]
    %v396 = vld [vmem:[#allocation12 + $0x80] sm:$0xff]
    %v397 = vld [vmem:[#allocation12 + $0x88] sm:$0xff]
    %v398 = vld [vmem:[#allocation12 + $0x90] sm:$0xff]
    %v399 = vld [vmem:[#allocation12 + $0x98] sm:$0xff]
    %v400 = vld [vmem:[#allocation12 + $0xa0] sm:$0xff]
    %v401 = vld [vmem:[#allocation12 + $0xa8] sm:$0xff]
    %v402 = vld [vmem:[#allocation12 + $0xb0] sm:$0xff]
    %v403 = vld [vmem:[#allocation12 + $0xb8] sm:$0xff]
    %v404 = vld [vmem:[#allocation12 + $0xc0] sm:$0xff]
    %v405 = vld [vmem:[#allocation12 + $0xc8] sm:$0xff]
    %v406 = vld [vmem:[#allocation12 + $0xd0] sm:$0xff]
    %v407 = vld [vmem:[#allocation12 + $0xd8] sm:$0xff]
    %v408 = vld [vmem:[#allocation12 + $0xe0] sm:$0xff]
    %v409 = vld [vmem:[#allocation12 + $0xe8] sm:$0xff]
    %v410 = vld [vmem:[#allocation12 + $0xf0] sm:$0xff]
    %v411 = vld [vmem:[#allocation12 + $0xf8] sm:$0xff]
    %v412 = vld [vmem:[#allocation12 + $0x100] sm:$0xff]
    %v413 = vld [vmem:[#allocation12 + $0x108] sm:$0xff]
    %v414 = vld [vmem:[#allocation12 + $0x110] sm:$0xff]
    %v415 = vld [vmem:[#allocation12 + $0x118] sm:$0xff]
    %v416 = vld [vmem:[#allocation12 + $0x120] sm:$0xff]
    %v417 = vld [vmem:[#allocation12 + $0x128] sm:$0xff]
    %v418 = vld [vmem:[#allocation12 + $0x130] sm:$0xff]
    %v419 = vld [vmem:[#allocation12 + $0x138] sm:$0xff]
    %v420 = vld [vmem:[#allocation12 + $0x140] sm:$0xff]
    %v421 = vld [vmem:[#allocation12 + $0x148] sm:$0xff]
    %v422 = vld [vmem:[#allocation12 + $0x150] sm:$0xff]
    %v423 = vld [vmem:[#allocation12 + $0x158] sm:$0xff]
    %v424 = vld [vmem:[#allocation12 + $0x160] sm:$0xff]
    %v425 = vld [vmem:[#allocation12 + $0x168] sm:$0xff]
    %v426 = vld [vmem:[#allocation12 + $0x170] sm:$0xff]
    %v427 = vld [vmem:[#allocation12 + $0x178] sm:$0xff]
    %v428 = vld [vmem:[#allocation12 + $0x180] sm:$0xff]
    %v429 = vld [vmem:[#allocation12 + $0x188] sm:$0xff]
    %v430 = vld [vmem:[#allocation12 + $0x190] sm:$0xff]
    %v431 = vld [vmem:[#allocation12 + $0x198] sm:$0xff]
    %v432 = vld [vmem:[#allocation12 + $0x1a0] sm:$0xff]
    %v433 = vld [vmem:[#allocation12 + $0x1a8] sm:$0xff]
    %v434 = vld [vmem:[#allocation12 + $0x1b0] sm:$0xff]
    %v435 = vld [vmem:[#allocation12 + $0x1b8] sm:$0xff]
    %v436 = vld [vmem:[#allocation12 + $0x1c0] sm:$0xff]
    %v437 = vld [vmem:[#allocation12 + $0x1c8] sm:$0xff]
    %v438 = vld [vmem:[#allocation12 + $0x1d0] sm:$0xff]
    %v439 = vld [vmem:[#allocation12 + $0x1d8] sm:$0xff]
    %v440 = vld [vmem:[#allocation12 + $0x1e0] sm:$0xff]
    %v441 = vld [vmem:[#allocation12 + $0x1e8] sm:$0xff]
    %v442 = vld [vmem:[#allocation12 + $0x1f0] sm:$0xff]
    %v443 = vld [vmem:[#allocation12 + $0x1f8] sm:$0xff]
    %444 = vmatprep.subr.mxu0 %v441
    %445 = vmatpush1.msra.mxu0 %v440
    %446 = vmatprep.subr.mxu0 %v437
    %447 = vmatpush1.msra.mxu0 %v436
    %448 = vmatprep.subr.mxu0 %v433
    %449 = vmatpush1.msra.mxu0 %v432
    %450 = vmatprep.subr.mxu0 %v429
    %451 = vmatpush1.msra.mxu0 %v428
    %452 = vmatprep.subr.mxu0 %v425
    %453 = vmatpush1.msra.mxu0 %v424
    %454 = vmatprep.subr.mxu0 %v421
    %455 = vmatpush1.msra.mxu0 %v420
    %456 = vmatprep.subr.mxu0 %v417
    %457 = vmatpush1.msra.mxu0 %v416
    %458 = vmatprep.subr.mxu0 %v413
    %459 = vmatpush1.msra.mxu0 %v412
    %460 = vmatprep.subr.mxu0 %v409
    %461 = vmatpush1.msra.mxu0 %v408
    %462 = vmatprep.subr.mxu0 %v405
    %463 = vmatpush1.msra.mxu0 %v404
    %464 = vmatprep.subr.mxu0 %v401
    %465 = vmatpush1.msra.mxu0 %v400
    %466 = vmatprep.subr.mxu0 %v397
    %467 = vmatpush1.msra.mxu0 %v396
    %468 = vmatprep.subr.mxu0 %v393
    %469 = vmatpush1.msra.mxu0 %v392
    %470 = vmatprep.subr.mxu0 %v389
    %471 = vmatpush1.msra.mxu0 %v388
    %472 = vmatprep.subr.mxu0 %v385
    %473 = vmatpush1.msra.mxu0 %v384
    %474 = vmatprep.subr.mxu0 %v381
    %475 = vmatpush1.msra.mxu0 %v380
    %476 = vmatprep.subr.mxu0 0.0
    %477 = vmatpush2.msra.mxu0 0.0
    %478 = vmatprep.subr.mxu0 0.0
    %479 = vmatpush2.msra.mxu0 0.0
    %480 = vmatprep.subr.mxu0 0.0
    %481 = vmatpush2.msra.mxu0 0.0
    %482 = vmatprep.subr.mxu0 0.0
    %483 = vmatpush2.msra.mxu0 0.0
    %484 = vmatprep.subr.mxu0 0.0
    %485 = vmatpush2.msra.mxu0 0.0
    %486 = vmatprep.subr.mxu0 0.0
    %487 = vmatpush2.msra.mxu0 0.0
    %488 = vmatprep.subr.mxu0 0.0
    %489 = vmatpush2.msra.mxu0 0.0
    %490 = vmatprep.subr.mxu0 0.0
    %491 = vmatpush2.msra.mxu0 0.0
    %492 = vmatprep.subr.mxu0 0.0
    %493 = vmatpush2.msra.mxu0 0.0
    %494 = vmatprep.subr.mxu0 0.0
    %495 = vmatpush2.msra.mxu0 0.0
    %496 = vmatprep.subr.mxu0 0.0
    %497 = vmatpush2.msra.mxu0 0.0
    %498 = vmatprep.subr.mxu0 0.0
    %499 = vmatpush2.msra.mxu0 0.0
    %500 = vmatprep.subr.mxu0 0.0
    %501 = vmatpush2.msra.mxu0 0.0
    %502 = vmatprep.subr.mxu0 0.0
    %503 = vmatpush2.msra.mxu0 0.0
    %504 = vmatprep.subr.mxu0 0.0
    %505 = vmatpush2.msra.mxu0 0.0
    %506 = vmatprep.subr.mxu0 0.0
    %507 = vmatpush2.msra.mxu0 0.0
    %508 = vmatprep.mubr.f32.mxu0 0.0
    %509 = vmatmul.mubr.f32.gmra.mxu0 %v376
    %v510 = vpop.f32.mrf.mxu0
    %v511 = vadd.f32 0.0, %v510
    %v512 = vpop.f32.mrf.mxu0
    %v513 = vadd.f32 0.0, %v512
    %514 = vdwg.mxu0
    %515 = vmatprep.subr.mxu0 %v443
    %516 = vmatpush1.msra.mxu0 %v442
    %517 = vmatprep.subr.mxu0 %v439
    %518 = vmatpush1.msra.mxu0 %v438
    %519 = vmatprep.subr.mxu0 %v435
    %520 = vmatpush1.msra.mxu0 %v434
    %521 = vmatprep.subr.mxu0 %v431
    %522 = vmatpush1.msra.mxu0 %v430
    %523 = vmatprep.subr.mxu0 %v427
    %524 = vmatpush1.msra.mxu0 %v426
    %525 = vmatprep.subr.mxu0 %v423
    %526 = vmatpush1.msra.mxu0 %v422
    %527 = vmatprep.subr.mxu0 %v419
    %528 = vmatpush1.msra.mxu0 %v418
    %529 = vmatprep.subr.mxu0 %v415
    %530 = vmatpush1.msra.mxu0 %v414
    %531 = vmatprep.subr.mxu0 %v411
    %532 = vmatpush1.msra.mxu0 %v410
    %533 = vmatprep.subr.mxu0 %v407
    %534 = vmatpush1.msra.mxu0 %v406
    %535 = vmatprep.subr.mxu0 %v403
    %536 = vmatpush1.msra.mxu0 %v402
    %537 = vmatprep.subr.mxu0 %v399
    %538 = vmatpush1.msra.mxu0 %v398
    %539 = vmatprep.subr.mxu0 %v395
    %540 = vmatpush1.msra.mxu0 %v394
    %541 = vmatprep.subr.mxu0 %v391
    %542 = vmatpush1.msra.mxu0 %v390
    %543 = vmatprep.subr.mxu0 %v387
    %544 = vmatpush1.msra.mxu0 %v386
    %545 = vmatprep.subr.mxu0 %v383
    %546 = vmatpush1.msra.mxu0 %v382
    %547 = vmatprep.subr.mxu0 0.0
    %548 = vmatpush2.msra.mxu0 0.0
    %549 = vmatprep.subr.mxu0 0.0
    %550 = vmatpush2.msra.mxu0 0.0
    %551 = vmatprep.subr.mxu0 0.0
    %552 = vmatpush2.msra.mxu0 0.0
    %553 = vmatprep.subr.mxu0 0.0
    %554 = vmatpush2.msra.mxu0 0.0
    %555 = vmatprep.subr.mxu0 0.0
    %556 = vmatpush2.msra.mxu0 0.0
    %557 = vmatprep.subr.mxu0 0.0
    %558 = vmatpush2.msra.mxu0 0.0
    %559 = vmatprep.subr.mxu0 0.0
    %560 = vmatpush2.msra.mxu0 0.0
    %561 = vmatprep.subr.mxu0 0.0
    %562 = vmatpush2.msra.mxu0 0.0
    %563 = vmatprep.subr.mxu0 0.0
    %564 = vmatpush2.msra.mxu0 0.0
    %565 = vmatprep.subr.mxu0 0.0
    %566 = vmatpush2.msra.mxu0 0.0
    %567 = vmatprep.subr.mxu0 0.0
    %568 = vmatpush2.msra.mxu0 0.0
    %569 = vmatprep.subr.mxu0 0.0
    %570 = vmatpush2.msra.mxu0 0.0
    %571 = vmatprep.subr.mxu0 0.0
    %572 = vmatpush2.msra.mxu0 0.0
    %573 = vmatprep.subr.mxu0 0.0
    %574 = vmatpush2.msra.mxu0 0.0
    %575 = vmatprep.subr.mxu0 0.0
    %576 = vmatpush2.msra.mxu0 0.0
    %577 = vmatprep.subr.mxu0 0.0
    %578 = vmatpush2.msra.mxu0 0.0
    %579 = vmatprep.mubr.f32.mxu0 0.0
    %580 = vmatmul.mubr.f32.gmra.mxu0 %v376
    %v581 = vpop.f32.mrf.mxu0
    %v582 = vadd.f32 0.0, %v581
    %v583 = vpop.f32.mrf.mxu0
    %v584 = vadd.f32 0.0, %v583
    %585 = vdwg.mxu0
    %v590 = vcombine.low %v511, %v513
    %v591 = vcombine.low %v582, %v584
    %v593 = vunpack.c.l.s4 1983009808
    %v594 = vunpack.c.0.s8 %v593
    %v595 = vlaneseq
    %v596 = vshrl.u32 %v595, 7
    %v597 = vsub.s32 %v594, %v596
    %v598 = vrot.slane %v590, %v597
    %v600 = vunpack.c.l.s4 1983009808
    %v601 = vunpack.c.0.s8 %v600
    %v602 = vlaneseq
    %v603 = vshrl.u32 %v602, 7
    %v604 = vsub.s32 %v601, %v603
    %v605 = vrot.slane %v591, %v604
    %v606 = vcombine.low %v598, %v605
    %v608 = vadd.f32 %v379, %v606
    %v609 = vxor.u32 %v608, 2147483648
    %v610 = vmul.f32 %v609, 1.442695
    %v611 = vpow.pop %v610
    %v612 = vadd.f32 %v611, 1.0
    %v613 = vrcp.pop %v612
    %v614 = vmul.f32 1.0, %v613
    %v616 = vrot.slane %v608, 2
    %v618 = vxor.u32 %v616, 2147483648
    %v619 = vmul.f32 %v618, 1.442695
    %v620 = vpow.pop %v619
    %v621 = vadd.f32 %v620, 1.0
    %v622 = vrcp.pop %v621
    %v623 = vmul.f32 1.0, %v622
    %v624 = vrot.slane %v608, 4
    %v626 = vtanh.pop %v624
    %v627 = vrot.slane %v608, 6
    %v629 = vxor.u32 %v627, 2147483648
    %v630 = vmul.f32 %v629, 1.442695
    %v631 = vpow.pop %v630
    %v632 = vadd.f32 %v631, 1.0
    %v633 = vrcp.pop %v632
    %v634 = vmul.f32 1.0, %v633
    %v635 = vmul.f32 %v623, %v377
    %v636 = vmul.f32 %v614, %v626
    %v637 = vadd.f32 %v635, %v636
    %v638 = vtanh.pop %v637
    %v639 = vmul.f32 %v634, %v638
    %s640 = sadd.s32 %s99, 7
    %v641 = vstv %s640
    %vm642 = vcmp.lt.s32.totalorder %v641, %v96
    %v643 = vsel %vm642, 1, 0
    %644 = vset.pattern.permute.xlu0 0
    %645 = vperm.xlu0 %644, %v643
    %v646 = vpop.permute.xlu0 %645
    %vm647 = vcmp.eq.s32.totalorder %v646, 1
    %v648 = vsel %vm647, %v637, %v377
    %649 = vst [vmem:[#allocation5] sm:$0x3] %v648
    %v650 = vsel %vm647, %v639, %v376
    %651 = vst [vmem:[#allocation4] sm:$0x3] %v650
    %v652 = vsel %vm647, %v639, 0.0
    %s653 = scalar_lea.vmem [#allocation15], 14
    %654 = vst [vmem:[%s653] sm:$0x3] %v652
    %v655 = vld [vmem:[#allocation2] sm:$0x3]
    %v656 = vld [vmem:[#allocation3] sm:$0x3]
    %s657 = scalar_lea.vmem [#allocation6], 8
    %v658 = vld [vmem:[%s657] sm:$0xff]
    %v659 = vld [vmem:[#allocation11] sm:$0xff]
    %v660 = vld [vmem:[#allocation11 + $0x8] sm:$0xff]
    %v661 = vld [vmem:[#allocation11 + $0x10] sm:$0xff]
    %v662 = vld [vmem:[#allocation11 + $0x18] sm:$0xff]
    %v663 = vld [vmem:[#allocation11 + $0x20] sm:$0xff]
    %v664 = vld [vmem:[#allocation11 + $0x28] sm:$0xff]
    %v665 = vld [vmem:[#allocation11 + $0x30] sm:$0xff]
    %v666 = vld [vmem:[#allocation11 + $0x38] sm:$0xff]
    %v667 = vld [vmem:[#allocation11 + $0x40] sm:$0xff]
    %v668 = vld [vmem:[#allocation11 + $0x48] sm:$0xff]
    %v669 = vld [vmem:[#allocation11 + $0x50] sm:$0xff]
    %v670 = vld [vmem:[#allocation11 + $0x58] sm:$0xff]
    %v671 = vld [vmem:[#allocation11 + $0x60] sm:$0xff]
    %v672 = vld [vmem:[#allocation11 + $0x68] sm:$0xff]
    %v673 = vld [vmem:[#allocation11 + $0x70] sm:$0xff]
    %v674 = vld [vmem:[#allocation11 + $0x78] sm:$0xff]
    %v675 = vld [vmem:[#allocation11 + $0x80] sm:$0xff]
    %v676 = vld [vmem:[#allocation11 + $0x88] sm:$0xff]
    %v677 = vld [vmem:[#allocation11 + $0x90] sm:$0xff]
    %v678 = vld [vmem:[#allocation11 + $0x98] sm:$0xff]
    %v679 = vld [vmem:[#allocation11 + $0xa0] sm:$0xff]
    %v680 = vld [vmem:[#allocation11 + $0xa8] sm:$0xff]
    %v681 = vld [vmem:[#allocation11 + $0xb0] sm:$0xff]
    %v682 = vld [vmem:[#allocation11 + $0xb8] sm:$0xff]
    %v683 = vld [vmem:[#allocation11 + $0xc0] sm:$0xff]
    %v684 = vld [vmem:[#allocation11 + $0xc8] sm:$0xff]
    %v685 = vld [vmem:[#allocation11 + $0xd0] sm:$0xff]
    %v686 = vld [vmem:[#allocation11 + $0xd8] sm:$0xff]
    %v687 = vld [vmem:[#allocation11 + $0xe0] sm:$0xff]
    %v688 = vld [vmem:[#allocation11 + $0xe8] sm:$0xff]
    %v689 = vld [vmem:[#allocation11 + $0xf0] sm:$0xff]
    %v690 = vld [vmem:[#allocation11 + $0xf8] sm:$0xff]
    %v691 = vld [vmem:[#allocation11 + $0x100] sm:$0xff]
    %v692 = vld [vmem:[#allocation11 + $0x108] sm:$0xff]
    %v693 = vld [vmem:[#allocation11 + $0x110] sm:$0xff]
    %v694 = vld [vmem:[#allocation11 + $0x118] sm:$0xff]
    %v695 = vld [vmem:[#allocation11 + $0x120] sm:$0xff]
    %v696 = vld [vmem:[#allocation11 + $0x128] sm:$0xff]
    %v697 = vld [vmem:[#allocation11 + $0x130] sm:$0xff]
    %v698 = vld [vmem:[#allocation11 + $0x138] sm:$0xff]
    %v699 = vld [vmem:[#allocation11 + $0x140] sm:$0xff]
    %v700 = vld [vmem:[#allocation11 + $0x148] sm:$0xff]
    %v701 = vld [vmem:[#allocation11 + $0x150] sm:$0xff]
    %v702 = vld [vmem:[#allocation11 + $0x158] sm:$0xff]
    %v703 = vld [vmem:[#allocation11 + $0x160] sm:$0xff]
    %v704 = vld [vmem:[#allocation11 + $0x168] sm:$0xff]
    %v705 = vld [vmem:[#allocation11 + $0x170] sm:$0xff]
    %v706 = vld [vmem:[#allocation11 + $0x178] sm:$0xff]
    %v707 = vld [vmem:[#allocation11 + $0x180] sm:$0xff]
    %v708 = vld [vmem:[#allocation11 + $0x188] sm:$0xff]
    %v709 = vld [vmem:[#allocation11 + $0x190] sm:$0xff]
    %v710 = vld [vmem:[#allocation11 + $0x198] sm:$0xff]
    %v711 = vld [vmem:[#allocation11 + $0x1a0] sm:$0xff]
    %v712 = vld [vmem:[#allocation11 + $0x1a8] sm:$0xff]
    %v713 = vld [vmem:[#allocation11 + $0x1b0] sm:$0xff]
    %v714 = vld [vmem:[#allocation11 + $0x1b8] sm:$0xff]
    %v715 = vld [vmem:[#allocation11 + $0x1c0] sm:$0xff]
    %v716 = vld [vmem:[#allocation11 + $0x1c8] sm:$0xff]
    %v717 = vld [vmem:[#allocation11 + $0x1d0] sm:$0xff]
    %v718 = vld [vmem:[#allocation11 + $0x1d8] sm:$0xff]
    %v719 = vld [vmem:[#allocation11 + $0x1e0] sm:$0xff]
    %v720 = vld [vmem:[#allocation11 + $0x1e8] sm:$0xff]
    %v721 = vld [vmem:[#allocation11 + $0x1f0] sm:$0xff]
    %v722 = vld [vmem:[#allocation11 + $0x1f8] sm:$0xff]
    %723 = vmatprep.subr.mxu0 %v720
    %724 = vmatpush1.msra.mxu0 %v719
    %725 = vmatprep.subr.mxu0 %v716
    %726 = vmatpush1.msra.mxu0 %v715
    %727 = vmatprep.subr.mxu0 %v712
    %728 = vmatpush1.msra.mxu0 %v711
    %729 = vmatprep.subr.mxu0 %v708
    %730 = vmatpush1.msra.mxu0 %v707
    %731 = vmatprep.subr.mxu0 %v704
    %732 = vmatpush1.msra.mxu0 %v703
    %733 = vmatprep.subr.mxu0 %v700
    %734 = vmatpush1.msra.mxu0 %v699
    %735 = vmatprep.subr.mxu0 %v696
    %736 = vmatpush1.msra.mxu0 %v695
    %737 = vmatprep.subr.mxu0 %v692
    %738 = vmatpush1.msra.mxu0 %v691
    %739 = vmatprep.subr.mxu0 %v688
    %740 = vmatpush1.msra.mxu0 %v687
    %741 = vmatprep.subr.mxu0 %v684
    %742 = vmatpush1.msra.mxu0 %v683
    %743 = vmatprep.subr.mxu0 %v680
    %744 = vmatpush1.msra.mxu0 %v679
    %745 = vmatprep.subr.mxu0 %v676
    %746 = vmatpush1.msra.mxu0 %v675
    %747 = vmatprep.subr.mxu0 %v672
    %748 = vmatpush1.msra.mxu0 %v671
    %749 = vmatprep.subr.mxu0 %v668
    %750 = vmatpush1.msra.mxu0 %v667
    %751 = vmatprep.subr.mxu0 %v664
    %752 = vmatpush1.msra.mxu0 %v663
    %753 = vmatprep.subr.mxu0 %v660
    %754 = vmatpush1.msra.mxu0 %v659
    %755 = vmatprep.subr.mxu0 0.0
    %756 = vmatpush2.msra.mxu0 0.0
    %757 = vmatprep.subr.mxu0 0.0
    %758 = vmatpush2.msra.mxu0 0.0
    %759 = vmatprep.subr.mxu0 0.0
    %760 = vmatpush2.msra.mxu0 0.0
    %761 = vmatprep.subr.mxu0 0.0
    %762 = vmatpush2.msra.mxu0 0.0
    %763 = vmatprep.subr.mxu0 0.0
    %764 = vmatpush2.msra.mxu0 0.0
    %765 = vmatprep.subr.mxu0 0.0
    %766 = vmatpush2.msra.mxu0 0.0
    %767 = vmatprep.subr.mxu0 0.0
    %768 = vmatpush2.msra.mxu0 0.0
    %769 = vmatprep.subr.mxu0 0.0
    %770 = vmatpush2.msra.mxu0 0.0
    %771 = vmatprep.subr.mxu0 0.0
    %772 = vmatpush2.msra.mxu0 0.0
    %773 = vmatprep.subr.mxu0 0.0
    %774 = vmatpush2.msra.mxu0 0.0
    %775 = vmatprep.subr.mxu0 0.0
    %776 = vmatpush2.msra.mxu0 0.0
    %777 = vmatprep.subr.mxu0 0.0
    %778 = vmatpush2.msra.mxu0 0.0
    %779 = vmatprep.subr.mxu0 0.0
    %780 = vmatpush2.msra.mxu0 0.0
    %781 = vmatprep.subr.mxu0 0.0
    %782 = vmatpush2.msra.mxu0 0.0
    %783 = vmatprep.subr.mxu0 0.0
    %784 = vmatpush2.msra.mxu0 0.0
    %785 = vmatprep.subr.mxu0 0.0
    %786 = vmatpush2.msra.mxu0 0.0
    %787 = vmatprep.mubr.f32.mxu0 0.0
    %788 = vmatmul.mubr.f32.gmra.mxu0 %v655
    %v789 = vpop.f32.mrf.mxu0
    %v790 = vadd.f32 0.0, %v789
    %v791 = vpop.f32.mrf.mxu0
    %v792 = vadd.f32 0.0, %v791
    %793 = vdwg.mxu0
    %794 = vmatprep.subr.mxu0 %v722
    %795 = vmatpush1.msra.mxu0 %v721
    %796 = vmatprep.subr.mxu0 %v718
    %797 = vmatpush1.msra.mxu0 %v717
    %798 = vmatprep.subr.mxu0 %v714
    %799 = vmatpush1.msra.mxu0 %v713
    %800 = vmatprep.subr.mxu0 %v710
    %801 = vmatpush1.msra.mxu0 %v709
    %802 = vmatprep.subr.mxu0 %v706
    %803 = vmatpush1.msra.mxu0 %v705
    %804 = vmatprep.subr.mxu0 %v702
    %805 = vmatpush1.msra.mxu0 %v701
    %806 = vmatprep.subr.mxu0 %v698
    %807 = vmatpush1.msra.mxu0 %v697
    %808 = vmatprep.subr.mxu0 %v694
    %809 = vmatpush1.msra.mxu0 %v693
    %810 = vmatprep.subr.mxu0 %v690
    %811 = vmatpush1.msra.mxu0 %v689
    %812 = vmatprep.subr.mxu0 %v686
    %813 = vmatpush1.msra.mxu0 %v685
    %814 = vmatprep.subr.mxu0 %v682
    %815 = vmatpush1.msra.mxu0 %v681
    %816 = vmatprep.subr.mxu0 %v678
    %817 = vmatpush1.msra.mxu0 %v677
    %818 = vmatprep.subr.mxu0 %v674
    %819 = vmatpush1.msra.mxu0 %v673
    %820 = vmatprep.subr.mxu0 %v670
    %821 = vmatpush1.msra.mxu0 %v669
    %822 = vmatprep.subr.mxu0 %v666
    %823 = vmatpush1.msra.mxu0 %v665
    %824 = vmatprep.subr.mxu0 %v662
    %825 = vmatpush1.msra.mxu0 %v661
    %826 = vmatprep.subr.mxu0 0.0
    %827 = vmatpush2.msra.mxu0 0.0
    %828 = vmatprep.subr.mxu0 0.0
    %829 = vmatpush2.msra.mxu0 0.0
    %830 = vmatprep.subr.mxu0 0.0
    %831 = vmatpush2.msra.mxu0 0.0
    %832 = vmatprep.subr.mxu0 0.0
    %833 = vmatpush2.msra.mxu0 0.0
    %834 = vmatprep.subr.mxu0 0.0
    %835 = vmatpush2.msra.mxu0 0.0
    %836 = vmatprep.subr.mxu0 0.0
    %837 = vmatpush2.msra.mxu0 0.0
    %838 = vmatprep.subr.mxu0 0.0
    %839 = vmatpush2.msra.mxu0 0.0
    %840 = vmatprep.subr.mxu0 0.0
    %841 = vmatpush2.msra.mxu0 0.0
    %842 = vmatprep.subr.mxu0 0.0
    %843 = vmatpush2.msra.mxu0 0.0
    %844 = vmatprep.subr.mxu0 0.0
    %845 = vmatpush2.msra.mxu0 0.0
    %846 = vmatprep.subr.mxu0 0.0
    %847 = vmatpush2.msra.mxu0 0.0
    %848 = vmatprep.subr.mxu0 0.0
    %849 = vmatpush2.msra.mxu0 0.0
    %850 = vmatprep.subr.mxu0 0.0
    %851 = vmatpush2.msra.mxu0 0.0
    %852 = vmatprep.subr.mxu0 0.0
    %853 = vmatpush2.msra.mxu0 0.0
    %854 = vmatprep.subr.mxu0 0.0
    %855 = vmatpush2.msra.mxu0 0.0
    %856 = vmatprep.subr.mxu0 0.0
    %857 = vmatpush2.msra.mxu0 0.0
    %858 = vmatprep.mubr.f32.mxu0 0.0
    %859 = vmatmul.mubr.f32.gmra.mxu0 %v655
    %v860 = vpop.f32.mrf.mxu0
    %v861 = vadd.f32 0.0, %v860
    %v862 = vpop.f32.mrf.mxu0
    %v863 = vadd.f32 0.0, %v862
    %864 = vdwg.mxu0
    %v869 = vcombine.low %v790, %v792
    %v870 = vcombine.low %v861, %v863
    %v872 = vunpack.c.l.s4 1983009808
    %v873 = vunpack.c.0.s8 %v872
    %v874 = vlaneseq
    %v875 = vshrl.u32 %v874, 7
    %v876 = vsub.s32 %v873, %v875
    %v877 = vrot.slane %v869, %v876
    %v879 = vunpack.c.l.s4 1983009808
    %v880 = vunpack.c.0.s8 %v879
    %v881 = vlaneseq
    %v882 = vshrl.u32 %v881, 7
    %v883 = vsub.s32 %v880, %v882
    %v884 = vrot.slane %v870, %v883
    %v885 = vcombine.low %v877, %v884
    %v887 = vadd.f32 %v658, %v885
    %v888 = vxor.u32 %v887, 2147483648
    %v889 = vmul.f32 %v888, 1.442695
    %v890 = vpow.pop %v889
    %v891 = vadd.f32 %v890, 1.0
    %v892 = vrcp.pop %v891
    %v893 = vmul.f32 1.0, %v892
    %v895 = vrot.slane %v887, 2
    %v897 = vxor.u32 %v895, 2147483648
    %v898 = vmul.f32 %v897, 1.442695
    %v899 = vpow.pop %v898
    %v900 = vadd.f32 %v899, 1.0
    %v901 = vrcp.pop %v900
    %v902 = vmul.f32 1.0, %v901
    %v903 = vrot.slane %v887, 4
    %v905 = vtanh.pop %v903
    %v906 = vrot.slane %v887, 6
    %v908 = vxor.u32 %v906, 2147483648
    %v909 = vmul.f32 %v908, 1.442695
    %v910 = vpow.pop %v909
    %v911 = vadd.f32 %v910, 1.0
    %v912 = vrcp.pop %v911
    %v913 = vmul.f32 1.0, %v912
    %v914 = vmul.f32 %v902, %v656
    %v915 = vmul.f32 %v893, %v905
    %v916 = vadd.f32 %v914, %v915
    %v917 = vtanh.pop %v916
    %v918 = vmul.f32 %v913, %v917
    %s919 = sadd.s32 %s97, 1
    %v920 = vstv %s919
    %vm921 = vcmp.lt.s32.totalorder %v920, %v96
    %v922 = vsel %vm921, 1, 0
    %923 = vset.pattern.permute.xlu0 0
    %924 = vperm.xlu0 %923, %v922
    %v925 = vpop.permute.xlu0 %924
    %vm926 = vcmp.eq.s32.totalorder %v925, 1
    %v927 = vsel %vm926, %v916, %v656
    %928 = vst [vmem:[#allocation3] sm:$0x3] %v927
    %v929 = vsel %vm926, %v918, %v655
    %930 = vst [vmem:[#allocation2] sm:$0x3] %v929
    %v931 = vsel %vm926, %v918, 0.0
    %s932 = scalar_lea.vmem [#allocation14], 2
    %933 = vst [vmem:[%s932] sm:$0x3] %v931
    %v934 = vld [vmem:[#allocation4] sm:$0x3]
    %v935 = vld [vmem:[#allocation5] sm:$0x3]
    %s936 = scalar_lea.vmem [#allocation9], 48
    %v937 = vld [vmem:[%s936] sm:$0xff]
    %v938 = vld [vmem:[#allocation12] sm:$0xff]
    %v939 = vld [vmem:[#allocation12 + $0x8] sm:$0xff]
    %v940 = vld [vmem:[#allocation12 + $0x10] sm:$0xff]
    %v941 = vld [vmem:[#allocation12 + $0x18] sm:$0xff]
    %v942 = vld [vmem:[#allocation12 + $0x20] sm:$0xff]
    %v943 = vld [vmem:[#allocation12 + $0x28] sm:$0xff]
    %v944 = vld [vmem:[#allocation12 + $0x30] sm:$0xff]
    %v945 = vld [vmem:[#allocation12 + $0x38] sm:$0xff]
    %v946 = vld [vmem:[#allocation12 + $0x40] sm:$0xff]
    %v947 = vld [vmem:[#allocation12 + $0x48] sm:$0xff]
    %v948 = vld [vmem:[#allocation12 + $0x50] sm:$0xff]
    %v949 = vld [vmem:[#allocation12 + $0x58] sm:$0xff]
    %v950 = vld [vmem:[#allocation12 + $0x60] sm:$0xff]
    %v951 = vld [vmem:[#allocation12 + $0x68] sm:$0xff]
    %v952 = vld [vmem:[#allocation12 + $0x70] sm:$0xff]
    %v953 = vld [vmem:[#allocation12 + $0x78] sm:$0xff]
    %v954 = vld [vmem:[#allocation12 + $0x80] sm:$0xff]
    %v955 = vld [vmem:[#allocation12 + $0x88] sm:$0xff]
    %v956 = vld [vmem:[#allocation12 + $0x90] sm:$0xff]
    %v957 = vld [vmem:[#allocation12 + $0x98] sm:$0xff]
    %v958 = vld [vmem:[#allocation12 + $0xa0] sm:$0xff]
    %v959 = vld [vmem:[#allocation12 + $0xa8] sm:$0xff]
    %v960 = vld [vmem:[#allocation12 + $0xb0] sm:$0xff]
    %v961 = vld [vmem:[#allocation12 + $0xb8] sm:$0xff]
    %v962 = vld [vmem:[#allocation12 + $0xc0] sm:$0xff]
    %v963 = vld [vmem:[#allocation12 + $0xc8] sm:$0xff]
    %v964 = vld [vmem:[#allocation12 + $0xd0] sm:$0xff]
    %v965 = vld [vmem:[#allocation12 + $0xd8] sm:$0xff]
    %v966 = vld [vmem:[#allocation12 + $0xe0] sm:$0xff]
    %v967 = vld [vmem:[#allocation12 + $0xe8] sm:$0xff]
    %v968 = vld [vmem:[#allocation12 + $0xf0] sm:$0xff]
    %v969 = vld [vmem:[#allocation12 + $0xf8] sm:$0xff]
    %v970 = vld [vmem:[#allocation12 + $0x100] sm:$0xff]
    %v971 = vld [vmem:[#allocation12 + $0x108] sm:$0xff]
    %v972 = vld [vmem:[#allocation12 + $0x110] sm:$0xff]
    %v973 = vld [vmem:[#allocation12 + $0x118] sm:$0xff]
    %v974 = vld [vmem:[#allocation12 + $0x120] sm:$0xff]
    %v975 = vld [vmem:[#allocation12 + $0x128] sm:$0xff]
    %v976 = vld [vmem:[#allocation12 + $0x130] sm:$0xff]
    %v977 = vld [vmem:[#allocation12 + $0x138] sm:$0xff]
    %v978 = vld [vmem:[#allocation12 + $0x140] sm:$0xff]
    %v979 = vld [vmem:[#allocation12 + $0x148] sm:$0xff]
    %v980 = vld [vmem:[#allocation12 + $0x150] sm:$0xff]
    %v981 = vld [vmem:[#allocation12 + $0x158] sm:$0xff]
    %v982 = vld [vmem:[#allocation12 + $0x160] sm:$0xff]
    %v983 = vld [vmem:[#allocation12 + $0x168] sm:$0xff]
    %v984 = vld [vmem:[#allocation12 + $0x170] sm:$0xff]
    %v985 = vld [vmem:[#allocation12 + $0x178] sm:$0xff]
    %v986 = vld [vmem:[#allocation12 + $0x180] sm:$0xff]
    %v987 = vld [vmem:[#allocation12 + $0x188] sm:$0xff]
    %v988 = vld [vmem:[#allocation12 + $0x190] sm:$0xff]
    %v989 = vld [vmem:[#allocation12 + $0x198] sm:$0xff]
    %v990 = vld [vmem:[#allocation12 + $0x1a0] sm:$0xff]
    %v991 = vld [vmem:[#allocation12 + $0x1a8] sm:$0xff]
    %v992 = vld [vmem:[#allocation12 + $0x1b0] sm:$0xff]
    %v993 = vld [vmem:[#allocation12 + $0x1b8] sm:$0xff]
    %v994 = vld [vmem:[#allocation12 + $0x1c0] sm:$0xff]
    %v995 = vld [vmem:[#allocation12 + $0x1c8] sm:$0xff]
    %v996 = vld [vmem:[#allocation12 + $0x1d0] sm:$0xff]
    %v997 = vld [vmem:[#allocation12 + $0x1d8] sm:$0xff]
    %v998 = vld [vmem:[#allocation12 + $0x1e0] sm:$0xff]
    %v999 = vld [vmem:[#allocation12 + $0x1e8] sm:$0xff]
    %v1000 = vld [vmem:[#allocation12 + $0x1f0] sm:$0xff]
    %v1001 = vld [vmem:[#allocation12 + $0x1f8] sm:$0xff]
    %1002 = vmatprep.subr.mxu0 %v999
    %1003 = vmatpush1.msra.mxu0 %v998
    %1004 = vmatprep.subr.mxu0 %v995
    %1005 = vmatpush1.msra.mxu0 %v994
    %1006 = vmatprep.subr.mxu0 %v991
    %1007 = vmatpush1.msra.mxu0 %v990
    %1008 = vmatprep.subr.mxu0 %v987
    %1009 = vmatpush1.msra.mxu0 %v986
    %1010 = vmatprep.subr.mxu0 %v983
    %1011 = vmatpush1.msra.mxu0 %v982
    %1012 = vmatprep.subr.mxu0 %v979
    %1013 = vmatpush1.msra.mxu0 %v978
    %1014 = vmatprep.subr.mxu0 %v975
    %1015 = vmatpush1.msra.mxu0 %v974
    %1016 = vmatprep.subr.mxu0 %v971
    %1017 = vmatpush1.msra.mxu0 %v970
    %1018 = vmatprep.subr.mxu0 %v967
    %1019 = vmatpush1.msra.mxu0 %v966
    %1020 = vmatprep.subr.mxu0 %v963
    %1021 = vmatpush1.msra.mxu0 %v962
    %1022 = vmatprep.subr.mxu0 %v959
    %1023 = vmatpush1.msra.mxu0 %v958
    %1024 = vmatprep.subr.mxu0 %v955
    %1025 = vmatpush1.msra.mxu0 %v954
    %1026 = vmatprep.subr.mxu0 %v951
    %1027 = vmatpush1.msra.mxu0 %v950
    %1028 = vmatprep.subr.mxu0 %v947
    %1029 = vmatpush1.msra.mxu0 %v946
    %1030 = vmatprep.subr.mxu0 %v943
    %1031 = vmatpush1.msra.mxu0 %v942
    %1032 = vmatprep.subr.mxu0 %v939
    %1033 = vmatpush1.msra.mxu0 %v938
    %1034 = vmatprep.subr.mxu0 0.0
    %1035 = vmatpush2.msra.mxu0 0.0
    %1036 = vmatprep.subr.mxu0 0.0
    %1037 = vmatpush2.msra.mxu0 0.0
    %1038 = vmatprep.subr.mxu0 0.0
    %1039 = vmatpush2.msra.mxu0 0.0
    %1040 = vmatprep.subr.mxu0 0.0
    %1041 = vmatpush2.msra.mxu0 0.0
    %1042 = vmatprep.subr.mxu0 0.0
    %1043 = vmatpush2.msra.mxu0 0.0
    %1044 = vmatprep.subr.mxu0 0.0
    %1045 = vmatpush2.msra.mxu0 0.0
    %1046 = vmatprep.subr.mxu0 0.0
    %1047 = vmatpush2.msra.mxu0 0.0
    %1048 = vmatprep.subr.mxu0 0.0
    %1049 = vmatpush2.msra.mxu0 0.0
    %1050 = vmatprep.subr.mxu0 0.0
    %1051 = vmatpush2.msra.mxu0 0.0
    %1052 = vmatprep.subr.mxu0 0.0
    %1053 = vmatpush2.msra.mxu0 0.0
    %1054 = vmatprep.subr.mxu0 0.0
    %1055 = vmatpush2.msra.mxu0 0.0
    %1056 = vmatprep.subr.mxu0 0.0
    %1057 = vmatpush2.msra.mxu0 0.0
    %1058 = vmatprep.subr.mxu0 0.0
    %1059 = vmatpush2.msra.mxu0 0.0
    %1060 = vmatprep.subr.mxu0 0.0
    %1061 = vmatpush2.msra.mxu0 0.0
    %1062 = vmatprep.subr.mxu0 0.0
    %1063 = vmatpush2.msra.mxu0 0.0
    %1064 = vmatprep.subr.mxu0 0.0
    %1065 = vmatpush2.msra.mxu0 0.0
    %1066 = vmatprep.mubr.f32.mxu0 0.0
    %1067 = vmatmul.mubr.f32.gmra.mxu0 %v934
    %v1068 = vpop.f32.mrf.mxu0
    %v1069 = vadd.f32 0.0, %v1068
    %v1070 = vpop.f32.mrf.mxu0
    %v1071 = vadd.f32 0.0, %v1070
    %1072 = vdwg.mxu0
    %1073 = vmatprep.subr.mxu0 %v1001
    %1074 = vmatpush1.msra.mxu0 %v1000
    %1075 = vmatprep.subr.mxu0 %v997
    %1076 = vmatpush1.msra.mxu0 %v996
    %1077 = vmatprep.subr.mxu0 %v993
    %1078 = vmatpush1.msra.mxu0 %v992
    %1079 = vmatprep.subr.mxu0 %v989
    %1080 = vmatpush1.msra.mxu0 %v988
    %1081 = vmatprep.subr.mxu0 %v985
    %1082 = vmatpush1.msra.mxu0 %v984
    %1083 = vmatprep.subr.mxu0 %v981
    %1084 = vmatpush1.msra.mxu0 %v980
    %1085 = vmatprep.subr.mxu0 %v977
    %1086 = vmatpush1.msra.mxu0 %v976
    %1087 = vmatprep.subr.mxu0 %v973
    %1088 = vmatpush1.msra.mxu0 %v972
    %1089 = vmatprep.subr.mxu0 %v969
    %1090 = vmatpush1.msra.mxu0 %v968
    %1091 = vmatprep.subr.mxu0 %v965
    %1092 = vmatpush1.msra.mxu0 %v964
    %1093 = vmatprep.subr.mxu0 %v961
    %1094 = vmatpush1.msra.mxu0 %v960
    %1095 = vmatprep.subr.mxu0 %v957
    %1096 = vmatpush1.msra.mxu0 %v956
    %1097 = vmatprep.subr.mxu0 %v953
    %1098 = vmatpush1.msra.mxu0 %v952
    %1099 = vmatprep.subr.mxu0 %v949
    %1100 = vmatpush1.msra.mxu0 %v948
    %1101 = vmatprep.subr.mxu0 %v945
    %1102 = vmatpush1.msra.mxu0 %v944
    %1103 = vmatprep.subr.mxu0 %v941
    %1104 = vmatpush1.msra.mxu0 %v940
    %1105 = vmatprep.subr.mxu0 0.0
    %1106 = vmatpush2.msra.mxu0 0.0
    %1107 = vmatprep.subr.mxu0 0.0
    %1108 = vmatpush2.msra.mxu0 0.0
    %1109 = vmatprep.subr.mxu0 0.0
    %1110 = vmatpush2.msra.mxu0 0.0
    %1111 = vmatprep.subr.mxu0 0.0
    %1112 = vmatpush2.msra.mxu0 0.0
    %1113 = vmatprep.subr.mxu0 0.0
    %1114 = vmatpush2.msra.mxu0 0.0
    %1115 = vmatprep.subr.mxu0 0.0
    %1116 = vmatpush2.msra.mxu0 0.0
    %1117 = vmatprep.subr.mxu0 0.0
    %1118 = vmatpush2.msra.mxu0 0.0
    %1119 = vmatprep.subr.mxu0 0.0
    %1120 = vmatpush2.msra.mxu0 0.0
    %1121 = vmatprep.subr.mxu0 0.0
    %1122 = vmatpush2.msra.mxu0 0.0
    %1123 = vmatprep.subr.mxu0 0.0
    %1124 = vmatpush2.msra.mxu0 0.0
    %1125 = vmatprep.subr.mxu0 0.0
    %1126 = vmatpush2.msra.mxu0 0.0
    %1127 = vmatprep.subr.mxu0 0.0
    %1128 = vmatpush2.msra.mxu0 0.0
    %1129 = vmatprep.subr.mxu0 0.0
    %1130 = vmatpush2.msra.mxu0 0.0
    %1131 = vmatprep.subr.mxu0 0.0
    %1132 = vmatpush2.msra.mxu0 0.0
    %1133 = vmatprep.subr.mxu0 0.0
    %1134 = vmatpush2.msra.mxu0 0.0
    %1135 = vmatprep.subr.mxu0 0.0
    %1136 = vmatpush2.msra.mxu0 0.0
    %1137 = vmatprep.mubr.f32.mxu0 0.0
    %1138 = vmatmul.mubr.f32.gmra.mxu0 %v934
    %v1139 = vpop.f32.mrf.mxu0
    %v1140 = vadd.f32 0.0, %v1139
    %v1141 = vpop.f32.mrf.mxu0
    %v1142 = vadd.f32 0.0, %v1141
    %1143 = vdwg.mxu0
    %v1148 = vcombine.low %v1069, %v1071
    %v1149 = vcombine.low %v1140, %v1142
    %v1151 = vunpack.c.l.s4 1983009808
    %v1152 = vunpack.c.0.s8 %v1151
    %v1153 = vlaneseq
    %v1154 = vshrl.u32 %v1153, 7
    %v1155 = vsub.s32 %v1152, %v1154
    %v1156 = vrot.slane %v1148, %v1155
    %v1158 = vunpack.c.l.s4 1983009808
    %v1159 = vunpack.c.0.s8 %v1158
    %v1160 = vlaneseq
    %v1161 = vshrl.u32 %v1160, 7
    %v1162 = vsub.s32 %v1159, %v1161
    %v1163 = vrot.slane %v1149, %v1162
    %v1164 = vcombine.low %v1156, %v1163
    %v1166 = vadd.f32 %v937, %v1164
    %v1167 = vxor.u32 %v1166, 2147483648
    %v1168 = vmul.f32 %v1167, 1.442695
    %v1169 = vpow.pop %v1168
    %v1170 = vadd.f32 %v1169, 1.0
    %v1171 = vrcp.pop %v1170
    %v1172 = vmul.f32 1.0, %v1171
    %v1174 = vrot.slane %v1166, 2
    %v1176 = vxor.u32 %v1174, 2147483648
    %v1177 = vmul.f32 %v1176, 1.442695
    %v1178 = vpow.pop %v1177
    %v1179 = vadd.f32 %v1178, 1.0
    %v1180 = vrcp.pop %v1179
    %v1181 = vmul.f32 1.0, %v1180
    %v1182 = vrot.slane %v1166, 4
    %v1184 = vtanh.pop %v1182
    %v1185 = vrot.slane %v1166, 6
    %v1187 = vxor.u32 %v1185, 2147483648
    %v1188 = vmul.f32 %v1187, 1.442695
    %v1189 = vpow.pop %v1188
    %v1190 = vadd.f32 %v1189, 1.0
    %v1191 = vrcp.pop %v1190
    %v1192 = vmul.f32 1.0, %v1191
    %v1193 = vmul.f32 %v1181, %v935
    %v1194 = vmul.f32 %v1172, %v1184
    %v1195 = vadd.f32 %v1193, %v1194
    %v1196 = vtanh.pop %v1195
    %v1197 = vmul.f32 %v1192, %v1196
    %s1198 = sadd.s32 %s99, 6
    %v1199 = vstv %s1198
    %vm1200 = vcmp.lt.s32.totalorder %v1199, %v96
    %v1201 = vsel %vm1200, 1, 0
    %1202 = vset.pattern.permute.xlu0 0
    %1203 = vperm.xlu0 %1202, %v1201
    %v1204 = vpop.permute.xlu0 %1203
    %vm1205 = vcmp.eq.s32.totalorder %v1204, 1
    %v1206 = vsel %vm1205, %v1195, %v935
    %1207 = vst [vmem:[#allocation5] sm:$0x3] %v1206
    %v1208 = vsel %vm1205, %v1197, %v934
    %1209 = vst [vmem:[#allocation4] sm:$0x3] %v1208
    %v1210 = vsel %vm1205, %v1197, 0.0
    %s1211 = scalar_lea.vmem [#allocation15], 12
    %1212 = vst [vmem:[%s1211] sm:$0x3] %v1210
    %v1213 = vld [vmem:[#allocation2] sm:$0x3]
    %v1214 = vld [vmem:[#allocation3] sm:$0x3]
    %s1215 = scalar_lea.vmem [#allocation6], 16
    %v1216 = vld [vmem:[%s1215] sm:$0xff]
    %v1217 = vld [vmem:[#allocation11] sm:$0xff]
    %v1218 = vld [vmem:[#allocation11 + $0x8] sm:$0xff]
    %v1219 = vld [vmem:[#allocation11 + $0x10] sm:$0xff]
    %v1220 = vld [vmem:[#allocation11 + $0x18] sm:$0xff]
    %v1221 = vld [vmem:[#allocation11 + $0x20] sm:$0xff]
    %v1222 = vld [vmem:[#allocation11 + $0x28] sm:$0xff]
    %v1223 = vld [vmem:[#allocation11 + $0x30] sm:$0xff]
    %v1224 = vld [vmem:[#allocation11 + $0x38] sm:$0xff]
    %v1225 = vld [vmem:[#allocation11 + $0x40] sm:$0xff]
    %v1226 = vld [vmem:[#allocation11 + $0x48] sm:$0xff]
    %v1227 = vld [vmem:[#allocation11 + $0x50] sm:$0xff]
    %v1228 = vld [vmem:[#allocation11 + $0x58] sm:$0xff]
    %v1229 = vld [vmem:[#allocation11 + $0x60] sm:$0xff]
    %v1230 = vld [vmem:[#allocation11 + $0x68] sm:$0xff]
    %v1231 = vld [vmem:[#allocation11 + $0x70] sm:$0xff]
    %v1232 = vld [vmem:[#allocation11 + $0x78] sm:$0xff]
    %v1233 = vld [vmem:[#allocation11 + $0x80] sm:$0xff]
    %v1234 = vld [vmem:[#allocation11 + $0x88] sm:$0xff]
    %v1235 = vld [vmem:[#allocation11 + $0x90] sm:$0xff]
    %v1236 = vld [vmem:[#allocation11 + $0x98] sm:$0xff]
    %v1237 = vld [vmem:[#allocation11 + $0xa0] sm:$0xff]
    %v1238 = vld [vmem:[#allocation11 + $0xa8] sm:$0xff]
    %v1239 = vld [vmem:[#allocation11 + $0xb0] sm:$0xff]
    %v1240 = vld [vmem:[#allocation11 + $0xb8] sm:$0xff]
    %v1241 = vld [vmem:[#allocation11 + $0xc0] sm:$0xff]
    %v1242 = vld [vmem:[#allocation11 + $0xc8] sm:$0xff]
    %v1243 = vld [vmem:[#allocation11 + $0xd0] sm:$0xff]
    %v1244 = vld [vmem:[#allocation11 + $0xd8] sm:$0xff]
    %v1245 = vld [vmem:[#allocation11 + $0xe0] sm:$0xff]
    %v1246 = vld [vmem:[#allocation11 + $0xe8] sm:$0xff]
    %v1247 = vld [vmem:[#allocation11 + $0xf0] sm:$0xff]
    %v1248 = vld [vmem:[#allocation11 + $0xf8] sm:$0xff]
    %v1249 = vld [vmem:[#allocation11 + $0x100] sm:$0xff]
    %v1250 = vld [vmem:[#allocation11 + $0x108] sm:$0xff]
    %v1251 = vld [vmem:[#allocation11 + $0x110] sm:$0xff]
    %v1252 = vld [vmem:[#allocation11 + $0x118] sm:$0xff]
    %v1253 = vld [vmem:[#allocation11 + $0x120] sm:$0xff]
    %v1254 = vld [vmem:[#allocation11 + $0x128] sm:$0xff]
    %v1255 = vld [vmem:[#allocation11 + $0x130] sm:$0xff]
    %v1256 = vld [vmem:[#allocation11 + $0x138] sm:$0xff]
    %v1257 = vld [vmem:[#allocation11 + $0x140] sm:$0xff]
    %v1258 = vld [vmem:[#allocation11 + $0x148] sm:$0xff]
    %v1259 = vld [vmem:[#allocation11 + $0x150] sm:$0xff]
    %v1260 = vld [vmem:[#allocation11 + $0x158] sm:$0xff]
    %v1261 = vld [vmem:[#allocation11 + $0x160] sm:$0xff]
    %v1262 = vld [vmem:[#allocation11 + $0x168] sm:$0xff]
    %v1263 = vld [vmem:[#allocation11 + $0x170] sm:$0xff]
    %v1264 = vld [vmem:[#allocation11 + $0x178] sm:$0xff]
    %v1265 = vld [vmem:[#allocation11 + $0x180] sm:$0xff]
    %v1266 = vld [vmem:[#allocation11 + $0x188] sm:$0xff]
    %v1267 = vld [vmem:[#allocation11 + $0x190] sm:$0xff]
    %v1268 = vld [vmem:[#allocation11 + $0x198] sm:$0xff]
    %v1269 = vld [vmem:[#allocation11 + $0x1a0] sm:$0xff]
    %v1270 = vld [vmem:[#allocation11 + $0x1a8] sm:$0xff]
    %v1271 = vld [vmem:[#allocation11 + $0x1b0] sm:$0xff]
    %v1272 = vld [vmem:[#allocation11 + $0x1b8] sm:$0xff]
    %v1273 = vld [vmem:[#allocation11 + $0x1c0] sm:$0xff]
    %v1274 = vld [vmem:[#allocation11 + $0x1c8] sm:$0xff]
    %v1275 = vld [vmem:[#allocation11 + $0x1d0] sm:$0xff]
    %v1276 = vld [vmem:[#allocation11 + $0x1d8] sm:$0xff]
    %v1277 = vld [vmem:[#allocation11 + $0x1e0] sm:$0xff]
    %v1278 = vld [vmem:[#allocation11 + $0x1e8] sm:$0xff]
    %v1279 = vld [vmem:[#allocation11 + $0x1f0] sm:$0xff]
    %v1280 = vld [vmem:[#allocation11 + $0x1f8] sm:$0xff]
    %1281 = vmatprep.subr.mxu0 %v1278
    %1282 = vmatpush1.msra.mxu0 %v1277
    %1283 = vmatprep.subr.mxu0 %v1274
    %1284 = vmatpush1.msra.mxu0 %v1273
    %1285 = vmatprep.subr.mxu0 %v1270
    %1286 = vmatpush1.msra.mxu0 %v1269
    %1287 = vmatprep.subr.mxu0 %v1266
    %1288 = vmatpush1.msra.mxu0 %v1265
    %1289 = vmatprep.subr.mxu0 %v1262
    %1290 = vmatpush1.msra.mxu0 %v1261
    %1291 = vmatprep.subr.mxu0 %v1258
    %1292 = vmatpush1.msra.mxu0 %v1257
    %1293 = vmatprep.subr.mxu0 %v1254
    %1294 = vmatpush1.msra.mxu0 %v1253
    %1295 = vmatprep.subr.mxu0 %v1250
    %1296 = vmatpush1.msra.mxu0 %v1249
    %1297 = vmatprep.subr.mxu0 %v1246
    %1298 = vmatpush1.msra.mxu0 %v1245
    %1299 = vmatprep.subr.mxu0 %v1242
    %1300 = vmatpush1.msra.mxu0 %v1241
    %1301 = vmatprep.subr.mxu0 %v1238
    %1302 = vmatpush1.msra.mxu0 %v1237
    %1303 = vmatprep.subr.mxu0 %v1234
    %1304 = vmatpush1.msra.mxu0 %v1233
    %1305 = vmatprep.subr.mxu0 %v1230
    %1306 = vmatpush1.msra.mxu0 %v1229
    %1307 = vmatprep.subr.mxu0 %v1226
    %1308 = vmatpush1.msra.mxu0 %v1225
    %1309 = vmatprep.subr.mxu0 %v1222
    %1310 = vmatpush1.msra.mxu0 %v1221
    %1311 = vmatprep.subr.mxu0 %v1218
    %1312 = vmatpush1.msra.mxu0 %v1217
    %1313 = vmatprep.subr.mxu0 0.0
    %1314 = vmatpush2.msra.mxu0 0.0
    %1315 = vmatprep.subr.mxu0 0.0
    %1316 = vmatpush2.msra.mxu0 0.0
    %1317 = vmatprep.subr.mxu0 0.0
    %1318 = vmatpush2.msra.mxu0 0.0
    %1319 = vmatprep.subr.mxu0 0.0
    %1320 = vmatpush2.msra.mxu0 0.0
    %1321 = vmatprep.subr.mxu0 0.0
    %1322 = vmatpush2.msra.mxu0 0.0
    %1323 = vmatprep.subr.mxu0 0.0
    %1324 = vmatpush2.msra.mxu0 0.0
    %1325 = vmatprep.subr.mxu0 0.0
    %1326 = vmatpush2.msra.mxu0 0.0
    %1327 = vmatprep.subr.mxu0 0.0
    %1328 = vmatpush2.msra.mxu0 0.0
    %1329 = vmatprep.subr.mxu0 0.0
    %1330 = vmatpush2.msra.mxu0 0.0
    %1331 = vmatprep.subr.mxu0 0.0
    %1332 = vmatpush2.msra.mxu0 0.0
    %1333 = vmatprep.subr.mxu0 0.0
    %1334 = vmatpush2.msra.mxu0 0.0
    %1335 = vmatprep.subr.mxu0 0.0
    %1336 = vmatpush2.msra.mxu0 0.0
    %1337 = vmatprep.subr.mxu0 0.0
    %1338 = vmatpush2.msra.mxu0 0.0
    %1339 = vmatprep.subr.mxu0 0.0
    %1340 = vmatpush2.msra.mxu0 0.0
    %1341 = vmatprep.subr.mxu0 0.0
    %1342 = vmatpush2.msra.mxu0 0.0
    %1343 = vmatprep.subr.mxu0 0.0
    %1344 = vmatpush2.msra.mxu0 0.0
    %1345 = vmatprep.mubr.f32.mxu0 0.0
    %1346 = vmatmul.mubr.f32.gmra.mxu0 %v1213
    %v1347 = vpop.f32.mrf.mxu0
    %v1348 = vadd.f32 0.0, %v1347
    %v1349 = vpop.f32.mrf.mxu0
    %v1350 = vadd.f32 0.0, %v1349
    %1351 = vdwg.mxu0
    %1352 = vmatprep.subr.mxu0 %v1280
    %1353 = vmatpush1.msra.mxu0 %v1279
    %1354 = vmatprep.subr.mxu0 %v1276
    %1355 = vmatpush1.msra.mxu0 %v1275
    %1356 = vmatprep.subr.mxu0 %v1272
    %1357 = vmatpush1.msra.mxu0 %v1271
    %1358 = vmatprep.subr.mxu0 %v1268
    %1359 = vmatpush1.msra.mxu0 %v1267
    %1360 = vmatprep.subr.mxu0 %v1264
    %1361 = vmatpush1.msra.mxu0 %v1263
    %1362 = vmatprep.subr.mxu0 %v1260
    %1363 = vmatpush1.msra.mxu0 %v1259
    %1364 = vmatprep.subr.mxu0 %v1256
    %1365 = vmatpush1.msra.mxu0 %v1255
    %1366 = vmatprep.subr.mxu0 %v1252
    %1367 = vmatpush1.msra.mxu0 %v1251
    %1368 = vmatprep.subr.mxu0 %v1248
    %1369 = vmatpush1.msra.mxu0 %v1247
    %1370 = vmatprep.subr.mxu0 %v1244
    %1371 = vmatpush1.msra.mxu0 %v1243
    %1372 = vmatprep.subr.mxu0 %v1240
    %1373 = vmatpush1.msra.mxu0 %v1239
    %1374 = vmatprep.subr.mxu0 %v1236
    %1375 = vmatpush1.msra.mxu0 %v1235
    %1376 = vmatprep.subr.mxu0 %v1232
    %1377 = vmatpush1.msra.mxu0 %v1231
    %1378 = vmatprep.subr.mxu0 %v1228
    %1379 = vmatpush1.msra.mxu0 %v1227
    %1380 = vmatprep.subr.mxu0 %v1224
    %1381 = vmatpush1.msra.mxu0 %v1223
    %1382 = vmatprep.subr.mxu0 %v1220
    %1383 = vmatpush1.msra.mxu0 %v1219
    %1384 = vmatprep.subr.mxu0 0.0
    %1385 = vmatpush2.msra.mxu0 0.0
    %1386 = vmatprep.subr.mxu0 0.0
    %1387 = vmatpush2.msra.mxu0 0.0
    %1388 = vmatprep.subr.mxu0 0.0
    %1389 = vmatpush2.msra.mxu0 0.0
    %1390 = vmatprep.subr.mxu0 0.0
    %1391 = vmatpush2.msra.mxu0 0.0
    %1392 = vmatprep.subr.mxu0 0.0
    %1393 = vmatpush2.msra.mxu0 0.0
    %1394 = vmatprep.subr.mxu0 0.0
    %1395 = vmatpush2.msra.mxu0 0.0
    %1396 = vmatprep.subr.mxu0 0.0
    %1397 = vmatpush2.msra.mxu0 0.0
    %1398 = vmatprep.subr.mxu0 0.0
    %1399 = vmatpush2.msra.mxu0 0.0
    %1400 = vmatprep.subr.mxu0 0.0
    %1401 = vmatpush2.msra.mxu0 0.0
    %1402 = vmatprep.subr.mxu0 0.0
    %1403 = vmatpush2.msra.mxu0 0.0
    %1404 = vmatprep.subr.mxu0 0.0
    %1405 = vmatpush2.msra.mxu0 0.0
    %1406 = vmatprep.subr.mxu0 0.0
    %1407 = vmatpush2.msra.mxu0 0.0
    %1408 = vmatprep.subr.mxu0 0.0
    %1409 = vmatpush2.msra.mxu0 0.0
    %1410 = vmatprep.subr.mxu0 0.0
    %1411 = vmatpush2.msra.mxu0 0.0
    %1412 = vmatprep.subr.mxu0 0.0
    %1413 = vmatpush2.msra.mxu0 0.0
    %1414 = vmatprep.subr.mxu0 0.0
    %1415 = vmatpush2.msra.mxu0 0.0
    %1416 = vmatprep.mubr.f32.mxu0 0.0
    %1417 = vmatmul.mubr.f32.gmra.mxu0 %v1213
    %v1418 = vpop.f32.mrf.mxu0
    %v1419 = vadd.f32 0.0, %v1418
    %v1420 = vpop.f32.mrf.mxu0
    %v1421 = vadd.f32 0.0, %v1420
    %1422 = vdwg.mxu0
    %v1427 = vcombine.low %v1348, %v1350
    %v1428 = vcombine.low %v1419, %v1421
    %v1430 = vunpack.c.l.s4 1983009808
    %v1431 = vunpack.c.0.s8 %v1430
    %v1432 = vlaneseq
    %v1433 = vshrl.u32 %v1432, 7
    %v1434 = vsub.s32 %v1431, %v1433
    %v1435 = vrot.slane %v1427, %v1434
    %v1437 = vunpack.c.l.s4 1983009808
    %v1438 = vunpack.c.0.s8 %v1437
    %v1439 = vlaneseq
    %v1440 = vshrl.u32 %v1439, 7
    %v1441 = vsub.s32 %v1438, %v1440
    %v1442 = vrot.slane %v1428, %v1441
    %v1443 = vcombine.low %v1435, %v1442
    %v1445 = vadd.f32 %v1216, %v1443
    %v1446 = vxor.u32 %v1445, 2147483648
    %v1447 = vmul.f32 %v1446, 1.442695
    %v1448 = vpow.pop %v1447
    %v1449 = vadd.f32 %v1448, 1.0
    %v1450 = vrcp.pop %v1449
    %v1451 = vmul.f32 1.0, %v1450
    %v1453 = vrot.slane %v1445, 2
    %v1455 = vxor.u32 %v1453, 2147483648
    %v1456 = vmul.f32 %v1455, 1.442695
    %v1457 = vpow.pop %v1456
    %v1458 = vadd.f32 %v1457, 1.0
    %v1459 = vrcp.pop %v1458
    %v1460 = vmul.f32 1.0, %v1459
    %v1461 = vrot.slane %v1445, 4
    %v1463 = vtanh.pop %v1461
    %v1464 = vrot.slane %v1445, 6
    %v1466 = vxor.u32 %v1464, 2147483648
    %v1467 = vmul.f32 %v1466, 1.442695
    %v1468 = vpow.pop %v1467
    %v1469 = vadd.f32 %v1468, 1.0
    %v1470 = vrcp.pop %v1469
    %v1471 = vmul.f32 1.0, %v1470
    %v1472 = vmul.f32 %v1460, %v1214
    %v1473 = vmul.f32 %v1451, %v1463
    %v1474 = vadd.f32 %v1472, %v1473
    %v1475 = vtanh.pop %v1474
    %v1476 = vmul.f32 %v1471, %v1475
    %s1477 = sadd.s32 %s97, 2
    %v1478 = vstv %s1477
    %vm1479 = vcmp.lt.s32.totalorder %v1478, %v96
    %v1480 = vsel %vm1479, 1, 0
    %1481 = vset.pattern.permute.xlu0 0
    %1482 = vperm.xlu0 %1481, %v1480
    %v1483 = vpop.permute.xlu0 %1482
    %vm1484 = vcmp.eq.s32.totalorder %v1483, 1
    %v1485 = vsel %vm1484, %v1474, %v1214
    %1486 = vst [vmem:[#allocation3] sm:$0x3] %v1485
    %v1487 = vsel %vm1484, %v1476, %v1213
    %1488 = vst [vmem:[#allocation2] sm:$0x3] %v1487
    %v1489 = vsel %vm1484, %v1476, 0.0
    %s1490 = scalar_lea.vmem [#allocation14], 4
    %1491 = vst [vmem:[%s1490] sm:$0x3] %v1489
    %v1492 = vld [vmem:[#allocation4] sm:$0x3]
    %v1493 = vld [vmem:[#allocation5] sm:$0x3]
    %s1494 = scalar_lea.vmem [#allocation9], 40
    %v1495 = vld [vmem:[%s1494] sm:$0xff]
    %v1496 = vld [vmem:[#allocation12] sm:$0xff]
    %v1497 = vld [vmem:[#allocation12 + $0x8] sm:$0xff]
    %v1498 = vld [vmem:[#allocation12 + $0x10] sm:$0xff]
    %v1499 = vld [vmem:[#allocation12 + $0x18] sm:$0xff]
    %v1500 = vld [vmem:[#allocation12 + $0x20] sm:$0xff]
    %v1501 = vld [vmem:[#allocation12 + $0x28] sm:$0xff]
    %v1502 = vld [vmem:[#allocation12 + $0x30] sm:$0xff]
    %v1503 = vld [vmem:[#allocation12 + $0x38] sm:$0xff]
    %v1504 = vld [vmem:[#allocation12 + $0x40] sm:$0xff]
    %v1505 = vld [vmem:[#allocation12 + $0x48] sm:$0xff]
    %v1506 = vld [vmem:[#allocation12 + $0x50] sm:$0xff]
    %v1507 = vld [vmem:[#allocation12 + $0x58] sm:$0xff]
    %v1508 = vld [vmem:[#allocation12 + $0x60] sm:$0xff]
    %v1509 = vld [vmem:[#allocation12 + $0x68] sm:$0xff]
    %v1510 = vld [vmem:[#allocation12 + $0x70] sm:$0xff]
    %v1511 = vld [vmem:[#allocation12 + $0x78] sm:$0xff]
    %v1512 = vld [vmem:[#allocation12 + $0x80] sm:$0xff]
    %v1513 = vld [vmem:[#allocation12 + $0x88] sm:$0xff]
    %v1514 = vld [vmem:[#allocation12 + $0x90] sm:$0xff]
    %v1515 = vld [vmem:[#allocation12 + $0x98] sm:$0xff]
    %v1516 = vld [vmem:[#allocation12 + $0xa0] sm:$0xff]
    %v1517 = vld [vmem:[#allocation12 + $0xa8] sm:$0xff]
    %v1518 = vld [vmem:[#allocation12 + $0xb0] sm:$0xff]
    %v1519 = vld [vmem:[#allocation12 + $0xb8] sm:$0xff]
    %v1520 = vld [vmem:[#allocation12 + $0xc0] sm:$0xff]
    %v1521 = vld [vmem:[#allocation12 + $0xc8] sm:$0xff]
    %v1522 = vld [vmem:[#allocation12 + $0xd0] sm:$0xff]
    %v1523 = vld [vmem:[#allocation12 + $0xd8] sm:$0xff]
    %v1524 = vld [vmem:[#allocation12 + $0xe0] sm:$0xff]
    %v1525 = vld [vmem:[#allocation12 + $0xe8] sm:$0xff]
    %v1526 = vld [vmem:[#allocation12 + $0xf0] sm:$0xff]
    %v1527 = vld [vmem:[#allocation12 + $0xf8] sm:$0xff]
    %v1528 = vld [vmem:[#allocation12 + $0x100] sm:$0xff]
    %v1529 = vld [vmem:[#allocation12 + $0x108] sm:$0xff]
    %v1530 = vld [vmem:[#allocation12 + $0x110] sm:$0xff]
    %v1531 = vld [vmem:[#allocation12 + $0x118] sm:$0xff]
    %v1532 = vld [vmem:[#allocation12 + $0x120] sm:$0xff]
    %v1533 = vld [vmem:[#allocation12 + $0x128] sm:$0xff]
    %v1534 = vld [vmem:[#allocation12 + $0x130] sm:$0xff]
    %v1535 = vld [vmem:[#allocation12 + $0x138] sm:$0xff]
    %v1536 = vld [vmem:[#allocation12 + $0x140] sm:$0xff]
    %v1537 = vld [vmem:[#allocation12 + $0x148] sm:$0xff]
    %v1538 = vld [vmem:[#allocation12 + $0x150] sm:$0xff]
    %v1539 = vld [vmem:[#allocation12 + $0x158] sm:$0xff]
    %v1540 = vld [vmem:[#allocation12 + $0x160] sm:$0xff]
    %v1541 = vld [vmem:[#allocation12 + $0x168] sm:$0xff]
    %v1542 = vld [vmem:[#allocation12 + $0x170] sm:$0xff]
    %v1543 = vld [vmem:[#allocation12 + $0x178] sm:$0xff]
    %v1544 = vld [vmem:[#allocation12 + $0x180] sm:$0xff]
    %v1545 = vld [vmem:[#allocation12 + $0x188] sm:$0xff]
    %v1546 = vld [vmem:[#allocation12 + $0x190] sm:$0xff]
    %v1547 = vld [vmem:[#allocation12 + $0x198] sm:$0xff]
    %v1548 = vld [vmem:[#allocation12 + $0x1a0] sm:$0xff]
    %v1549 = vld [vmem:[#allocation12 + $0x1a8] sm:$0xff]
    %v1550 = vld [vmem:[#allocation12 + $0x1b0] sm:$0xff]
    %v1551 = vld [vmem:[#allocation12 + $0x1b8] sm:$0xff]
    %v1552 = vld [vmem:[#allocation12 + $0x1c0] sm:$0xff]
    %v1553 = vld [vmem:[#allocation12 + $0x1c8] sm:$0xff]
    %v1554 = vld [vmem:[#allocation12 + $0x1d0] sm:$0xff]
    %v1555 = vld [vmem:[#allocation12 + $0x1d8] sm:$0xff]
    %v1556 = vld [vmem:[#allocation12 + $0x1e0] sm:$0xff]
    %v1557 = vld [vmem:[#allocation12 + $0x1e8] sm:$0xff]
    %v1558 = vld [vmem:[#allocation12 + $0x1f0] sm:$0xff]
    %v1559 = vld [vmem:[#allocation12 + $0x1f8] sm:$0xff]
    %1560 = vmatprep.subr.mxu0 %v1557
    %1561 = vmatpush1.msra.mxu0 %v1556
    %1562 = vmatprep.subr.mxu0 %v1553
    %1563 = vmatpush1.msra.mxu0 %v1552
    %1564 = vmatprep.subr.mxu0 %v1549
    %1565 = vmatpush1.msra.mxu0 %v1548
    %1566 = vmatprep.subr.mxu0 %v1545
    %1567 = vmatpush1.msra.mxu0 %v1544
    %1568 = vmatprep.subr.mxu0 %v1541
    %1569 = vmatpush1.msra.mxu0 %v1540
    %1570 = vmatprep.subr.mxu0 %v1537
    %1571 = vmatpush1.msra.mxu0 %v1536
    %1572 = vmatprep.subr.mxu0 %v1533
    %1573 = vmatpush1.msra.mxu0 %v1532
    %1574 = vmatprep.subr.mxu0 %v1529
    %1575 = vmatpush1.msra.mxu0 %v1528
    %1576 = vmatprep.subr.mxu0 %v1525
    %1577 = vmatpush1.msra.mxu0 %v1524
    %1578 = vmatprep.subr.mxu0 %v1521
    %1579 = vmatpush1.msra.mxu0 %v1520
    %1580 = vmatprep.subr.mxu0 %v1517
    %1581 = vmatpush1.msra.mxu0 %v1516
    %1582 = vmatprep.subr.mxu0 %v1513
    %1583 = vmatpush1.msra.mxu0 %v1512
    %1584 = vmatprep.subr.mxu0 %v1509
    %1585 = vmatpush1.msra.mxu0 %v1508
    %1586 = vmatprep.subr.mxu0 %v1505
    %1587 = vmatpush1.msra.mxu0 %v1504
    %1588 = vmatprep.subr.mxu0 %v1501
    %1589 = vmatpush1.msra.mxu0 %v1500
    %1590 = vmatprep.subr.mxu0 %v1497
    %1591 = vmatpush1.msra.mxu0 %v1496
    %1592 = vmatprep.subr.mxu0 0.0
    %1593 = vmatpush2.msra.mxu0 0.0
    %1594 = vmatprep.subr.mxu0 0.0
    %1595 = vmatpush2.msra.mxu0 0.0
    %1596 = vmatprep.subr.mxu0 0.0
    %1597 = vmatpush2.msra.mxu0 0.0
    %1598 = vmatprep.subr.mxu0 0.0
    %1599 = vmatpush2.msra.mxu0 0.0
    %1600 = vmatprep.subr.mxu0 0.0
    %1601 = vmatpush2.msra.mxu0 0.0
    %1602 = vmatprep.subr.mxu0 0.0
    %1603 = vmatpush2.msra.mxu0 0.0
    %1604 = vmatprep.subr.mxu0 0.0
    %1605 = vmatpush2.msra.mxu0 0.0
    %1606 = vmatprep.subr.mxu0 0.0
    %1607 = vmatpush2.msra.mxu0 0.0
    %1608 = vmatprep.subr.mxu0 0.0
    %1609 = vmatpush2.msra.mxu0 0.0
    %1610 = vmatprep.subr.mxu0 0.0
    %1611 = vmatpush2.msra.mxu0 0.0
    %1612 = vmatprep.subr.mxu0 0.0
    %1613 = vmatpush2.msra.mxu0 0.0
    %1614 = vmatprep.subr.mxu0 0.0
    %1615 = vmatpush2.msra.mxu0 0.0
    %1616 = vmatprep.subr.mxu0 0.0
    %1617 = vmatpush2.msra.mxu0 0.0
    %1618 = vmatprep.subr.mxu0 0.0
    %1619 = vmatpush2.msra.mxu0 0.0
    %1620 = vmatprep.subr.mxu0 0.0
    %1621 = vmatpush2.msra.mxu0 0.0
    %1622 = vmatprep.subr.mxu0 0.0
    %1623 = vmatpush2.msra.mxu0 0.0
    %1624 = vmatprep.mubr.f32.mxu0 0.0
    %1625 = vmatmul.mubr.f32.gmra.mxu0 %v1492
    %v1626 = vpop.f32.mrf.mxu0
    %v1627 = vadd.f32 0.0, %v1626
    %v1628 = vpop.f32.mrf.mxu0
    %v1629 = vadd.f32 0.0, %v1628
    %1630 = vdwg.mxu0
    %1631 = vmatprep.subr.mxu0 %v1559
    %1632 = vmatpush1.msra.mxu0 %v1558
    %1633 = vmatprep.subr.mxu0 %v1555
    %1634 = vmatpush1.msra.mxu0 %v1554
    %1635 = vmatprep.subr.mxu0 %v1551
    %1636 = vmatpush1.msra.mxu0 %v1550
    %1637 = vmatprep.subr.mxu0 %v1547
    %1638 = vmatpush1.msra.mxu0 %v1546
    %1639 = vmatprep.subr.mxu0 %v1543
    %1640 = vmatpush1.msra.mxu0 %v1542
    %1641 = vmatprep.subr.mxu0 %v1539
    %1642 = vmatpush1.msra.mxu0 %v1538
    %1643 = vmatprep.subr.mxu0 %v1535
    %1644 = vmatpush1.msra.mxu0 %v1534
    %1645 = vmatprep.subr.mxu0 %v1531
    %1646 = vmatpush1.msra.mxu0 %v1530
    %1647 = vmatprep.subr.mxu0 %v1527
    %1648 = vmatpush1.msra.mxu0 %v1526
    %1649 = vmatprep.subr.mxu0 %v1523
    %1650 = vmatpush1.msra.mxu0 %v1522
    %1651 = vmatprep.subr.mxu0 %v1519
    %1652 = vmatpush1.msra.mxu0 %v1518
    %1653 = vmatprep.subr.mxu0 %v1515
    %1654 = vmatpush1.msra.mxu0 %v1514
    %1655 = vmatprep.subr.mxu0 %v1511
    %1656 = vmatpush1.msra.mxu0 %v1510
    %1657 = vmatprep.subr.mxu0 %v1507
    %1658 = vmatpush1.msra.mxu0 %v1506
    %1659 = vmatprep.subr.mxu0 %v1503
    %1660 = vmatpush1.msra.mxu0 %v1502
    %1661 = vmatprep.subr.mxu0 %v1499
    %1662 = vmatpush1.msra.mxu0 %v1498
    %1663 = vmatprep.subr.mxu0 0.0
    %1664 = vmatpush2.msra.mxu0 0.0
    %1665 = vmatprep.subr.mxu0 0.0
    %1666 = vmatpush2.msra.mxu0 0.0
    %1667 = vmatprep.subr.mxu0 0.0
    %1668 = vmatpush2.msra.mxu0 0.0
    %1669 = vmatprep.subr.mxu0 0.0
    %1670 = vmatpush2.msra.mxu0 0.0
    %1671 = vmatprep.subr.mxu0 0.0
    %1672 = vmatpush2.msra.mxu0 0.0
    %1673 = vmatprep.subr.mxu0 0.0
    %1674 = vmatpush2.msra.mxu0 0.0
    %1675 = vmatprep.subr.mxu0 0.0
    %1676 = vmatpush2.msra.mxu0 0.0
    %1677 = vmatprep.subr.mxu0 0.0
    %1678 = vmatpush2.msra.mxu0 0.0
    %1679 = vmatprep.subr.mxu0 0.0
    %1680 = vmatpush2.msra.mxu0 0.0
    %1681 = vmatprep.subr.mxu0 0.0
    %1682 = vmatpush2.msra.mxu0 0.0
    %1683 = vmatprep.subr.mxu0 0.0
    %1684 = vmatpush2.msra.mxu0 0.0
    %1685 = vmatprep.subr.mxu0 0.0
    %1686 = vmatpush2.msra.mxu0 0.0
    %1687 = vmatprep.subr.mxu0 0.0
    %1688 = vmatpush2.msra.mxu0 0.0
    %1689 = vmatprep.subr.mxu0 0.0
    %1690 = vmatpush2.msra.mxu0 0.0
    %1691 = vmatprep.subr.mxu0 0.0
    %1692 = vmatpush2.msra.mxu0 0.0
    %1693 = vmatprep.subr.mxu0 0.0
    %1694 = vmatpush2.msra.mxu0 0.0
    %1695 = vmatprep.mubr.f32.mxu0 0.0
    %1696 = vmatmul.mubr.f32.gmra.mxu0 %v1492
    %v1697 = vpop.f32.mrf.mxu0
    %v1698 = vadd.f32 0.0, %v1697
    %v1699 = vpop.f32.mrf.mxu0
    %v1700 = vadd.f32 0.0, %v1699
    %1701 = vdwg.mxu0
    %v1706 = vcombine.low %v1627, %v1629
    %v1707 = vcombine.low %v1698, %v1700
    %v1709 = vunpack.c.l.s4 1983009808
    %v1710 = vunpack.c.0.s8 %v1709
    %v1711 = vlaneseq
    %v1712 = vshrl.u32 %v1711, 7
    %v1713 = vsub.s32 %v1710, %v1712
    %v1714 = vrot.slane %v1706, %v1713
    %v1716 = vunpack.c.l.s4 1983009808
    %v1717 = vunpack.c.0.s8 %v1716
    %v1718 = vlaneseq
    %v1719 = vshrl.u32 %v1718, 7
    %v1720 = vsub.s32 %v1717, %v1719
    %v1721 = vrot.slane %v1707, %v1720
    %v1722 = vcombine.low %v1714, %v1721
    %v1724 = vadd.f32 %v1495, %v1722
    %v1725 = vxor.u32 %v1724, 2147483648
    %v1726 = vmul.f32 %v1725, 1.442695
    %v1727 = vpow.pop %v1726
    %v1728 = vadd.f32 %v1727, 1.0
    %v1729 = vrcp.pop %v1728
    %v1730 = vmul.f32 1.0, %v1729
    %v1732 = vrot.slane %v1724, 2
    %v1734 = vxor.u32 %v1732, 2147483648
    %v1735 = vmul.f32 %v1734, 1.442695
    %v1736 = vpow.pop %v1735
    %v1737 = vadd.f32 %v1736, 1.0
    %v1738 = vrcp.pop %v1737
    %v1739 = vmul.f32 1.0, %v1738
    %v1740 = vrot.slane %v1724, 4
    %v1742 = vtanh.pop %v1740
    %v1743 = vrot.slane %v1724, 6
    %v1745 = vxor.u32 %v1743, 2147483648
    %v1746 = vmul.f32 %v1745, 1.442695
    %v1747 = vpow.pop %v1746
    %v1748 = vadd.f32 %v1747, 1.0
    %v1749 = vrcp.pop %v1748
    %v1750 = vmul.f32 1.0, %v1749
    %v1751 = vmul.f32 %v1739, %v1493
    %v1752 = vmul.f32 %v1730, %v1742
    %v1753 = vadd.f32 %v1751, %v1752
    %v1754 = vtanh.pop %v1753
    %v1755 = vmul.f32 %v1750, %v1754
    %s1756 = sadd.s32 %s99, 5
    %v1757 = vstv %s1756
    %vm1758 = vcmp.lt.s32.totalorder %v1757, %v96
    %v1759 = vsel %vm1758, 1, 0
    %1760 = vset.pattern.permute.xlu0 0
    %1761 = vperm.xlu0 %1760, %v1759
    %v1762 = vpop.permute.xlu0 %1761
    %vm1763 = vcmp.eq.s32.totalorder %v1762, 1
    %v1764 = vsel %vm1763, %v1753, %v1493
    %1765 = vst [vmem:[#allocation5] sm:$0x3] %v1764
    %v1766 = vsel %vm1763, %v1755, %v1492
    %1767 = vst [vmem:[#allocation4] sm:$0x3] %v1766
    %v1768 = vsel %vm1763, %v1755, 0.0
    %s1769 = scalar_lea.vmem [#allocation15], 10
    %1770 = vst [vmem:[%s1769] sm:$0x3] %v1768
    %v1771 = vld [vmem:[#allocation2] sm:$0x3]
    %v1772 = vld [vmem:[#allocation3] sm:$0x3]
    %s1773 = scalar_lea.vmem [#allocation6], 24
    %v1774 = vld [vmem:[%s1773] sm:$0xff]
    %v1775 = vld [vmem:[#allocation11] sm:$0xff]
    %v1776 = vld [vmem:[#allocation11 + $0x8] sm:$0xff]
    %v1777 = vld [vmem:[#allocation11 + $0x10] sm:$0xff]
    %v1778 = vld [vmem:[#allocation11 + $0x18] sm:$0xff]
    %v1779 = vld [vmem:[#allocation11 + $0x20] sm:$0xff]
    %v1780 = vld [vmem:[#allocation11 + $0x28] sm:$0xff]
    %v1781 = vld [vmem:[#allocation11 + $0x30] sm:$0xff]
    %v1782 = vld [vmem:[#allocation11 + $0x38] sm:$0xff]
    %v1783 = vld [vmem:[#allocation11 + $0x40] sm:$0xff]
    %v1784 = vld [vmem:[#allocation11 + $0x48] sm:$0xff]
    %v1785 = vld [vmem:[#allocation11 + $0x50] sm:$0xff]
    %v1786 = vld [vmem:[#allocation11 + $0x58] sm:$0xff]
    %v1787 = vld [vmem:[#allocation11 + $0x60] sm:$0xff]
    %v1788 = vld [vmem:[#allocation11 + $0x68] sm:$0xff]
    %v1789 = vld [vmem:[#allocation11 + $0x70] sm:$0xff]
    %v1790 = vld [vmem:[#allocation11 + $0x78] sm:$0xff]
    %v1791 = vld [vmem:[#allocation11 + $0x80] sm:$0xff]
    %v1792 = vld [vmem:[#allocation11 + $0x88] sm:$0xff]
    %v1793 = vld [vmem:[#allocation11 + $0x90] sm:$0xff]
    %v1794 = vld [vmem:[#allocation11 + $0x98] sm:$0xff]
    %v1795 = vld [vmem:[#allocation11 + $0xa0] sm:$0xff]
    %v1796 = vld [vmem:[#allocation11 + $0xa8] sm:$0xff]
    %v1797 = vld [vmem:[#allocation11 + $0xb0] sm:$0xff]
    %v1798 = vld [vmem:[#allocation11 + $0xb8] sm:$0xff]
    %v1799 = vld [vmem:[#allocation11 + $0xc0] sm:$0xff]
    %v1800 = vld [vmem:[#allocation11 + $0xc8] sm:$0xff]
    %v1801 = vld [vmem:[#allocation11 + $0xd0] sm:$0xff]
    %v1802 = vld [vmem:[#allocation11 + $0xd8] sm:$0xff]
    %v1803 = vld [vmem:[#allocation11 + $0xe0] sm:$0xff]
    %v1804 = vld [vmem:[#allocation11 + $0xe8] sm:$0xff]
    %v1805 = vld [vmem:[#allocation11 + $0xf0] sm:$0xff]
    %v1806 = vld [vmem:[#allocation11 + $0xf8] sm:$0xff]
    %v1807 = vld [vmem:[#allocation11 + $0x100] sm:$0xff]
    %v1808 = vld [vmem:[#allocation11 + $0x108] sm:$0xff]
    %v1809 = vld [vmem:[#allocation11 + $0x110] sm:$0xff]
    %v1810 = vld [vmem:[#allocation11 + $0x118] sm:$0xff]
    %v1811 = vld [vmem:[#allocation11 + $0x120] sm:$0xff]
    %v1812 = vld [vmem:[#allocation11 + $0x128] sm:$0xff]
    %v1813 = vld [vmem:[#allocation11 + $0x130] sm:$0xff]
    %v1814 = vld [vmem:[#allocation11 + $0x138] sm:$0xff]
    %v1815 = vld [vmem:[#allocation11 + $0x140] sm:$0xff]
    %v1816 = vld [vmem:[#allocation11 + $0x148] sm:$0xff]
    %v1817 = vld [vmem:[#allocation11 + $0x150] sm:$0xff]
    %v1818 = vld [vmem:[#allocation11 + $0x158] sm:$0xff]
    %v1819 = vld [vmem:[#allocation11 + $0x160] sm:$0xff]
    %v1820 = vld [vmem:[#allocation11 + $0x168] sm:$0xff]
    %v1821 = vld [vmem:[#allocation11 + $0x170] sm:$0xff]
    %v1822 = vld [vmem:[#allocation11 + $0x178] sm:$0xff]
    %v1823 = vld [vmem:[#allocation11 + $0x180] sm:$0xff]
    %v1824 = vld [vmem:[#allocation11 + $0x188] sm:$0xff]
    %v1825 = vld [vmem:[#allocation11 + $0x190] sm:$0xff]
    %v1826 = vld [vmem:[#allocation11 + $0x198] sm:$0xff]
    %v1827 = vld [vmem:[#allocation11 + $0x1a0] sm:$0xff]
    %v1828 = vld [vmem:[#allocation11 + $0x1a8] sm:$0xff]
    %v1829 = vld [vmem:[#allocation11 + $0x1b0] sm:$0xff]
    %v1830 = vld [vmem:[#allocation11 + $0x1b8] sm:$0xff]
    %v1831 = vld [vmem:[#allocation11 + $0x1c0] sm:$0xff]
    %v1832 = vld [vmem:[#allocation11 + $0x1c8] sm:$0xff]
    %v1833 = vld [vmem:[#allocation11 + $0x1d0] sm:$0xff]
    %v1834 = vld [vmem:[#allocation11 + $0x1d8] sm:$0xff]
    %v1835 = vld [vmem:[#allocation11 + $0x1e0] sm:$0xff]
    %v1836 = vld [vmem:[#allocation11 + $0x1e8] sm:$0xff]
    %v1837 = vld [vmem:[#allocation11 + $0x1f0] sm:$0xff]
    %v1838 = vld [vmem:[#allocation11 + $0x1f8] sm:$0xff]
    %1839 = vmatprep.subr.mxu0 %v1836
    %1840 = vmatpush1.msra.mxu0 %v1835
    %1841 = vmatprep.subr.mxu0 %v1832
    %1842 = vmatpush1.msra.mxu0 %v1831
    %1843 = vmatprep.subr.mxu0 %v1828
    %1844 = vmatpush1.msra.mxu0 %v1827
    %1845 = vmatprep.subr.mxu0 %v1824
    %1846 = vmatpush1.msra.mxu0 %v1823
    %1847 = vmatprep.subr.mxu0 %v1820
    %1848 = vmatpush1.msra.mxu0 %v1819
    %1849 = vmatprep.subr.mxu0 %v1816
    %1850 = vmatpush1.msra.mxu0 %v1815
    %1851 = vmatprep.subr.mxu0 %v1812
    %1852 = vmatpush1.msra.mxu0 %v1811
    %1853 = vmatprep.subr.mxu0 %v1808
    %1854 = vmatpush1.msra.mxu0 %v1807
    %1855 = vmatprep.subr.mxu0 %v1804
    %1856 = vmatpush1.msra.mxu0 %v1803
    %1857 = vmatprep.subr.mxu0 %v1800
    %1858 = vmatpush1.msra.mxu0 %v1799
    %1859 = vmatprep.subr.mxu0 %v1796
    %1860 = vmatpush1.msra.mxu0 %v1795
    %1861 = vmatprep.subr.mxu0 %v1792
    %1862 = vmatpush1.msra.mxu0 %v1791
    %1863 = vmatprep.subr.mxu0 %v1788
    %1864 = vmatpush1.msra.mxu0 %v1787
    %1865 = vmatprep.subr.mxu0 %v1784
    %1866 = vmatpush1.msra.mxu0 %v1783
    %1867 = vmatprep.subr.mxu0 %v1780
    %1868 = vmatpush1.msra.mxu0 %v1779
    %1869 = vmatprep.subr.mxu0 %v1776
    %1870 = vmatpush1.msra.mxu0 %v1775
    %1871 = vmatprep.subr.mxu0 0.0
    %1872 = vmatpush2.msra.mxu0 0.0
    %1873 = vmatprep.subr.mxu0 0.0
    %1874 = vmatpush2.msra.mxu0 0.0
    %1875 = vmatprep.subr.mxu0 0.0
    %1876 = vmatpush2.msra.mxu0 0.0
    %1877 = vmatprep.subr.mxu0 0.0
    %1878 = vmatpush2.msra.mxu0 0.0
    %1879 = vmatprep.subr.mxu0 0.0
    %1880 = vmatpush2.msra.mxu0 0.0
    %1881 = vmatprep.subr.mxu0 0.0
    %1882 = vmatpush2.msra.mxu0 0.0
    %1883 = vmatprep.subr.mxu0 0.0
    %1884 = vmatpush2.msra.mxu0 0.0
    %1885 = vmatprep.subr.mxu0 0.0
    %1886 = vmatpush2.msra.mxu0 0.0
    %1887 = vmatprep.subr.mxu0 0.0
    %1888 = vmatpush2.msra.mxu0 0.0
    %1889 = vmatprep.subr.mxu0 0.0
    %1890 = vmatpush2.msra.mxu0 0.0
    %1891 = vmatprep.subr.mxu0 0.0
    %1892 = vmatpush2.msra.mxu0 0.0
    %1893 = vmatprep.subr.mxu0 0.0
    %1894 = vmatpush2.msra.mxu0 0.0
    %1895 = vmatprep.subr.mxu0 0.0
    %1896 = vmatpush2.msra.mxu0 0.0
    %1897 = vmatprep.subr.mxu0 0.0
    %1898 = vmatpush2.msra.mxu0 0.0
    %1899 = vmatprep.subr.mxu0 0.0
    %1900 = vmatpush2.msra.mxu0 0.0
    %1901 = vmatprep.subr.mxu0 0.0
    %1902 = vmatpush2.msra.mxu0 0.0
    %1903 = vmatprep.mubr.f32.mxu0 0.0
    %1904 = vmatmul.mubr.f32.gmra.mxu0 %v1771
    %v1905 = vpop.f32.mrf.mxu0
    %v1906 = vadd.f32 0.0, %v1905
    %v1907 = vpop.f32.mrf.mxu0
    %v1908 = vadd.f32 0.0, %v1907
    %1909 = vdwg.mxu0
    %1910 = vmatprep.subr.mxu0 %v1838
    %1911 = vmatpush1.msra.mxu0 %v1837
    %1912 = vmatprep.subr.mxu0 %v1834
    %1913 = vmatpush1.msra.mxu0 %v1833
    %1914 = vmatprep.subr.mxu0 %v1830
    %1915 = vmatpush1.msra.mxu0 %v1829
    %1916 = vmatprep.subr.mxu0 %v1826
    %1917 = vmatpush1.msra.mxu0 %v1825
    %1918 = vmatprep.subr.mxu0 %v1822
    %1919 = vmatpush1.msra.mxu0 %v1821
    %1920 = vmatprep.subr.mxu0 %v1818
    %1921 = vmatpush1.msra.mxu0 %v1817
    %1922 = vmatprep.subr.mxu0 %v1814
    %1923 = vmatpush1.msra.mxu0 %v1813
    %1924 = vmatprep.subr.mxu0 %v1810
    %1925 = vmatpush1.msra.mxu0 %v1809
    %1926 = vmatprep.subr.mxu0 %v1806
    %1927 = vmatpush1.msra.mxu0 %v1805
    %1928 = vmatprep.subr.mxu0 %v1802
    %1929 = vmatpush1.msra.mxu0 %v1801
    %1930 = vmatprep.subr.mxu0 %v1798
    %1931 = vmatpush1.msra.mxu0 %v1797
    %1932 = vmatprep.subr.mxu0 %v1794
    %1933 = vmatpush1.msra.mxu0 %v1793
    %1934 = vmatprep.subr.mxu0 %v1790
    %1935 = vmatpush1.msra.mxu0 %v1789
    %1936 = vmatprep.subr.mxu0 %v1786
    %1937 = vmatpush1.msra.mxu0 %v1785
    %1938 = vmatprep.subr.mxu0 %v1782
    %1939 = vmatpush1.msra.mxu0 %v1781
    %1940 = vmatprep.subr.mxu0 %v1778
    %1941 = vmatpush1.msra.mxu0 %v1777
    %1942 = vmatprep.subr.mxu0 0.0
    %1943 = vmatpush2.msra.mxu0 0.0
    %1944 = vmatprep.subr.mxu0 0.0
    %1945 = vmatpush2.msra.mxu0 0.0
    %1946 = vmatprep.subr.mxu0 0.0
    %1947 = vmatpush2.msra.mxu0 0.0
    %1948 = vmatprep.subr.mxu0 0.0
    %1949 = vmatpush2.msra.mxu0 0.0
    %1950 = vmatprep.subr.mxu0 0.0
    %1951 = vmatpush2.msra.mxu0 0.0
    %1952 = vmatprep.subr.mxu0 0.0
    %1953 = vmatpush2.msra.mxu0 0.0
    %1954 = vmatprep.subr.mxu0 0.0
    %1955 = vmatpush2.msra.mxu0 0.0
    %1956 = vmatprep.subr.mxu0 0.0
    %1957 = vmatpush2.msra.mxu0 0.0
    %1958 = vmatprep.subr.mxu0 0.0
    %1959 = vmatpush2.msra.mxu0 0.0
    %1960 = vmatprep.subr.mxu0 0.0
    %1961 = vmatpush2.msra.mxu0 0.0
    %1962 = vmatprep.subr.mxu0 0.0
    %1963 = vmatpush2.msra.mxu0 0.0
    %1964 = vmatprep.subr.mxu0 0.0
    %1965 = vmatpush2.msra.mxu0 0.0
    %1966 = vmatprep.subr.mxu0 0.0
    %1967 = vmatpush2.msra.mxu0 0.0
    %1968 = vmatprep.subr.mxu0 0.0
    %1969 = vmatpush2.msra.mxu0 0.0
    %1970 = vmatprep.subr.mxu0 0.0
    %1971 = vmatpush2.msra.mxu0 0.0
    %1972 = vmatprep.subr.mxu0 0.0
    %1973 = vmatpush2.msra.mxu0 0.0
    %1974 = vmatprep.mubr.f32.mxu0 0.0
    %1975 = vmatmul.mubr.f32.gmra.mxu0 %v1771
    %v1976 = vpop.f32.mrf.mxu0
    %v1977 = vadd.f32 0.0, %v1976
    %v1978 = vpop.f32.mrf.mxu0
    %v1979 = vadd.f32 0.0, %v1978
    %1980 = vdwg.mxu0
    %v1985 = vcombine.low %v1906, %v1908
    %v1986 = vcombine.low %v1977, %v1979
    %v1988 = vunpack.c.l.s4 1983009808
    %v1989 = vunpack.c.0.s8 %v1988
    %v1990 = vlaneseq
    %v1991 = vshrl.u32 %v1990, 7
    %v1992 = vsub.s32 %v1989, %v1991
    %v1993 = vrot.slane %v1985, %v1992
    %v1995 = vunpack.c.l.s4 1983009808
    %v1996 = vunpack.c.0.s8 %v1995
    %v1997 = vlaneseq
    %v1998 = vshrl.u32 %v1997, 7
    %v1999 = vsub.s32 %v1996, %v1998
    %v2000 = vrot.slane %v1986, %v1999
    %v2001 = vcombine.low %v1993, %v2000
    %v2003 = vadd.f32 %v1774, %v2001
    %v2004 = vxor.u32 %v2003, 2147483648
    %v2005 = vmul.f32 %v2004, 1.442695
    %v2006 = vpow.pop %v2005
    %v2007 = vadd.f32 %v2006, 1.0
    %v2008 = vrcp.pop %v2007
    %v2009 = vmul.f32 1.0, %v2008
    %v2011 = vrot.slane %v2003, 2
    %v2013 = vxor.u32 %v2011, 2147483648
    %v2014 = vmul.f32 %v2013, 1.442695
    %v2015 = vpow.pop %v2014
    %v2016 = vadd.f32 %v2015, 1.0
    %v2017 = vrcp.pop %v2016
    %v2018 = vmul.f32 1.0, %v2017
    %v2019 = vrot.slane %v2003, 4
    %v2021 = vtanh.pop %v2019
    %v2022 = vrot.slane %v2003, 6
    %v2024 = vxor.u32 %v2022, 2147483648
    %v2025 = vmul.f32 %v2024, 1.442695
    %v2026 = vpow.pop %v2025
    %v2027 = vadd.f32 %v2026, 1.0
    %v2028 = vrcp.pop %v2027
    %v2029 = vmul.f32 1.0, %v2028
    %v2030 = vmul.f32 %v2018, %v1772
    %v2031 = vmul.f32 %v2009, %v2021
    %v2032 = vadd.f32 %v2030, %v2031
    %v2033 = vtanh.pop %v2032
    %v2034 = vmul.f32 %v2029, %v2033
    %s2035 = sadd.s32 %s97, 3
    %v2036 = vstv %s2035
    %vm2037 = vcmp.lt.s32.totalorder %v2036, %v96
    %v2038 = vsel %vm2037, 1, 0
    %2039 = vset.pattern.permute.xlu0 0
    %2040 = vperm.xlu0 %2039, %v2038
    %v2041 = vpop.permute.xlu0 %2040
    %vm2042 = vcmp.eq.s32.totalorder %v2041, 1
    %v2043 = vsel %vm2042, %v2032, %v1772
    %2044 = vst [vmem:[#allocation3] sm:$0x3] %v2043
    %v2045 = vsel %vm2042, %v2034, %v1771
    %2046 = vst [vmem:[#allocation2] sm:$0x3] %v2045
    %v2047 = vsel %vm2042, %v2034, 0.0
    %s2048 = scalar_lea.vmem [#allocation14], 6
    %2049 = vst [vmem:[%s2048] sm:$0x3] %v2047
    %v2050 = vld [vmem:[#allocation4] sm:$0x3]
    %v2051 = vld [vmem:[#allocation5] sm:$0x3]
    %s2052 = scalar_lea.vmem [#allocation9], 32
    %v2053 = vld [vmem:[%s2052] sm:$0xff]
    %v2054 = vld [vmem:[#allocation12] sm:$0xff]
    %v2055 = vld [vmem:[#allocation12 + $0x8] sm:$0xff]
    %v2056 = vld [vmem:[#allocation12 + $0x10] sm:$0xff]
    %v2057 = vld [vmem:[#allocation12 + $0x18] sm:$0xff]
    %v2058 = vld [vmem:[#allocation12 + $0x20] sm:$0xff]
    %v2059 = vld [vmem:[#allocation12 + $0x28] sm:$0xff]
    %v2060 = vld [vmem:[#allocation12 + $0x30] sm:$0xff]
    %v2061 = vld [vmem:[#allocation12 + $0x38] sm:$0xff]
    %v2062 = vld [vmem:[#allocation12 + $0x40] sm:$0xff]
    %v2063 = vld [vmem:[#allocation12 + $0x48] sm:$0xff]
    %v2064 = vld [vmem:[#allocation12 + $0x50] sm:$0xff]
    %v2065 = vld [vmem:[#allocation12 + $0x58] sm:$0xff]
    %v2066 = vld [vmem:[#allocation12 + $0x60] sm:$0xff]
    %v2067 = vld [vmem:[#allocation12 + $0x68] sm:$0xff]
    %v2068 = vld [vmem:[#allocation12 + $0x70] sm:$0xff]
    %v2069 = vld [vmem:[#allocation12 + $0x78] sm:$0xff]
    %v2070 = vld [vmem:[#allocation12 + $0x80] sm:$0xff]
    %v2071 = vld [vmem:[#allocation12 + $0x88] sm:$0xff]
    %v2072 = vld [vmem:[#allocation12 + $0x90] sm:$0xff]
    %v2073 = vld [vmem:[#allocation12 + $0x98] sm:$0xff]
    %v2074 = vld [vmem:[#allocation12 + $0xa0] sm:$0xff]
    %v2075 = vld [vmem:[#allocation12 + $0xa8] sm:$0xff]
    %v2076 = vld [vmem:[#allocation12 + $0xb0] sm:$0xff]
    %v2077 = vld [vmem:[#allocation12 + $0xb8] sm:$0xff]
    %v2078 = vld [vmem:[#allocation12 + $0xc0] sm:$0xff]
    %v2079 = vld [vmem:[#allocation12 + $0xc8] sm:$0xff]
    %v2080 = vld [vmem:[#allocation12 + $0xd0] sm:$0xff]
    %v2081 = vld [vmem:[#allocation12 + $0xd8] sm:$0xff]
    %v2082 = vld [vmem:[#allocation12 + $0xe0] sm:$0xff]
    %v2083 = vld [vmem:[#allocation12 + $0xe8] sm:$0xff]
    %v2084 = vld [vmem:[#allocation12 + $0xf0] sm:$0xff]
    %v2085 = vld [vmem:[#allocation12 + $0xf8] sm:$0xff]
    %v2086 = vld [vmem:[#allocation12 + $0x100] sm:$0xff]
    %v2087 = vld [vmem:[#allocation12 + $0x108] sm:$0xff]
    %v2088 = vld [vmem:[#allocation12 + $0x110] sm:$0xff]
    %v2089 = vld [vmem:[#allocation12 + $0x118] sm:$0xff]
    %v2090 = vld [vmem:[#allocation12 + $0x120] sm:$0xff]
    %v2091 = vld [vmem:[#allocation12 + $0x128] sm:$0xff]
    %v2092 = vld [vmem:[#allocation12 + $0x130] sm:$0xff]
    %v2093 = vld [vmem:[#allocation12 + $0x138] sm:$0xff]
    %v2094 = vld [vmem:[#allocation12 + $0x140] sm:$0xff]
    %v2095 = vld [vmem:[#allocation12 + $0x148] sm:$0xff]
    %v2096 = vld [vmem:[#allocation12 + $0x150] sm:$0xff]
    %v2097 = vld [vmem:[#allocation12 + $0x158] sm:$0xff]
    %v2098 = vld [vmem:[#allocation12 + $0x160] sm:$0xff]
    %v2099 = vld [vmem:[#allocation12 + $0x168] sm:$0xff]
    %v2100 = vld [vmem:[#allocation12 + $0x170] sm:$0xff]
    %v2101 = vld [vmem:[#allocation12 + $0x178] sm:$0xff]
    %v2102 = vld [vmem:[#allocation12 + $0x180] sm:$0xff]
    %v2103 = vld [vmem:[#allocation12 + $0x188] sm:$0xff]
    %v2104 = vld [vmem:[#allocation12 + $0x190] sm:$0xff]
    %v2105 = vld [vmem:[#allocation12 + $0x198] sm:$0xff]
    %v2106 = vld [vmem:[#allocation12 + $0x1a0] sm:$0xff]
    %v2107 = vld [vmem:[#allocation12 + $0x1a8] sm:$0xff]
    %v2108 = vld [vmem:[#allocation12 + $0x1b0] sm:$0xff]
    %v2109 = vld [vmem:[#allocation12 + $0x1b8] sm:$0xff]
    %v2110 = vld [vmem:[#allocation12 + $0x1c0] sm:$0xff]
    %v2111 = vld [vmem:[#allocation12 + $0x1c8] sm:$0xff]
    %v2112 = vld [vmem:[#allocation12 + $0x1d0] sm:$0xff]
    %v2113 = vld [vmem:[#allocation12 + $0x1d8] sm:$0xff]
    %v2114 = vld [vmem:[#allocation12 + $0x1e0] sm:$0xff]
    %v2115 = vld [vmem:[#allocation12 + $0x1e8] sm:$0xff]
    %v2116 = vld [vmem:[#allocation12 + $0x1f0] sm:$0xff]
    %v2117 = vld [vmem:[#allocation12 + $0x1f8] sm:$0xff]
    %2118 = vmatprep.subr.mxu0 %v2115
    %2119 = vmatpush1.msra.mxu0 %v2114
    %2120 = vmatprep.subr.mxu0 %v2111
    %2121 = vmatpush1.msra.mxu0 %v2110
    %2122 = vmatprep.subr.mxu0 %v2107
    %2123 = vmatpush1.msra.mxu0 %v2106
    %2124 = vmatprep.subr.mxu0 %v2103
    %2125 = vmatpush1.msra.mxu0 %v2102
    %2126 = vmatprep.subr.mxu0 %v2099
    %2127 = vmatpush1.msra.mxu0 %v2098
    %2128 = vmatprep.subr.mxu0 %v2095
    %2129 = vmatpush1.msra.mxu0 %v2094
    %2130 = vmatprep.subr.mxu0 %v2091
    %2131 = vmatpush1.msra.mxu0 %v2090
    %2132 = vmatprep.subr.mxu0 %v2087
    %2133 = vmatpush1.msra.mxu0 %v2086
    %2134 = vmatprep.subr.mxu0 %v2083
    %2135 = vmatpush1.msra.mxu0 %v2082
    %2136 = vmatprep.subr.mxu0 %v2079
    %2137 = vmatpush1.msra.mxu0 %v2078
    %2138 = vmatprep.subr.mxu0 %v2075
    %2139 = vmatpush1.msra.mxu0 %v2074
    %2140 = vmatprep.subr.mxu0 %v2071
    %2141 = vmatpush1.msra.mxu0 %v2070
    %2142 = vmatprep.subr.mxu0 %v2067
    %2143 = vmatpush1.msra.mxu0 %v2066
    %2144 = vmatprep.subr.mxu0 %v2063
    %2145 = vmatpush1.msra.mxu0 %v2062
    %2146 = vmatprep.subr.mxu0 %v2059
    %2147 = vmatpush1.msra.mxu0 %v2058
    %2148 = vmatprep.subr.mxu0 %v2055
    %2149 = vmatpush1.msra.mxu0 %v2054
    %2150 = vmatprep.subr.mxu0 0.0
    %2151 = vmatpush2.msra.mxu0 0.0
    %2152 = vmatprep.subr.mxu0 0.0
    %2153 = vmatpush2.msra.mxu0 0.0
    %2154 = vmatprep.subr.mxu0 0.0
    %2155 = vmatpush2.msra.mxu0 0.0
    %2156 = vmatprep.subr.mxu0 0.0
    %2157 = vmatpush2.msra.mxu0 0.0
    %2158 = vmatprep.subr.mxu0 0.0
    %2159 = vmatpush2.msra.mxu0 0.0
    %2160 = vmatprep.subr.mxu0 0.0
    %2161 = vmatpush2.msra.mxu0 0.0
    %2162 = vmatprep.subr.mxu0 0.0
    %2163 = vmatpush2.msra.mxu0 0.0
    %2164 = vmatprep.subr.mxu0 0.0
    %2165 = vmatpush2.msra.mxu0 0.0
    %2166 = vmatprep.subr.mxu0 0.0
    %2167 = vmatpush2.msra.mxu0 0.0
    %2168 = vmatprep.subr.mxu0 0.0
    %2169 = vmatpush2.msra.mxu0 0.0
    %2170 = vmatprep.subr.mxu0 0.0
    %2171 = vmatpush2.msra.mxu0 0.0
    %2172 = vmatprep.subr.mxu0 0.0
    %2173 = vmatpush2.msra.mxu0 0.0
    %2174 = vmatprep.subr.mxu0 0.0
    %2175 = vmatpush2.msra.mxu0 0.0
    %2176 = vmatprep.subr.mxu0 0.0
    %2177 = vmatpush2.msra.mxu0 0.0
    %2178 = vmatprep.subr.mxu0 0.0
    %2179 = vmatpush2.msra.mxu0 0.0
    %2180 = vmatprep.subr.mxu0 0.0
    %2181 = vmatpush2.msra.mxu0 0.0
    %2182 = vmatprep.mubr.f32.mxu0 0.0
    %2183 = vmatmul.mubr.f32.gmra.mxu0 %v2050
    %v2184 = vpop.f32.mrf.mxu0
    %v2185 = vadd.f32 0.0, %v2184
    %v2186 = vpop.f32.mrf.mxu0
    %v2187 = vadd.f32 0.0, %v2186
    %2188 = vdwg.mxu0
    %2189 = vmatprep.subr.mxu0 %v2117
    %2190 = vmatpush1.msra.mxu0 %v2116
    %2191 = vmatprep.subr.mxu0 %v2113
    %2192 = vmatpush1.msra.mxu0 %v2112
    %2193 = vmatprep.subr.mxu0 %v2109
    %2194 = vmatpush1.msra.mxu0 %v2108
    %2195 = vmatprep.subr.mxu0 %v2105
    %2196 = vmatpush1.msra.mxu0 %v2104
    %2197 = vmatprep.subr.mxu0 %v2101
    %2198 = vmatpush1.msra.mxu0 %v2100
    %2199 = vmatprep.subr.mxu0 %v2097
    %2200 = vmatpush1.msra.mxu0 %v2096
    %2201 = vmatprep.subr.mxu0 %v2093
    %2202 = vmatpush1.msra.mxu0 %v2092
    %2203 = vmatprep.subr.mxu0 %v2089
    %2204 = vmatpush1.msra.mxu0 %v2088
    %2205 = vmatprep.subr.mxu0 %v2085
    %2206 = vmatpush1.msra.mxu0 %v2084
    %2207 = vmatprep.subr.mxu0 %v2081
    %2208 = vmatpush1.msra.mxu0 %v2080
    %2209 = vmatprep.subr.mxu0 %v2077
    %2210 = vmatpush1.msra.mxu0 %v2076
    %2211 = vmatprep.subr.mxu0 %v2073
    %2212 = vmatpush1.msra.mxu0 %v2072
    %2213 = vmatprep.subr.mxu0 %v2069
    %2214 = vmatpush1.msra.mxu0 %v2068
    %2215 = vmatprep.subr.mxu0 %v2065
    %2216 = vmatpush1.msra.mxu0 %v2064
    %2217 = vmatprep.subr.mxu0 %v2061
    %2218 = vmatpush1.msra.mxu0 %v2060
    %2219 = vmatprep.subr.mxu0 %v2057
    %2220 = vmatpush1.msra.mxu0 %v2056
    %2221 = vmatprep.subr.mxu0 0.0
    %2222 = vmatpush2.msra.mxu0 0.0
    %2223 = vmatprep.subr.mxu0 0.0
    %2224 = vmatpush2.msra.mxu0 0.0
    %2225 = vmatprep.subr.mxu0 0.0
    %2226 = vmatpush2.msra.mxu0 0.0
    %2227 = vmatprep.subr.mxu0 0.0
    %2228 = vmatpush2.msra.mxu0 0.0
    %2229 = vmatprep.subr.mxu0 0.0
    %2230 = vmatpush2.msra.mxu0 0.0
    %2231 = vmatprep.subr.mxu0 0.0
    %2232 = vmatpush2.msra.mxu0 0.0
    %2233 = vmatprep.subr.mxu0 0.0
    %2234 = vmatpush2.msra.mxu0 0.0
    %2235 = vmatprep.subr.mxu0 0.0
    %2236 = vmatpush2.msra.mxu0 0.0
    %2237 = vmatprep.subr.mxu0 0.0
    %2238 = vmatpush2.msra.mxu0 0.0
    %2239 = vmatprep.subr.mxu0 0.0
    %2240 = vmatpush2.msra.mxu0 0.0
    %2241 = vmatprep.subr.mxu0 0.0
    %2242 = vmatpush2.msra.mxu0 0.0
    %2243 = vmatprep.subr.mxu0 0.0
    %2244 = vmatpush2.msra.mxu0 0.0
    %2245 = vmatprep.subr.mxu0 0.0
    %2246 = vmatpush2.msra.mxu0 0.0
    %2247 = vmatprep.subr.mxu0 0.0
    %2248 = vmatpush2.msra.mxu0 0.0
    %2249 = vmatprep.subr.mxu0 0.0
    %2250 = vmatpush2.msra.mxu0 0.0
    %2251 = vmatprep.subr.mxu0 0.0
    %2252 = vmatpush2.msra.mxu0 0.0
    %2253 = vmatprep.mubr.f32.mxu0 0.0
    %2254 = vmatmul.mubr.f32.gmra.mxu0 %v2050
    %v2255 = vpop.f32.mrf.mxu0
    %v2256 = vadd.f32 0.0, %v2255
    %v2257 = vpop.f32.mrf.mxu0
    %v2258 = vadd.f32 0.0, %v2257
    %2259 = vdwg.mxu0
    %v2264 = vcombine.low %v2185, %v2187
    %v2265 = vcombine.low %v2256, %v2258
    %v2267 = vunpack.c.l.s4 1983009808
    %v2268 = vunpack.c.0.s8 %v2267
    %v2269 = vlaneseq
    %v2270 = vshrl.u32 %v2269, 7
    %v2271 = vsub.s32 %v2268, %v2270
    %v2272 = vrot.slane %v2264, %v2271
    %v2274 = vunpack.c.l.s4 1983009808
    %v2275 = vunpack.c.0.s8 %v2274
    %v2276 = vlaneseq
    %v2277 = vshrl.u32 %v2276, 7
    %v2278 = vsub.s32 %v2275, %v2277
    %v2279 = vrot.slane %v2265, %v2278
    %v2280 = vcombine.low %v2272, %v2279
    %v2282 = vadd.f32 %v2053, %v2280
    %v2283 = vxor.u32 %v2282, 2147483648
    %v2284 = vmul.f32 %v2283, 1.442695
    %v2285 = vpow.pop %v2284
    %v2286 = vadd.f32 %v2285, 1.0
    %v2287 = vrcp.pop %v2286
    %v2288 = vmul.f32 1.0, %v2287
    %v2290 = vrot.slane %v2282, 2
    %v2292 = vxor.u32 %v2290, 2147483648
    %v2293 = vmul.f32 %v2292, 1.442695
    %v2294 = vpow.pop %v2293
    %v2295 = vadd.f32 %v2294, 1.0
    %v2296 = vrcp.pop %v2295
    %v2297 = vmul.f32 1.0, %v2296
    %v2298 = vrot.slane %v2282, 4
    %v2300 = vtanh.pop %v2298
    %v2301 = vrot.slane %v2282, 6
    %v2303 = vxor.u32 %v2301, 2147483648
    %v2304 = vmul.f32 %v2303, 1.442695
    %v2305 = vpow.pop %v2304
    %v2306 = vadd.f32 %v2305, 1.0
    %v2307 = vrcp.pop %v2306
    %v2308 = vmul.f32 1.0, %v2307
    %v2309 = vmul.f32 %v2297, %v2051
    %v2310 = vmul.f32 %v2288, %v2300
    %v2311 = vadd.f32 %v2309, %v2310
    %v2312 = vtanh.pop %v2311
    %v2313 = vmul.f32 %v2308, %v2312
    %s2314 = sadd.s32 %s99, 4
    %v2315 = vstv %s2314
    %vm2316 = vcmp.lt.s32.totalorder %v2315, %v96
    %v2317 = vsel %vm2316, 1, 0
    %2318 = vset.pattern.permute.xlu0 0
    %2319 = vperm.xlu0 %2318, %v2317
    %v2320 = vpop.permute.xlu0 %2319
    %vm2321 = vcmp.eq.s32.totalorder %v2320, 1
    %v2322 = vsel %vm2321, %v2311, %v2051
    %2323 = vst [vmem:[#allocation5] sm:$0x3] %v2322
    %v2324 = vsel %vm2321, %v2313, %v2050
    %2325 = vst [vmem:[#allocation4] sm:$0x3] %v2324
    %v2326 = vsel %vm2321, %v2313, 0.0
    %s2327 = scalar_lea.vmem [#allocation15], 8
    %2328 = vst [vmem:[%s2327] sm:$0x3] %v2326
    %v2329 = vld [vmem:[#allocation2] sm:$0x3]
    %v2330 = vld [vmem:[#allocation3] sm:$0x3]
    %s2331 = scalar_lea.vmem [#allocation6], 32
    %v2332 = vld [vmem:[%s2331] sm:$0xff]
    %v2333 = vld [vmem:[#allocation11] sm:$0xff]
    %v2334 = vld [vmem:[#allocation11 + $0x8] sm:$0xff]
    %v2335 = vld [vmem:[#allocation11 + $0x10] sm:$0xff]
    %v2336 = vld [vmem:[#allocation11 + $0x18] sm:$0xff]
    %v2337 = vld [vmem:[#allocation11 + $0x20] sm:$0xff]
    %v2338 = vld [vmem:[#allocation11 + $0x28] sm:$0xff]
    %v2339 = vld [vmem:[#allocation11 + $0x30] sm:$0xff]
    %v2340 = vld [vmem:[#allocation11 + $0x38] sm:$0xff]
    %v2341 = vld [vmem:[#allocation11 + $0x40] sm:$0xff]
    %v2342 = vld [vmem:[#allocation11 + $0x48] sm:$0xff]
    %v2343 = vld [vmem:[#allocation11 + $0x50] sm:$0xff]
    %v2344 = vld [vmem:[#allocation11 + $0x58] sm:$0xff]
    %v2345 = vld [vmem:[#allocation11 + $0x60] sm:$0xff]
    %v2346 = vld [vmem:[#allocation11 + $0x68] sm:$0xff]
    %v2347 = vld [vmem:[#allocation11 + $0x70] sm:$0xff]
    %v2348 = vld [vmem:[#allocation11 + $0x78] sm:$0xff]
    %v2349 = vld [vmem:[#allocation11 + $0x80] sm:$0xff]
    %v2350 = vld [vmem:[#allocation11 + $0x88] sm:$0xff]
    %v2351 = vld [vmem:[#allocation11 + $0x90] sm:$0xff]
    %v2352 = vld [vmem:[#allocation11 + $0x98] sm:$0xff]
    %v2353 = vld [vmem:[#allocation11 + $0xa0] sm:$0xff]
    %v2354 = vld [vmem:[#allocation11 + $0xa8] sm:$0xff]
    %v2355 = vld [vmem:[#allocation11 + $0xb0] sm:$0xff]
    %v2356 = vld [vmem:[#allocation11 + $0xb8] sm:$0xff]
    %v2357 = vld [vmem:[#allocation11 + $0xc0] sm:$0xff]
    %v2358 = vld [vmem:[#allocation11 + $0xc8] sm:$0xff]
    %v2359 = vld [vmem:[#allocation11 + $0xd0] sm:$0xff]
    %v2360 = vld [vmem:[#allocation11 + $0xd8] sm:$0xff]
    %v2361 = vld [vmem:[#allocation11 + $0xe0] sm:$0xff]
    %v2362 = vld [vmem:[#allocation11 + $0xe8] sm:$0xff]
    %v2363 = vld [vmem:[#allocation11 + $0xf0] sm:$0xff]
    %v2364 = vld [vmem:[#allocation11 + $0xf8] sm:$0xff]
    %v2365 = vld [vmem:[#allocation11 + $0x100] sm:$0xff]
    %v2366 = vld [vmem:[#allocation11 + $0x108] sm:$0xff]
    %v2367 = vld [vmem:[#allocation11 + $0x110] sm:$0xff]
    %v2368 = vld [vmem:[#allocation11 + $0x118] sm:$0xff]
    %v2369 = vld [vmem:[#allocation11 + $0x120] sm:$0xff]
    %v2370 = vld [vmem:[#allocation11 + $0x128] sm:$0xff]
    %v2371 = vld [vmem:[#allocation11 + $0x130] sm:$0xff]
    %v2372 = vld [vmem:[#allocation11 + $0x138] sm:$0xff]
    %v2373 = vld [vmem:[#allocation11 + $0x140] sm:$0xff]
    %v2374 = vld [vmem:[#allocation11 + $0x148] sm:$0xff]
    %v2375 = vld [vmem:[#allocation11 + $0x150] sm:$0xff]
    %v2376 = vld [vmem:[#allocation11 + $0x158] sm:$0xff]
    %v2377 = vld [vmem:[#allocation11 + $0x160] sm:$0xff]
    %v2378 = vld [vmem:[#allocation11 + $0x168] sm:$0xff]
    %v2379 = vld [vmem:[#allocation11 + $0x170] sm:$0xff]
    %v2380 = vld [vmem:[#allocation11 + $0x178] sm:$0xff]
    %v2381 = vld [vmem:[#allocation11 + $0x180] sm:$0xff]
    %v2382 = vld [vmem:[#allocation11 + $0x188] sm:$0xff]
    %v2383 = vld [vmem:[#allocation11 + $0x190] sm:$0xff]
    %v2384 = vld [vmem:[#allocation11 + $0x198] sm:$0xff]
    %v2385 = vld [vmem:[#allocation11 + $0x1a0] sm:$0xff]
    %v2386 = vld [vmem:[#allocation11 + $0x1a8] sm:$0xff]
    %v2387 = vld [vmem:[#allocation11 + $0x1b0] sm:$0xff]
    %v2388 = vld [vmem:[#allocation11 + $0x1b8] sm:$0xff]
    %v2389 = vld [vmem:[#allocation11 + $0x1c0] sm:$0xff]
    %v2390 = vld [vmem:[#allocation11 + $0x1c8] sm:$0xff]
    %v2391 = vld [vmem:[#allocation11 + $0x1d0] sm:$0xff]
    %v2392 = vld [vmem:[#allocation11 + $0x1d8] sm:$0xff]
    %v2393 = vld [vmem:[#allocation11 + $0x1e0] sm:$0xff]
    %v2394 = vld [vmem:[#allocation11 + $0x1e8] sm:$0xff]
    %v2395 = vld [vmem:[#allocation11 + $0x1f0] sm:$0xff]
    %v2396 = vld [vmem:[#allocation11 + $0x1f8] sm:$0xff]
    %2397 = vmatprep.subr.mxu0 %v2394
    %2398 = vmatpush1.msra.mxu0 %v2393
    %2399 = vmatprep.subr.mxu0 %v2390
    %2400 = vmatpush1.msra.mxu0 %v2389
    %2401 = vmatprep.subr.mxu0 %v2386
    %2402 = vmatpush1.msra.mxu0 %v2385
    %2403 = vmatprep.subr.mxu0 %v2382
    %2404 = vmatpush1.msra.mxu0 %v2381
    %2405 = vmatprep.subr.mxu0 %v2378
    %2406 = vmatpush1.msra.mxu0 %v2377
    %2407 = vmatprep.subr.mxu0 %v2374
    %2408 = vmatpush1.msra.mxu0 %v2373
    %2409 = vmatprep.subr.mxu0 %v2370
    %2410 = vmatpush1.msra.mxu0 %v2369
    %2411 = vmatprep.subr.mxu0 %v2366
    %2412 = vmatpush1.msra.mxu0 %v2365
    %2413 = vmatprep.subr.mxu0 %v2362
    %2414 = vmatpush1.msra.mxu0 %v2361
    %2415 = vmatprep.subr.mxu0 %v2358
    %2416 = vmatpush1.msra.mxu0 %v2357
    %2417 = vmatprep.subr.mxu0 %v2354
    %2418 = vmatpush1.msra.mxu0 %v2353
    %2419 = vmatprep.subr.mxu0 %v2350
    %2420 = vmatpush1.msra.mxu0 %v2349
    %2421 = vmatprep.subr.mxu0 %v2346
    %2422 = vmatpush1.msra.mxu0 %v2345
    %2423 = vmatprep.subr.mxu0 %v2342
    %2424 = vmatpush1.msra.mxu0 %v2341
    %2425 = vmatprep.subr.mxu0 %v2338
    %2426 = vmatpush1.msra.mxu0 %v2337
    %2427 = vmatprep.subr.mxu0 %v2334
    %2428 = vmatpush1.msra.mxu0 %v2333
    %2429 = vmatprep.subr.mxu0 0.0
    %2430 = vmatpush2.msra.mxu0 0.0
    %2431 = vmatprep.subr.mxu0 0.0
    %2432 = vmatpush2.msra.mxu0 0.0
    %2433 = vmatprep.subr.mxu0 0.0
    %2434 = vmatpush2.msra.mxu0 0.0
    %2435 = vmatprep.subr.mxu0 0.0
    %2436 = vmatpush2.msra.mxu0 0.0
    %2437 = vmatprep.subr.mxu0 0.0
    %2438 = vmatpush2.msra.mxu0 0.0
    %2439 = vmatprep.subr.mxu0 0.0
    %2440 = vmatpush2.msra.mxu0 0.0
    %2441 = vmatprep.subr.mxu0 0.0
    %2442 = vmatpush2.msra.mxu0 0.0
    %2443 = vmatprep.subr.mxu0 0.0
    %2444 = vmatpush2.msra.mxu0 0.0
    %2445 = vmatprep.subr.mxu0 0.0
    %2446 = vmatpush2.msra.mxu0 0.0
    %2447 = vmatprep.subr.mxu0 0.0
    %2448 = vmatpush2.msra.mxu0 0.0
    %2449 = vmatprep.subr.mxu0 0.0
    %2450 = vmatpush2.msra.mxu0 0.0
    %2451 = vmatprep.subr.mxu0 0.0
    %2452 = vmatpush2.msra.mxu0 0.0
    %2453 = vmatprep.subr.mxu0 0.0
    %2454 = vmatpush2.msra.mxu0 0.0
    %2455 = vmatprep.subr.mxu0 0.0
    %2456 = vmatpush2.msra.mxu0 0.0
    %2457 = vmatprep.subr.mxu0 0.0
    %2458 = vmatpush2.msra.mxu0 0.0
    %2459 = vmatprep.subr.mxu0 0.0
    %2460 = vmatpush2.msra.mxu0 0.0
    %2461 = vmatprep.mubr.f32.mxu0 0.0
    %2462 = vmatmul.mubr.f32.gmra.mxu0 %v2329
    %v2463 = vpop.f32.mrf.mxu0
    %v2464 = vadd.f32 0.0, %v2463
    %v2465 = vpop.f32.mrf.mxu0
    %v2466 = vadd.f32 0.0, %v2465
    %2467 = vdwg.mxu0
    %2468 = vmatprep.subr.mxu0 %v2396
    %2469 = vmatpush1.msra.mxu0 %v2395
    %2470 = vmatprep.subr.mxu0 %v2392
    %2471 = vmatpush1.msra.mxu0 %v2391
    %2472 = vmatprep.subr.mxu0 %v2388
    %2473 = vmatpush1.msra.mxu0 %v2387
    %2474 = vmatprep.subr.mxu0 %v2384
    %2475 = vmatpush1.msra.mxu0 %v2383
    %2476 = vmatprep.subr.mxu0 %v2380
    %2477 = vmatpush1.msra.mxu0 %v2379
    %2478 = vmatprep.subr.mxu0 %v2376
    %2479 = vmatpush1.msra.mxu0 %v2375
    %2480 = vmatprep.subr.mxu0 %v2372
    %2481 = vmatpush1.msra.mxu0 %v2371
    %2482 = vmatprep.subr.mxu0 %v2368
    %2483 = vmatpush1.msra.mxu0 %v2367
    %2484 = vmatprep.subr.mxu0 %v2364
    %2485 = vmatpush1.msra.mxu0 %v2363
    %2486 = vmatprep.subr.mxu0 %v2360
    %2487 = vmatpush1.msra.mxu0 %v2359
    %2488 = vmatprep.subr.mxu0 %v2356
    %2489 = vmatpush1.msra.mxu0 %v2355
    %2490 = vmatprep.subr.mxu0 %v2352
    %2491 = vmatpush1.msra.mxu0 %v2351
    %2492 = vmatprep.subr.mxu0 %v2348
    %2493 = vmatpush1.msra.mxu0 %v2347
    %2494 = vmatprep.subr.mxu0 %v2344
    %2495 = vmatpush1.msra.mxu0 %v2343
    %2496 = vmatprep.subr.mxu0 %v2340
    %2497 = vmatpush1.msra.mxu0 %v2339
    %2498 = vmatprep.subr.mxu0 %v2336
    %2499 = vmatpush1.msra.mxu0 %v2335
    %2500 = vmatprep.subr.mxu0 0.0
    %2501 = vmatpush2.msra.mxu0 0.0
    %2502 = vmatprep.subr.mxu0 0.0
    %2503 = vmatpush2.msra.mxu0 0.0
    %2504 = vmatprep.subr.mxu0 0.0
    %2505 = vmatpush2.msra.mxu0 0.0
    %2506 = vmatprep.subr.mxu0 0.0
    %2507 = vmatpush2.msra.mxu0 0.0
    %2508 = vmatprep.subr.mxu0 0.0
    %2509 = vmatpush2.msra.mxu0 0.0
    %2510 = vmatprep.subr.mxu0 0.0
    %2511 = vmatpush2.msra.mxu0 0.0
    %2512 = vmatprep.subr.mxu0 0.0
    %2513 = vmatpush2.msra.mxu0 0.0
    %2514 = vmatprep.subr.mxu0 0.0
    %2515 = vmatpush2.msra.mxu0 0.0
    %2516 = vmatprep.subr.mxu0 0.0
    %2517 = vmatpush2.msra.mxu0 0.0
    %2518 = vmatprep.subr.mxu0 0.0
    %2519 = vmatpush2.msra.mxu0 0.0
    %2520 = vmatprep.subr.mxu0 0.0
    %2521 = vmatpush2.msra.mxu0 0.0
    %2522 = vmatprep.subr.mxu0 0.0
    %2523 = vmatpush2.msra.mxu0 0.0
    %2524 = vmatprep.subr.mxu0 0.0
    %2525 = vmatpush2.msra.mxu0 0.0
    %2526 = vmatprep.subr.mxu0 0.0
    %2527 = vmatpush2.msra.mxu0 0.0
    %2528 = vmatprep.subr.mxu0 0.0
    %2529 = vmatpush2.msra.mxu0 0.0
    %2530 = vmatprep.subr.mxu0 0.0
    %2531 = vmatpush2.msra.mxu0 0.0
    %2532 = vmatprep.mubr.f32.mxu0 0.0
    %2533 = vmatmul.mubr.f32.gmra.mxu0 %v2329
    %v2534 = vpop.f32.mrf.mxu0
    %v2535 = vadd.f32 0.0, %v2534
    %v2536 = vpop.f32.mrf.mxu0
    %v2537 = vadd.f32 0.0, %v2536
    %2538 = vdwg.mxu0
    %v2543 = vcombine.low %v2464, %v2466
    %v2544 = vcombine.low %v2535, %v2537
    %v2546 = vunpack.c.l.s4 1983009808
    %v2547 = vunpack.c.0.s8 %v2546
    %v2548 = vlaneseq
    %v2549 = vshrl.u32 %v2548, 7
    %v2550 = vsub.s32 %v2547, %v2549
    %v2551 = vrot.slane %v2543, %v2550
    %v2553 = vunpack.c.l.s4 1983009808
    %v2554 = vunpack.c.0.s8 %v2553
    %v2555 = vlaneseq
    %v2556 = vshrl.u32 %v2555, 7
    %v2557 = vsub.s32 %v2554, %v2556
    %v2558 = vrot.slane %v2544, %v2557
    %v2559 = vcombine.low %v2551, %v2558
    %v2561 = vadd.f32 %v2332, %v2559
    %v2562 = vxor.u32 %v2561, 2147483648
    %v2563 = vmul.f32 %v2562, 1.442695
    %v2564 = vpow.pop %v2563
    %v2565 = vadd.f32 %v2564, 1.0
    %v2566 = vrcp.pop %v2565
    %v2567 = vmul.f32 1.0, %v2566
    %v2569 = vrot.slane %v2561, 2
    %v2571 = vxor.u32 %v2569, 2147483648
    %v2572 = vmul.f32 %v2571, 1.442695
    %v2573 = vpow.pop %v2572
    %v2574 = vadd.f32 %v2573, 1.0
    %v2575 = vrcp.pop %v2574
    %v2576 = vmul.f32 1.0, %v2575
    %v2577 = vrot.slane %v2561, 4
    %v2579 = vtanh.pop %v2577
    %v2580 = vrot.slane %v2561, 6
    %v2582 = vxor.u32 %v2580, 2147483648
    %v2583 = vmul.f32 %v2582, 1.442695
    %v2584 = vpow.pop %v2583
    %v2585 = vadd.f32 %v2584, 1.0
    %v2586 = vrcp.pop %v2585
    %v2587 = vmul.f32 1.0, %v2586
    %v2588 = vmul.f32 %v2576, %v2330
    %v2589 = vmul.f32 %v2567, %v2579
    %v2590 = vadd.f32 %v2588, %v2589
    %v2591 = vtanh.pop %v2590
    %v2592 = vmul.f32 %v2587, %v2591
    %s2593 = sadd.s32 %s97, 4
    %v2594 = vstv %s2593
    %vm2595 = vcmp.lt.s32.totalorder %v2594, %v96
    %v2596 = vsel %vm2595, 1, 0
    %2597 = vset.pattern.permute.xlu0 0
    %2598 = vperm.xlu0 %2597, %v2596
    %v2599 = vpop.permute.xlu0 %2598
    %vm2600 = vcmp.eq.s32.totalorder %v2599, 1
    %v2601 = vsel %vm2600, %v2590, %v2330
    %2602 = vst [vmem:[#allocation3] sm:$0x3] %v2601
    %v2603 = vsel %vm2600, %v2592, %v2329
    %2604 = vst [vmem:[#allocation2] sm:$0x3] %v2603
    %v2605 = vsel %vm2600, %v2592, 0.0
    %s2606 = scalar_lea.vmem [#allocation14], 8
    %2607 = vst [vmem:[%s2606] sm:$0x3] %v2605
    %v2608 = vld [vmem:[#allocation4] sm:$0x3]
    %v2609 = vld [vmem:[#allocation5] sm:$0x3]
    %s2610 = scalar_lea.vmem [#allocation9], 24
    %v2611 = vld [vmem:[%s2610] sm:$0xff]
    %v2612 = vld [vmem:[#allocation12] sm:$0xff]
    %v2613 = vld [vmem:[#allocation12 + $0x8] sm:$0xff]
    %v2614 = vld [vmem:[#allocation12 + $0x10] sm:$0xff]
    %v2615 = vld [vmem:[#allocation12 + $0x18] sm:$0xff]
    %v2616 = vld [vmem:[#allocation12 + $0x20] sm:$0xff]
    %v2617 = vld [vmem:[#allocation12 + $0x28] sm:$0xff]
    %v2618 = vld [vmem:[#allocation12 + $0x30] sm:$0xff]
    %v2619 = vld [vmem:[#allocation12 + $0x38] sm:$0xff]
    %v2620 = vld [vmem:[#allocation12 + $0x40] sm:$0xff]
    %v2621 = vld [vmem:[#allocation12 + $0x48] sm:$0xff]
    %v2622 = vld [vmem:[#allocation12 + $0x50] sm:$0xff]
    %v2623 = vld [vmem:[#allocation12 + $0x58] sm:$0xff]
    %v2624 = vld [vmem:[#allocation12 + $0x60] sm:$0xff]
    %v2625 = vld [vmem:[#allocation12 + $0x68] sm:$0xff]
    %v2626 = vld [vmem:[#allocation12 + $0x70] sm:$0xff]
    %v2627 = vld [vmem:[#allocation12 + $0x78] sm:$0xff]
    %v2628 = vld [vmem:[#allocation12 + $0x80] sm:$0xff]
    %v2629 = vld [vmem:[#allocation12 + $0x88] sm:$0xff]
    %v2630 = vld [vmem:[#allocation12 + $0x90] sm:$0xff]
    %v2631 = vld [vmem:[#allocation12 + $0x98] sm:$0xff]
    %v2632 = vld [vmem:[#allocation12 + $0xa0] sm:$0xff]
    %v2633 = vld [vmem:[#allocation12 + $0xa8] sm:$0xff]
    %v2634 = vld [vmem:[#allocation12 + $0xb0] sm:$0xff]
    %v2635 = vld [vmem:[#allocation12 + $0xb8] sm:$0xff]
    %v2636 = vld [vmem:[#allocation12 + $0xc0] sm:$0xff]
    %v2637 = vld [vmem:[#allocation12 + $0xc8] sm:$0xff]
    %v2638 = vld [vmem:[#allocation12 + $0xd0] sm:$0xff]
    %v2639 = vld [vmem:[#allocation12 + $0xd8] sm:$0xff]
    %v2640 = vld [vmem:[#allocation12 + $0xe0] sm:$0xff]
    %v2641 = vld [vmem:[#allocation12 + $0xe8] sm:$0xff]
    %v2642 = vld [vmem:[#allocation12 + $0xf0] sm:$0xff]
    %v2643 = vld [vmem:[#allocation12 + $0xf8] sm:$0xff]
    %v2644 = vld [vmem:[#allocation12 + $0x100] sm:$0xff]
    %v2645 = vld [vmem:[#allocation12 + $0x108] sm:$0xff]
    %v2646 = vld [vmem:[#allocation12 + $0x110] sm:$0xff]
    %v2647 = vld [vmem:[#allocation12 + $0x118] sm:$0xff]
    %v2648 = vld [vmem:[#allocation12 + $0x120] sm:$0xff]
    %v2649 = vld [vmem:[#allocation12 + $0x128] sm:$0xff]
    %v2650 = vld [vmem:[#allocation12 + $0x130] sm:$0xff]
    %v2651 = vld [vmem:[#allocation12 + $0x138] sm:$0xff]
    %v2652 = vld [vmem:[#allocation12 + $0x140] sm:$0xff]
    %v2653 = vld [vmem:[#allocation12 + $0x148] sm:$0xff]
    %v2654 = vld [vmem:[#allocation12 + $0x150] sm:$0xff]
    %v2655 = vld [vmem:[#allocation12 + $0x158] sm:$0xff]
    %v2656 = vld [vmem:[#allocation12 + $0x160] sm:$0xff]
    %v2657 = vld [vmem:[#allocation12 + $0x168] sm:$0xff]
    %v2658 = vld [vmem:[#allocation12 + $0x170] sm:$0xff]
    %v2659 = vld [vmem:[#allocation12 + $0x178] sm:$0xff]
    %v2660 = vld [vmem:[#allocation12 + $0x180] sm:$0xff]
    %v2661 = vld [vmem:[#allocation12 + $0x188] sm:$0xff]
    %v2662 = vld [vmem:[#allocation12 + $0x190] sm:$0xff]
    %v2663 = vld [vmem:[#allocation12 + $0x198] sm:$0xff]
    %v2664 = vld [vmem:[#allocation12 + $0x1a0] sm:$0xff]
    %v2665 = vld [vmem:[#allocation12 + $0x1a8] sm:$0xff]
    %v2666 = vld [vmem:[#allocation12 + $0x1b0] sm:$0xff]
    %v2667 = vld [vmem:[#allocation12 + $0x1b8] sm:$0xff]
    %v2668 = vld [vmem:[#allocation12 + $0x1c0] sm:$0xff]
    %v2669 = vld [vmem:[#allocation12 + $0x1c8] sm:$0xff]
    %v2670 = vld [vmem:[#allocation12 + $0x1d0] sm:$0xff]
    %v2671 = vld [vmem:[#allocation12 + $0x1d8] sm:$0xff]
    %v2672 = vld [vmem:[#allocation12 + $0x1e0] sm:$0xff]
    %v2673 = vld [vmem:[#allocation12 + $0x1e8] sm:$0xff]
    %v2674 = vld [vmem:[#allocation12 + $0x1f0] sm:$0xff]
    %v2675 = vld [vmem:[#allocation12 + $0x1f8] sm:$0xff]
    %2676 = vmatprep.subr.mxu0 %v2673
    %2677 = vmatpush1.msra.mxu0 %v2672
    %2678 = vmatprep.subr.mxu0 %v2669
    %2679 = vmatpush1.msra.mxu0 %v2668
    %2680 = vmatprep.subr.mxu0 %v2665
    %2681 = vmatpush1.msra.mxu0 %v2664
    %2682 = vmatprep.subr.mxu0 %v2661
    %2683 = vmatpush1.msra.mxu0 %v2660
    %2684 = vmatprep.subr.mxu0 %v2657
    %2685 = vmatpush1.msra.mxu0 %v2656
    %2686 = vmatprep.subr.mxu0 %v2653
    %2687 = vmatpush1.msra.mxu0 %v2652
    %2688 = vmatprep.subr.mxu0 %v2649
    %2689 = vmatpush1.msra.mxu0 %v2648
    %2690 = vmatprep.subr.mxu0 %v2645
    %2691 = vmatpush1.msra.mxu0 %v2644
    %2692 = vmatprep.subr.mxu0 %v2641
    %2693 = vmatpush1.msra.mxu0 %v2640
    %2694 = vmatprep.subr.mxu0 %v2637
    %2695 = vmatpush1.msra.mxu0 %v2636
    %2696 = vmatprep.subr.mxu0 %v2633
    %2697 = vmatpush1.msra.mxu0 %v2632
    %2698 = vmatprep.subr.mxu0 %v2629
    %2699 = vmatpush1.msra.mxu0 %v2628
    %2700 = vmatprep.subr.mxu0 %v2625
    %2701 = vmatpush1.msra.mxu0 %v2624
    %2702 = vmatprep.subr.mxu0 %v2621
    %2703 = vmatpush1.msra.mxu0 %v2620
    %2704 = vmatprep.subr.mxu0 %v2617
    %2705 = vmatpush1.msra.mxu0 %v2616
    %2706 = vmatprep.subr.mxu0 %v2613
    %2707 = vmatpush1.msra.mxu0 %v2612
    %2708 = vmatprep.subr.mxu0 0.0
    %2709 = vmatpush2.msra.mxu0 0.0
    %2710 = vmatprep.subr.mxu0 0.0
    %2711 = vmatpush2.msra.mxu0 0.0
    %2712 = vmatprep.subr.mxu0 0.0
    %2713 = vmatpush2.msra.mxu0 0.0
    %2714 = vmatprep.subr.mxu0 0.0
    %2715 = vmatpush2.msra.mxu0 0.0
    %2716 = vmatprep.subr.mxu0 0.0
    %2717 = vmatpush2.msra.mxu0 0.0
    %2718 = vmatprep.subr.mxu0 0.0
    %2719 = vmatpush2.msra.mxu0 0.0
    %2720 = vmatprep.subr.mxu0 0.0
    %2721 = vmatpush2.msra.mxu0 0.0
    %2722 = vmatprep.subr.mxu0 0.0
    %2723 = vmatpush2.msra.mxu0 0.0
    %2724 = vmatprep.subr.mxu0 0.0
    %2725 = vmatpush2.msra.mxu0 0.0
    %2726 = vmatprep.subr.mxu0 0.0
    %2727 = vmatpush2.msra.mxu0 0.0
    %2728 = vmatprep.subr.mxu0 0.0
    %2729 = vmatpush2.msra.mxu0 0.0
    %2730 = vmatprep.subr.mxu0 0.0
    %2731 = vmatpush2.msra.mxu0 0.0
    %2732 = vmatprep.subr.mxu0 0.0
    %2733 = vmatpush2.msra.mxu0 0.0
    %2734 = vmatprep.subr.mxu0 0.0
    %2735 = vmatpush2.msra.mxu0 0.0
    %2736 = vmatprep.subr.mxu0 0.0
    %2737 = vmatpush2.msra.mxu0 0.0
    %2738 = vmatprep.subr.mxu0 0.0
    %2739 = vmatpush2.msra.mxu0 0.0
    %2740 = vmatprep.mubr.f32.mxu0 0.0
    %2741 = vmatmul.mubr.f32.gmra.mxu0 %v2608
    %v2742 = vpop.f32.mrf.mxu0
    %v2743 = vadd.f32 0.0, %v2742
    %v2744 = vpop.f32.mrf.mxu0
    %v2745 = vadd.f32 0.0, %v2744
    %2746 = vdwg.mxu0
    %2747 = vmatprep.subr.mxu0 %v2675
    %2748 = vmatpush1.msra.mxu0 %v2674
    %2749 = vmatprep.subr.mxu0 %v2671
    %2750 = vmatpush1.msra.mxu0 %v2670
    %2751 = vmatprep.subr.mxu0 %v2667
    %2752 = vmatpush1.msra.mxu0 %v2666
    %2753 = vmatprep.subr.mxu0 %v2663
    %2754 = vmatpush1.msra.mxu0 %v2662
    %2755 = vmatprep.subr.mxu0 %v2659
    %2756 = vmatpush1.msra.mxu0 %v2658
    %2757 = vmatprep.subr.mxu0 %v2655
    %2758 = vmatpush1.msra.mxu0 %v2654
    %2759 = vmatprep.subr.mxu0 %v2651
    %2760 = vmatpush1.msra.mxu0 %v2650
    %2761 = vmatprep.subr.mxu0 %v2647
    %2762 = vmatpush1.msra.mxu0 %v2646
    %2763 = vmatprep.subr.mxu0 %v2643
    %2764 = vmatpush1.msra.mxu0 %v2642
    %2765 = vmatprep.subr.mxu0 %v2639
    %2766 = vmatpush1.msra.mxu0 %v2638
    %2767 = vmatprep.subr.mxu0 %v2635
    %2768 = vmatpush1.msra.mxu0 %v2634
    %2769 = vmatprep.subr.mxu0 %v2631
    %2770 = vmatpush1.msra.mxu0 %v2630
    %2771 = vmatprep.subr.mxu0 %v2627
    %2772 = vmatpush1.msra.mxu0 %v2626
    %2773 = vmatprep.subr.mxu0 %v2623
    %2774 = vmatpush1.msra.mxu0 %v2622
    %2775 = vmatprep.subr.mxu0 %v2619
    %2776 = vmatpush1.msra.mxu0 %v2618
    %2777 = vmatprep.subr.mxu0 %v2615
    %2778 = vmatpush1.msra.mxu0 %v2614
    %2779 = vmatprep.subr.mxu0 0.0
    %2780 = vmatpush2.msra.mxu0 0.0
    %2781 = vmatprep.subr.mxu0 0.0
    %2782 = vmatpush2.msra.mxu0 0.0
    %2783 = vmatprep.subr.mxu0 0.0
    %2784 = vmatpush2.msra.mxu0 0.0
    %2785 = vmatprep.subr.mxu0 0.0
    %2786 = vmatpush2.msra.mxu0 0.0
    %2787 = vmatprep.subr.mxu0 0.0
    %2788 = vmatpush2.msra.mxu0 0.0
    %2789 = vmatprep.subr.mxu0 0.0
    %2790 = vmatpush2.msra.mxu0 0.0
    %2791 = vmatprep.subr.mxu0 0.0
    %2792 = vmatpush2.msra.mxu0 0.0
    %2793 = vmatprep.subr.mxu0 0.0
    %2794 = vmatpush2.msra.mxu0 0.0
    %2795 = vmatprep.subr.mxu0 0.0
    %2796 = vmatpush2.msra.mxu0 0.0
    %2797 = vmatprep.subr.mxu0 0.0
    %2798 = vmatpush2.msra.mxu0 0.0
    %2799 = vmatprep.subr.mxu0 0.0
    %2800 = vmatpush2.msra.mxu0 0.0
    %2801 = vmatprep.subr.mxu0 0.0
    %2802 = vmatpush2.msra.mxu0 0.0
    %2803 = vmatprep.subr.mxu0 0.0
    %2804 = vmatpush2.msra.mxu0 0.0
    %2805 = vmatprep.subr.mxu0 0.0
    %2806 = vmatpush2.msra.mxu0 0.0
    %2807 = vmatprep.subr.mxu0 0.0
    %2808 = vmatpush2.msra.mxu0 0.0
    %2809 = vmatprep.subr.mxu0 0.0
    %2810 = vmatpush2.msra.mxu0 0.0
    %2811 = vmatprep.mubr.f32.mxu0 0.0
    %2812 = vmatmul.mubr.f32.gmra.mxu0 %v2608
    %v2813 = vpop.f32.mrf.mxu0
    %v2814 = vadd.f32 0.0, %v2813
    %v2815 = vpop.f32.mrf.mxu0
    %v2816 = vadd.f32 0.0, %v2815
    %2817 = vdwg.mxu0
    %v2822 = vcombine.low %v2743, %v2745
    %v2823 = vcombine.low %v2814, %v2816
    %v2825 = vunpack.c.l.s4 1983009808
    %v2826 = vunpack.c.0.s8 %v2825
    %v2827 = vlaneseq
    %v2828 = vshrl.u32 %v2827, 7
    %v2829 = vsub.s32 %v2826, %v2828
    %v2830 = vrot.slane %v2822, %v2829
    %v2832 = vunpack.c.l.s4 1983009808
    %v2833 = vunpack.c.0.s8 %v2832
    %v2834 = vlaneseq
    %v2835 = vshrl.u32 %v2834, 7
    %v2836 = vsub.s32 %v2833, %v2835
    %v2837 = vrot.slane %v2823, %v2836
    %v2838 = vcombine.low %v2830, %v2837
    %v2840 = vadd.f32 %v2611, %v2838
    %v2841 = vxor.u32 %v2840, 2147483648
    %v2842 = vmul.f32 %v2841, 1.442695
    %v2843 = vpow.pop %v2842
    %v2844 = vadd.f32 %v2843, 1.0
    %v2845 = vrcp.pop %v2844
    %v2846 = vmul.f32 1.0, %v2845
    %v2848 = vrot.slane %v2840, 2
    %v2850 = vxor.u32 %v2848, 2147483648
    %v2851 = vmul.f32 %v2850, 1.442695
    %v2852 = vpow.pop %v2851
    %v2853 = vadd.f32 %v2852, 1.0
    %v2854 = vrcp.pop %v2853
    %v2855 = vmul.f32 1.0, %v2854
    %v2856 = vrot.slane %v2840, 4
    %v2858 = vtanh.pop %v2856
    %v2859 = vrot.slane %v2840, 6
    %v2861 = vxor.u32 %v2859, 2147483648
    %v2862 = vmul.f32 %v2861, 1.442695
    %v2863 = vpow.pop %v2862
    %v2864 = vadd.f32 %v2863, 1.0
    %v2865 = vrcp.pop %v2864
    %v2866 = vmul.f32 1.0, %v2865
    %v2867 = vmul.f32 %v2855, %v2609
    %v2868 = vmul.f32 %v2846, %v2858
    %v2869 = vadd.f32 %v2867, %v2868
    %v2870 = vtanh.pop %v2869
    %v2871 = vmul.f32 %v2866, %v2870
    %s2872 = sadd.s32 %s99, 3
    %v2873 = vstv %s2872
    %vm2874 = vcmp.lt.s32.totalorder %v2873, %v96
    %v2875 = vsel %vm2874, 1, 0
    %2876 = vset.pattern.permute.xlu0 0
    %2877 = vperm.xlu0 %2876, %v2875
    %v2878 = vpop.permute.xlu0 %2877
    %vm2879 = vcmp.eq.s32.totalorder %v2878, 1
    %v2880 = vsel %vm2879, %v2869, %v2609
    %2881 = vst [vmem:[#allocation5] sm:$0x3] %v2880
    %v2882 = vsel %vm2879, %v2871, %v2608
    %2883 = vst [vmem:[#allocation4] sm:$0x3] %v2882
    %v2884 = vsel %vm2879, %v2871, 0.0
    %s2885 = scalar_lea.vmem [#allocation15], 6
    %2886 = vst [vmem:[%s2885] sm:$0x3] %v2884
    %v2887 = vld [vmem:[#allocation2] sm:$0x3]
    %v2888 = vld [vmem:[#allocation3] sm:$0x3]
    %s2889 = scalar_lea.vmem [#allocation6], 40
    %v2890 = vld [vmem:[%s2889] sm:$0xff]
    %v2891 = vld [vmem:[#allocation11] sm:$0xff]
    %v2892 = vld [vmem:[#allocation11 + $0x8] sm:$0xff]
    %v2893 = vld [vmem:[#allocation11 + $0x10] sm:$0xff]
    %v2894 = vld [vmem:[#allocation11 + $0x18] sm:$0xff]
    %v2895 = vld [vmem:[#allocation11 + $0x20] sm:$0xff]
    %v2896 = vld [vmem:[#allocation11 + $0x28] sm:$0xff]
    %v2897 = vld [vmem:[#allocation11 + $0x30] sm:$0xff]
    %v2898 = vld [vmem:[#allocation11 + $0x38] sm:$0xff]
    %v2899 = vld [vmem:[#allocation11 + $0x40] sm:$0xff]
    %v2900 = vld [vmem:[#allocation11 + $0x48] sm:$0xff]
    %v2901 = vld [vmem:[#allocation11 + $0x50] sm:$0xff]
    %v2902 = vld [vmem:[#allocation11 + $0x58] sm:$0xff]
    %v2903 = vld [vmem:[#allocation11 + $0x60] sm:$0xff]
    %v2904 = vld [vmem:[#allocation11 + $0x68] sm:$0xff]
    %v2905 = vld [vmem:[#allocation11 + $0x70] sm:$0xff]
    %v2906 = vld [vmem:[#allocation11 + $0x78] sm:$0xff]
    %v2907 = vld [vmem:[#allocation11 + $0x80] sm:$0xff]
    %v2908 = vld [vmem:[#allocation11 + $0x88] sm:$0xff]
    %v2909 = vld [vmem:[#allocation11 + $0x90] sm:$0xff]
    %v2910 = vld [vmem:[#allocation11 + $0x98] sm:$0xff]
    %v2911 = vld [vmem:[#allocation11 + $0xa0] sm:$0xff]
    %v2912 = vld [vmem:[#allocation11 + $0xa8] sm:$0xff]
    %v2913 = vld [vmem:[#allocation11 + $0xb0] sm:$0xff]
    %v2914 = vld [vmem:[#allocation11 + $0xb8] sm:$0xff]
    %v2915 = vld [vmem:[#allocation11 + $0xc0] sm:$0xff]
    %v2916 = vld [vmem:[#allocation11 + $0xc8] sm:$0xff]
    %v2917 = vld [vmem:[#allocation11 + $0xd0] sm:$0xff]
    %v2918 = vld [vmem:[#allocation11 + $0xd8] sm:$0xff]
    %v2919 = vld [vmem:[#allocation11 + $0xe0] sm:$0xff]
    %v2920 = vld [vmem:[#allocation11 + $0xe8] sm:$0xff]
    %v2921 = vld [vmem:[#allocation11 + $0xf0] sm:$0xff]
    %v2922 = vld [vmem:[#allocation11 + $0xf8] sm:$0xff]
    %v2923 = vld [vmem:[#allocation11 + $0x100] sm:$0xff]
    %v2924 = vld [vmem:[#allocation11 + $0x108] sm:$0xff]
    %v2925 = vld [vmem:[#allocation11 + $0x110] sm:$0xff]
    %v2926 = vld [vmem:[#allocation11 + $0x118] sm:$0xff]
    %v2927 = vld [vmem:[#allocation11 + $0x120] sm:$0xff]
    %v2928 = vld [vmem:[#allocation11 + $0x128] sm:$0xff]
    %v2929 = vld [vmem:[#allocation11 + $0x130] sm:$0xff]
    %v2930 = vld [vmem:[#allocation11 + $0x138] sm:$0xff]
    %v2931 = vld [vmem:[#allocation11 + $0x140] sm:$0xff]
    %v2932 = vld [vmem:[#allocation11 + $0x148] sm:$0xff]
    %v2933 = vld [vmem:[#allocation11 + $0x150] sm:$0xff]
    %v2934 = vld [vmem:[#allocation11 + $0x158] sm:$0xff]
    %v2935 = vld [vmem:[#allocation11 + $0x160] sm:$0xff]
    %v2936 = vld [vmem:[#allocation11 + $0x168] sm:$0xff]
    %v2937 = vld [vmem:[#allocation11 + $0x170] sm:$0xff]
    %v2938 = vld [vmem:[#allocation11 + $0x178] sm:$0xff]
    %v2939 = vld [vmem:[#allocation11 + $0x180] sm:$0xff]
    %v2940 = vld [vmem:[#allocation11 + $0x188] sm:$0xff]
    %v2941 = vld [vmem:[#allocation11 + $0x190] sm:$0xff]
    %v2942 = vld [vmem:[#allocation11 + $0x198] sm:$0xff]
    %v2943 = vld [vmem:[#allocation11 + $0x1a0] sm:$0xff]
    %v2944 = vld [vmem:[#allocation11 + $0x1a8] sm:$0xff]
    %v2945 = vld [vmem:[#allocation11 + $0x1b0] sm:$0xff]
    %v2946 = vld [vmem:[#allocation11 + $0x1b8] sm:$0xff]
    %v2947 = vld [vmem:[#allocation11 + $0x1c0] sm:$0xff]
    %v2948 = vld [vmem:[#allocation11 + $0x1c8] sm:$0xff]
    %v2949 = vld [vmem:[#allocation11 + $0x1d0] sm:$0xff]
    %v2950 = vld [vmem:[#allocation11 + $0x1d8] sm:$0xff]
    %v2951 = vld [vmem:[#allocation11 + $0x1e0] sm:$0xff]
    %v2952 = vld [vmem:[#allocation11 + $0x1e8] sm:$0xff]
    %v2953 = vld [vmem:[#allocation11 + $0x1f0] sm:$0xff]
    %v2954 = vld [vmem:[#allocation11 + $0x1f8] sm:$0xff]
    %2955 = vmatprep.subr.mxu0 %v2952
    %2956 = vmatpush1.msra.mxu0 %v2951
    %2957 = vmatprep.subr.mxu0 %v2948
    %2958 = vmatpush1.msra.mxu0 %v2947
    %2959 = vmatprep.subr.mxu0 %v2944
    %2960 = vmatpush1.msra.mxu0 %v2943
    %2961 = vmatprep.subr.mxu0 %v2940
    %2962 = vmatpush1.msra.mxu0 %v2939
    %2963 = vmatprep.subr.mxu0 %v2936
    %2964 = vmatpush1.msra.mxu0 %v2935
    %2965 = vmatprep.subr.mxu0 %v2932
    %2966 = vmatpush1.msra.mxu0 %v2931
    %2967 = vmatprep.subr.mxu0 %v2928
    %2968 = vmatpush1.msra.mxu0 %v2927
    %2969 = vmatprep.subr.mxu0 %v2924
    %2970 = vmatpush1.msra.mxu0 %v2923
    %2971 = vmatprep.subr.mxu0 %v2920
    %2972 = vmatpush1.msra.mxu0 %v2919
    %2973 = vmatprep.subr.mxu0 %v2916
    %2974 = vmatpush1.msra.mxu0 %v2915
    %2975 = vmatprep.subr.mxu0 %v2912
    %2976 = vmatpush1.msra.mxu0 %v2911
    %2977 = vmatprep.subr.mxu0 %v2908
    %2978 = vmatpush1.msra.mxu0 %v2907
    %2979 = vmatprep.subr.mxu0 %v2904
    %2980 = vmatpush1.msra.mxu0 %v2903
    %2981 = vmatprep.subr.mxu0 %v2900
    %2982 = vmatpush1.msra.mxu0 %v2899
    %2983 = vmatprep.subr.mxu0 %v2896
    %2984 = vmatpush1.msra.mxu0 %v2895
    %2985 = vmatprep.subr.mxu0 %v2892
    %2986 = vmatpush1.msra.mxu0 %v2891
    %2987 = vmatprep.subr.mxu0 0.0
    %2988 = vmatpush2.msra.mxu0 0.0
    %2989 = vmatprep.subr.mxu0 0.0
    %2990 = vmatpush2.msra.mxu0 0.0
    %2991 = vmatprep.subr.mxu0 0.0
    %2992 = vmatpush2.msra.mxu0 0.0
    %2993 = vmatprep.subr.mxu0 0.0
    %2994 = vmatpush2.msra.mxu0 0.0
    %2995 = vmatprep.subr.mxu0 0.0
    %2996 = vmatpush2.msra.mxu0 0.0
    %2997 = vmatprep.subr.mxu0 0.0
    %2998 = vmatpush2.msra.mxu0 0.0
    %2999 = vmatprep.subr.mxu0 0.0
    %3000 = vmatpush2.msra.mxu0 0.0
    %3001 = vmatprep.subr.mxu0 0.0
    %3002 = vmatpush2.msra.mxu0 0.0
    %3003 = vmatprep.subr.mxu0 0.0
    %3004 = vmatpush2.msra.mxu0 0.0
    %3005 = vmatprep.subr.mxu0 0.0
    %3006 = vmatpush2.msra.mxu0 0.0
    %3007 = vmatprep.subr.mxu0 0.0
    %3008 = vmatpush2.msra.mxu0 0.0
    %3009 = vmatprep.subr.mxu0 0.0
    %3010 = vmatpush2.msra.mxu0 0.0
    %3011 = vmatprep.subr.mxu0 0.0
    %3012 = vmatpush2.msra.mxu0 0.0
    %3013 = vmatprep.subr.mxu0 0.0
    %3014 = vmatpush2.msra.mxu0 0.0
    %3015 = vmatprep.subr.mxu0 0.0
    %3016 = vmatpush2.msra.mxu0 0.0
    %3017 = vmatprep.subr.mxu0 0.0
    %3018 = vmatpush2.msra.mxu0 0.0
    %3019 = vmatprep.mubr.f32.mxu0 0.0
    %3020 = vmatmul.mubr.f32.gmra.mxu0 %v2887
    %v3021 = vpop.f32.mrf.mxu0
    %v3022 = vadd.f32 0.0, %v3021
    %v3023 = vpop.f32.mrf.mxu0
    %v3024 = vadd.f32 0.0, %v3023
    %3025 = vdwg.mxu0
    %3026 = vmatprep.subr.mxu0 %v2954
    %3027 = vmatpush1.msra.mxu0 %v2953
    %3028 = vmatprep.subr.mxu0 %v2950
    %3029 = vmatpush1.msra.mxu0 %v2949
    %3030 = vmatprep.subr.mxu0 %v2946
    %3031 = vmatpush1.msra.mxu0 %v2945
    %3032 = vmatprep.subr.mxu0 %v2942
    %3033 = vmatpush1.msra.mxu0 %v2941
    %3034 = vmatprep.subr.mxu0 %v2938
    %3035 = vmatpush1.msra.mxu0 %v2937
    %3036 = vmatprep.subr.mxu0 %v2934
    %3037 = vmatpush1.msra.mxu0 %v2933
    %3038 = vmatprep.subr.mxu0 %v2930
    %3039 = vmatpush1.msra.mxu0 %v2929
    %3040 = vmatprep.subr.mxu0 %v2926
    %3041 = vmatpush1.msra.mxu0 %v2925
    %3042 = vmatprep.subr.mxu0 %v2922
    %3043 = vmatpush1.msra.mxu0 %v2921
    %3044 = vmatprep.subr.mxu0 %v2918
    %3045 = vmatpush1.msra.mxu0 %v2917
    %3046 = vmatprep.subr.mxu0 %v2914
    %3047 = vmatpush1.msra.mxu0 %v2913
    %3048 = vmatprep.subr.mxu0 %v2910
    %3049 = vmatpush1.msra.mxu0 %v2909
    %3050 = vmatprep.subr.mxu0 %v2906
    %3051 = vmatpush1.msra.mxu0 %v2905
    %3052 = vmatprep.subr.mxu0 %v2902
    %3053 = vmatpush1.msra.mxu0 %v2901
    %3054 = vmatprep.subr.mxu0 %v2898
    %3055 = vmatpush1.msra.mxu0 %v2897
    %3056 = vmatprep.subr.mxu0 %v2894
    %3057 = vmatpush1.msra.mxu0 %v2893
    %3058 = vmatprep.subr.mxu0 0.0
    %3059 = vmatpush2.msra.mxu0 0.0
    %3060 = vmatprep.subr.mxu0 0.0
    %3061 = vmatpush2.msra.mxu0 0.0
    %3062 = vmatprep.subr.mxu0 0.0
    %3063 = vmatpush2.msra.mxu0 0.0
    %3064 = vmatprep.subr.mxu0 0.0
    %3065 = vmatpush2.msra.mxu0 0.0
    %3066 = vmatprep.subr.mxu0 0.0
    %3067 = vmatpush2.msra.mxu0 0.0
    %3068 = vmatprep.subr.mxu0 0.0
    %3069 = vmatpush2.msra.mxu0 0.0
    %3070 = vmatprep.subr.mxu0 0.0
    %3071 = vmatpush2.msra.mxu0 0.0
    %3072 = vmatprep.subr.mxu0 0.0
    %3073 = vmatpush2.msra.mxu0 0.0
    %3074 = vmatprep.subr.mxu0 0.0
    %3075 = vmatpush2.msra.mxu0 0.0
    %3076 = vmatprep.subr.mxu0 0.0
    %3077 = vmatpush2.msra.mxu0 0.0
    %3078 = vmatprep.subr.mxu0 0.0
    %3079 = vmatpush2.msra.mxu0 0.0
    %3080 = vmatprep.subr.mxu0 0.0
    %3081 = vmatpush2.msra.mxu0 0.0
    %3082 = vmatprep.subr.mxu0 0.0
    %3083 = vmatpush2.msra.mxu0 0.0
    %3084 = vmatprep.subr.mxu0 0.0
    %3085 = vmatpush2.msra.mxu0 0.0
    %3086 = vmatprep.subr.mxu0 0.0
    %3087 = vmatpush2.msra.mxu0 0.0
    %3088 = vmatprep.subr.mxu0 0.0
    %3089 = vmatpush2.msra.mxu0 0.0
    %3090 = vmatprep.mubr.f32.mxu0 0.0
    %3091 = vmatmul.mubr.f32.gmra.mxu0 %v2887
    %v3092 = vpop.f32.mrf.mxu0
    %v3093 = vadd.f32 0.0, %v3092
    %v3094 = vpop.f32.mrf.mxu0
    %v3095 = vadd.f32 0.0, %v3094
    %3096 = vdwg.mxu0
    %v3101 = vcombine.low %v3022, %v3024
    %v3102 = vcombine.low %v3093, %v3095
    %v3104 = vunpack.c.l.s4 1983009808
    %v3105 = vunpack.c.0.s8 %v3104
    %v3106 = vlaneseq
    %v3107 = vshrl.u32 %v3106, 7
    %v3108 = vsub.s32 %v3105, %v3107
    %v3109 = vrot.slane %v3101, %v3108
    %v3111 = vunpack.c.l.s4 1983009808
    %v3112 = vunpack.c.0.s8 %v3111
    %v3113 = vlaneseq
    %v3114 = vshrl.u32 %v3113, 7
    %v3115 = vsub.s32 %v3112, %v3114
    %v3116 = vrot.slane %v3102, %v3115
    %v3117 = vcombine.low %v3109, %v3116
    %v3119 = vadd.f32 %v2890, %v3117
    %v3120 = vxor.u32 %v3119, 2147483648
    %v3121 = vmul.f32 %v3120, 1.442695
    %v3122 = vpow.pop %v3121
    %v3123 = vadd.f32 %v3122, 1.0
    %v3124 = vrcp.pop %v3123
    %v3125 = vmul.f32 1.0, %v3124
    %v3127 = vrot.slane %v3119, 2
    %v3129 = vxor.u32 %v3127, 2147483648
    %v3130 = vmul.f32 %v3129, 1.442695
    %v3131 = vpow.pop %v3130
    %v3132 = vadd.f32 %v3131, 1.0
    %v3133 = vrcp.pop %v3132
    %v3134 = vmul.f32 1.0, %v3133
    %v3135 = vrot.slane %v3119, 4
    %v3137 = vtanh.pop %v3135
    %v3138 = vrot.slane %v3119, 6
    %v3140 = vxor.u32 %v3138, 2147483648
    %v3141 = vmul.f32 %v3140, 1.442695
    %v3142 = vpow.pop %v3141
    %v3143 = vadd.f32 %v3142, 1.0
    %v3144 = vrcp.pop %v3143
    %v3145 = vmul.f32 1.0, %v3144
    %v3146 = vmul.f32 %v3134, %v2888
    %v3147 = vmul.f32 %v3125, %v3137
    %v3148 = vadd.f32 %v3146, %v3147
    %v3149 = vtanh.pop %v3148
    %v3150 = vmul.f32 %v3145, %v3149
    %s3151 = sadd.s32 %s97, 5
    %v3152 = vstv %s3151
    %vm3153 = vcmp.lt.s32.totalorder %v3152, %v96
    %v3154 = vsel %vm3153, 1, 0
    %3155 = vset.pattern.permute.xlu0 0
    %3156 = vperm.xlu0 %3155, %v3154
    %v3157 = vpop.permute.xlu0 %3156
    %vm3158 = vcmp.eq.s32.totalorder %v3157, 1
    %v3159 = vsel %vm3158, %v3148, %v2888
    %3160 = vst [vmem:[#allocation3] sm:$0x3] %v3159
    %v3161 = vsel %vm3158, %v3150, %v2887
    %3162 = vst [vmem:[#allocation2] sm:$0x3] %v3161
    %v3163 = vsel %vm3158, %v3150, 0.0
    %s3164 = scalar_lea.vmem [#allocation14], 10
    %3165 = vst [vmem:[%s3164] sm:$0x3] %v3163
    %v3166 = vld [vmem:[#allocation4] sm:$0x3]
    %v3167 = vld [vmem:[#allocation5] sm:$0x3]
    %s3168 = scalar_lea.vmem [#allocation9], 16
    %v3169 = vld [vmem:[%s3168] sm:$0xff]
    %v3170 = vld [vmem:[#allocation12] sm:$0xff]
    %v3171 = vld [vmem:[#allocation12 + $0x8] sm:$0xff]
    %v3172 = vld [vmem:[#allocation12 + $0x10] sm:$0xff]
    %v3173 = vld [vmem:[#allocation12 + $0x18] sm:$0xff]
    %v3174 = vld [vmem:[#allocation12 + $0x20] sm:$0xff]
    %v3175 = vld [vmem:[#allocation12 + $0x28] sm:$0xff]
    %v3176 = vld [vmem:[#allocation12 + $0x30] sm:$0xff]
    %v3177 = vld [vmem:[#allocation12 + $0x38] sm:$0xff]
    %v3178 = vld [vmem:[#allocation12 + $0x40] sm:$0xff]
    %v3179 = vld [vmem:[#allocation12 + $0x48] sm:$0xff]
    %v3180 = vld [vmem:[#allocation12 + $0x50] sm:$0xff]
    %v3181 = vld [vmem:[#allocation12 + $0x58] sm:$0xff]
    %v3182 = vld [vmem:[#allocation12 + $0x60] sm:$0xff]
    %v3183 = vld [vmem:[#allocation12 + $0x68] sm:$0xff]
    %v3184 = vld [vmem:[#allocation12 + $0x70] sm:$0xff]
    %v3185 = vld [vmem:[#allocation12 + $0x78] sm:$0xff]
    %v3186 = vld [vmem:[#allocation12 + $0x80] sm:$0xff]
    %v3187 = vld [vmem:[#allocation12 + $0x88] sm:$0xff]
    %v3188 = vld [vmem:[#allocation12 + $0x90] sm:$0xff]
    %v3189 = vld [vmem:[#allocation12 + $0x98] sm:$0xff]
    %v3190 = vld [vmem:[#allocation12 + $0xa0] sm:$0xff]
    %v3191 = vld [vmem:[#allocation12 + $0xa8] sm:$0xff]
    %v3192 = vld [vmem:[#allocation12 + $0xb0] sm:$0xff]
    %v3193 = vld [vmem:[#allocation12 + $0xb8] sm:$0xff]
    %v3194 = vld [vmem:[#allocation12 + $0xc0] sm:$0xff]
    %v3195 = vld [vmem:[#allocation12 + $0xc8] sm:$0xff]
    %v3196 = vld [vmem:[#allocation12 + $0xd0] sm:$0xff]
    %v3197 = vld [vmem:[#allocation12 + $0xd8] sm:$0xff]
    %v3198 = vld [vmem:[#allocation12 + $0xe0] sm:$0xff]
    %v3199 = vld [vmem:[#allocation12 + $0xe8] sm:$0xff]
    %v3200 = vld [vmem:[#allocation12 + $0xf0] sm:$0xff]
    %v3201 = vld [vmem:[#allocation12 + $0xf8] sm:$0xff]
    %v3202 = vld [vmem:[#allocation12 + $0x100] sm:$0xff]
    %v3203 = vld [vmem:[#allocation12 + $0x108] sm:$0xff]
    %v3204 = vld [vmem:[#allocation12 + $0x110] sm:$0xff]
    %v3205 = vld [vmem:[#allocation12 + $0x118] sm:$0xff]
    %v3206 = vld [vmem:[#allocation12 + $0x120] sm:$0xff]
    %v3207 = vld [vmem:[#allocation12 + $0x128] sm:$0xff]
    %v3208 = vld [vmem:[#allocation12 + $0x130] sm:$0xff]
    %v3209 = vld [vmem:[#allocation12 + $0x138] sm:$0xff]
    %v3210 = vld [vmem:[#allocation12 + $0x140] sm:$0xff]
    %v3211 = vld [vmem:[#allocation12 + $0x148] sm:$0xff]
    %v3212 = vld [vmem:[#allocation12 + $0x150] sm:$0xff]
    %v3213 = vld [vmem:[#allocation12 + $0x158] sm:$0xff]
    %v3214 = vld [vmem:[#allocation12 + $0x160] sm:$0xff]
    %v3215 = vld [vmem:[#allocation12 + $0x168] sm:$0xff]
    %v3216 = vld [vmem:[#allocation12 + $0x170] sm:$0xff]
    %v3217 = vld [vmem:[#allocation12 + $0x178] sm:$0xff]
    %v3218 = vld [vmem:[#allocation12 + $0x180] sm:$0xff]
    %v3219 = vld [vmem:[#allocation12 + $0x188] sm:$0xff]
    %v3220 = vld [vmem:[#allocation12 + $0x190] sm:$0xff]
    %v3221 = vld [vmem:[#allocation12 + $0x198] sm:$0xff]
    %v3222 = vld [vmem:[#allocation12 + $0x1a0] sm:$0xff]
    %v3223 = vld [vmem:[#allocation12 + $0x1a8] sm:$0xff]
    %v3224 = vld [vmem:[#allocation12 + $0x1b0] sm:$0xff]
    %v3225 = vld [vmem:[#allocation12 + $0x1b8] sm:$0xff]
    %v3226 = vld [vmem:[#allocation12 + $0x1c0] sm:$0xff]
    %v3227 = vld [vmem:[#allocation12 + $0x1c8] sm:$0xff]
    %v3228 = vld [vmem:[#allocation12 + $0x1d0] sm:$0xff]
    %v3229 = vld [vmem:[#allocation12 + $0x1d8] sm:$0xff]
    %v3230 = vld [vmem:[#allocation12 + $0x1e0] sm:$0xff]
    %v3231 = vld [vmem:[#allocation12 + $0x1e8] sm:$0xff]
    %v3232 = vld [vmem:[#allocation12 + $0x1f0] sm:$0xff]
    %v3233 = vld [vmem:[#allocation12 + $0x1f8] sm:$0xff]
    %3234 = vmatprep.subr.mxu0 %v3231
    %3235 = vmatpush1.msra.mxu0 %v3230
    %3236 = vmatprep.subr.mxu0 %v3227
    %3237 = vmatpush1.msra.mxu0 %v3226
    %3238 = vmatprep.subr.mxu0 %v3223
    %3239 = vmatpush1.msra.mxu0 %v3222
    %3240 = vmatprep.subr.mxu0 %v3219
    %3241 = vmatpush1.msra.mxu0 %v3218
    %3242 = vmatprep.subr.mxu0 %v3215
    %3243 = vmatpush1.msra.mxu0 %v3214
    %3244 = vmatprep.subr.mxu0 %v3211
    %3245 = vmatpush1.msra.mxu0 %v3210
    %3246 = vmatprep.subr.mxu0 %v3207
    %3247 = vmatpush1.msra.mxu0 %v3206
    %3248 = vmatprep.subr.mxu0 %v3203
    %3249 = vmatpush1.msra.mxu0 %v3202
    %3250 = vmatprep.subr.mxu0 %v3199
    %3251 = vmatpush1.msra.mxu0 %v3198
    %3252 = vmatprep.subr.mxu0 %v3195
    %3253 = vmatpush1.msra.mxu0 %v3194
    %3254 = vmatprep.subr.mxu0 %v3191
    %3255 = vmatpush1.msra.mxu0 %v3190
    %3256 = vmatprep.subr.mxu0 %v3187
    %3257 = vmatpush1.msra.mxu0 %v3186
    %3258 = vmatprep.subr.mxu0 %v3183
    %3259 = vmatpush1.msra.mxu0 %v3182
    %3260 = vmatprep.subr.mxu0 %v3179
    %3261 = vmatpush1.msra.mxu0 %v3178
    %3262 = vmatprep.subr.mxu0 %v3175
    %3263 = vmatpush1.msra.mxu0 %v3174
    %3264 = vmatprep.subr.mxu0 %v3171
    %3265 = vmatpush1.msra.mxu0 %v3170
    %3266 = vmatprep.subr.mxu0 0.0
    %3267 = vmatpush2.msra.mxu0 0.0
    %3268 = vmatprep.subr.mxu0 0.0
    %3269 = vmatpush2.msra.mxu0 0.0
    %3270 = vmatprep.subr.mxu0 0.0
    %3271 = vmatpush2.msra.mxu0 0.0
    %3272 = vmatprep.subr.mxu0 0.0
    %3273 = vmatpush2.msra.mxu0 0.0
    %3274 = vmatprep.subr.mxu0 0.0
    %3275 = vmatpush2.msra.mxu0 0.0
    %3276 = vmatprep.subr.mxu0 0.0
    %3277 = vmatpush2.msra.mxu0 0.0
    %3278 = vmatprep.subr.mxu0 0.0
    %3279 = vmatpush2.msra.mxu0 0.0
    %3280 = vmatprep.subr.mxu0 0.0
    %3281 = vmatpush2.msra.mxu0 0.0
    %3282 = vmatprep.subr.mxu0 0.0
    %3283 = vmatpush2.msra.mxu0 0.0
    %3284 = vmatprep.subr.mxu0 0.0
    %3285 = vmatpush2.msra.mxu0 0.0
    %3286 = vmatprep.subr.mxu0 0.0
    %3287 = vmatpush2.msra.mxu0 0.0
    %3288 = vmatprep.subr.mxu0 0.0
    %3289 = vmatpush2.msra.mxu0 0.0
    %3290 = vmatprep.subr.mxu0 0.0
    %3291 = vmatpush2.msra.mxu0 0.0
    %3292 = vmatprep.subr.mxu0 0.0
    %3293 = vmatpush2.msra.mxu0 0.0
    %3294 = vmatprep.subr.mxu0 0.0
    %3295 = vmatpush2.msra.mxu0 0.0
    %3296 = vmatprep.subr.mxu0 0.0
    %3297 = vmatpush2.msra.mxu0 0.0
    %3298 = vmatprep.mubr.f32.mxu0 0.0
    %3299 = vmatmul.mubr.f32.gmra.mxu0 %v3166
    %v3300 = vpop.f32.mrf.mxu0
    %v3301 = vadd.f32 0.0, %v3300
    %v3302 = vpop.f32.mrf.mxu0
    %v3303 = vadd.f32 0.0, %v3302
    %3304 = vdwg.mxu0
    %3305 = vmatprep.subr.mxu0 %v3233
    %3306 = vmatpush1.msra.mxu0 %v3232
    %3307 = vmatprep.subr.mxu0 %v3229
    %3308 = vmatpush1.msra.mxu0 %v3228
    %3309 = vmatprep.subr.mxu0 %v3225
    %3310 = vmatpush1.msra.mxu0 %v3224
    %3311 = vmatprep.subr.mxu0 %v3221
    %3312 = vmatpush1.msra.mxu0 %v3220
    %3313 = vmatprep.subr.mxu0 %v3217
    %3314 = vmatpush1.msra.mxu0 %v3216
    %3315 = vmatprep.subr.mxu0 %v3213
    %3316 = vmatpush1.msra.mxu0 %v3212
    %3317 = vmatprep.subr.mxu0 %v3209
    %3318 = vmatpush1.msra.mxu0 %v3208
    %3319 = vmatprep.subr.mxu0 %v3205
    %3320 = vmatpush1.msra.mxu0 %v3204
    %3321 = vmatprep.subr.mxu0 %v3201
    %3322 = vmatpush1.msra.mxu0 %v3200
    %3323 = vmatprep.subr.mxu0 %v3197
    %3324 = vmatpush1.msra.mxu0 %v3196
    %3325 = vmatprep.subr.mxu0 %v3193
    %3326 = vmatpush1.msra.mxu0 %v3192
    %3327 = vmatprep.subr.mxu0 %v3189
    %3328 = vmatpush1.msra.mxu0 %v3188
    %3329 = vmatprep.subr.mxu0 %v3185
    %3330 = vmatpush1.msra.mxu0 %v3184
    %3331 = vmatprep.subr.mxu0 %v3181
    %3332 = vmatpush1.msra.mxu0 %v3180
    %3333 = vmatprep.subr.mxu0 %v3177
    %3334 = vmatpush1.msra.mxu0 %v3176
    %3335 = vmatprep.subr.mxu0 %v3173
    %3336 = vmatpush1.msra.mxu0 %v3172
    %3337 = vmatprep.subr.mxu0 0.0
    %3338 = vmatpush2.msra.mxu0 0.0
    %3339 = vmatprep.subr.mxu0 0.0
    %3340 = vmatpush2.msra.mxu0 0.0
    %3341 = vmatprep.subr.mxu0 0.0
    %3342 = vmatpush2.msra.mxu0 0.0
    %3343 = vmatprep.subr.mxu0 0.0
    %3344 = vmatpush2.msra.mxu0 0.0
    %3345 = vmatprep.subr.mxu0 0.0
    %3346 = vmatpush2.msra.mxu0 0.0
    %3347 = vmatprep.subr.mxu0 0.0
    %3348 = vmatpush2.msra.mxu0 0.0
    %3349 = vmatprep.subr.mxu0 0.0
    %3350 = vmatpush2.msra.mxu0 0.0
    %3351 = vmatprep.subr.mxu0 0.0
    %3352 = vmatpush2.msra.mxu0 0.0
    %3353 = vmatprep.subr.mxu0 0.0
    %3354 = vmatpush2.msra.mxu0 0.0
    %3355 = vmatprep.subr.mxu0 0.0
    %3356 = vmatpush2.msra.mxu0 0.0
    %3357 = vmatprep.subr.mxu0 0.0
    %3358 = vmatpush2.msra.mxu0 0.0
    %3359 = vmatprep.subr.mxu0 0.0
    %3360 = vmatpush2.msra.mxu0 0.0
    %3361 = vmatprep.subr.mxu0 0.0
    %3362 = vmatpush2.msra.mxu0 0.0
    %3363 = vmatprep.subr.mxu0 0.0
    %3364 = vmatpush2.msra.mxu0 0.0
    %3365 = vmatprep.subr.mxu0 0.0
    %3366 = vmatpush2.msra.mxu0 0.0
    %3367 = vmatprep.subr.mxu0 0.0
    %3368 = vmatpush2.msra.mxu0 0.0
    %3369 = vmatprep.mubr.f32.mxu0 0.0
    %3370 = vmatmul.mubr.f32.gmra.mxu0 %v3166
    %v3371 = vpop.f32.mrf.mxu0
    %v3372 = vadd.f32 0.0, %v3371
    %v3373 = vpop.f32.mrf.mxu0
    %v3374 = vadd.f32 0.0, %v3373
    %3375 = vdwg.mxu0
    %v3380 = vcombine.low %v3301, %v3303
    %v3381 = vcombine.low %v3372, %v3374
    %v3383 = vunpack.c.l.s4 1983009808
    %v3384 = vunpack.c.0.s8 %v3383
    %v3385 = vlaneseq
    %v3386 = vshrl.u32 %v3385, 7
    %v3387 = vsub.s32 %v3384, %v3386
    %v3388 = vrot.slane %v3380, %v3387
    %v3390 = vunpack.c.l.s4 1983009808
    %v3391 = vunpack.c.0.s8 %v3390
    %v3392 = vlaneseq
    %v3393 = vshrl.u32 %v3392, 7
    %v3394 = vsub.s32 %v3391, %v3393
    %v3395 = vrot.slane %v3381, %v3394
    %v3396 = vcombine.low %v3388, %v3395
    %v3398 = vadd.f32 %v3169, %v3396
    %v3399 = vxor.u32 %v3398, 2147483648
    %v3400 = vmul.f32 %v3399, 1.442695
    %v3401 = vpow.pop %v3400
    %v3402 = vadd.f32 %v3401, 1.0
    %v3403 = vrcp.pop %v3402
    %v3404 = vmul.f32 1.0, %v3403
    %v3406 = vrot.slane %v3398, 2
    %v3408 = vxor.u32 %v3406, 2147483648
    %v3409 = vmul.f32 %v3408, 1.442695
    %v3410 = vpow.pop %v3409
    %v3411 = vadd.f32 %v3410, 1.0
    %v3412 = vrcp.pop %v3411
    %v3413 = vmul.f32 1.0, %v3412
    %v3414 = vrot.slane %v3398, 4
    %v3416 = vtanh.pop %v3414
    %v3417 = vrot.slane %v3398, 6
    %v3419 = vxor.u32 %v3417, 2147483648
    %v3420 = vmul.f32 %v3419, 1.442695
    %v3421 = vpow.pop %v3420
    %v3422 = vadd.f32 %v3421, 1.0
    %v3423 = vrcp.pop %v3422
    %v3424 = vmul.f32 1.0, %v3423
    %v3425 = vmul.f32 %v3413, %v3167
    %v3426 = vmul.f32 %v3404, %v3416
    %v3427 = vadd.f32 %v3425, %v3426
    %v3428 = vtanh.pop %v3427
    %v3429 = vmul.f32 %v3424, %v3428
    %s3430 = sadd.s32 %s99, 2
    %v3431 = vstv %s3430
    %vm3432 = vcmp.lt.s32.totalorder %v3431, %v96
    %v3433 = vsel %vm3432, 1, 0
    %3434 = vset.pattern.permute.xlu0 0
    %3435 = vperm.xlu0 %3434, %v3433
    %v3436 = vpop.permute.xlu0 %3435
    %vm3437 = vcmp.eq.s32.totalorder %v3436, 1
    %v3438 = vsel %vm3437, %v3427, %v3167
    %3439 = vst [vmem:[#allocation5] sm:$0x3] %v3438
    %v3440 = vsel %vm3437, %v3429, %v3166
    %3441 = vst [vmem:[#allocation4] sm:$0x3] %v3440
    %v3442 = vsel %vm3437, %v3429, 0.0
    %s3443 = scalar_lea.vmem [#allocation15], 4
    %3444 = vst [vmem:[%s3443] sm:$0x3] %v3442
    %v3445 = vld [vmem:[#allocation2] sm:$0x3]
    %v3446 = vld [vmem:[#allocation3] sm:$0x3]
    %s3447 = scalar_lea.vmem [#allocation6], 48
    %v3448 = vld [vmem:[%s3447] sm:$0xff]
    %v3449 = vld [vmem:[#allocation11] sm:$0xff]
    %v3450 = vld [vmem:[#allocation11 + $0x8] sm:$0xff]
    %v3451 = vld [vmem:[#allocation11 + $0x10] sm:$0xff]
    %v3452 = vld [vmem:[#allocation11 + $0x18] sm:$0xff]
    %v3453 = vld [vmem:[#allocation11 + $0x20] sm:$0xff]
    %v3454 = vld [vmem:[#allocation11 + $0x28] sm:$0xff]
    %v3455 = vld [vmem:[#allocation11 + $0x30] sm:$0xff]
    %v3456 = vld [vmem:[#allocation11 + $0x38] sm:$0xff]
    %v3457 = vld [vmem:[#allocation11 + $0x40] sm:$0xff]
    %v3458 = vld [vmem:[#allocation11 + $0x48] sm:$0xff]
    %v3459 = vld [vmem:[#allocation11 + $0x50] sm:$0xff]
    %v3460 = vld [vmem:[#allocation11 + $0x58] sm:$0xff]
    %v3461 = vld [vmem:[#allocation11 + $0x60] sm:$0xff]
    %v3462 = vld [vmem:[#allocation11 + $0x68] sm:$0xff]
    %v3463 = vld [vmem:[#allocation11 + $0x70] sm:$0xff]
    %v3464 = vld [vmem:[#allocation11 + $0x78] sm:$0xff]
    %v3465 = vld [vmem:[#allocation11 + $0x80] sm:$0xff]
    %v3466 = vld [vmem:[#allocation11 + $0x88] sm:$0xff]
    %v3467 = vld [vmem:[#allocation11 + $0x90] sm:$0xff]
    %v3468 = vld [vmem:[#allocation11 + $0x98] sm:$0xff]
    %v3469 = vld [vmem:[#allocation11 + $0xa0] sm:$0xff]
    %v3470 = vld [vmem:[#allocation11 + $0xa8] sm:$0xff]
    %v3471 = vld [vmem:[#allocation11 + $0xb0] sm:$0xff]
    %v3472 = vld [vmem:[#allocation11 + $0xb8] sm:$0xff]
    %v3473 = vld [vmem:[#allocation11 + $0xc0] sm:$0xff]
    %v3474 = vld [vmem:[#allocation11 + $0xc8] sm:$0xff]
    %v3475 = vld [vmem:[#allocation11 + $0xd0] sm:$0xff]
    %v3476 = vld [vmem:[#allocation11 + $0xd8] sm:$0xff]
    %v3477 = vld [vmem:[#allocation11 + $0xe0] sm:$0xff]
    %v3478 = vld [vmem:[#allocation11 + $0xe8] sm:$0xff]
    %v3479 = vld [vmem:[#allocation11 + $0xf0] sm:$0xff]
    %v3480 = vld [vmem:[#allocation11 + $0xf8] sm:$0xff]
    %v3481 = vld [vmem:[#allocation11 + $0x100] sm:$0xff]
    %v3482 = vld [vmem:[#allocation11 + $0x108] sm:$0xff]
    %v3483 = vld [vmem:[#allocation11 + $0x110] sm:$0xff]
    %v3484 = vld [vmem:[#allocation11 + $0x118] sm:$0xff]
    %v3485 = vld [vmem:[#allocation11 + $0x120] sm:$0xff]
    %v3486 = vld [vmem:[#allocation11 + $0x128] sm:$0xff]
    %v3487 = vld [vmem:[#allocation11 + $0x130] sm:$0xff]
    %v3488 = vld [vmem:[#allocation11 + $0x138] sm:$0xff]
    %v3489 = vld [vmem:[#allocation11 + $0x140] sm:$0xff]
    %v3490 = vld [vmem:[#allocation11 + $0x148] sm:$0xff]
    %v3491 = vld [vmem:[#allocation11 + $0x150] sm:$0xff]
    %v3492 = vld [vmem:[#allocation11 + $0x158] sm:$0xff]
    %v3493 = vld [vmem:[#allocation11 + $0x160] sm:$0xff]
    %v3494 = vld [vmem:[#allocation11 + $0x168] sm:$0xff]
    %v3495 = vld [vmem:[#allocation11 + $0x170] sm:$0xff]
    %v3496 = vld [vmem:[#allocation11 + $0x178] sm:$0xff]
    %v3497 = vld [vmem:[#allocation11 + $0x180] sm:$0xff]
    %v3498 = vld [vmem:[#allocation11 + $0x188] sm:$0xff]
    %v3499 = vld [vmem:[#allocation11 + $0x190] sm:$0xff]
    %v3500 = vld [vmem:[#allocation11 + $0x198] sm:$0xff]
    %v3501 = vld [vmem:[#allocation11 + $0x1a0] sm:$0xff]
    %v3502 = vld [vmem:[#allocation11 + $0x1a8] sm:$0xff]
    %v3503 = vld [vmem:[#allocation11 + $0x1b0] sm:$0xff]
    %v3504 = vld [vmem:[#allocation11 + $0x1b8] sm:$0xff]
    %v3505 = vld [vmem:[#allocation11 + $0x1c0] sm:$0xff]
    %v3506 = vld [vmem:[#allocation11 + $0x1c8] sm:$0xff]
    %v3507 = vld [vmem:[#allocation11 + $0x1d0] sm:$0xff]
    %v3508 = vld [vmem:[#allocation11 + $0x1d8] sm:$0xff]
    %v3509 = vld [vmem:[#allocation11 + $0x1e0] sm:$0xff]
    %v3510 = vld [vmem:[#allocation11 + $0x1e8] sm:$0xff]
    %v3511 = vld [vmem:[#allocation11 + $0x1f0] sm:$0xff]
    %v3512 = vld [vmem:[#allocation11 + $0x1f8] sm:$0xff]
    %3513 = vmatprep.subr.mxu0 %v3510
    %3514 = vmatpush1.msra.mxu0 %v3509
    %3515 = vmatprep.subr.mxu0 %v3506
    %3516 = vmatpush1.msra.mxu0 %v3505
    %3517 = vmatprep.subr.mxu0 %v3502
    %3518 = vmatpush1.msra.mxu0 %v3501
    %3519 = vmatprep.subr.mxu0 %v3498
    %3520 = vmatpush1.msra.mxu0 %v3497
    %3521 = vmatprep.subr.mxu0 %v3494
    %3522 = vmatpush1.msra.mxu0 %v3493
    %3523 = vmatprep.subr.mxu0 %v3490
    %3524 = vmatpush1.msra.mxu0 %v3489
    %3525 = vmatprep.subr.mxu0 %v3486
    %3526 = vmatpush1.msra.mxu0 %v3485
    %3527 = vmatprep.subr.mxu0 %v3482
    %3528 = vmatpush1.msra.mxu0 %v3481
    %3529 = vmatprep.subr.mxu0 %v3478
    %3530 = vmatpush1.msra.mxu0 %v3477
    %3531 = vmatprep.subr.mxu0 %v3474
    %3532 = vmatpush1.msra.mxu0 %v3473
    %3533 = vmatprep.subr.mxu0 %v3470
    %3534 = vmatpush1.msra.mxu0 %v3469
    %3535 = vmatprep.subr.mxu0 %v3466
    %3536 = vmatpush1.msra.mxu0 %v3465
    %3537 = vmatprep.subr.mxu0 %v3462
    %3538 = vmatpush1.msra.mxu0 %v3461
    %3539 = vmatprep.subr.mxu0 %v3458
    %3540 = vmatpush1.msra.mxu0 %v3457
    %3541 = vmatprep.subr.mxu0 %v3454
    %3542 = vmatpush1.msra.mxu0 %v3453
    %3543 = vmatprep.subr.mxu0 %v3450
    %3544 = vmatpush1.msra.mxu0 %v3449
    %3545 = vmatprep.subr.mxu0 0.0
    %3546 = vmatpush2.msra.mxu0 0.0
    %3547 = vmatprep.subr.mxu0 0.0
    %3548 = vmatpush2.msra.mxu0 0.0
    %3549 = vmatprep.subr.mxu0 0.0
    %3550 = vmatpush2.msra.mxu0 0.0
    %3551 = vmatprep.subr.mxu0 0.0
    %3552 = vmatpush2.msra.mxu0 0.0
    %3553 = vmatprep.subr.mxu0 0.0
    %3554 = vmatpush2.msra.mxu0 0.0
    %3555 = vmatprep.subr.mxu0 0.0
    %3556 = vmatpush2.msra.mxu0 0.0
    %3557 = vmatprep.subr.mxu0 0.0
    %3558 = vmatpush2.msra.mxu0 0.0
    %3559 = vmatprep.subr.mxu0 0.0
    %3560 = vmatpush2.msra.mxu0 0.0
    %3561 = vmatprep.subr.mxu0 0.0
    %3562 = vmatpush2.msra.mxu0 0.0
    %3563 = vmatprep.subr.mxu0 0.0
    %3564 = vmatpush2.msra.mxu0 0.0
    %3565 = vmatprep.subr.mxu0 0.0
    %3566 = vmatpush2.msra.mxu0 0.0
    %3567 = vmatprep.subr.mxu0 0.0
    %3568 = vmatpush2.msra.mxu0 0.0
    %3569 = vmatprep.subr.mxu0 0.0
    %3570 = vmatpush2.msra.mxu0 0.0
    %3571 = vmatprep.subr.mxu0 0.0
    %3572 = vmatpush2.msra.mxu0 0.0
    %3573 = vmatprep.subr.mxu0 0.0
    %3574 = vmatpush2.msra.mxu0 0.0
    %3575 = vmatprep.subr.mxu0 0.0
    %3576 = vmatpush2.msra.mxu0 0.0
    %3577 = vmatprep.mubr.f32.mxu0 0.0
    %3578 = vmatmul.mubr.f32.gmra.mxu0 %v3445
    %v3579 = vpop.f32.mrf.mxu0
    %v3580 = vadd.f32 0.0, %v3579
    %v3581 = vpop.f32.mrf.mxu0
    %v3582 = vadd.f32 0.0, %v3581
    %3583 = vdwg.mxu0
    %3584 = vmatprep.subr.mxu0 %v3512
    %3585 = vmatpush1.msra.mxu0 %v3511
    %3586 = vmatprep.subr.mxu0 %v3508
    %3587 = vmatpush1.msra.mxu0 %v3507
    %3588 = vmatprep.subr.mxu0 %v3504
    %3589 = vmatpush1.msra.mxu0 %v3503
    %3590 = vmatprep.subr.mxu0 %v3500
    %3591 = vmatpush1.msra.mxu0 %v3499
    %3592 = vmatprep.subr.mxu0 %v3496
    %3593 = vmatpush1.msra.mxu0 %v3495
    %3594 = vmatprep.subr.mxu0 %v3492
    %3595 = vmatpush1.msra.mxu0 %v3491
    %3596 = vmatprep.subr.mxu0 %v3488
    %3597 = vmatpush1.msra.mxu0 %v3487
    %3598 = vmatprep.subr.mxu0 %v3484
    %3599 = vmatpush1.msra.mxu0 %v3483
    %3600 = vmatprep.subr.mxu0 %v3480
    %3601 = vmatpush1.msra.mxu0 %v3479
    %3602 = vmatprep.subr.mxu0 %v3476
    %3603 = vmatpush1.msra.mxu0 %v3475
    %3604 = vmatprep.subr.mxu0 %v3472
    %3605 = vmatpush1.msra.mxu0 %v3471
    %3606 = vmatprep.subr.mxu0 %v3468
    %3607 = vmatpush1.msra.mxu0 %v3467
    %3608 = vmatprep.subr.mxu0 %v3464
    %3609 = vmatpush1.msra.mxu0 %v3463
    %3610 = vmatprep.subr.mxu0 %v3460
    %3611 = vmatpush1.msra.mxu0 %v3459
    %3612 = vmatprep.subr.mxu0 %v3456
    %3613 = vmatpush1.msra.mxu0 %v3455
    %3614 = vmatprep.subr.mxu0 %v3452
    %3615 = vmatpush1.msra.mxu0 %v3451
    %3616 = vmatprep.subr.mxu0 0.0
    %3617 = vmatpush2.msra.mxu0 0.0
    %3618 = vmatprep.subr.mxu0 0.0
    %3619 = vmatpush2.msra.mxu0 0.0
    %3620 = vmatprep.subr.mxu0 0.0
    %3621 = vmatpush2.msra.mxu0 0.0
    %3622 = vmatprep.subr.mxu0 0.0
    %3623 = vmatpush2.msra.mxu0 0.0
    %3624 = vmatprep.subr.mxu0 0.0
    %3625 = vmatpush2.msra.mxu0 0.0
    %3626 = vmatprep.subr.mxu0 0.0
    %3627 = vmatpush2.msra.mxu0 0.0
    %3628 = vmatprep.subr.mxu0 0.0
    %3629 = vmatpush2.msra.mxu0 0.0
    %3630 = vmatprep.subr.mxu0 0.0
    %3631 = vmatpush2.msra.mxu0 0.0
    %3632 = vmatprep.subr.mxu0 0.0
    %3633 = vmatpush2.msra.mxu0 0.0
    %3634 = vmatprep.subr.mxu0 0.0
    %3635 = vmatpush2.msra.mxu0 0.0
    %3636 = vmatprep.subr.mxu0 0.0
    %3637 = vmatpush2.msra.mxu0 0.0
    %3638 = vmatprep.subr.mxu0 0.0
    %3639 = vmatpush2.msra.mxu0 0.0
    %3640 = vmatprep.subr.mxu0 0.0
    %3641 = vmatpush2.msra.mxu0 0.0
    %3642 = vmatprep.subr.mxu0 0.0
    %3643 = vmatpush2.msra.mxu0 0.0
    %3644 = vmatprep.subr.mxu0 0.0
    %3645 = vmatpush2.msra.mxu0 0.0
    %3646 = vmatprep.subr.mxu0 0.0
    %3647 = vmatpush2.msra.mxu0 0.0
    %3648 = vmatprep.mubr.f32.mxu0 0.0
    %3649 = vmatmul.mubr.f32.gmra.mxu0 %v3445
    %v3650 = vpop.f32.mrf.mxu0
    %v3651 = vadd.f32 0.0, %v3650
    %v3652 = vpop.f32.mrf.mxu0
    %v3653 = vadd.f32 0.0, %v3652
    %3654 = vdwg.mxu0
    %v3659 = vcombine.low %v3580, %v3582
    %v3660 = vcombine.low %v3651, %v3653
    %v3662 = vunpack.c.l.s4 1983009808
    %v3663 = vunpack.c.0.s8 %v3662
    %v3664 = vlaneseq
    %v3665 = vshrl.u32 %v3664, 7
    %v3666 = vsub.s32 %v3663, %v3665
    %v3667 = vrot.slane %v3659, %v3666
    %v3669 = vunpack.c.l.s4 1983009808
    %v3670 = vunpack.c.0.s8 %v3669
    %v3671 = vlaneseq
    %v3672 = vshrl.u32 %v3671, 7
    %v3673 = vsub.s32 %v3670, %v3672
    %v3674 = vrot.slane %v3660, %v3673
    %v3675 = vcombine.low %v3667, %v3674
    %v3677 = vadd.f32 %v3448, %v3675
    %v3678 = vxor.u32 %v3677, 2147483648
    %v3679 = vmul.f32 %v3678, 1.442695
    %v3680 = vpow.pop %v3679
    %v3681 = vadd.f32 %v3680, 1.0
    %v3682 = vrcp.pop %v3681
    %v3683 = vmul.f32 1.0, %v3682
    %v3685 = vrot.slane %v3677, 2
    %v3687 = vxor.u32 %v3685, 2147483648
    %v3688 = vmul.f32 %v3687, 1.442695
    %v3689 = vpow.pop %v3688
    %v3690 = vadd.f32 %v3689, 1.0
    %v3691 = vrcp.pop %v3690
    %v3692 = vmul.f32 1.0, %v3691
    %v3693 = vrot.slane %v3677, 4
    %v3695 = vtanh.pop %v3693
    %v3696 = vrot.slane %v3677, 6
    %v3698 = vxor.u32 %v3696, 2147483648
    %v3699 = vmul.f32 %v3698, 1.442695
    %v3700 = vpow.pop %v3699
    %v3701 = vadd.f32 %v3700, 1.0
    %v3702 = vrcp.pop %v3701
    %v3703 = vmul.f32 1.0, %v3702
    %v3704 = vmul.f32 %v3692, %v3446
    %v3705 = vmul.f32 %v3683, %v3695
    %v3706 = vadd.f32 %v3704, %v3705
    %v3707 = vtanh.pop %v3706
    %v3708 = vmul.f32 %v3703, %v3707
    %s3709 = sadd.s32 %s97, 6
    %v3710 = vstv %s3709
    %vm3711 = vcmp.lt.s32.totalorder %v3710, %v96
    %v3712 = vsel %vm3711, 1, 0
    %3713 = vset.pattern.permute.xlu0 0
    %3714 = vperm.xlu0 %3713, %v3712
    %v3715 = vpop.permute.xlu0 %3714
    %vm3716 = vcmp.eq.s32.totalorder %v3715, 1
    %v3717 = vsel %vm3716, %v3706, %v3446
    %3718 = vst [vmem:[#allocation3] sm:$0x3] %v3717
    %v3719 = vsel %vm3716, %v3708, %v3445
    %3720 = vst [vmem:[#allocation2] sm:$0x3] %v3719
    %v3721 = vsel %vm3716, %v3708, 0.0
    %s3722 = scalar_lea.vmem [#allocation14], 12
    %3723 = vst [vmem:[%s3722] sm:$0x3] %v3721
    %v3724 = vld [vmem:[#allocation4] sm:$0x3]
    %v3725 = vld [vmem:[#allocation5] sm:$0x3]
    %s3726 = scalar_lea.vmem [#allocation9], 8
    %v3727 = vld [vmem:[%s3726] sm:$0xff]
    %v3728 = vld [vmem:[#allocation12] sm:$0xff]
    %v3729 = vld [vmem:[#allocation12 + $0x8] sm:$0xff]
    %v3730 = vld [vmem:[#allocation12 + $0x10] sm:$0xff]
    %v3731 = vld [vmem:[#allocation12 + $0x18] sm:$0xff]
    %v3732 = vld [vmem:[#allocation12 + $0x20] sm:$0xff]
    %v3733 = vld [vmem:[#allocation12 + $0x28] sm:$0xff]
    %v3734 = vld [vmem:[#allocation12 + $0x30] sm:$0xff]
    %v3735 = vld [vmem:[#allocation12 + $0x38] sm:$0xff]
    %v3736 = vld [vmem:[#allocation12 + $0x40] sm:$0xff]
    %v3737 = vld [vmem:[#allocation12 + $0x48] sm:$0xff]
    %v3738 = vld [vmem:[#allocation12 + $0x50] sm:$0xff]
    %v3739 = vld [vmem:[#allocation12 + $0x58] sm:$0xff]
    %v3740 = vld [vmem:[#allocation12 + $0x60] sm:$0xff]
    %v3741 = vld [vmem:[#allocation12 + $0x68] sm:$0xff]
    %v3742 = vld [vmem:[#allocation12 + $0x70] sm:$0xff]
    %v3743 = vld [vmem:[#allocation12 + $0x78] sm:$0xff]
    %v3744 = vld [vmem:[#allocation12 + $0x80] sm:$0xff]
    %v3745 = vld [vmem:[#allocation12 + $0x88] sm:$0xff]
    %v3746 = vld [vmem:[#allocation12 + $0x90] sm:$0xff]
    %v3747 = vld [vmem:[#allocation12 + $0x98] sm:$0xff]
    %v3748 = vld [vmem:[#allocation12 + $0xa0] sm:$0xff]
    %v3749 = vld [vmem:[#allocation12 + $0xa8] sm:$0xff]
    %v3750 = vld [vmem:[#allocation12 + $0xb0] sm:$0xff]
    %v3751 = vld [vmem:[#allocation12 + $0xb8] sm:$0xff]
    %v3752 = vld [vmem:[#allocation12 + $0xc0] sm:$0xff]
    %v3753 = vld [vmem:[#allocation12 + $0xc8] sm:$0xff]
    %v3754 = vld [vmem:[#allocation12 + $0xd0] sm:$0xff]
    %v3755 = vld [vmem:[#allocation12 + $0xd8] sm:$0xff]
    %v3756 = vld [vmem:[#allocation12 + $0xe0] sm:$0xff]
    %v3757 = vld [vmem:[#allocation12 + $0xe8] sm:$0xff]
    %v3758 = vld [vmem:[#allocation12 + $0xf0] sm:$0xff]
    %v3759 = vld [vmem:[#allocation12 + $0xf8] sm:$0xff]
    %v3760 = vld [vmem:[#allocation12 + $0x100] sm:$0xff]
    %v3761 = vld [vmem:[#allocation12 + $0x108] sm:$0xff]
    %v3762 = vld [vmem:[#allocation12 + $0x110] sm:$0xff]
    %v3763 = vld [vmem:[#allocation12 + $0x118] sm:$0xff]
    %v3764 = vld [vmem:[#allocation12 + $0x120] sm:$0xff]
    %v3765 = vld [vmem:[#allocation12 + $0x128] sm:$0xff]
    %v3766 = vld [vmem:[#allocation12 + $0x130] sm:$0xff]
    %v3767 = vld [vmem:[#allocation12 + $0x138] sm:$0xff]
    %v3768 = vld [vmem:[#allocation12 + $0x140] sm:$0xff]
    %v3769 = vld [vmem:[#allocation12 + $0x148] sm:$0xff]
    %v3770 = vld [vmem:[#allocation12 + $0x150] sm:$0xff]
    %v3771 = vld [vmem:[#allocation12 + $0x158] sm:$0xff]
    %v3772 = vld [vmem:[#allocation12 + $0x160] sm:$0xff]
    %v3773 = vld [vmem:[#allocation12 + $0x168] sm:$0xff]
    %v3774 = vld [vmem:[#allocation12 + $0x170] sm:$0xff]
    %v3775 = vld [vmem:[#allocation12 + $0x178] sm:$0xff]
    %v3776 = vld [vmem:[#allocation12 + $0x180] sm:$0xff]
    %v3777 = vld [vmem:[#allocation12 + $0x188] sm:$0xff]
    %v3778 = vld [vmem:[#allocation12 + $0x190] sm:$0xff]
    %v3779 = vld [vmem:[#allocation12 + $0x198] sm:$0xff]
    %v3780 = vld [vmem:[#allocation12 + $0x1a0] sm:$0xff]
    %v3781 = vld [vmem:[#allocation12 + $0x1a8] sm:$0xff]
    %v3782 = vld [vmem:[#allocation12 + $0x1b0] sm:$0xff]
    %v3783 = vld [vmem:[#allocation12 + $0x1b8] sm:$0xff]
    %v3784 = vld [vmem:[#allocation12 + $0x1c0] sm:$0xff]
    %v3785 = vld [vmem:[#allocation12 + $0x1c8] sm:$0xff]
    %v3786 = vld [vmem:[#allocation12 + $0x1d0] sm:$0xff]
    %v3787 = vld [vmem:[#allocation12 + $0x1d8] sm:$0xff]
    %v3788 = vld [vmem:[#allocation12 + $0x1e0] sm:$0xff]
    %v3789 = vld [vmem:[#allocation12 + $0x1e8] sm:$0xff]
    %v3790 = vld [vmem:[#allocation12 + $0x1f0] sm:$0xff]
    %v3791 = vld [vmem:[#allocation12 + $0x1f8] sm:$0xff]
    %3792 = vmatprep.subr.mxu0 %v3789
    %3793 = vmatpush1.msra.mxu0 %v3788
    %3794 = vmatprep.subr.mxu0 %v3785
    %3795 = vmatpush1.msra.mxu0 %v3784
    %3796 = vmatprep.subr.mxu0 %v3781
    %3797 = vmatpush1.msra.mxu0 %v3780
    %3798 = vmatprep.subr.mxu0 %v3777
    %3799 = vmatpush1.msra.mxu0 %v3776
    %3800 = vmatprep.subr.mxu0 %v3773
    %3801 = vmatpush1.msra.mxu0 %v3772
    %3802 = vmatprep.subr.mxu0 %v3769
    %3803 = vmatpush1.msra.mxu0 %v3768
    %3804 = vmatprep.subr.mxu0 %v3765
    %3805 = vmatpush1.msra.mxu0 %v3764
    %3806 = vmatprep.subr.mxu0 %v3761
    %3807 = vmatpush1.msra.mxu0 %v3760
    %3808 = vmatprep.subr.mxu0 %v3757
    %3809 = vmatpush1.msra.mxu0 %v3756
    %3810 = vmatprep.subr.mxu0 %v3753
    %3811 = vmatpush1.msra.mxu0 %v3752
    %3812 = vmatprep.subr.mxu0 %v3749
    %3813 = vmatpush1.msra.mxu0 %v3748
    %3814 = vmatprep.subr.mxu0 %v3745
    %3815 = vmatpush1.msra.mxu0 %v3744
    %3816 = vmatprep.subr.mxu0 %v3741
    %3817 = vmatpush1.msra.mxu0 %v3740
    %3818 = vmatprep.subr.mxu0 %v3737
    %3819 = vmatpush1.msra.mxu0 %v3736
    %3820 = vmatprep.subr.mxu0 %v3733
    %3821 = vmatpush1.msra.mxu0 %v3732
    %3822 = vmatprep.subr.mxu0 %v3729
    %3823 = vmatpush1.msra.mxu0 %v3728
    %3824 = vmatprep.subr.mxu0 0.0
    %3825 = vmatpush2.msra.mxu0 0.0
    %3826 = vmatprep.subr.mxu0 0.0
    %3827 = vmatpush2.msra.mxu0 0.0
    %3828 = vmatprep.subr.mxu0 0.0
    %3829 = vmatpush2.msra.mxu0 0.0
    %3830 = vmatprep.subr.mxu0 0.0
    %3831 = vmatpush2.msra.mxu0 0.0
    %3832 = vmatprep.subr.mxu0 0.0
    %3833 = vmatpush2.msra.mxu0 0.0
    %3834 = vmatprep.subr.mxu0 0.0
    %3835 = vmatpush2.msra.mxu0 0.0
    %3836 = vmatprep.subr.mxu0 0.0
    %3837 = vmatpush2.msra.mxu0 0.0
    %3838 = vmatprep.subr.mxu0 0.0
    %3839 = vmatpush2.msra.mxu0 0.0
    %3840 = vmatprep.subr.mxu0 0.0
    %3841 = vmatpush2.msra.mxu0 0.0
    %3842 = vmatprep.subr.mxu0 0.0
    %3843 = vmatpush2.msra.mxu0 0.0
    %3844 = vmatprep.subr.mxu0 0.0
    %3845 = vmatpush2.msra.mxu0 0.0
    %3846 = vmatprep.subr.mxu0 0.0
    %3847 = vmatpush2.msra.mxu0 0.0
    %3848 = vmatprep.subr.mxu0 0.0
    %3849 = vmatpush2.msra.mxu0 0.0
    %3850 = vmatprep.subr.mxu0 0.0
    %3851 = vmatpush2.msra.mxu0 0.0
    %3852 = vmatprep.subr.mxu0 0.0
    %3853 = vmatpush2.msra.mxu0 0.0
    %3854 = vmatprep.subr.mxu0 0.0
    %3855 = vmatpush2.msra.mxu0 0.0
    %3856 = vmatprep.mubr.f32.mxu0 0.0
    %3857 = vmatmul.mubr.f32.gmra.mxu0 %v3724
    %v3858 = vpop.f32.mrf.mxu0
    %v3859 = vadd.f32 0.0, %v3858
    %v3860 = vpop.f32.mrf.mxu0
    %v3861 = vadd.f32 0.0, %v3860
    %3862 = vdwg.mxu0
    %3863 = vmatprep.subr.mxu0 %v3791
    %3864 = vmatpush1.msra.mxu0 %v3790
    %3865 = vmatprep.subr.mxu0 %v3787
    %3866 = vmatpush1.msra.mxu0 %v3786
    %3867 = vmatprep.subr.mxu0 %v3783
    %3868 = vmatpush1.msra.mxu0 %v3782
    %3869 = vmatprep.subr.mxu0 %v3779
    %3870 = vmatpush1.msra.mxu0 %v3778
    %3871 = vmatprep.subr.mxu0 %v3775
    %3872 = vmatpush1.msra.mxu0 %v3774
    %3873 = vmatprep.subr.mxu0 %v3771
    %3874 = vmatpush1.msra.mxu0 %v3770
    %3875 = vmatprep.subr.mxu0 %v3767
    %3876 = vmatpush1.msra.mxu0 %v3766
    %3877 = vmatprep.subr.mxu0 %v3763
    %3878 = vmatpush1.msra.mxu0 %v3762
    %3879 = vmatprep.subr.mxu0 %v3759
    %3880 = vmatpush1.msra.mxu0 %v3758
    %3881 = vmatprep.subr.mxu0 %v3755
    %3882 = vmatpush1.msra.mxu0 %v3754
    %3883 = vmatprep.subr.mxu0 %v3751
    %3884 = vmatpush1.msra.mxu0 %v3750
    %3885 = vmatprep.subr.mxu0 %v3747
    %3886 = vmatpush1.msra.mxu0 %v3746
    %3887 = vmatprep.subr.mxu0 %v3743
    %3888 = vmatpush1.msra.mxu0 %v3742
    %3889 = vmatprep.subr.mxu0 %v3739
    %3890 = vmatpush1.msra.mxu0 %v3738
    %3891 = vmatprep.subr.mxu0 %v3735
    %3892 = vmatpush1.msra.mxu0 %v3734
    %3893 = vmatprep.subr.mxu0 %v3731
    %3894 = vmatpush1.msra.mxu0 %v3730
    %3895 = vmatprep.subr.mxu0 0.0
    %3896 = vmatpush2.msra.mxu0 0.0
    %3897 = vmatprep.subr.mxu0 0.0
    %3898 = vmatpush2.msra.mxu0 0.0
    %3899 = vmatprep.subr.mxu0 0.0
    %3900 = vmatpush2.msra.mxu0 0.0
    %3901 = vmatprep.subr.mxu0 0.0
    %3902 = vmatpush2.msra.mxu0 0.0
    %3903 = vmatprep.subr.mxu0 0.0
    %3904 = vmatpush2.msra.mxu0 0.0
    %3905 = vmatprep.subr.mxu0 0.0
    %3906 = vmatpush2.msra.mxu0 0.0
    %3907 = vmatprep.subr.mxu0 0.0
    %3908 = vmatpush2.msra.mxu0 0.0
    %3909 = vmatprep.subr.mxu0 0.0
    %3910 = vmatpush2.msra.mxu0 0.0
    %3911 = vmatprep.subr.mxu0 0.0
    %3912 = vmatpush2.msra.mxu0 0.0
    %3913 = vmatprep.subr.mxu0 0.0
    %3914 = vmatpush2.msra.mxu0 0.0
    %3915 = vmatprep.subr.mxu0 0.0
    %3916 = vmatpush2.msra.mxu0 0.0
    %3917 = vmatprep.subr.mxu0 0.0
    %3918 = vmatpush2.msra.mxu0 0.0
    %3919 = vmatprep.subr.mxu0 0.0
    %3920 = vmatpush2.msra.mxu0 0.0
    %3921 = vmatprep.subr.mxu0 0.0
    %3922 = vmatpush2.msra.mxu0 0.0
    %3923 = vmatprep.subr.mxu0 0.0
    %3924 = vmatpush2.msra.mxu0 0.0
    %3925 = vmatprep.subr.mxu0 0.0
    %3926 = vmatpush2.msra.mxu0 0.0
    %3927 = vmatprep.mubr.f32.mxu0 0.0
    %3928 = vmatmul.mubr.f32.gmra.mxu0 %v3724
    %v3929 = vpop.f32.mrf.mxu0
    %v3930 = vadd.f32 0.0, %v3929
    %v3931 = vpop.f32.mrf.mxu0
    %v3932 = vadd.f32 0.0, %v3931
    %3933 = vdwg.mxu0
    %v3938 = vcombine.low %v3859, %v3861
    %v3939 = vcombine.low %v3930, %v3932
    %v3941 = vunpack.c.l.s4 1983009808
    %v3942 = vunpack.c.0.s8 %v3941
    %v3943 = vlaneseq
    %v3944 = vshrl.u32 %v3943, 7
    %v3945 = vsub.s32 %v3942, %v3944
    %v3946 = vrot.slane %v3938, %v3945
    %v3948 = vunpack.c.l.s4 1983009808
    %v3949 = vunpack.c.0.s8 %v3948
    %v3950 = vlaneseq
    %v3951 = vshrl.u32 %v3950, 7
    %v3952 = vsub.s32 %v3949, %v3951
    %v3953 = vrot.slane %v3939, %v3952
    %v3954 = vcombine.low %v3946, %v3953
    %v3956 = vadd.f32 %v3727, %v3954
    %v3957 = vxor.u32 %v3956, 2147483648
    %v3958 = vmul.f32 %v3957, 1.442695
    %v3959 = vpow.pop %v3958
    %v3960 = vadd.f32 %v3959, 1.0
    %v3961 = vrcp.pop %v3960
    %v3962 = vmul.f32 1.0, %v3961
    %v3964 = vrot.slane %v3956, 2
    %v3966 = vxor.u32 %v3964, 2147483648
    %v3967 = vmul.f32 %v3966, 1.442695
    %v3968 = vpow.pop %v3967
    %v3969 = vadd.f32 %v3968, 1.0
    %v3970 = vrcp.pop %v3969
    %v3971 = vmul.f32 1.0, %v3970
    %v3972 = vrot.slane %v3956, 4
    %v3974 = vtanh.pop %v3972
    %v3975 = vrot.slane %v3956, 6
    %v3977 = vxor.u32 %v3975, 2147483648
    %v3978 = vmul.f32 %v3977, 1.442695
    %v3979 = vpow.pop %v3978
    %v3980 = vadd.f32 %v3979, 1.0
    %v3981 = vrcp.pop %v3980
    %v3982 = vmul.f32 1.0, %v3981
    %v3983 = vmul.f32 %v3971, %v3725
    %v3984 = vmul.f32 %v3962, %v3974
    %v3985 = vadd.f32 %v3983, %v3984
    %v3986 = vtanh.pop %v3985
    %v3987 = vmul.f32 %v3982, %v3986
    %s3988 = sadd.s32 %s99, 1
    %v3989 = vstv %s3988
    %vm3990 = vcmp.lt.s32.totalorder %v3989, %v96
    %v3991 = vsel %vm3990, 1, 0
    %3992 = vset.pattern.permute.xlu0 0
    %3993 = vperm.xlu0 %3992, %v3991
    %v3994 = vpop.permute.xlu0 %3993
    %vm3995 = vcmp.eq.s32.totalorder %v3994, 1
    %v3996 = vsel %vm3995, %v3985, %v3725
    %3997 = vst [vmem:[#allocation5] sm:$0x3] %v3996
    %v3998 = vsel %vm3995, %v3987, %v3724
    %3999 = vst [vmem:[#allocation4] sm:$0x3] %v3998
    %v4000 = vsel %vm3995, %v3987, 0.0
    %s4001 = scalar_lea.vmem [#allocation15], 2
    %4002 = vst [vmem:[%s4001] sm:$0x3] %v4000
    %v4003 = vld [vmem:[#allocation2] sm:$0x3]
    %v4004 = vld [vmem:[#allocation3] sm:$0x3]
    %s4005 = scalar_lea.vmem [#allocation6], 56
    %v4006 = vld [vmem:[%s4005] sm:$0xff]
    %v4007 = vld [vmem:[#allocation11] sm:$0xff]
    %v4008 = vld [vmem:[#allocation11 + $0x8] sm:$0xff]
    %v4009 = vld [vmem:[#allocation11 + $0x10] sm:$0xff]
    %v4010 = vld [vmem:[#allocation11 + $0x18] sm:$0xff]
    %v4011 = vld [vmem:[#allocation11 + $0x20] sm:$0xff]
    %v4012 = vld [vmem:[#allocation11 + $0x28] sm:$0xff]
    %v4013 = vld [vmem:[#allocation11 + $0x30] sm:$0xff]
    %v4014 = vld [vmem:[#allocation11 + $0x38] sm:$0xff]
    %v4015 = vld [vmem:[#allocation11 + $0x40] sm:$0xff]
    %v4016 = vld [vmem:[#allocation11 + $0x48] sm:$0xff]
    %v4017 = vld [vmem:[#allocation11 + $0x50] sm:$0xff]
    %v4018 = vld [vmem:[#allocation11 + $0x58] sm:$0xff]
    %v4019 = vld [vmem:[#allocation11 + $0x60] sm:$0xff]
    %v4020 = vld [vmem:[#allocation11 + $0x68] sm:$0xff]
    %v4021 = vld [vmem:[#allocation11 + $0x70] sm:$0xff]
    %v4022 = vld [vmem:[#allocation11 + $0x78] sm:$0xff]
    %v4023 = vld [vmem:[#allocation11 + $0x80] sm:$0xff]
    %v4024 = vld [vmem:[#allocation11 + $0x88] sm:$0xff]
    %v4025 = vld [vmem:[#allocation11 + $0x90] sm:$0xff]
    %v4026 = vld [vmem:[#allocation11 + $0x98] sm:$0xff]
    %v4027 = vld [vmem:[#allocation11 + $0xa0] sm:$0xff]
    %v4028 = vld [vmem:[#allocation11 + $0xa8] sm:$0xff]
    %v4029 = vld [vmem:[#allocation11 + $0xb0] sm:$0xff]
    %v4030 = vld [vmem:[#allocation11 + $0xb8] sm:$0xff]
    %v4031 = vld [vmem:[#allocation11 + $0xc0] sm:$0xff]
    %v4032 = vld [vmem:[#allocation11 + $0xc8] sm:$0xff]
    %v4033 = vld [vmem:[#allocation11 + $0xd0] sm:$0xff]
    %v4034 = vld [vmem:[#allocation11 + $0xd8] sm:$0xff]
    %v4035 = vld [vmem:[#allocation11 + $0xe0] sm:$0xff]
    %v4036 = vld [vmem:[#allocation11 + $0xe8] sm:$0xff]
    %v4037 = vld [vmem:[#allocation11 + $0xf0] sm:$0xff]
    %v4038 = vld [vmem:[#allocation11 + $0xf8] sm:$0xff]
    %v4039 = vld [vmem:[#allocation11 + $0x100] sm:$0xff]
    %v4040 = vld [vmem:[#allocation11 + $0x108] sm:$0xff]
    %v4041 = vld [vmem:[#allocation11 + $0x110] sm:$0xff]
    %v4042 = vld [vmem:[#allocation11 + $0x118] sm:$0xff]
    %v4043 = vld [vmem:[#allocation11 + $0x120] sm:$0xff]
    %v4044 = vld [vmem:[#allocation11 + $0x128] sm:$0xff]
    %v4045 = vld [vmem:[#allocation11 + $0x130] sm:$0xff]
    %v4046 = vld [vmem:[#allocation11 + $0x138] sm:$0xff]
    %v4047 = vld [vmem:[#allocation11 + $0x140] sm:$0xff]
    %v4048 = vld [vmem:[#allocation11 + $0x148] sm:$0xff]
    %v4049 = vld [vmem:[#allocation11 + $0x150] sm:$0xff]
    %v4050 = vld [vmem:[#allocation11 + $0x158] sm:$0xff]
    %v4051 = vld [vmem:[#allocation11 + $0x160] sm:$0xff]
    %v4052 = vld [vmem:[#allocation11 + $0x168] sm:$0xff]
    %v4053 = vld [vmem:[#allocation11 + $0x170] sm:$0xff]
    %v4054 = vld [vmem:[#allocation11 + $0x178] sm:$0xff]
    %v4055 = vld [vmem:[#allocation11 + $0x180] sm:$0xff]
    %v4056 = vld [vmem:[#allocation11 + $0x188] sm:$0xff]
    %v4057 = vld [vmem:[#allocation11 + $0x190] sm:$0xff]
    %v4058 = vld [vmem:[#allocation11 + $0x198] sm:$0xff]
    %v4059 = vld [vmem:[#allocation11 + $0x1a0] sm:$0xff]
    %v4060 = vld [vmem:[#allocation11 + $0x1a8] sm:$0xff]
    %v4061 = vld [vmem:[#allocation11 + $0x1b0] sm:$0xff]
    %v4062 = vld [vmem:[#allocation11 + $0x1b8] sm:$0xff]
    %v4063 = vld [vmem:[#allocation11 + $0x1c0] sm:$0xff]
    %v4064 = vld [vmem:[#allocation11 + $0x1c8] sm:$0xff]
    %v4065 = vld [vmem:[#allocation11 + $0x1d0] sm:$0xff]
    %v4066 = vld [vmem:[#allocation11 + $0x1d8] sm:$0xff]
    %v4067 = vld [vmem:[#allocation11 + $0x1e0] sm:$0xff]
    %v4068 = vld [vmem:[#allocation11 + $0x1e8] sm:$0xff]
    %v4069 = vld [vmem:[#allocation11 + $0x1f0] sm:$0xff]
    %v4070 = vld [vmem:[#allocation11 + $0x1f8] sm:$0xff]
    %4071 = vmatprep.subr.mxu0 %v4068
    %4072 = vmatpush1.msra.mxu0 %v4067
    %4073 = vmatprep.subr.mxu0 %v4064
    %4074 = vmatpush1.msra.mxu0 %v4063
    %4075 = vmatprep.subr.mxu0 %v4060
    %4076 = vmatpush1.msra.mxu0 %v4059
    %4077 = vmatprep.subr.mxu0 %v4056
    %4078 = vmatpush1.msra.mxu0 %v4055
    %4079 = vmatprep.subr.mxu0 %v4052
    %4080 = vmatpush1.msra.mxu0 %v4051
    %4081 = vmatprep.subr.mxu0 %v4048
    %4082 = vmatpush1.msra.mxu0 %v4047
    %4083 = vmatprep.subr.mxu0 %v4044
    %4084 = vmatpush1.msra.mxu0 %v4043
    %4085 = vmatprep.subr.mxu0 %v4040
    %4086 = vmatpush1.msra.mxu0 %v4039
    %4087 = vmatprep.subr.mxu0 %v4036
    %4088 = vmatpush1.msra.mxu0 %v4035
    %4089 = vmatprep.subr.mxu0 %v4032
    %4090 = vmatpush1.msra.mxu0 %v4031
    %4091 = vmatprep.subr.mxu0 %v4028
    %4092 = vmatpush1.msra.mxu0 %v4027
    %4093 = vmatprep.subr.mxu0 %v4024
    %4094 = vmatpush1.msra.mxu0 %v4023
    %4095 = vmatprep.subr.mxu0 %v4020
    %4096 = vmatpush1.msra.mxu0 %v4019
    %4097 = vmatprep.subr.mxu0 %v4016
    %4098 = vmatpush1.msra.mxu0 %v4015
    %4099 = vmatprep.subr.mxu0 %v4012
    %4100 = vmatpush1.msra.mxu0 %v4011
    %4101 = vmatprep.subr.mxu0 %v4008
    %4102 = vmatpush1.msra.mxu0 %v4007
    %4103 = vmatprep.subr.mxu0 0.0
    %4104 = vmatpush2.msra.mxu0 0.0
    %4105 = vmatprep.subr.mxu0 0.0
    %4106 = vmatpush2.msra.mxu0 0.0
    %4107 = vmatprep.subr.mxu0 0.0
    %4108 = vmatpush2.msra.mxu0 0.0
    %4109 = vmatprep.subr.mxu0 0.0
    %4110 = vmatpush2.msra.mxu0 0.0
    %4111 = vmatprep.subr.mxu0 0.0
    %4112 = vmatpush2.msra.mxu0 0.0
    %4113 = vmatprep.subr.mxu0 0.0
    %4114 = vmatpush2.msra.mxu0 0.0
    %4115 = vmatprep.subr.mxu0 0.0
    %4116 = vmatpush2.msra.mxu0 0.0
    %4117 = vmatprep.subr.mxu0 0.0
    %4118 = vmatpush2.msra.mxu0 0.0
    %4119 = vmatprep.subr.mxu0 0.0
    %4120 = vmatpush2.msra.mxu0 0.0
    %4121 = vmatprep.subr.mxu0 0.0
    %4122 = vmatpush2.msra.mxu0 0.0
    %4123 = vmatprep.subr.mxu0 0.0
    %4124 = vmatpush2.msra.mxu0 0.0
    %4125 = vmatprep.subr.mxu0 0.0
    %4126 = vmatpush2.msra.mxu0 0.0
    %4127 = vmatprep.subr.mxu0 0.0
    %4128 = vmatpush2.msra.mxu0 0.0
    %4129 = vmatprep.subr.mxu0 0.0
    %4130 = vmatpush2.msra.mxu0 0.0
    %4131 = vmatprep.subr.mxu0 0.0
    %4132 = vmatpush2.msra.mxu0 0.0
    %4133 = vmatprep.subr.mxu0 0.0
    %4134 = vmatpush2.msra.mxu0 0.0
    %4135 = vmatprep.mubr.f32.mxu0 0.0
    %4136 = vmatmul.mubr.f32.gmra.mxu0 %v4003
    %v4137 = vpop.f32.mrf.mxu0
    %v4138 = vadd.f32 0.0, %v4137
    %v4139 = vpop.f32.mrf.mxu0
    %v4140 = vadd.f32 0.0, %v4139
    %4141 = vdwg.mxu0
    %4142 = vmatprep.subr.mxu0 %v4070
    %4143 = vmatpush1.msra.mxu0 %v4069
    %4144 = vmatprep.subr.mxu0 %v4066
    %4145 = vmatpush1.msra.mxu0 %v4065
    %4146 = vmatprep.subr.mxu0 %v4062
    %4147 = vmatpush1.msra.mxu0 %v4061
    %4148 = vmatprep.subr.mxu0 %v4058
    %4149 = vmatpush1.msra.mxu0 %v4057
    %4150 = vmatprep.subr.mxu0 %v4054
    %4151 = vmatpush1.msra.mxu0 %v4053
    %4152 = vmatprep.subr.mxu0 %v4050
    %4153 = vmatpush1.msra.mxu0 %v4049
    %4154 = vmatprep.subr.mxu0 %v4046
    %4155 = vmatpush1.msra.mxu0 %v4045
    %4156 = vmatprep.subr.mxu0 %v4042
    %4157 = vmatpush1.msra.mxu0 %v4041
    %4158 = vmatprep.subr.mxu0 %v4038
    %4159 = vmatpush1.msra.mxu0 %v4037
    %4160 = vmatprep.subr.mxu0 %v4034
    %4161 = vmatpush1.msra.mxu0 %v4033
    %4162 = vmatprep.subr.mxu0 %v4030
    %4163 = vmatpush1.msra.mxu0 %v4029
    %4164 = vmatprep.subr.mxu0 %v4026
    %4165 = vmatpush1.msra.mxu0 %v4025
    %4166 = vmatprep.subr.mxu0 %v4022
    %4167 = vmatpush1.msra.mxu0 %v4021
    %4168 = vmatprep.subr.mxu0 %v4018
    %4169 = vmatpush1.msra.mxu0 %v4017
    %4170 = vmatprep.subr.mxu0 %v4014
    %4171 = vmatpush1.msra.mxu0 %v4013
    %4172 = vmatprep.subr.mxu0 %v4010
    %4173 = vmatpush1.msra.mxu0 %v4009
    %4174 = vmatprep.subr.mxu0 0.0
    %4175 = vmatpush2.msra.mxu0 0.0
    %4176 = vmatprep.subr.mxu0 0.0
    %4177 = vmatpush2.msra.mxu0 0.0
    %4178 = vmatprep.subr.mxu0 0.0
    %4179 = vmatpush2.msra.mxu0 0.0
    %4180 = vmatprep.subr.mxu0 0.0
    %4181 = vmatpush2.msra.mxu0 0.0
    %4182 = vmatprep.subr.mxu0 0.0
    %4183 = vmatpush2.msra.mxu0 0.0
    %4184 = vmatprep.subr.mxu0 0.0
    %4185 = vmatpush2.msra.mxu0 0.0
    %4186 = vmatprep.subr.mxu0 0.0
    %4187 = vmatpush2.msra.mxu0 0.0
    %4188 = vmatprep.subr.mxu0 0.0
    %4189 = vmatpush2.msra.mxu0 0.0
    %4190 = vmatprep.subr.mxu0 0.0
    %4191 = vmatpush2.msra.mxu0 0.0
    %4192 = vmatprep.subr.mxu0 0.0
    %4193 = vmatpush2.msra.mxu0 0.0
    %4194 = vmatprep.subr.mxu0 0.0
    %4195 = vmatpush2.msra.mxu0 0.0
    %4196 = vmatprep.subr.mxu0 0.0
    %4197 = vmatpush2.msra.mxu0 0.0
    %4198 = vmatprep.subr.mxu0 0.0
    %4199 = vmatpush2.msra.mxu0 0.0
    %4200 = vmatprep.subr.mxu0 0.0
    %4201 = vmatpush2.msra.mxu0 0.0
    %4202 = vmatprep.subr.mxu0 0.0
    %4203 = vmatpush2.msra.mxu0 0.0
    %4204 = vmatprep.subr.mxu0 0.0
    %4205 = vmatpush2.msra.mxu0 0.0
    %4206 = vmatprep.mubr.f32.mxu0 0.0
    %4207 = vmatmul.mubr.f32.gmra.mxu0 %v4003
    %v4208 = vpop.f32.mrf.mxu0
    %v4209 = vadd.f32 0.0, %v4208
    %v4210 = vpop.f32.mrf.mxu0
    %v4211 = vadd.f32 0.0, %v4210
    %4212 = vdwg.mxu0
    %v4217 = vcombine.low %v4138, %v4140
    %v4218 = vcombine.low %v4209, %v4211
    %v4220 = vunpack.c.l.s4 1983009808
    %v4221 = vunpack.c.0.s8 %v4220
    %v4222 = vlaneseq
    %v4223 = vshrl.u32 %v4222, 7
    %v4224 = vsub.s32 %v4221, %v4223
    %v4225 = vrot.slane %v4217, %v4224
    %v4227 = vunpack.c.l.s4 1983009808
    %v4228 = vunpack.c.0.s8 %v4227
    %v4229 = vlaneseq
    %v4230 = vshrl.u32 %v4229, 7
    %v4231 = vsub.s32 %v4228, %v4230
    %v4232 = vrot.slane %v4218, %v4231
    %v4233 = vcombine.low %v4225, %v4232
    %v4235 = vadd.f32 %v4006, %v4233
    %v4236 = vxor.u32 %v4235, 2147483648
    %v4237 = vmul.f32 %v4236, 1.442695
    %v4238 = vpow.pop %v4237
    %v4239 = vadd.f32 %v4238, 1.0
    %v4240 = vrcp.pop %v4239
    %v4241 = vmul.f32 1.0, %v4240
    %v4243 = vrot.slane %v4235, 2
    %v4245 = vxor.u32 %v4243, 2147483648
    %v4246 = vmul.f32 %v4245, 1.442695
    %v4247 = vpow.pop %v4246
    %v4248 = vadd.f32 %v4247, 1.0
    %v4249 = vrcp.pop %v4248
    %v4250 = vmul.f32 1.0, %v4249
    %v4251 = vrot.slane %v4235, 4
    %v4253 = vtanh.pop %v4251
    %v4254 = vrot.slane %v4235, 6
    %v4256 = vxor.u32 %v4254, 2147483648
    %v4257 = vmul.f32 %v4256, 1.442695
    %v4258 = vpow.pop %v4257
    %v4259 = vadd.f32 %v4258, 1.0
    %v4260 = vrcp.pop %v4259
    %v4261 = vmul.f32 1.0, %v4260
    %v4262 = vmul.f32 %v4250, %v4004
    %v4263 = vmul.f32 %v4241, %v4253
    %v4264 = vadd.f32 %v4262, %v4263
    %v4265 = vtanh.pop %v4264
    %v4266 = vmul.f32 %v4261, %v4265
    %s4267 = sadd.s32 %s97, 7
    %v4268 = vstv %s4267
    %vm4269 = vcmp.lt.s32.totalorder %v4268, %v96
    %v4270 = vsel %vm4269, 1, 0
    %4271 = vset.pattern.permute.xlu0 0
    %4272 = vperm.xlu0 %4271, %v4270
    %v4273 = vpop.permute.xlu0 %4272
    %vm4274 = vcmp.eq.s32.totalorder %v4273, 1
    %v4275 = vsel %vm4274, %v4264, %v4004
    %4276 = vst [vmem:[#allocation3] sm:$0x3] %v4275
    %v4277 = vsel %vm4274, %v4266, %v4003
    %4278 = vst [vmem:[#allocation2] sm:$0x3] %v4277
    %v4279 = vsel %vm4274, %v4266, 0.0
    %s4280 = scalar_lea.vmem [#allocation14], 14
    %4281 = vst [vmem:[%s4280] sm:$0x3] %v4279
    %v4282 = vld [vmem:[#allocation4] sm:$0x3]
    %v4283 = vld [vmem:[#allocation5] sm:$0x3]
    %v4284 = vld [vmem:[#allocation9] sm:$0xff]
    %v4285 = vld [vmem:[#allocation12] sm:$0xff]
    %v4286 = vld [vmem:[#allocation12 + $0x8] sm:$0xff]
    %v4287 = vld [vmem:[#allocation12 + $0x10] sm:$0xff]
    %v4288 = vld [vmem:[#allocation12 + $0x18] sm:$0xff]
    %v4289 = vld [vmem:[#allocation12 + $0x20] sm:$0xff]
    %v4290 = vld [vmem:[#allocation12 + $0x28] sm:$0xff]
    %v4291 = vld [vmem:[#allocation12 + $0x30] sm:$0xff]
    %v4292 = vld [vmem:[#allocation12 + $0x38] sm:$0xff]
    %v4293 = vld [vmem:[#allocation12 + $0x40] sm:$0xff]
    %v4294 = vld [vmem:[#allocation12 + $0x48] sm:$0xff]
    %v4295 = vld [vmem:[#allocation12 + $0x50] sm:$0xff]
    %v4296 = vld [vmem:[#allocation12 + $0x58] sm:$0xff]
    %v4297 = vld [vmem:[#allocation12 + $0x60] sm:$0xff]
    %v4298 = vld [vmem:[#allocation12 + $0x68] sm:$0xff]
    %v4299 = vld [vmem:[#allocation12 + $0x70] sm:$0xff]
    %v4300 = vld [vmem:[#allocation12 + $0x78] sm:$0xff]
    %v4301 = vld [vmem:[#allocation12 + $0x80] sm:$0xff]
    %v4302 = vld [vmem:[#allocation12 + $0x88] sm:$0xff]
    %v4303 = vld [vmem:[#allocation12 + $0x90] sm:$0xff]
    %v4304 = vld [vmem:[#allocation12 + $0x98] sm:$0xff]
    %v4305 = vld [vmem:[#allocation12 + $0xa0] sm:$0xff]
    %v4306 = vld [vmem:[#allocation12 + $0xa8] sm:$0xff]
    %v4307 = vld [vmem:[#allocation12 + $0xb0] sm:$0xff]
    %v4308 = vld [vmem:[#allocation12 + $0xb8] sm:$0xff]
    %v4309 = vld [vmem:[#allocation12 + $0xc0] sm:$0xff]
    %v4310 = vld [vmem:[#allocation12 + $0xc8] sm:$0xff]
    %v4311 = vld [vmem:[#allocation12 + $0xd0] sm:$0xff]
    %v4312 = vld [vmem:[#allocation12 + $0xd8] sm:$0xff]
    %v4313 = vld [vmem:[#allocation12 + $0xe0] sm:$0xff]
    %v4314 = vld [vmem:[#allocation12 + $0xe8] sm:$0xff]
    %v4315 = vld [vmem:[#allocation12 + $0xf0] sm:$0xff]
    %v4316 = vld [vmem:[#allocation12 + $0xf8] sm:$0xff]
    %v4317 = vld [vmem:[#allocation12 + $0x100] sm:$0xff]
    %v4318 = vld [vmem:[#allocation12 + $0x108] sm:$0xff]
    %v4319 = vld [vmem:[#allocation12 + $0x110] sm:$0xff]
    %v4320 = vld [vmem:[#allocation12 + $0x118] sm:$0xff]
    %v4321 = vld [vmem:[#allocation12 + $0x120] sm:$0xff]
    %v4322 = vld [vmem:[#allocation12 + $0x128] sm:$0xff]
    %v4323 = vld [vmem:[#allocation12 + $0x130] sm:$0xff]
    %v4324 = vld [vmem:[#allocation12 + $0x138] sm:$0xff]
    %v4325 = vld [vmem:[#allocation12 + $0x140] sm:$0xff]
    %v4326 = vld [vmem:[#allocation12 + $0x148] sm:$0xff]
    %v4327 = vld [vmem:[#allocation12 + $0x150] sm:$0xff]
    %v4328 = vld [vmem:[#allocation12 + $0x158] sm:$0xff]
    %v4329 = vld [vmem:[#allocation12 + $0x160] sm:$0xff]
    %v4330 = vld [vmem:[#allocation12 + $0x168] sm:$0xff]
    %v4331 = vld [vmem:[#allocation12 + $0x170] sm:$0xff]
    %v4332 = vld [vmem:[#allocation12 + $0x178] sm:$0xff]
    %v4333 = vld [vmem:[#allocation12 + $0x180] sm:$0xff]
    %v4334 = vld [vmem:[#allocation12 + $0x188] sm:$0xff]
    %v4335 = vld [vmem:[#allocation12 + $0x190] sm:$0xff]
    %v4336 = vld [vmem:[#allocation12 + $0x198] sm:$0xff]
    %v4337 = vld [vmem:[#allocation12 + $0x1a0] sm:$0xff]
    %v4338 = vld [vmem:[#allocation12 + $0x1a8] sm:$0xff]
    %v4339 = vld [vmem:[#allocation12 + $0x1b0] sm:$0xff]
    %v4340 = vld [vmem:[#allocation12 + $0x1b8] sm:$0xff]
    %v4341 = vld [vmem:[#allocation12 + $0x1c0] sm:$0xff]
    %v4342 = vld [vmem:[#allocation12 + $0x1c8] sm:$0xff]
    %v4343 = vld [vmem:[#allocation12 + $0x1d0] sm:$0xff]
    %v4344 = vld [vmem:[#allocation12 + $0x1d8] sm:$0xff]
    %v4345 = vld [vmem:[#allocation12 + $0x1e0] sm:$0xff]
    %v4346 = vld [vmem:[#allocation12 + $0x1e8] sm:$0xff]
    %v4347 = vld [vmem:[#allocation12 + $0x1f0] sm:$0xff]
    %v4348 = vld [vmem:[#allocation12 + $0x1f8] sm:$0xff]
    %4349 = vmatprep.subr.mxu0 %v4346
    %4350 = vmatpush1.msra.mxu0 %v4345
    %4351 = vmatprep.subr.mxu0 %v4342
    %4352 = vmatpush1.msra.mxu0 %v4341
    %4353 = vmatprep.subr.mxu0 %v4338
    %4354 = vmatpush1.msra.mxu0 %v4337
    %4355 = vmatprep.subr.mxu0 %v4334
    %4356 = vmatpush1.msra.mxu0 %v4333
    %4357 = vmatprep.subr.mxu0 %v4330
    %4358 = vmatpush1.msra.mxu0 %v4329
    %4359 = vmatprep.subr.mxu0 %v4326
    %4360 = vmatpush1.msra.mxu0 %v4325
    %4361 = vmatprep.subr.mxu0 %v4322
    %4362 = vmatpush1.msra.mxu0 %v4321
    %4363 = vmatprep.subr.mxu0 %v4318
    %4364 = vmatpush1.msra.mxu0 %v4317
    %4365 = vmatprep.subr.mxu0 %v4314
    %4366 = vmatpush1.msra.mxu0 %v4313
    %4367 = vmatprep.subr.mxu0 %v4310
    %4368 = vmatpush1.msra.mxu0 %v4309
    %4369 = vmatprep.subr.mxu0 %v4306
    %4370 = vmatpush1.msra.mxu0 %v4305
    %4371 = vmatprep.subr.mxu0 %v4302
    %4372 = vmatpush1.msra.mxu0 %v4301
    %4373 = vmatprep.subr.mxu0 %v4298
    %4374 = vmatpush1.msra.mxu0 %v4297
    %4375 = vmatprep.subr.mxu0 %v4294
    %4376 = vmatpush1.msra.mxu0 %v4293
    %4377 = vmatprep.subr.mxu0 %v4290
    %4378 = vmatpush1.msra.mxu0 %v4289
    %4379 = vmatprep.subr.mxu0 %v4286
    %4380 = vmatpush1.msra.mxu0 %v4285
    %4381 = vmatprep.subr.mxu0 0.0
    %4382 = vmatpush2.msra.mxu0 0.0
    %4383 = vmatprep.subr.mxu0 0.0
    %4384 = vmatpush2.msra.mxu0 0.0
    %4385 = vmatprep.subr.mxu0 0.0
    %4386 = vmatpush2.msra.mxu0 0.0
    %4387 = vmatprep.subr.mxu0 0.0
    %4388 = vmatpush2.msra.mxu0 0.0
    %4389 = vmatprep.subr.mxu0 0.0
    %4390 = vmatpush2.msra.mxu0 0.0
    %4391 = vmatprep.subr.mxu0 0.0
    %4392 = vmatpush2.msra.mxu0 0.0
    %4393 = vmatprep.subr.mxu0 0.0
    %4394 = vmatpush2.msra.mxu0 0.0
    %4395 = vmatprep.subr.mxu0 0.0
    %4396 = vmatpush2.msra.mxu0 0.0
    %4397 = vmatprep.subr.mxu0 0.0
    %4398 = vmatpush2.msra.mxu0 0.0
    %4399 = vmatprep.subr.mxu0 0.0
    %4400 = vmatpush2.msra.mxu0 0.0
    %4401 = vmatprep.subr.mxu0 0.0
    %4402 = vmatpush2.msra.mxu0 0.0
    %4403 = vmatprep.subr.mxu0 0.0
    %4404 = vmatpush2.msra.mxu0 0.0
    %4405 = vmatprep.subr.mxu0 0.0
    %4406 = vmatpush2.msra.mxu0 0.0
    %4407 = vmatprep.subr.mxu0 0.0
    %4408 = vmatpush2.msra.mxu0 0.0
    %4409 = vmatprep.subr.mxu0 0.0
    %4410 = vmatpush2.msra.mxu0 0.0
    %4411 = vmatprep.subr.mxu0 0.0
    %4412 = vmatpush2.msra.mxu0 0.0
    %4413 = vmatprep.mubr.f32.mxu0 0.0
    %4414 = vmatmul.mubr.f32.gmra.mxu0 %v4282
    %v4415 = vpop.f32.mrf.mxu0
    %v4416 = vadd.f32 0.0, %v4415
    %v4417 = vpop.f32.mrf.mxu0
    %v4418 = vadd.f32 0.0, %v4417
    %4419 = vdwg.mxu0
    %4420 = vmatprep.subr.mxu0 %v4348
    %4421 = vmatpush1.msra.mxu0 %v4347
    %4422 = vmatprep.subr.mxu0 %v4344
    %4423 = vmatpush1.msra.mxu0 %v4343
    %4424 = vmatprep.subr.mxu0 %v4340
    %4425 = vmatpush1.msra.mxu0 %v4339
    %4426 = vmatprep.subr.mxu0 %v4336
    %4427 = vmatpush1.msra.mxu0 %v4335
    %4428 = vmatprep.subr.mxu0 %v4332
    %4429 = vmatpush1.msra.mxu0 %v4331
    %4430 = vmatprep.subr.mxu0 %v4328
    %4431 = vmatpush1.msra.mxu0 %v4327
    %4432 = vmatprep.subr.mxu0 %v4324
    %4433 = vmatpush1.msra.mxu0 %v4323
    %4434 = vmatprep.subr.mxu0 %v4320
    %4435 = vmatpush1.msra.mxu0 %v4319
    %4436 = vmatprep.subr.mxu0 %v4316
    %4437 = vmatpush1.msra.mxu0 %v4315
    %4438 = vmatprep.subr.mxu0 %v4312
    %4439 = vmatpush1.msra.mxu0 %v4311
    %4440 = vmatprep.subr.mxu0 %v4308
    %4441 = vmatpush1.msra.mxu0 %v4307
    %4442 = vmatprep.subr.mxu0 %v4304
    %4443 = vmatpush1.msra.mxu0 %v4303
    %4444 = vmatprep.subr.mxu0 %v4300
    %4445 = vmatpush1.msra.mxu0 %v4299
    %4446 = vmatprep.subr.mxu0 %v4296
    %4447 = vmatpush1.msra.mxu0 %v4295
    %4448 = vmatprep.subr.mxu0 %v4292
    %4449 = vmatpush1.msra.mxu0 %v4291
    %4450 = vmatprep.subr.mxu0 %v4288
    %4451 = vmatpush1.msra.mxu0 %v4287
    %4452 = vmatprep.subr.mxu0 0.0
    %4453 = vmatpush2.msra.mxu0 0.0
    %4454 = vmatprep.subr.mxu0 0.0
    %4455 = vmatpush2.msra.mxu0 0.0
    %4456 = vmatprep.subr.mxu0 0.0
    %4457 = vmatpush2.msra.mxu0 0.0
    %4458 = vmatprep.subr.mxu0 0.0
    %4459 = vmatpush2.msra.mxu0 0.0
    %4460 = vmatprep.subr.mxu0 0.0
    %4461 = vmatpush2.msra.mxu0 0.0
    %4462 = vmatprep.subr.mxu0 0.0
    %4463 = vmatpush2.msra.mxu0 0.0
    %4464 = vmatprep.subr.mxu0 0.0
    %4465 = vmatpush2.msra.mxu0 0.0
    %4466 = vmatprep.subr.mxu0 0.0
    %4467 = vmatpush2.msra.mxu0 0.0
    %4468 = vmatprep.subr.mxu0 0.0
    %4469 = vmatpush2.msra.mxu0 0.0
    %4470 = vmatprep.subr.mxu0 0.0
    %4471 = vmatpush2.msra.mxu0 0.0
    %4472 = vmatprep.subr.mxu0 0.0
    %4473 = vmatpush2.msra.mxu0 0.0
    %4474 = vmatprep.subr.mxu0 0.0
    %4475 = vmatpush2.msra.mxu0 0.0
    %4476 = vmatprep.subr.mxu0 0.0
    %4477 = vmatpush2.msra.mxu0 0.0
    %4478 = vmatprep.subr.mxu0 0.0
    %4479 = vmatpush2.msra.mxu0 0.0
    %4480 = vmatprep.subr.mxu0 0.0
    %4481 = vmatpush2.msra.mxu0 0.0
    %4482 = vmatprep.subr.mxu0 0.0
    %4483 = vmatpush2.msra.mxu0 0.0
    %4484 = vmatprep.mubr.f32.mxu0 0.0
    %4485 = vmatmul.mubr.f32.gmra.mxu0 %v4282
    %v4486 = vpop.f32.mrf.mxu0
    %v4487 = vadd.f32 0.0, %v4486
    %v4488 = vpop.f32.mrf.mxu0
    %v4489 = vadd.f32 0.0, %v4488
    %4490 = vdwg.mxu0
    %v4495 = vcombine.low %v4416, %v4418
    %v4496 = vcombine.low %v4487, %v4489
    %v4498 = vunpack.c.l.s4 1983009808
    %v4499 = vunpack.c.0.s8 %v4498
    %v4500 = vlaneseq
    %v4501 = vshrl.u32 %v4500, 7
    %v4502 = vsub.s32 %v4499, %v4501
    %v4503 = vrot.slane %v4495, %v4502
    %v4505 = vunpack.c.l.s4 1983009808
    %v4506 = vunpack.c.0.s8 %v4505
    %v4507 = vlaneseq
    %v4508 = vshrl.u32 %v4507, 7
    %v4509 = vsub.s32 %v4506, %v4508
    %v4510 = vrot.slane %v4496, %v4509
    %v4511 = vcombine.low %v4503, %v4510
    %v4513 = vadd.f32 %v4284, %v4511
    %v4514 = vxor.u32 %v4513, 2147483648
    %v4515 = vmul.f32 %v4514, 1.442695
    %v4516 = vpow.pop %v4515
    %v4517 = vadd.f32 %v4516, 1.0
    %v4518 = vrcp.pop %v4517
    %v4519 = vmul.f32 1.0, %v4518
    %v4521 = vrot.slane %v4513, 2
    %v4523 = vxor.u32 %v4521, 2147483648
    %v4524 = vmul.f32 %v4523, 1.442695
    %v4525 = vpow.pop %v4524
    %v4526 = vadd.f32 %v4525, 1.0
    %v4527 = vrcp.pop %v4526
    %v4528 = vmul.f32 1.0, %v4527
    %v4529 = vrot.slane %v4513, 4
    %v4531 = vtanh.pop %v4529
    %v4532 = vrot.slane %v4513, 6
    %v4534 = vxor.u32 %v4532, 2147483648
    %v4535 = vmul.f32 %v4534, 1.442695
    %v4536 = vpow.pop %v4535
    %v4537 = vadd.f32 %v4536, 1.0
    %v4538 = vrcp.pop %v4537
    %v4539 = vmul.f32 1.0, %v4538
    %v4540 = vmul.f32 %v4528, %v4283
    %v4541 = vmul.f32 %v4519, %v4531
    %v4542 = vadd.f32 %v4540, %v4541
    %v4543 = vtanh.pop %v4542
    %v4544 = vmul.f32 %v4539, %v4543
    %v4545 = vstv %s99
    %vm4546 = vcmp.lt.s32.totalorder %v4545, %v96
    %v4547 = vsel %vm4546, 1, 0
    %4548 = vset.pattern.permute.xlu0 0
    %4549 = vperm.xlu0 %4548, %v4547
    %v4550 = vpop.permute.xlu0 %4549
    %vm4551 = vcmp.eq.s32.totalorder %v4550, 1
    %v4552 = vsel %vm4551, %v4542, %v4283
    %4553 = vst [vmem:[#allocation5] sm:$0x3] %v4552
    %v4554 = vsel %vm4551, %v4544, %v4282
    %4555 = vst [vmem:[#allocation4] sm:$0x3] %v4554
    %v4556 = vsel %vm4551, %v4544, 0.0
    %4557 = vst [vmem:[#allocation15] sm:$0x3] %v4556
    // Predicated region
    $region42: #{tpu_custom_call.1} parent=1 // pred_check
      _
    $region43: #{tpu_custom_call.1} parent=1 // pred_check_branch
      %4559 = sbr.rel (0) target = $region45
    $region44: #{tpu_custom_call.1} parent=1 // pred_region
      %s4561 = ssub.s32 256, 256
      %4562 = vsyncadd [#allocation8], %s4561
      %s4563 = sshll.u32 [#allocation14], 4
      %s4564 = int_to_ptr.vmem [resolvable:$true] %s4563
      %4569 = dma.vmem_to_hbm [thread:$0]  %s4564, 256, %s5, [#allocation8], 32, 32, 2
    $region45: #{tpu_custom_call.1} parent=1 // pred_fallthru
      _
    // Predicated region
    $region46: #{tpu_custom_call.1} parent=1 // pred_check
      _
    $region47: #{tpu_custom_call.1} parent=1 // pred_check_branch
      %4571 = sbr.rel (0) target = $region49
    $region48: #{tpu_custom_call.1} parent=1 // pred_region
      %s4572 = ssub.s32 0, 0
      %s4573 = smul.u32 8, %s4572
      %s4575 = ssub.s32 256, 256
      %4576 = vsyncadd [#allocation16], %s4575
      %s4577 = smul.addr %s4573, 32
      %s4578 = scalar_lea.hbm %s6, %s4577
      %s4579 = sshll.u32 [#allocation15], 4
      %s4580 = int_to_ptr.vmem [resolvable:$true] %s4579
      %4585 = dma.vmem_to_hbm [thread:$0]  %s4580, 256, %s4578, [#allocation16], 32, 32, 2
    $region49: #{tpu_custom_call.1} parent=1 // pred_fallthru
      _
    // Predicated region
    $region50: #{tpu_custom_call.1} parent=1 // pred_check
      _
    $region51: #{tpu_custom_call.1} parent=1 // pred_check_branch
      %4587 = sbr.rel (0) target = $region53
    $region52: #{tpu_custom_call.1} parent=1 // pred_region
      %4588 = dma.done [#allocation8], 256
    $region53: #{tpu_custom_call.1} parent=1 // pred_fallthru
      _
    // Predicated region
    $region54: #{tpu_custom_call.1} parent=1 // pred_check
      _
    $region55: #{tpu_custom_call.1} parent=1 // pred_check_branch
      %4590 = sbr.rel (0) target = $region57
    $region56: #{tpu_custom_call.1} parent=1 // pred_region
      %4591 = dma.done [#allocation16], 256
    $region57: #{tpu_custom_call.1} parent=1 // pred_fallthru
      _
    %4592 = vsyncpa [#allocation7], 1
    %4593 = vsyncpa [#allocation10], 1
    %4594 = vsyncpa [#allocation13], 1
    %4595 = vsyncpa [#allocation8], 1
    %4596 = vsyncpa [#allocation16], 1

</llo_original>
